<compile_context>
chip_gen: v7x
topology: tpu7x:2x2x1
jax: 0.10.0
libtpu: 0.0.40
codegen_flags: <defaults>
</compile_context>

<pallas_src>
import math
from functools import partial

import jax
import jax.numpy as jnp
from jax.experimental import pallas as pl
from jax.experimental.pallas import tpu as pltpu


# ------------------------------------------------------------------ kernel

def decoder_kernel(code_ref, xyz_ref,
                   w1_ref, b1_ref, wc_ref, bc_ref,
                   w2_ref, b2_ref, w4_ref, b4_ref,
                   sw1_ref, sb1_ref, sw2_ref, sb2_ref, sw3_ref, sb3_ref,
                   p_ref, sdf_ref, *, steps, dt):
    """Fused Warper (all NODE blocks) + SdfDecoder on one point tile.

    code_ref: (latent, tn)   xyz_ref: (3, tn)
    w*_ref:   (steps, out, in)   b*_ref: (steps, out, 1)
    sw*_ref:  (out, in)          sb*_ref: (out, 1)
    p_ref:    (3, tn)        sdf_ref: (1, tn)
    """
    code = code_ref[...]          # (latent, tn)
    y0 = xyz_ref[...]             # (3, tn)

    def node_step(s, y):
        w1 = w1_ref[s]; b1 = b1_ref[s]
        wc = wc_ref[s]; bc = bc_ref[s]
        w2 = w2_ref[s]; b2 = b2_ref[s]
        w4 = w4_ref[s]; b4 = b4_ref[s]

        # shape features depend only on the (constant) latent code: once/step.
        sf = jnp.tanh(
            jnp.dot(wc, code, preferred_element_type=jnp.float32) + bc)

        def odefunc(x):
            pf = jax.nn.relu(
                jnp.dot(w1, x, preferred_element_type=jnp.float32) + b1)
            psf = pf * sf
            psf = jax.nn.relu(
                jnp.dot(w2, psf, preferred_element_type=jnp.float32) + b2) + psf
            return jnp.tanh(
                jnp.dot(w4, psf, preferred_element_type=jnp.float32) + b4)

        # Classic RK4 over [0, dt] with incremental accumulation so that only
        # {y, current k, acc} stay live (no spills from holding k1..k4).
        k = odefunc(y)
        acc = y + (dt / 6.0) * k
        k = odefunc(y + (0.5 * dt) * k)
        acc = acc + (dt / 3.0) * k
        k = odefunc(y + (0.5 * dt) * k)
        acc = acc + (dt / 3.0) * k
        k = odefunc(y + dt * k)
        return acc + (dt / 6.0) * k

    y = jax.lax.fori_loop(0, steps, node_step, y0, unroll=True)
    p_ref[...] = y

    # Fused SdfDecoder MLP on the warped points (weights already in VMEM).
    h = jax.nn.relu(
        jnp.dot(sw1_ref[...], y, preferred_element_type=jnp.float32)
        + sb1_ref[...])
    h = jax.nn.relu(
        jnp.dot(sw2_ref[...], h, preferred_element_type=jnp.float32)
        + sb2_ref[...])
    sdf_ref[...] = jnp.tanh(
        jnp.dot(sw3_ref[...], h, preferred_element_type=jnp.float32)
        + sb3_ref[...])


# ------------------------------------------------------------------ wrapper

def decoder_forward(cxyz, params, *, time=1.0, tile_n=1024):
    """Decoder.forward in eval mode with output_warped_points=True."""
    wp = params["warper"]
    sp = params["sdf"]

    n, c = cxyz.shape
    latent = c - 3
    steps, hidden, _ = wp["w1"].shape          # (steps, hidden, 3)
    sdf_hidden = sp["w1"].shape[0]
    dt = time / steps

    # Layout plumbing: feature-major (channels on sublanes, points on lanes).
    code_t = cxyz[:, :-3].T                    # (latent, n)
    xyz_t = cxyz[:, -3:].T                     # (3, n)

    # Pad the point dim to a lane-aligned tile multiple.
    tn = max(128, min(tile_n, -(-n // 128) * 128))
    n_pad = -(-n // tn) * tn
    if n_pad != n:
        code_t = jnp.pad(code_t, ((0, 0), (0, n_pad - n)))
        xyz_t = jnp.pad(xyz_t, ((0, 0), (0, n_pad - n)))

    col = lambda i: (0, i)                     # tile along the point axis
    full2 = lambda i: (0, 0)                   # weights: single resident block
    full3 = lambda i: (0, 0, 0)

    # Advisory cost estimate (helps XLA schedule around this tiny call).
    flops_per_pt = steps * (
        2 * latent * hidden
        + 4 * (2 * 3 * hidden + 2 * hidden * hidden + 2 * hidden * 3
               + 8 * hidden)) \
        + 2 * 3 * sdf_hidden + 2 * sdf_hidden * sdf_hidden + 2 * sdf_hidden
    transc_per_pt = steps * (hidden + 4 * 3) + 1
    weight_bytes = sum(int(v.size) * 4 for d in (wp, sp) for v in d.values())
    bytes_accessed = (latent + 3 + 3 + 1) * n_pad * 4 + weight_bytes

    p_t, sdf_t = pl.pallas_call(
        partial(decoder_kernel, steps=steps, dt=dt),
        out_shape=(jax.ShapeDtypeStruct((3, n_pad), jnp.float32),
                   jax.ShapeDtypeStruct((1, n_pad), jnp.float32)),
        grid=(n_pad // tn,),
        in_specs=[
            pl.BlockSpec((latent, tn), col),
            pl.BlockSpec((3, tn), col),
            pl.BlockSpec((steps, hidden, 3), full3),
            pl.BlockSpec((steps, hidden, 1), full3),
            pl.BlockSpec((steps, hidden, latent), full3),
            pl.BlockSpec((steps, hidden, 1), full3),
            pl.BlockSpec((steps, hidden, hidden), full3),
            pl.BlockSpec((steps, hidden, 1), full3),
            pl.BlockSpec((steps, 3, hidden), full3),
            pl.BlockSpec((steps, 3, 1), full3),
            pl.BlockSpec((sdf_hidden, 3), full2),
            pl.BlockSpec((sdf_hidden, 1), full2),
            pl.BlockSpec((sdf_hidden, sdf_hidden), full2),
            pl.BlockSpec((sdf_hidden, 1), full2),
            pl.BlockSpec((1, sdf_hidden), full2),
            pl.BlockSpec((1, 1), full2),
        ],
        out_specs=(pl.BlockSpec((3, tn), col),
                   pl.BlockSpec((1, tn), col)),
        compiler_params=pltpu.CompilerParams(
            dimension_semantics=("parallel",)),
        cost_estimate=pl.CostEstimate(
            flops=int(flops_per_pt * n_pad),
            transcendentals=int(transc_per_pt * n_pad),
            bytes_accessed=int(bytes_accessed)),
    )(code_t, xyz_t,
      wp["w1"], wp["b1"], wp["wc"], wp["bc"],
      wp["w2"], wp["b2"], wp["w4"], wp["b4"],
      sp["w1"], sp["b1"], sp["w2"], sp["b2"], sp["w3"], sp["b3"])

    p_final = p_t[:, :n].T                     # (n, 3)
    sdf = sdf_t[:, :n].T                       # (n, 1)
    return p_final, sdf


# ------------------------------------------------------------------ params

def _linear(key, fan_in, fan_out):
    """Deterministic PyTorch-style nn.Linear init, stored as (out, in)."""
    kw, kb = jax.random.split(key)
    bound = 1.0 / math.sqrt(fan_in)
    w = jax.random.uniform(kw, (fan_out, fan_in), jnp.float32, -bound, bound)
    b = jax.random.uniform(kb, (fan_out, 1), jnp.float32, -bound, bound)
    return w, b


def init_params(key, latent_size, hidden_size, steps, sdf_hidden):
    keys = jax.random.split(key, steps * 4 + 3)
    w1s, b1s, wcs, bcs, w2s, b2s, w4s, b4s = [], [], [], [], [], [], [], []
    for s in range(steps):
        k1, kc, k2, k4 = keys[4 * s: 4 * s + 4]
        w1, b1 = _linear(k1, 3, hidden_size)
        wc, bc = _linear(kc, latent_size, hidden_size)
        w2, b2 = _linear(k2, hidden_size, hidden_size)
        w4, b4 = _linear(k4, hidden_size, 3)
        w1s.append(w1); b1s.append(b1); wcs.append(wc); bcs.append(bc)
        w2s.append(w2); b2s.append(b2); w4s.append(w4); b4s.append(b4)
    warper = {
        "w1": jnp.stack(w1s), "b1": jnp.stack(b1s),
        "wc": jnp.stack(wcs), "bc": jnp.stack(bcs),
        "w2": jnp.stack(w2s), "b2": jnp.stack(b2s),
        "w4": jnp.stack(w4s), "b4": jnp.stack(b4s),
    }
    ks1, ks2, ks3 = keys[-3:]
    sw1, sb1 = _linear(ks1, 3, sdf_hidden)
    sw2, sb2 = _linear(ks2, sdf_hidden, sdf_hidden)
    sw3, sb3 = _linear(ks3, sdf_hidden, 1)
    sdf = {"w1": sw1, "b1": sb1, "w2": sw2, "b2": sb2, "w3": sw3, "b3": sb3}
    return {"warper": warper, "sdf": sdf}


# ------------------------------------------------------------------ main

if __name__ == "__main__":
    N = 256             # number of points
    LATENT = 16         # latent code size
    HIDDEN = 32         # ODEFunc hidden size
    STEPS = 4           # number of NODE blocks in the Warper
    SDF_HIDDEN = 64     # SdfDecoder hidden size

    key = jax.random.PRNGKey(0)
    k_params, k_code, k_xyz = jax.random.split(key, 3)

    params = init_params(k_params, LATENT, HIDDEN, STEPS, SDF_HIDDEN)

    code = jax.random.normal(k_code, (N, LATENT), jnp.float32)
    xyz = jax.random.uniform(k_xyz, (N, 3), jnp.float32, -1.0, 1.0)
    cxyz = jnp.concatenate([code, xyz], axis=1)   # (N, latent+3)

    p_final, sdf = jax.jit(decoder_forward)(cxyz, params)
    jax.block_until_ready((p_final, sdf))

    assert p_final.shape == (N, 3) and sdf.shape == (N, 1)
    assert jnp.all(jnp.isfinite(p_final)) and jnp.all(jnp.isfinite(sdf))
    print("KERNEL_OK")
</pallas_src>

<mosaic_0001>
module attributes {stable_mosaic.version = 11 : i64} {
  func.func @decoder_kernel(%arg0: i32, %arg1: memref<16x256xf32, #tpu.memory_space<vmem>>, %arg2: memref<3x256xf32, #tpu.memory_space<vmem>>, %arg3: memref<4x32x3xf32, #tpu.memory_space<vmem>>, %arg4: memref<4x32x1xf32, #tpu.memory_space<vmem>>, %arg5: memref<4x32x16xf32, #tpu.memory_space<vmem>>, %arg6: memref<4x32x1xf32, #tpu.memory_space<vmem>>, %arg7: memref<4x32x32xf32, #tpu.memory_space<vmem>>, %arg8: memref<4x32x1xf32, #tpu.memory_space<vmem>>, %arg9: memref<4x3x32xf32, #tpu.memory_space<vmem>>, %arg10: memref<4x3x1xf32, #tpu.memory_space<vmem>>, %arg11: memref<64x3xf32, #tpu.memory_space<vmem>>, %arg12: memref<64x1xf32, #tpu.memory_space<vmem>>, %arg13: memref<64x64xf32, #tpu.memory_space<vmem>>, %arg14: memref<64x1xf32, #tpu.memory_space<vmem>>, %arg15: memref<1x64xf32, #tpu.memory_space<vmem>>, %arg16: memref<1x1xf32, #tpu.memory_space<vmem>>, %arg17: memref<3x256xf32, #tpu.memory_space<vmem>>, %arg18: memref<1x256xf32, #tpu.memory_space<vmem>>) attributes {dimension_semantics = [#tpu.dimension_semantics<parallel>], iteration_bounds = array<i64: 1>, scalar_prefetch = 0 : i64, scratch_operands = 0 : i64, tpu.core_type = #tpu.core_type<tc>, window_params = [{transform_indices = @transform_0, window_bounds = array<i64: 16, 256>}, {transform_indices = @transform_1, window_bounds = array<i64: 3, 256>}, {pipeline_mode = #tpu.pipeline_mode<synchronous>, transform_indices = @transform_2, window_bounds = array<i64: 4, 32, 3>}, {pipeline_mode = #tpu.pipeline_mode<synchronous>, transform_indices = @transform_3, window_bounds = array<i64: 4, 32, 1>}, {pipeline_mode = #tpu.pipeline_mode<synchronous>, transform_indices = @transform_4, window_bounds = array<i64: 4, 32, 16>}, {pipeline_mode = #tpu.pipeline_mode<synchronous>, transform_indices = @transform_5, window_bounds = array<i64: 4, 32, 1>}, {pipeline_mode = #tpu.pipeline_mode<synchronous>, transform_indices = @transform_6, window_bounds = array<i64: 4, 32, 32>}, {pipeline_mode = #tpu.pipeline_mode<synchronous>, transform_indices = @transform_7, window_bounds = array<i64: 4, 32, 1>}, {pipeline_mode = #tpu.pipeline_mode<synchronous>, transform_indices = @transform_8, window_bounds = array<i64: 4, 3, 32>}, {pipeline_mode = #tpu.pipeline_mode<synchronous>, transform_indices = @transform_9, window_bounds = array<i64: 4, 3, 1>}, {pipeline_mode = #tpu.pipeline_mode<synchronous>, transform_indices = @transform_10, window_bounds = array<i64: 64, 3>}, {pipeline_mode = #tpu.pipeline_mode<synchronous>, transform_indices = @transform_11, window_bounds = array<i64: 64, 1>}, {pipeline_mode = #tpu.pipeline_mode<synchronous>, transform_indices = @transform_12, window_bounds = array<i64: 64, 64>}, {pipeline_mode = #tpu.pipeline_mode<synchronous>, transform_indices = @transform_13, window_bounds = array<i64: 64, 1>}, {pipeline_mode = #tpu.pipeline_mode<synchronous>, transform_indices = @transform_14, window_bounds = array<i64: 1, 64>}, {pipeline_mode = #tpu.pipeline_mode<synchronous>, transform_indices = @transform_15, window_bounds = array<i64: 1, 1>}, {transform_indices = @transform_16, window_bounds = array<i64: 3, 256>}, {transform_indices = @transform_17, window_bounds = array<i64: 1, 256>}]} {
    %c0 = arith.constant 0 : index
    %c0_0 = arith.constant 0 : index
    %0 = vector.load %arg1[%c0, %c0_0] : memref<16x256xf32, #tpu.memory_space<vmem>>, vector<16x256xf32>
    %c0_1 = arith.constant 0 : index
    %c0_2 = arith.constant 0 : index
    %1 = vector.load %arg2[%c0_1, %c0_2] : memref<3x256xf32, #tpu.memory_space<vmem>>, vector<3x256xf32>
    %c0_i32 = arith.constant 0 : i32
    %2 = arith.index_cast %c0_i32 : i32 to index
    %c0_3 = arith.constant 0 : index
    %c0_4 = arith.constant 0 : index
    %3 = vector.load %arg3[%2, %c0_3, %c0_4] : memref<4x32x3xf32, #tpu.memory_space<vmem>>, vector<1x32x3xf32>
    %4 = vector.shape_cast %3 : vector<1x32x3xf32> to vector<32x3xf32>
    %5 = arith.index_cast %c0_i32 : i32 to index
    %c0_5 = arith.constant 0 : index
    %c0_6 = arith.constant 0 : index
    %6 = vector.load %arg4[%5, %c0_5, %c0_6] : memref<4x32x1xf32, #tpu.memory_space<vmem>>, vector<1x32x1xf32>
    %7 = vector.shape_cast %6 : vector<1x32x1xf32> to vector<32x1xf32>
    %8 = arith.index_cast %c0_i32 : i32 to index
    %c0_7 = arith.constant 0 : index
    %c0_8 = arith.constant 0 : index
    %9 = vector.load %arg5[%8, %c0_7, %c0_8] : memref<4x32x16xf32, #tpu.memory_space<vmem>>, vector<1x32x16xf32>
    %10 = vector.shape_cast %9 : vector<1x32x16xf32> to vector<32x16xf32>
    %11 = arith.index_cast %c0_i32 : i32 to index
    %c0_9 = arith.constant 0 : index
    %c0_10 = arith.constant 0 : index
    %12 = vector.load %arg6[%11, %c0_9, %c0_10] : memref<4x32x1xf32, #tpu.memory_space<vmem>>, vector<1x32x1xf32>
    %13 = vector.shape_cast %12 : vector<1x32x1xf32> to vector<32x1xf32>
    %14 = arith.index_cast %c0_i32 : i32 to index
    %c0_11 = arith.constant 0 : index
    %c0_12 = arith.constant 0 : index
    %15 = vector.load %arg7[%14, %c0_11, %c0_12] : memref<4x32x32xf32, #tpu.memory_space<vmem>>, vector<1x32x32xf32>
    %16 = vector.shape_cast %15 : vector<1x32x32xf32> to vector<32x32xf32>
    %17 = arith.index_cast %c0_i32 : i32 to index
    %c0_13 = arith.constant 0 : index
    %c0_14 = arith.constant 0 : index
    %18 = vector.load %arg8[%17, %c0_13, %c0_14] : memref<4x32x1xf32, #tpu.memory_space<vmem>>, vector<1x32x1xf32>
    %19 = vector.shape_cast %18 : vector<1x32x1xf32> to vector<32x1xf32>
    %20 = arith.index_cast %c0_i32 : i32 to index
    %c0_15 = arith.constant 0 : index
    %c0_16 = arith.constant 0 : index
    %21 = vector.load %arg9[%20, %c0_15, %c0_16] : memref<4x3x32xf32, #tpu.memory_space<vmem>>, vector<1x3x32xf32>
    %22 = vector.shape_cast %21 : vector<1x3x32xf32> to vector<3x32xf32>
    %23 = arith.index_cast %c0_i32 : i32 to index
    %c0_17 = arith.constant 0 : index
    %c0_18 = arith.constant 0 : index
    %24 = vector.load %arg10[%23, %c0_17, %c0_18] : memref<4x3x1xf32, #tpu.memory_space<vmem>>, vector<1x3x1xf32>
    %25 = vector.shape_cast %24 : vector<1x3x1xf32> to vector<3x1xf32>
    %cst = arith.constant dense<0.000000e+00> : vector<32x256xf32>
    %26 = tpu.matmul %10, %0, %cst {dimension_numbers = #tpu.dot_dimension_numbers<[1], [0], [0], [1], [0, 0, 1, 1], [], []>} : vector<32x16xf32>, vector<16x256xf32>, vector<32x256xf32> -> vector<32x256xf32>
    %27 = vector.broadcast %13 : vector<32x1xf32> to vector<32x256xf32>
    %28 = arith.addf %26, %27 : vector<32x256xf32>
    %29 = math.tanh %28 : vector<32x256xf32>
    %cst_19 = arith.constant dense<0.000000e+00> : vector<32x256xf32>
    %30 = tpu.matmul %4, %1, %cst_19 {dimension_numbers = #tpu.dot_dimension_numbers<[1], [0], [0], [1], [0, 0, 1, 1], [], []>} : vector<32x3xf32>, vector<3x256xf32>, vector<32x256xf32> -> vector<32x256xf32>
    %31 = vector.broadcast %7 : vector<32x1xf32> to vector<32x256xf32>
    %32 = arith.addf %30, %31 : vector<32x256xf32>
    %cst_20 = arith.constant 0.000000e+00 : f32
    %33 = vector.broadcast %cst_20 : f32 to vector<32x256xf32>
    %34 = arith.maximumf %32, %33 : vector<32x256xf32>
    %35 = arith.mulf %34, %29 : vector<32x256xf32>
    %cst_21 = arith.constant dense<0.000000e+00> : vector<32x256xf32>
    %36 = tpu.matmul %16, %35, %cst_21 {dimension_numbers = #tpu.dot_dimension_numbers<[1], [0], [0], [1], [0, 0, 1, 1], [], []>} : vector<32x32xf32>, vector<32x256xf32>, vector<32x256xf32> -> vector<32x256xf32>
    %37 = vector.broadcast %19 : vector<32x1xf32> to vector<32x256xf32>
    %38 = arith.addf %36, %37 : vector<32x256xf32>
    %cst_22 = arith.constant 0.000000e+00 : f32
    %39 = vector.broadcast %cst_22 : f32 to vector<32x256xf32>
    %40 = arith.maximumf %38, %39 : vector<32x256xf32>
    %41 = arith.addf %40, %35 : vector<32x256xf32>
    %cst_23 = arith.constant dense<0.000000e+00> : vector<3x256xf32>
    %42 = tpu.matmul %22, %41, %cst_23 {dimension_numbers = #tpu.dot_dimension_numbers<[1], [0], [0], [1], [0, 0, 1, 1], [], []>} : vector<3x32xf32>, vector<32x256xf32>, vector<3x256xf32> -> vector<3x256xf32>
    %43 = vector.broadcast %25 : vector<3x1xf32> to vector<3x256xf32>
    %44 = arith.addf %42, %43 : vector<3x256xf32>
    %45 = math.tanh %44 : vector<3x256xf32>
    %cst_24 = arith.constant 0.0416666679 : f32
    %46 = vector.broadcast %cst_24 : f32 to vector<3x256xf32>
    %47 = arith.mulf %46, %45 : vector<3x256xf32>
    %48 = arith.addf %1, %47 : vector<3x256xf32>
    %cst_25 = arith.constant 1.250000e-01 : f32
    %49 = vector.broadcast %cst_25 : f32 to vector<3x256xf32>
    %50 = arith.mulf %49, %45 : vector<3x256xf32>
    %51 = arith.addf %1, %50 : vector<3x256xf32>
    %cst_26 = arith.constant dense<0.000000e+00> : vector<32x256xf32>
    %52 = tpu.matmul %4, %51, %cst_26 {dimension_numbers = #tpu.dot_dimension_numbers<[1], [0], [0], [1], [0, 0, 1, 1], [], []>} : vector<32x3xf32>, vector<3x256xf32>, vector<32x256xf32> -> vector<32x256xf32>
    %53 = vector.broadcast %7 : vector<32x1xf32> to vector<32x256xf32>
    %54 = arith.addf %52, %53 : vector<32x256xf32>
    %cst_27 = arith.constant 0.000000e+00 : f32
    %55 = vector.broadcast %cst_27 : f32 to vector<32x256xf32>
    %56 = arith.maximumf %54, %55 : vector<32x256xf32>
    %57 = arith.mulf %56, %29 : vector<32x256xf32>
    %cst_28 = arith.constant dense<0.000000e+00> : vector<32x256xf32>
    %58 = tpu.matmul %16, %57, %cst_28 {dimension_numbers = #tpu.dot_dimension_numbers<[1], [0], [0], [1], [0, 0, 1, 1], [], []>} : vector<32x32xf32>, vector<32x256xf32>, vector<32x256xf32> -> vector<32x256xf32>
    %59 = vector.broadcast %19 : vector<32x1xf32> to vector<32x256xf32>
    %60 = arith.addf %58, %59 : vector<32x256xf32>
    %cst_29 = arith.constant 0.000000e+00 : f32
    %61 = vector.broadcast %cst_29 : f32 to vector<32x256xf32>
    %62 = arith.maximumf %60, %61 : vector<32x256xf32>
    %63 = arith.addf %62, %57 : vector<32x256xf32>
    %cst_30 = arith.constant dense<0.000000e+00> : vector<3x256xf32>
    %64 = tpu.matmul %22, %63, %cst_30 {dimension_numbers = #tpu.dot_dimension_numbers<[1], [0], [0], [1], [0, 0, 1, 1], [], []>} : vector<3x32xf32>, vector<32x256xf32>, vector<3x256xf32> -> vector<3x256xf32>
    %65 = vector.broadcast %25 : vector<3x1xf32> to vector<3x256xf32>
    %66 = arith.addf %64, %65 : vector<3x256xf32>
    %67 = math.tanh %66 : vector<3x256xf32>
    %cst_31 = arith.constant 0.0833333358 : f32
    %68 = vector.broadcast %cst_31 : f32 to vector<3x256xf32>
    %69 = arith.mulf %68, %67 : vector<3x256xf32>
    %70 = arith.addf %48, %69 : vector<3x256xf32>
    %cst_32 = arith.constant 1.250000e-01 : f32
    %71 = vector.broadcast %cst_32 : f32 to vector<3x256xf32>
    %72 = arith.mulf %71, %67 : vector<3x256xf32>
    %73 = arith.addf %1, %72 : vector<3x256xf32>
    %cst_33 = arith.constant dense<0.000000e+00> : vector<32x256xf32>
    %74 = tpu.matmul %4, %73, %cst_33 {dimension_numbers = #tpu.dot_dimension_numbers<[1], [0], [0], [1], [0, 0, 1, 1], [], []>} : vector<32x3xf32>, vector<3x256xf32>, vector<32x256xf32> -> vector<32x256xf32>
    %75 = vector.broadcast %7 : vector<32x1xf32> to vector<32x256xf32>
    %76 = arith.addf %74, %75 : vector<32x256xf32>
    %cst_34 = arith.constant 0.000000e+00 : f32
    %77 = vector.broadcast %cst_34 : f32 to vector<32x256xf32>
    %78 = arith.maximumf %76, %77 : vector<32x256xf32>
    %79 = arith.mulf %78, %29 : vector<32x256xf32>
    %cst_35 = arith.constant dense<0.000000e+00> : vector<32x256xf32>
    %80 = tpu.matmul %16, %79, %cst_35 {dimension_numbers = #tpu.dot_dimension_numbers<[1], [0], [0], [1], [0, 0, 1, 1], [], []>} : vector<32x32xf32>, vector<32x256xf32>, vector<32x256xf32> -> vector<32x256xf32>
    %81 = vector.broadcast %19 : vector<32x1xf32> to vector<32x256xf32>
    %82 = arith.addf %80, %81 : vector<32x256xf32>
    %cst_36 = arith.constant 0.000000e+00 : f32
    %83 = vector.broadcast %cst_36 : f32 to vector<32x256xf32>
    %84 = arith.maximumf %82, %83 : vector<32x256xf32>
    %85 = arith.addf %84, %79 : vector<32x256xf32>
    %cst_37 = arith.constant dense<0.000000e+00> : vector<3x256xf32>
    %86 = tpu.matmul %22, %85, %cst_37 {dimension_numbers = #tpu.dot_dimension_numbers<[1], [0], [0], [1], [0, 0, 1, 1], [], []>} : vector<3x32xf32>, vector<32x256xf32>, vector<3x256xf32> -> vector<3x256xf32>
    %87 = vector.broadcast %25 : vector<3x1xf32> to vector<3x256xf32>
    %88 = arith.addf %86, %87 : vector<3x256xf32>
    %89 = math.tanh %88 : vector<3x256xf32>
    %cst_38 = arith.constant 0.0833333358 : f32
    %90 = vector.broadcast %cst_38 : f32 to vector<3x256xf32>
    %91 = arith.mulf %90, %89 : vector<3x256xf32>
    %92 = arith.addf %70, %91 : vector<3x256xf32>
    %cst_39 = arith.constant 2.500000e-01 : f32
    %93 = vector.broadcast %cst_39 : f32 to vector<3x256xf32>
    %94 = arith.mulf %93, %89 : vector<3x256xf32>
    %95 = arith.addf %1, %94 : vector<3x256xf32>
    %cst_40 = arith.constant dense<0.000000e+00> : vector<32x256xf32>
    %96 = tpu.matmul %4, %95, %cst_40 {dimension_numbers = #tpu.dot_dimension_numbers<[1], [0], [0], [1], [0, 0, 1, 1], [], []>} : vector<32x3xf32>, vector<3x256xf32>, vector<32x256xf32> -> vector<32x256xf32>
    %97 = vector.broadcast %7 : vector<32x1xf32> to vector<32x256xf32>
    %98 = arith.addf %96, %97 : vector<32x256xf32>
    %cst_41 = arith.constant 0.000000e+00 : f32
    %99 = vector.broadcast %cst_41 : f32 to vector<32x256xf32>
    %100 = arith.maximumf %98, %99 : vector<32x256xf32>
    %101 = arith.mulf %100, %29 : vector<32x256xf32>
    %cst_42 = arith.constant dense<0.000000e+00> : vector<32x256xf32>
    %102 = tpu.matmul %16, %101, %cst_42 {dimension_numbers = #tpu.dot_dimension_numbers<[1], [0], [0], [1], [0, 0, 1, 1], [], []>} : vector<32x32xf32>, vector<32x256xf32>, vector<32x256xf32> -> vector<32x256xf32>
    %103 = vector.broadcast %19 : vector<32x1xf32> to vector<32x256xf32>
    %104 = arith.addf %102, %103 : vector<32x256xf32>
    %cst_43 = arith.constant 0.000000e+00 : f32
    %105 = vector.broadcast %cst_43 : f32 to vector<32x256xf32>
    %106 = arith.maximumf %104, %105 : vector<32x256xf32>
    %107 = arith.addf %106, %101 : vector<32x256xf32>
    %cst_44 = arith.constant dense<0.000000e+00> : vector<3x256xf32>
    %108 = tpu.matmul %22, %107, %cst_44 {dimension_numbers = #tpu.dot_dimension_numbers<[1], [0], [0], [1], [0, 0, 1, 1], [], []>} : vector<3x32xf32>, vector<32x256xf32>, vector<3x256xf32> -> vector<3x256xf32>
    %109 = vector.broadcast %25 : vector<3x1xf32> to vector<3x256xf32>
    %110 = arith.addf %108, %109 : vector<3x256xf32>
    %111 = math.tanh %110 : vector<3x256xf32>
    %cst_45 = arith.constant 0.0416666679 : f32
    %112 = vector.broadcast %cst_45 : f32 to vector<3x256xf32>
    %113 = arith.mulf %112, %111 : vector<3x256xf32>
    %114 = arith.addf %92, %113 : vector<3x256xf32>
    %c1_i32 = arith.constant 1 : i32
    %115 = arith.index_cast %c1_i32 : i32 to index
    %c0_46 = arith.constant 0 : index
    %c0_47 = arith.constant 0 : index
    %116 = vector.load %arg3[%115, %c0_46, %c0_47] : memref<4x32x3xf32, #tpu.memory_space<vmem>>, vector<1x32x3xf32>
    %117 = vector.shape_cast %116 : vector<1x32x3xf32> to vector<32x3xf32>
    %118 = arith.index_cast %c1_i32 : i32 to index
    %c0_48 = arith.constant 0 : index
    %c0_49 = arith.constant 0 : index
    %119 = vector.load %arg4[%118, %c0_48, %c0_49] : memref<4x32x1xf32, #tpu.memory_space<vmem>>, vector<1x32x1xf32>
    %120 = vector.shape_cast %119 : vector<1x32x1xf32> to vector<32x1xf32>
    %121 = arith.index_cast %c1_i32 : i32 to index
    %c0_50 = arith.constant 0 : index
    %c0_51 = arith.constant 0 : index
    %122 = vector.load %arg5[%121, %c0_50, %c0_51] : memref<4x32x16xf32, #tpu.memory_space<vmem>>, vector<1x32x16xf32>
    %123 = vector.shape_cast %122 : vector<1x32x16xf32> to vector<32x16xf32>
    %124 = arith.index_cast %c1_i32 : i32 to index
    %c0_52 = arith.constant 0 : index
    %c0_53 = arith.constant 0 : index
    %125 = vector.load %arg6[%124, %c0_52, %c0_53] : memref<4x32x1xf32, #tpu.memory_space<vmem>>, vector<1x32x1xf32>
    %126 = vector.shape_cast %125 : vector<1x32x1xf32> to vector<32x1xf32>
    %127 = arith.index_cast %c1_i32 : i32 to index
    %c0_54 = arith.constant 0 : index
    %c0_55 = arith.constant 0 : index
    %128 = vector.load %arg7[%127, %c0_54, %c0_55] : memref<4x32x32xf32, #tpu.memory_space<vmem>>, vector<1x32x32xf32>
    %129 = vector.shape_cast %128 : vector<1x32x32xf32> to vector<32x32xf32>
    %130 = arith.index_cast %c1_i32 : i32 to index
    %c0_56 = arith.constant 0 : index
    %c0_57 = arith.constant 0 : index
    %131 = vector.load %arg8[%130, %c0_56, %c0_57] : memref<4x32x1xf32, #tpu.memory_space<vmem>>, vector<1x32x1xf32>
    %132 = vector.shape_cast %131 : vector<1x32x1xf32> to vector<32x1xf32>
    %133 = arith.index_cast %c1_i32 : i32 to index
    %c0_58 = arith.constant 0 : index
    %c0_59 = arith.constant 0 : index
    %134 = vector.load %arg9[%133, %c0_58, %c0_59] : memref<4x3x32xf32, #tpu.memory_space<vmem>>, vector<1x3x32xf32>
    %135 = vector.shape_cast %134 : vector<1x3x32xf32> to vector<3x32xf32>
    %136 = arith.index_cast %c1_i32 : i32 to index
    %c0_60 = arith.constant 0 : index
    %c0_61 = arith.constant 0 : index
    %137 = vector.load %arg10[%136, %c0_60, %c0_61] : memref<4x3x1xf32, #tpu.memory_space<vmem>>, vector<1x3x1xf32>
    %138 = vector.shape_cast %137 : vector<1x3x1xf32> to vector<3x1xf32>
    %cst_62 = arith.constant dense<0.000000e+00> : vector<32x256xf32>
    %139 = tpu.matmul %123, %0, %cst_62 {dimension_numbers = #tpu.dot_dimension_numbers<[1], [0], [0], [1], [0, 0, 1, 1], [], []>} : vector<32x16xf32>, vector<16x256xf32>, vector<32x256xf32> -> vector<32x256xf32>
    %140 = vector.broadcast %126 : vector<32x1xf32> to vector<32x256xf32>
    %141 = arith.addf %139, %140 : vector<32x256xf32>
    %142 = math.tanh %141 : vector<32x256xf32>
    %cst_63 = arith.constant dense<0.000000e+00> : vector<32x256xf32>
    %143 = tpu.matmul %117, %114, %cst_63 {dimension_numbers = #tpu.dot_dimension_numbers<[1], [0], [0], [1], [0, 0, 1, 1], [], []>} : vector<32x3xf32>, vector<3x256xf32>, vector<32x256xf32> -> vector<32x256xf32>
    %144 = vector.broadcast %120 : vector<32x1xf32> to vector<32x256xf32>
    %145 = arith.addf %143, %144 : vector<32x256xf32>
    %cst_64 = arith.constant 0.000000e+00 : f32
    %146 = vector.broadcast %cst_64 : f32 to vector<32x256xf32>
    %147 = arith.maximumf %145, %146 : vector<32x256xf32>
    %148 = arith.mulf %147, %142 : vector<32x256xf32>
    %cst_65 = arith.constant dense<0.000000e+00> : vector<32x256xf32>
    %149 = tpu.matmul %129, %148, %cst_65 {dimension_numbers = #tpu.dot_dimension_numbers<[1], [0], [0], [1], [0, 0, 1, 1], [], []>} : vector<32x32xf32>, vector<32x256xf32>, vector<32x256xf32> -> vector<32x256xf32>
    %150 = vector.broadcast %132 : vector<32x1xf32> to vector<32x256xf32>
    %151 = arith.addf %149, %150 : vector<32x256xf32>
    %cst_66 = arith.constant 0.000000e+00 : f32
    %152 = vector.broadcast %cst_66 : f32 to vector<32x256xf32>
    %153 = arith.maximumf %151, %152 : vector<32x256xf32>
    %154 = arith.addf %153, %148 : vector<32x256xf32>
    %cst_67 = arith.constant dense<0.000000e+00> : vector<3x256xf32>
    %155 = tpu.matmul %135, %154, %cst_67 {dimension_numbers = #tpu.dot_dimension_numbers<[1], [0], [0], [1], [0, 0, 1, 1], [], []>} : vector<3x32xf32>, vector<32x256xf32>, vector<3x256xf32> -> vector<3x256xf32>
    %156 = vector.broadcast %138 : vector<3x1xf32> to vector<3x256xf32>
    %157 = arith.addf %155, %156 : vector<3x256xf32>
    %158 = math.tanh %157 : vector<3x256xf32>
    %cst_68 = arith.constant 0.0416666679 : f32
    %159 = vector.broadcast %cst_68 : f32 to vector<3x256xf32>
    %160 = arith.mulf %159, %158 : vector<3x256xf32>
    %161 = arith.addf %114, %160 : vector<3x256xf32>
    %cst_69 = arith.constant 1.250000e-01 : f32
    %162 = vector.broadcast %cst_69 : f32 to vector<3x256xf32>
    %163 = arith.mulf %162, %158 : vector<3x256xf32>
    %164 = arith.addf %114, %163 : vector<3x256xf32>
    %cst_70 = arith.constant dense<0.000000e+00> : vector<32x256xf32>
    %165 = tpu.matmul %117, %164, %cst_70 {dimension_numbers = #tpu.dot_dimension_numbers<[1], [0], [0], [1], [0, 0, 1, 1], [], []>} : vector<32x3xf32>, vector<3x256xf32>, vector<32x256xf32> -> vector<32x256xf32>
    %166 = vector.broadcast %120 : vector<32x1xf32> to vector<32x256xf32>
    %167 = arith.addf %165, %166 : vector<32x256xf32>
    %cst_71 = arith.constant 0.000000e+00 : f32
    %168 = vector.broadcast %cst_71 : f32 to vector<32x256xf32>
    %169 = arith.maximumf %167, %168 : vector<32x256xf32>
    %170 = arith.mulf %169, %142 : vector<32x256xf32>
    %cst_72 = arith.constant dense<0.000000e+00> : vector<32x256xf32>
    %171 = tpu.matmul %129, %170, %cst_72 {dimension_numbers = #tpu.dot_dimension_numbers<[1], [0], [0], [1], [0, 0, 1, 1], [], []>} : vector<32x32xf32>, vector<32x256xf32>, vector<32x256xf32> -> vector<32x256xf32>
    %172 = vector.broadcast %132 : vector<32x1xf32> to vector<32x256xf32>
    %173 = arith.addf %171, %172 : vector<32x256xf32>
    %cst_73 = arith.constant 0.000000e+00 : f32
    %174 = vector.broadcast %cst_73 : f32 to vector<32x256xf32>
    %175 = arith.maximumf %173, %174 : vector<32x256xf32>
    %176 = arith.addf %175, %170 : vector<32x256xf32>
    %cst_74 = arith.constant dense<0.000000e+00> : vector<3x256xf32>
    %177 = tpu.matmul %135, %176, %cst_74 {dimension_numbers = #tpu.dot_dimension_numbers<[1], [0], [0], [1], [0, 0, 1, 1], [], []>} : vector<3x32xf32>, vector<32x256xf32>, vector<3x256xf32> -> vector<3x256xf32>
    %178 = vector.broadcast %138 : vector<3x1xf32> to vector<3x256xf32>
    %179 = arith.addf %177, %178 : vector<3x256xf32>
    %180 = math.tanh %179 : vector<3x256xf32>
    %cst_75 = arith.constant 0.0833333358 : f32
    %181 = vector.broadcast %cst_75 : f32 to vector<3x256xf32>
    %182 = arith.mulf %181, %180 : vector<3x256xf32>
    %183 = arith.addf %161, %182 : vector<3x256xf32>
    %cst_76 = arith.constant 1.250000e-01 : f32
    %184 = vector.broadcast %cst_76 : f32 to vector<3x256xf32>
    %185 = arith.mulf %184, %180 : vector<3x256xf32>
    %186 = arith.addf %114, %185 : vector<3x256xf32>
    %cst_77 = arith.constant dense<0.000000e+00> : vector<32x256xf32>
    %187 = tpu.matmul %117, %186, %cst_77 {dimension_numbers = #tpu.dot_dimension_numbers<[1], [0], [0], [1], [0, 0, 1, 1], [], []>} : vector<32x3xf32>, vector<3x256xf32>, vector<32x256xf32> -> vector<32x256xf32>
    %188 = vector.broadcast %120 : vector<32x1xf32> to vector<32x256xf32>
    %189 = arith.addf %187, %188 : vector<32x256xf32>
    %cst_78 = arith.constant 0.000000e+00 : f32
    %190 = vector.broadcast %cst_78 : f32 to vector<32x256xf32>
    %191 = arith.maximumf %189, %190 : vector<32x256xf32>
    %192 = arith.mulf %191, %142 : vector<32x256xf32>
    %cst_79 = arith.constant dense<0.000000e+00> : vector<32x256xf32>
    %193 = tpu.matmul %129, %192, %cst_79 {dimension_numbers = #tpu.dot_dimension_numbers<[1], [0], [0], [1], [0, 0, 1, 1], [], []>} : vector<32x32xf32>, vector<32x256xf32>, vector<32x256xf32> -> vector<32x256xf32>
    %194 = vector.broadcast %132 : vector<32x1xf32> to vector<32x256xf32>
    %195 = arith.addf %193, %194 : vector<32x256xf32>
    %cst_80 = arith.constant 0.000000e+00 : f32
    %196 = vector.broadcast %cst_80 : f32 to vector<32x256xf32>
    %197 = arith.maximumf %195, %196 : vector<32x256xf32>
    %198 = arith.addf %197, %192 : vector<32x256xf32>
    %cst_81 = arith.constant dense<0.000000e+00> : vector<3x256xf32>
    %199 = tpu.matmul %135, %198, %cst_81 {dimension_numbers = #tpu.dot_dimension_numbers<[1], [0], [0], [1], [0, 0, 1, 1], [], []>} : vector<3x32xf32>, vector<32x256xf32>, vector<3x256xf32> -> vector<3x256xf32>
    %200 = vector.broadcast %138 : vector<3x1xf32> to vector<3x256xf32>
    %201 = arith.addf %199, %200 : vector<3x256xf32>
    %202 = math.tanh %201 : vector<3x256xf32>
    %cst_82 = arith.constant 0.0833333358 : f32
    %203 = vector.broadcast %cst_82 : f32 to vector<3x256xf32>
    %204 = arith.mulf %203, %202 : vector<3x256xf32>
    %205 = arith.addf %183, %204 : vector<3x256xf32>
    %cst_83 = arith.constant 2.500000e-01 : f32
    %206 = vector.broadcast %cst_83 : f32 to vector<3x256xf32>
    %207 = arith.mulf %206, %202 : vector<3x256xf32>
    %208 = arith.addf %114, %207 : vector<3x256xf32>
    %cst_84 = arith.constant dense<0.000000e+00> : vector<32x256xf32>
    %209 = tpu.matmul %117, %208, %cst_84 {dimension_numbers = #tpu.dot_dimension_numbers<[1], [0], [0], [1], [0, 0, 1, 1], [], []>} : vector<32x3xf32>, vector<3x256xf32>, vector<32x256xf32> -> vector<32x256xf32>
    %210 = vector.broadcast %120 : vector<32x1xf32> to vector<32x256xf32>
    %211 = arith.addf %209, %210 : vector<32x256xf32>
    %cst_85 = arith.constant 0.000000e+00 : f32
    %212 = vector.broadcast %cst_85 : f32 to vector<32x256xf32>
    %213 = arith.maximumf %211, %212 : vector<32x256xf32>
    %214 = arith.mulf %213, %142 : vector<32x256xf32>
    %cst_86 = arith.constant dense<0.000000e+00> : vector<32x256xf32>
    %215 = tpu.matmul %129, %214, %cst_86 {dimension_numbers = #tpu.dot_dimension_numbers<[1], [0], [0], [1], [0, 0, 1, 1], [], []>} : vector<32x32xf32>, vector<32x256xf32>, vector<32x256xf32> -> vector<32x256xf32>
    %216 = vector.broadcast %132 : vector<32x1xf32> to vector<32x256xf32>
    %217 = arith.addf %215, %216 : vector<32x256xf32>
    %cst_87 = arith.constant 0.000000e+00 : f32
    %218 = vector.broadcast %cst_87 : f32 to vector<32x256xf32>
    %219 = arith.maximumf %217, %218 : vector<32x256xf32>
    %220 = arith.addf %219, %214 : vector<32x256xf32>
    %cst_88 = arith.constant dense<0.000000e+00> : vector<3x256xf32>
    %221 = tpu.matmul %135, %220, %cst_88 {dimension_numbers = #tpu.dot_dimension_numbers<[1], [0], [0], [1], [0, 0, 1, 1], [], []>} : vector<3x32xf32>, vector<32x256xf32>, vector<3x256xf32> -> vector<3x256xf32>
    %222 = vector.broadcast %138 : vector<3x1xf32> to vector<3x256xf32>
    %223 = arith.addf %221, %222 : vector<3x256xf32>
    %224 = math.tanh %223 : vector<3x256xf32>
    %cst_89 = arith.constant 0.0416666679 : f32
    %225 = vector.broadcast %cst_89 : f32 to vector<3x256xf32>
    %226 = arith.mulf %225, %224 : vector<3x256xf32>
    %227 = arith.addf %205, %226 : vector<3x256xf32>
    %c2_i32 = arith.constant 2 : i32
    %228 = arith.index_cast %c2_i32 : i32 to index
    %c0_90 = arith.constant 0 : index
    %c0_91 = arith.constant 0 : index
    %229 = vector.load %arg3[%228, %c0_90, %c0_91] : memref<4x32x3xf32, #tpu.memory_space<vmem>>, vector<1x32x3xf32>
    %230 = vector.shape_cast %229 : vector<1x32x3xf32> to vector<32x3xf32>
    %231 = arith.index_cast %c2_i32 : i32 to index
    %c0_92 = arith.constant 0 : index
    %c0_93 = arith.constant 0 : index
    %232 = vector.load %arg4[%231, %c0_92, %c0_93] : memref<4x32x1xf32, #tpu.memory_space<vmem>>, vector<1x32x1xf32>
    %233 = vector.shape_cast %232 : vector<1x32x1xf32> to vector<32x1xf32>
    %234 = arith.index_cast %c2_i32 : i32 to index
    %c0_94 = arith.constant 0 : index
    %c0_95 = arith.constant 0 : index
    %235 = vector.load %arg5[%234, %c0_94, %c0_95] : memref<4x32x16xf32, #tpu.memory_space<vmem>>, vector<1x32x16xf32>
    %236 = vector.shape_cast %235 : vector<1x32x16xf32> to vector<32x16xf32>
    %237 = arith.index_cast %c2_i32 : i32 to index
    %c0_96 = arith.constant 0 : index
    %c0_97 = arith.constant 0 : index
    %238 = vector.load %arg6[%237, %c0_96, %c0_97] : memref<4x32x1xf32, #tpu.memory_space<vmem>>, vector<1x32x1xf32>
    %239 = vector.shape_cast %238 : vector<1x32x1xf32> to vector<32x1xf32>
    %240 = arith.index_cast %c2_i32 : i32 to index
    %c0_98 = arith.constant 0 : index
    %c0_99 = arith.constant 0 : index
    %241 = vector.load %arg7[%240, %c0_98, %c0_99] : memref<4x32x32xf32, #tpu.memory_space<vmem>>, vector<1x32x32xf32>
    %242 = vector.shape_cast %241 : vector<1x32x32xf32> to vector<32x32xf32>
    %243 = arith.index_cast %c2_i32 : i32 to index
    %c0_100 = arith.constant 0 : index
    %c0_101 = arith.constant 0 : index
    %244 = vector.load %arg8[%243, %c0_100, %c0_101] : memref<4x32x1xf32, #tpu.memory_space<vmem>>, vector<1x32x1xf32>
    %245 = vector.shape_cast %244 : vector<1x32x1xf32> to vector<32x1xf32>
    %246 = arith.index_cast %c2_i32 : i32 to index
    %c0_102 = arith.constant 0 : index
    %c0_103 = arith.constant 0 : index
    %247 = vector.load %arg9[%246, %c0_102, %c0_103] : memref<4x3x32xf32, #tpu.memory_space<vmem>>, vector<1x3x32xf32>
    %248 = vector.shape_cast %247 : vector<1x3x32xf32> to vector<3x32xf32>
    %249 = arith.index_cast %c2_i32 : i32 to index
    %c0_104 = arith.constant 0 : index
    %c0_105 = arith.constant 0 : index
    %250 = vector.load %arg10[%249, %c0_104, %c0_105] : memref<4x3x1xf32, #tpu.memory_space<vmem>>, vector<1x3x1xf32>
    %251 = vector.shape_cast %250 : vector<1x3x1xf32> to vector<3x1xf32>
    %cst_106 = arith.constant dense<0.000000e+00> : vector<32x256xf32>
    %252 = tpu.matmul %236, %0, %cst_106 {dimension_numbers = #tpu.dot_dimension_numbers<[1], [0], [0], [1], [0, 0, 1, 1], [], []>} : vector<32x16xf32>, vector<16x256xf32>, vector<32x256xf32> -> vector<32x256xf32>
    %253 = vector.broadcast %239 : vector<32x1xf32> to vector<32x256xf32>
    %254 = arith.addf %252, %253 : vector<32x256xf32>
    %255 = math.tanh %254 : vector<32x256xf32>
    %cst_107 = arith.constant dense<0.000000e+00> : vector<32x256xf32>
    %256 = tpu.matmul %230, %227, %cst_107 {dimension_numbers = #tpu.dot_dimension_numbers<[1], [0], [0], [1], [0, 0, 1, 1], [], []>} : vector<32x3xf32>, vector<3x256xf32>, vector<32x256xf32> -> vector<32x256xf32>
    %257 = vector.broadcast %233 : vector<32x1xf32> to vector<32x256xf32>
    %258 = arith.addf %256, %257 : vector<32x256xf32>
    %cst_108 = arith.constant 0.000000e+00 : f32
    %259 = vector.broadcast %cst_108 : f32 to vector<32x256xf32>
    %260 = arith.maximumf %258, %259 : vector<32x256xf32>
    %261 = arith.mulf %260, %255 : vector<32x256xf32>
    %cst_109 = arith.constant dense<0.000000e+00> : vector<32x256xf32>
    %262 = tpu.matmul %242, %261, %cst_109 {dimension_numbers = #tpu.dot_dimension_numbers<[1], [0], [0], [1], [0, 0, 1, 1], [], []>} : vector<32x32xf32>, vector<32x256xf32>, vector<32x256xf32> -> vector<32x256xf32>
    %263 = vector.broadcast %245 : vector<32x1xf32> to vector<32x256xf32>
    %264 = arith.addf %262, %263 : vector<32x256xf32>
    %cst_110 = arith.constant 0.000000e+00 : f32
    %265 = vector.broadcast %cst_110 : f32 to vector<32x256xf32>
    %266 = arith.maximumf %264, %265 : vector<32x256xf32>
    %267 = arith.addf %266, %261 : vector<32x256xf32>
    %cst_111 = arith.constant dense<0.000000e+00> : vector<3x256xf32>
    %268 = tpu.matmul %248, %267, %cst_111 {dimension_numbers = #tpu.dot_dimension_numbers<[1], [0], [0], [1], [0, 0, 1, 1], [], []>} : vector<3x32xf32>, vector<32x256xf32>, vector<3x256xf32> -> vector<3x256xf32>
    %269 = vector.broadcast %251 : vector<3x1xf32> to vector<3x256xf32>
    %270 = arith.addf %268, %269 : vector<3x256xf32>
    %271 = math.tanh %270 : vector<3x256xf32>
    %cst_112 = arith.constant 0.0416666679 : f32
    %272 = vector.broadcast %cst_112 : f32 to vector<3x256xf32>
    %273 = arith.mulf %272, %271 : vector<3x256xf32>
    %274 = arith.addf %227, %273 : vector<3x256xf32>
    %cst_113 = arith.constant 1.250000e-01 : f32
    %275 = vector.broadcast %cst_113 : f32 to vector<3x256xf32>
    %276 = arith.mulf %275, %271 : vector<3x256xf32>
    %277 = arith.addf %227, %276 : vector<3x256xf32>
    %cst_114 = arith.constant dense<0.000000e+00> : vector<32x256xf32>
    %278 = tpu.matmul %230, %277, %cst_114 {dimension_numbers = #tpu.dot_dimension_numbers<[1], [0], [0], [1], [0, 0, 1, 1], [], []>} : vector<32x3xf32>, vector<3x256xf32>, vector<32x256xf32> -> vector<32x256xf32>
    %279 = vector.broadcast %233 : vector<32x1xf32> to vector<32x256xf32>
    %280 = arith.addf %278, %279 : vector<32x256xf32>
    %cst_115 = arith.constant 0.000000e+00 : f32
    %281 = vector.broadcast %cst_115 : f32 to vector<32x256xf32>
    %282 = arith.maximumf %280, %281 : vector<32x256xf32>
    %283 = arith.mulf %282, %255 : vector<32x256xf32>
    %cst_116 = arith.constant dense<0.000000e+00> : vector<32x256xf32>
    %284 = tpu.matmul %242, %283, %cst_116 {dimension_numbers = #tpu.dot_dimension_numbers<[1], [0], [0], [1], [0, 0, 1, 1], [], []>} : vector<32x32xf32>, vector<32x256xf32>, vector<32x256xf32> -> vector<32x256xf32>
    %285 = vector.broadcast %245 : vector<32x1xf32> to vector<32x256xf32>
    %286 = arith.addf %284, %285 : vector<32x256xf32>
    %cst_117 = arith.constant 0.000000e+00 : f32
    %287 = vector.broadcast %cst_117 : f32 to vector<32x256xf32>
    %288 = arith.maximumf %286, %287 : vector<32x256xf32>
    %289 = arith.addf %288, %283 : vector<32x256xf32>
    %cst_118 = arith.constant dense<0.000000e+00> : vector<3x256xf32>
    %290 = tpu.matmul %248, %289, %cst_118 {dimension_numbers = #tpu.dot_dimension_numbers<[1], [0], [0], [1], [0, 0, 1, 1], [], []>} : vector<3x32xf32>, vector<32x256xf32>, vector<3x256xf32> -> vector<3x256xf32>
    %291 = vector.broadcast %251 : vector<3x1xf32> to vector<3x256xf32>
    %292 = arith.addf %290, %291 : vector<3x256xf32>
    %293 = math.tanh %292 : vector<3x256xf32>
    %cst_119 = arith.constant 0.0833333358 : f32
    %294 = vector.broadcast %cst_119 : f32 to vector<3x256xf32>
    %295 = arith.mulf %294, %293 : vector<3x256xf32>
    %296 = arith.addf %274, %295 : vector<3x256xf32>
    %cst_120 = arith.constant 1.250000e-01 : f32
    %297 = vector.broadcast %cst_120 : f32 to vector<3x256xf32>
    %298 = arith.mulf %297, %293 : vector<3x256xf32>
    %299 = arith.addf %227, %298 : vector<3x256xf32>
    %cst_121 = arith.constant dense<0.000000e+00> : vector<32x256xf32>
    %300 = tpu.matmul %230, %299, %cst_121 {dimension_numbers = #tpu.dot_dimension_numbers<[1], [0], [0], [1], [0, 0, 1, 1], [], []>} : vector<32x3xf32>, vector<3x256xf32>, vector<32x256xf32> -> vector<32x256xf32>
    %301 = vector.broadcast %233 : vector<32x1xf32> to vector<32x256xf32>
    %302 = arith.addf %300, %301 : vector<32x256xf32>
    %cst_122 = arith.constant 0.000000e+00 : f32
    %303 = vector.broadcast %cst_122 : f32 to vector<32x256xf32>
    %304 = arith.maximumf %302, %303 : vector<32x256xf32>
    %305 = arith.mulf %304, %255 : vector<32x256xf32>
    %cst_123 = arith.constant dense<0.000000e+00> : vector<32x256xf32>
    %306 = tpu.matmul %242, %305, %cst_123 {dimension_numbers = #tpu.dot_dimension_numbers<[1], [0], [0], [1], [0, 0, 1, 1], [], []>} : vector<32x32xf32>, vector<32x256xf32>, vector<32x256xf32> -> vector<32x256xf32>
    %307 = vector.broadcast %245 : vector<32x1xf32> to vector<32x256xf32>
    %308 = arith.addf %306, %307 : vector<32x256xf32>
    %cst_124 = arith.constant 0.000000e+00 : f32
    %309 = vector.broadcast %cst_124 : f32 to vector<32x256xf32>
    %310 = arith.maximumf %308, %309 : vector<32x256xf32>
    %311 = arith.addf %310, %305 : vector<32x256xf32>
    %cst_125 = arith.constant dense<0.000000e+00> : vector<3x256xf32>
    %312 = tpu.matmul %248, %311, %cst_125 {dimension_numbers = #tpu.dot_dimension_numbers<[1], [0], [0], [1], [0, 0, 1, 1], [], []>} : vector<3x32xf32>, vector<32x256xf32>, vector<3x256xf32> -> vector<3x256xf32>
    %313 = vector.broadcast %251 : vector<3x1xf32> to vector<3x256xf32>
    %314 = arith.addf %312, %313 : vector<3x256xf32>
    %315 = math.tanh %314 : vector<3x256xf32>
    %cst_126 = arith.constant 0.0833333358 : f32
    %316 = vector.broadcast %cst_126 : f32 to vector<3x256xf32>
    %317 = arith.mulf %316, %315 : vector<3x256xf32>
    %318 = arith.addf %296, %317 : vector<3x256xf32>
    %cst_127 = arith.constant 2.500000e-01 : f32
    %319 = vector.broadcast %cst_127 : f32 to vector<3x256xf32>
    %320 = arith.mulf %319, %315 : vector<3x256xf32>
    %321 = arith.addf %227, %320 : vector<3x256xf32>
    %cst_128 = arith.constant dense<0.000000e+00> : vector<32x256xf32>
    %322 = tpu.matmul %230, %321, %cst_128 {dimension_numbers = #tpu.dot_dimension_numbers<[1], [0], [0], [1], [0, 0, 1, 1], [], []>} : vector<32x3xf32>, vector<3x256xf32>, vector<32x256xf32> -> vector<32x256xf32>
    %323 = vector.broadcast %233 : vector<32x1xf32> to vector<32x256xf32>
    %324 = arith.addf %322, %323 : vector<32x256xf32>
    %cst_129 = arith.constant 0.000000e+00 : f32
    %325 = vector.broadcast %cst_129 : f32 to vector<32x256xf32>
    %326 = arith.maximumf %324, %325 : vector<32x256xf32>
    %327 = arith.mulf %326, %255 : vector<32x256xf32>
    %cst_130 = arith.constant dense<0.000000e+00> : vector<32x256xf32>
    %328 = tpu.matmul %242, %327, %cst_130 {dimension_numbers = #tpu.dot_dimension_numbers<[1], [0], [0], [1], [0, 0, 1, 1], [], []>} : vector<32x32xf32>, vector<32x256xf32>, vector<32x256xf32> -> vector<32x256xf32>
    %329 = vector.broadcast %245 : vector<32x1xf32> to vector<32x256xf32>
    %330 = arith.addf %328, %329 : vector<32x256xf32>
    %cst_131 = arith.constant 0.000000e+00 : f32
    %331 = vector.broadcast %cst_131 : f32 to vector<32x256xf32>
    %332 = arith.maximumf %330, %331 : vector<32x256xf32>
    %333 = arith.addf %332, %327 : vector<32x256xf32>
    %cst_132 = arith.constant dense<0.000000e+00> : vector<3x256xf32>
    %334 = tpu.matmul %248, %333, %cst_132 {dimension_numbers = #tpu.dot_dimension_numbers<[1], [0], [0], [1], [0, 0, 1, 1], [], []>} : vector<3x32xf32>, vector<32x256xf32>, vector<3x256xf32> -> vector<3x256xf32>
    %335 = vector.broadcast %251 : vector<3x1xf32> to vector<3x256xf32>
    %336 = arith.addf %334, %335 : vector<3x256xf32>
    %337 = math.tanh %336 : vector<3x256xf32>
    %cst_133 = arith.constant 0.0416666679 : f32
    %338 = vector.broadcast %cst_133 : f32 to vector<3x256xf32>
    %339 = arith.mulf %338, %337 : vector<3x256xf32>
    %340 = arith.addf %318, %339 : vector<3x256xf32>
    %c3_i32 = arith.constant 3 : i32
    %341 = arith.index_cast %c3_i32 : i32 to index
    %c0_134 = arith.constant 0 : index
    %c0_135 = arith.constant 0 : index
    %342 = vector.load %arg3[%341, %c0_134, %c0_135] : memref<4x32x3xf32, #tpu.memory_space<vmem>>, vector<1x32x3xf32>
    %343 = vector.shape_cast %342 : vector<1x32x3xf32> to vector<32x3xf32>
    %344 = arith.index_cast %c3_i32 : i32 to index
    %c0_136 = arith.constant 0 : index
    %c0_137 = arith.constant 0 : index
    %345 = vector.load %arg4[%344, %c0_136, %c0_137] : memref<4x32x1xf32, #tpu.memory_space<vmem>>, vector<1x32x1xf32>
    %346 = vector.shape_cast %345 : vector<1x32x1xf32> to vector<32x1xf32>
    %347 = arith.index_cast %c3_i32 : i32 to index
    %c0_138 = arith.constant 0 : index
    %c0_139 = arith.constant 0 : index
    %348 = vector.load %arg5[%347, %c0_138, %c0_139] : memref<4x32x16xf32, #tpu.memory_space<vmem>>, vector<1x32x16xf32>
    %349 = vector.shape_cast %348 : vector<1x32x16xf32> to vector<32x16xf32>
    %350 = arith.index_cast %c3_i32 : i32 to index
    %c0_140 = arith.constant 0 : index
    %c0_141 = arith.constant 0 : index
    %351 = vector.load %arg6[%350, %c0_140, %c0_141] : memref<4x32x1xf32, #tpu.memory_space<vmem>>, vector<1x32x1xf32>
    %352 = vector.shape_cast %351 : vector<1x32x1xf32> to vector<32x1xf32>
    %353 = arith.index_cast %c3_i32 : i32 to index
    %c0_142 = arith.constant 0 : index
    %c0_143 = arith.constant 0 : index
    %354 = vector.load %arg7[%353, %c0_142, %c0_143] : memref<4x32x32xf32, #tpu.memory_space<vmem>>, vector<1x32x32xf32>
    %355 = vector.shape_cast %354 : vector<1x32x32xf32> to vector<32x32xf32>
    %356 = arith.index_cast %c3_i32 : i32 to index
    %c0_144 = arith.constant 0 : index
    %c0_145 = arith.constant 0 : index
    %357 = vector.load %arg8[%356, %c0_144, %c0_145] : memref<4x32x1xf32, #tpu.memory_space<vmem>>, vector<1x32x1xf32>
    %358 = vector.shape_cast %357 : vector<1x32x1xf32> to vector<32x1xf32>
    %359 = arith.index_cast %c3_i32 : i32 to index
    %c0_146 = arith.constant 0 : index
    %c0_147 = arith.constant 0 : index
    %360 = vector.load %arg9[%359, %c0_146, %c0_147] : memref<4x3x32xf32, #tpu.memory_space<vmem>>, vector<1x3x32xf32>
    %361 = vector.shape_cast %360 : vector<1x3x32xf32> to vector<3x32xf32>
    %362 = arith.index_cast %c3_i32 : i32 to index
    %c0_148 = arith.constant 0 : index
    %c0_149 = arith.constant 0 : index
    %363 = vector.load %arg10[%362, %c0_148, %c0_149] : memref<4x3x1xf32, #tpu.memory_space<vmem>>, vector<1x3x1xf32>
    %364 = vector.shape_cast %363 : vector<1x3x1xf32> to vector<3x1xf32>
    %cst_150 = arith.constant dense<0.000000e+00> : vector<32x256xf32>
    %365 = tpu.matmul %349, %0, %cst_150 {dimension_numbers = #tpu.dot_dimension_numbers<[1], [0], [0], [1], [0, 0, 1, 1], [], []>} : vector<32x16xf32>, vector<16x256xf32>, vector<32x256xf32> -> vector<32x256xf32>
    %366 = vector.broadcast %352 : vector<32x1xf32> to vector<32x256xf32>
    %367 = arith.addf %365, %366 : vector<32x256xf32>
    %368 = math.tanh %367 : vector<32x256xf32>
    %cst_151 = arith.constant dense<0.000000e+00> : vector<32x256xf32>
    %369 = tpu.matmul %343, %340, %cst_151 {dimension_numbers = #tpu.dot_dimension_numbers<[1], [0], [0], [1], [0, 0, 1, 1], [], []>} : vector<32x3xf32>, vector<3x256xf32>, vector<32x256xf32> -> vector<32x256xf32>
    %370 = vector.broadcast %346 : vector<32x1xf32> to vector<32x256xf32>
    %371 = arith.addf %369, %370 : vector<32x256xf32>
    %cst_152 = arith.constant 0.000000e+00 : f32
    %372 = vector.broadcast %cst_152 : f32 to vector<32x256xf32>
    %373 = arith.maximumf %371, %372 : vector<32x256xf32>
    %374 = arith.mulf %373, %368 : vector<32x256xf32>
    %cst_153 = arith.constant dense<0.000000e+00> : vector<32x256xf32>
    %375 = tpu.matmul %355, %374, %cst_153 {dimension_numbers = #tpu.dot_dimension_numbers<[1], [0], [0], [1], [0, 0, 1, 1], [], []>} : vector<32x32xf32>, vector<32x256xf32>, vector<32x256xf32> -> vector<32x256xf32>
    %376 = vector.broadcast %358 : vector<32x1xf32> to vector<32x256xf32>
    %377 = arith.addf %375, %376 : vector<32x256xf32>
    %cst_154 = arith.constant 0.000000e+00 : f32
    %378 = vector.broadcast %cst_154 : f32 to vector<32x256xf32>
    %379 = arith.maximumf %377, %378 : vector<32x256xf32>
    %380 = arith.addf %379, %374 : vector<32x256xf32>
    %cst_155 = arith.constant dense<0.000000e+00> : vector<3x256xf32>
    %381 = tpu.matmul %361, %380, %cst_155 {dimension_numbers = #tpu.dot_dimension_numbers<[1], [0], [0], [1], [0, 0, 1, 1], [], []>} : vector<3x32xf32>, vector<32x256xf32>, vector<3x256xf32> -> vector<3x256xf32>
    %382 = vector.broadcast %364 : vector<3x1xf32> to vector<3x256xf32>
    %383 = arith.addf %381, %382 : vector<3x256xf32>
    %384 = math.tanh %383 : vector<3x256xf32>
    %cst_156 = arith.constant 0.0416666679 : f32
    %385 = vector.broadcast %cst_156 : f32 to vector<3x256xf32>
    %386 = arith.mulf %385, %384 : vector<3x256xf32>
    %387 = arith.addf %340, %386 : vector<3x256xf32>
    %cst_157 = arith.constant 1.250000e-01 : f32
    %388 = vector.broadcast %cst_157 : f32 to vector<3x256xf32>
    %389 = arith.mulf %388, %384 : vector<3x256xf32>
    %390 = arith.addf %340, %389 : vector<3x256xf32>
    %cst_158 = arith.constant dense<0.000000e+00> : vector<32x256xf32>
    %391 = tpu.matmul %343, %390, %cst_158 {dimension_numbers = #tpu.dot_dimension_numbers<[1], [0], [0], [1], [0, 0, 1, 1], [], []>} : vector<32x3xf32>, vector<3x256xf32>, vector<32x256xf32> -> vector<32x256xf32>
    %392 = vector.broadcast %346 : vector<32x1xf32> to vector<32x256xf32>
    %393 = arith.addf %391, %392 : vector<32x256xf32>
    %cst_159 = arith.constant 0.000000e+00 : f32
    %394 = vector.broadcast %cst_159 : f32 to vector<32x256xf32>
    %395 = arith.maximumf %393, %394 : vector<32x256xf32>
    %396 = arith.mulf %395, %368 : vector<32x256xf32>
    %cst_160 = arith.constant dense<0.000000e+00> : vector<32x256xf32>
    %397 = tpu.matmul %355, %396, %cst_160 {dimension_numbers = #tpu.dot_dimension_numbers<[1], [0], [0], [1], [0, 0, 1, 1], [], []>} : vector<32x32xf32>, vector<32x256xf32>, vector<32x256xf32> -> vector<32x256xf32>
    %398 = vector.broadcast %358 : vector<32x1xf32> to vector<32x256xf32>
    %399 = arith.addf %397, %398 : vector<32x256xf32>
    %cst_161 = arith.constant 0.000000e+00 : f32
    %400 = vector.broadcast %cst_161 : f32 to vector<32x256xf32>
    %401 = arith.maximumf %399, %400 : vector<32x256xf32>
    %402 = arith.addf %401, %396 : vector<32x256xf32>
    %cst_162 = arith.constant dense<0.000000e+00> : vector<3x256xf32>
    %403 = tpu.matmul %361, %402, %cst_162 {dimension_numbers = #tpu.dot_dimension_numbers<[1], [0], [0], [1], [0, 0, 1, 1], [], []>} : vector<3x32xf32>, vector<32x256xf32>, vector<3x256xf32> -> vector<3x256xf32>
    %404 = vector.broadcast %364 : vector<3x1xf32> to vector<3x256xf32>
    %405 = arith.addf %403, %404 : vector<3x256xf32>
    %406 = math.tanh %405 : vector<3x256xf32>
    %cst_163 = arith.constant 0.0833333358 : f32
    %407 = vector.broadcast %cst_163 : f32 to vector<3x256xf32>
    %408 = arith.mulf %407, %406 : vector<3x256xf32>
    %409 = arith.addf %387, %408 : vector<3x256xf32>
    %cst_164 = arith.constant 1.250000e-01 : f32
    %410 = vector.broadcast %cst_164 : f32 to vector<3x256xf32>
    %411 = arith.mulf %410, %406 : vector<3x256xf32>
    %412 = arith.addf %340, %411 : vector<3x256xf32>
    %cst_165 = arith.constant dense<0.000000e+00> : vector<32x256xf32>
    %413 = tpu.matmul %343, %412, %cst_165 {dimension_numbers = #tpu.dot_dimension_numbers<[1], [0], [0], [1], [0, 0, 1, 1], [], []>} : vector<32x3xf32>, vector<3x256xf32>, vector<32x256xf32> -> vector<32x256xf32>
    %414 = vector.broadcast %346 : vector<32x1xf32> to vector<32x256xf32>
    %415 = arith.addf %413, %414 : vector<32x256xf32>
    %cst_166 = arith.constant 0.000000e+00 : f32
    %416 = vector.broadcast %cst_166 : f32 to vector<32x256xf32>
    %417 = arith.maximumf %415, %416 : vector<32x256xf32>
    %418 = arith.mulf %417, %368 : vector<32x256xf32>
    %cst_167 = arith.constant dense<0.000000e+00> : vector<32x256xf32>
    %419 = tpu.matmul %355, %418, %cst_167 {dimension_numbers = #tpu.dot_dimension_numbers<[1], [0], [0], [1], [0, 0, 1, 1], [], []>} : vector<32x32xf32>, vector<32x256xf32>, vector<32x256xf32> -> vector<32x256xf32>
    %420 = vector.broadcast %358 : vector<32x1xf32> to vector<32x256xf32>
    %421 = arith.addf %419, %420 : vector<32x256xf32>
    %cst_168 = arith.constant 0.000000e+00 : f32
    %422 = vector.broadcast %cst_168 : f32 to vector<32x256xf32>
    %423 = arith.maximumf %421, %422 : vector<32x256xf32>
    %424 = arith.addf %423, %418 : vector<32x256xf32>
    %cst_169 = arith.constant dense<0.000000e+00> : vector<3x256xf32>
    %425 = tpu.matmul %361, %424, %cst_169 {dimension_numbers = #tpu.dot_dimension_numbers<[1], [0], [0], [1], [0, 0, 1, 1], [], []>} : vector<3x32xf32>, vector<32x256xf32>, vector<3x256xf32> -> vector<3x256xf32>
    %426 = vector.broadcast %364 : vector<3x1xf32> to vector<3x256xf32>
    %427 = arith.addf %425, %426 : vector<3x256xf32>
    %428 = math.tanh %427 : vector<3x256xf32>
    %cst_170 = arith.constant 0.0833333358 : f32
    %429 = vector.broadcast %cst_170 : f32 to vector<3x256xf32>
    %430 = arith.mulf %429, %428 : vector<3x256xf32>
    %431 = arith.addf %409, %430 : vector<3x256xf32>
    %cst_171 = arith.constant 2.500000e-01 : f32
    %432 = vector.broadcast %cst_171 : f32 to vector<3x256xf32>
    %433 = arith.mulf %432, %428 : vector<3x256xf32>
    %434 = arith.addf %340, %433 : vector<3x256xf32>
    %cst_172 = arith.constant dense<0.000000e+00> : vector<32x256xf32>
    %435 = tpu.matmul %343, %434, %cst_172 {dimension_numbers = #tpu.dot_dimension_numbers<[1], [0], [0], [1], [0, 0, 1, 1], [], []>} : vector<32x3xf32>, vector<3x256xf32>, vector<32x256xf32> -> vector<32x256xf32>
    %436 = vector.broadcast %346 : vector<32x1xf32> to vector<32x256xf32>
    %437 = arith.addf %435, %436 : vector<32x256xf32>
    %cst_173 = arith.constant 0.000000e+00 : f32
    %438 = vector.broadcast %cst_173 : f32 to vector<32x256xf32>
    %439 = arith.maximumf %437, %438 : vector<32x256xf32>
    %440 = arith.mulf %439, %368 : vector<32x256xf32>
    %cst_174 = arith.constant dense<0.000000e+00> : vector<32x256xf32>
    %441 = tpu.matmul %355, %440, %cst_174 {dimension_numbers = #tpu.dot_dimension_numbers<[1], [0], [0], [1], [0, 0, 1, 1], [], []>} : vector<32x32xf32>, vector<32x256xf32>, vector<32x256xf32> -> vector<32x256xf32>
    %442 = vector.broadcast %358 : vector<32x1xf32> to vector<32x256xf32>
    %443 = arith.addf %441, %442 : vector<32x256xf32>
    %cst_175 = arith.constant 0.000000e+00 : f32
    %444 = vector.broadcast %cst_175 : f32 to vector<32x256xf32>
    %445 = arith.maximumf %443, %444 : vector<32x256xf32>
    %446 = arith.addf %445, %440 : vector<32x256xf32>
    %cst_176 = arith.constant dense<0.000000e+00> : vector<3x256xf32>
    %447 = tpu.matmul %361, %446, %cst_176 {dimension_numbers = #tpu.dot_dimension_numbers<[1], [0], [0], [1], [0, 0, 1, 1], [], []>} : vector<3x32xf32>, vector<32x256xf32>, vector<3x256xf32> -> vector<3x256xf32>
    %448 = vector.broadcast %364 : vector<3x1xf32> to vector<3x256xf32>
    %449 = arith.addf %447, %448 : vector<3x256xf32>
    %450 = math.tanh %449 : vector<3x256xf32>
    %cst_177 = arith.constant 0.0416666679 : f32
    %451 = vector.broadcast %cst_177 : f32 to vector<3x256xf32>
    %452 = arith.mulf %451, %450 : vector<3x256xf32>
    %453 = arith.addf %431, %452 : vector<3x256xf32>
    %c4_i32 = arith.constant 4 : i32
    %c0_178 = arith.constant 0 : index
    %c0_179 = arith.constant 0 : index
    %454 = vector.load %arg17[%c0_178, %c0_179] : memref<3x256xf32, #tpu.memory_space<vmem>>, vector<3x256xf32>
    tpu.vector_store %arg17[%c0_178, %c0_179], %453 {strides = array<i32>} : memref<3x256xf32, #tpu.memory_space<vmem>>, vector<3x256xf32>,
    %c0_180 = arith.constant 0 : index
    %c0_181 = arith.constant 0 : index
    %455 = vector.load %arg11[%c0_180, %c0_181] : memref<64x3xf32, #tpu.memory_space<vmem>>, vector<64x3xf32>
    %cst_182 = arith.constant dense<0.000000e+00> : vector<64x256xf32>
    %456 = tpu.matmul %455, %453, %cst_182 {dimension_numbers = #tpu.dot_dimension_numbers<[1], [0], [0], [1], [0, 0, 1, 1], [], []>} : vector<64x3xf32>, vector<3x256xf32>, vector<64x256xf32> -> vector<64x256xf32>
    %c0_183 = arith.constant 0 : index
    %c0_184 = arith.constant 0 : index
    %457 = vector.load %arg12[%c0_183, %c0_184] : memref<64x1xf32, #tpu.memory_space<vmem>>, vector<64x1xf32>
    %458 = vector.broadcast %457 : vector<64x1xf32> to vector<64x256xf32>
    %459 = arith.addf %456, %458 : vector<64x256xf32>
    %cst_185 = arith.constant 0.000000e+00 : f32
    %460 = vector.broadcast %cst_185 : f32 to vector<64x256xf32>
    %461 = arith.maximumf %459, %460 : vector<64x256xf32>
    %c0_186 = arith.constant 0 : index
    %c0_187 = arith.constant 0 : index
    %462 = vector.load %arg13[%c0_186, %c0_187] : memref<64x64xf32, #tpu.memory_space<vmem>>, vector<64x64xf32>
    %cst_188 = arith.constant dense<0.000000e+00> : vector<64x256xf32>
    %463 = tpu.matmul %462, %461, %cst_188 {dimension_numbers = #tpu.dot_dimension_numbers<[1], [0], [0], [1], [0, 0, 1, 1], [], []>} : vector<64x64xf32>, vector<64x256xf32>, vector<64x256xf32> -> vector<64x256xf32>
    %c0_189 = arith.constant 0 : index
    %c0_190 = arith.constant 0 : index
    %464 = vector.load %arg14[%c0_189, %c0_190] : memref<64x1xf32, #tpu.memory_space<vmem>>, vector<64x1xf32>
    %465 = vector.broadcast %464 : vector<64x1xf32> to vector<64x256xf32>
    %466 = arith.addf %463, %465 : vector<64x256xf32>
    %cst_191 = arith.constant 0.000000e+00 : f32
    %467 = vector.broadcast %cst_191 : f32 to vector<64x256xf32>
    %468 = arith.maximumf %466, %467 : vector<64x256xf32>
    %c0_192 = arith.constant 0 : index
    %c0_193 = arith.constant 0 : index
    %469 = vector.load %arg15[%c0_192, %c0_193] : memref<1x64xf32, #tpu.memory_space<vmem>>, vector<1x64xf32>
    %cst_194 = arith.constant dense<0.000000e+00> : vector<1x256xf32>
    %470 = tpu.matmul %469, %468, %cst_194 {dimension_numbers = #tpu.dot_dimension_numbers<[1], [0], [0], [1], [0, 0, 1, 1], [], []>} : vector<1x64xf32>, vector<64x256xf32>, vector<1x256xf32> -> vector<1x256xf32>
    %c0_195 = arith.constant 0 : index
    %c0_196 = arith.constant 0 : index
    %471 = vector.load %arg16[%c0_195, %c0_196] : memref<1x1xf32, #tpu.memory_space<vmem>>, vector<1x1xf32>
    %472 = vector.broadcast %471 : vector<1x1xf32> to vector<1x256xf32>
    %473 = arith.addf %470, %472 : vector<1x256xf32>
    %474 = math.tanh %473 : vector<1x256xf32>
    %c0_197 = arith.constant 0 : index
    %c0_198 = arith.constant 0 : index
    %475 = vector.load %arg18[%c0_197, %c0_198] : memref<1x256xf32, #tpu.memory_space<vmem>>, vector<1x256xf32>
    tpu.vector_store %arg18[%c0_197, %c0_198], %474 {strides = array<i32>} : memref<1x256xf32, #tpu.memory_space<vmem>>, vector<1x256xf32>,
    return
  }
  func.func @transform_0(%arg0: i32) -> (i32, i32) {
    %c0_i32 = arith.constant 0 : i32
    %c0_i32_0 = arith.constant 0 : i32
    return %c0_i32, %arg0 : i32, i32
  }
  func.func @transform_1(%arg0: i32) -> (i32, i32) {
    %c0_i32 = arith.constant 0 : i32
    %c0_i32_0 = arith.constant 0 : i32
    return %c0_i32, %arg0 : i32, i32
  }
  func.func @transform_2(%arg0: i32) -> (i32, i32, i32) {
    %c0_i32 = arith.constant 0 : i32
    %c0_i32_0 = arith.constant 0 : i32
    %c0_i32_1 = arith.constant 0 : i32
    %c0_i32_2 = arith.constant 0 : i32
    return %c0_i32, %c0_i32_0, %c0_i32_1 : i32, i32, i32
  }
  func.func @transform_3(%arg0: i32) -> (i32, i32, i32) {
    %c0_i32 = arith.constant 0 : i32
    %c0_i32_0 = arith.constant 0 : i32
    %c0_i32_1 = arith.constant 0 : i32
    %c0_i32_2 = arith.constant 0 : i32
    return %c0_i32, %c0_i32_0, %c0_i32_1 : i32, i32, i32
  }
  func.func @transform_4(%arg0: i32) -> (i32, i32, i32) {
    %c0_i32 = arith.constant 0 : i32
    %c0_i32_0 = arith.constant 0 : i32
    %c0_i32_1 = arith.constant 0 : i32
    %c0_i32_2 = arith.constant 0 : i32
    return %c0_i32, %c0_i32_0, %c0_i32_1 : i32, i32, i32
  }
  func.func @transform_5(%arg0: i32) -> (i32, i32, i32) {
    %c0_i32 = arith.constant 0 : i32
    %c0_i32_0 = arith.constant 0 : i32
    %c0_i32_1 = arith.constant 0 : i32
    %c0_i32_2 = arith.constant 0 : i32
    return %c0_i32, %c0_i32_0, %c0_i32_1 : i32, i32, i32
  }
  func.func @transform_6(%arg0: i32) -> (i32, i32, i32) {
    %c0_i32 = arith.constant 0 : i32
    %c0_i32_0 = arith.constant 0 : i32
    %c0_i32_1 = arith.constant 0 : i32
    %c0_i32_2 = arith.constant 0 : i32
    return %c0_i32, %c0_i32_0, %c0_i32_1 : i32, i32, i32
  }
  func.func @transform_7(%arg0: i32) -> (i32, i32, i32) {
    %c0_i32 = arith.constant 0 : i32
    %c0_i32_0 = arith.constant 0 : i32
    %c0_i32_1 = arith.constant 0 : i32
    %c0_i32_2 = arith.constant 0 : i32
    return %c0_i32, %c0_i32_0, %c0_i32_1 : i32, i32, i32
  }
  func.func @transform_8(%arg0: i32) -> (i32, i32, i32) {
    %c0_i32 = arith.constant 0 : i32
    %c0_i32_0 = arith.constant 0 : i32
    %c0_i32_1 = arith.constant 0 : i32
    %c0_i32_2 = arith.constant 0 : i32
    return %c0_i32, %c0_i32_0, %c0_i32_1 : i32, i32, i32
  }
  func.func @transform_9(%arg0: i32) -> (i32, i32, i32) {
    %c0_i32 = arith.constant 0 : i32
    %c0_i32_0 = arith.constant 0 : i32
    %c0_i32_1 = arith.constant 0 : i32
    %c0_i32_2 = arith.constant 0 : i32
    return %c0_i32, %c0_i32_0, %c0_i32_1 : i32, i32, i32
  }
  func.func @transform_10(%arg0: i32) -> (i32, i32) {
    %c0_i32 = arith.constant 0 : i32
    %c0_i32_0 = arith.constant 0 : i32
    %c0_i32_1 = arith.constant 0 : i32
    return %c0_i32, %c0_i32_0 : i32, i32
  }
  func.func @transform_11(%arg0: i32) -> (i32, i32) {
    %c0_i32 = arith.constant 0 : i32
    %c0_i32_0 = arith.constant 0 : i32
    %c0_i32_1 = arith.constant 0 : i32
    return %c0_i32, %c0_i32_0 : i32, i32
  }
  func.func @transform_12(%arg0: i32) -> (i32, i32) {
    %c0_i32 = arith.constant 0 : i32
    %c0_i32_0 = arith.constant 0 : i32
    %c0_i32_1 = arith.constant 0 : i32
    return %c0_i32, %c0_i32_0 : i32, i32
  }
  func.func @transform_13(%arg0: i32) -> (i32, i32) {
    %c0_i32 = arith.constant 0 : i32
    %c0_i32_0 = arith.constant 0 : i32
    %c0_i32_1 = arith.constant 0 : i32
    return %c0_i32, %c0_i32_0 : i32, i32
  }
  func.func @transform_14(%arg0: i32) -> (i32, i32) {
    %c0_i32 = arith.constant 0 : i32
    %c0_i32_0 = arith.constant 0 : i32
    %c0_i32_1 = arith.constant 0 : i32
    return %c0_i32, %c0_i32_0 : i32, i32
  }
  func.func @transform_15(%arg0: i32) -> (i32, i32) {
    %c0_i32 = arith.constant 0 : i32
    %c0_i32_0 = arith.constant 0 : i32
    %c0_i32_1 = arith.constant 0 : i32
    return %c0_i32, %c0_i32_0 : i32, i32
  }
  func.func @transform_16(%arg0: i32) -> (i32, i32) {
    %c0_i32 = arith.constant 0 : i32
    %c0_i32_0 = arith.constant 0 : i32
    return %c0_i32, %arg0 : i32, i32
  }
  func.func @transform_17(%arg0: i32) -> (i32, i32) {
    %c0_i32 = arith.constant 0 : i32
    %c0_i32_0 = arith.constant 0 : i32
    return %c0_i32, %arg0 : i32, i32
  }
}

</mosaic_0001>

<llo_original>
// kernel: decoder_forward.1
$region0: #{decoder_forward.1}
  #allocation0 [shape = 'u32[]', space=smem, size = 0x4, offset = 0x4, fixed_abs, tag = 'smem constant byte address 0x4 - core index']
  #allocation1 [shape = 'u32[144,128]{1,0:T(1,128)}', space=vmem, size = 0x12000, scoped, tag = 'internal scratch']
  #allocation2 [shape = 'f32[1,1]{1,0:T(1,128)S(1)}', space=vmem, size = 0x200, scoped, tag = 'scoped memory for decoder_forward.1']
  %s0 = inlined_call_operand.vmem [shape: f32[16,256], index: 0, kind: input, shape index: {}]
  %s1 = inlined_call_operand.vmem [shape: f32[3,256], index: 1, kind: input, shape index: {}]
  %s2 = inlined_call_operand.vmem [shape: f32[4,32,3], index: 2, kind: input, shape index: {}]
  %s3 = inlined_call_operand.vmem [shape: f32[4,32,1], index: 3, kind: input, shape index: {}]
  %s4 = inlined_call_operand.vmem [shape: f32[4,32,16], index: 4, kind: input, shape index: {}]
  %s5 = inlined_call_operand.vmem [shape: f32[4,32,1], index: 5, kind: input, shape index: {}]
  %s6 = inlined_call_operand.vmem [shape: f32[4,32,32], index: 6, kind: input, shape index: {}]
  %s7 = inlined_call_operand.vmem [shape: f32[4,32,1], index: 7, kind: input, shape index: {}]
  %s8 = inlined_call_operand.vmem [shape: f32[4,3,32], index: 8, kind: input, shape index: {}]
  %s9 = inlined_call_operand.vmem [shape: f32[4,3,1], index: 9, kind: input, shape index: {}]
  %s10 = inlined_call_operand.vmem [shape: f32[64,3], index: 10, kind: input, shape index: {}]
  %s11 = inlined_call_operand.vmem [shape: f32[64,1], index: 11, kind: input, shape index: {}]
  %s12 = inlined_call_operand.vmem [shape: f32[64,64], index: 12, kind: input, shape index: {}]
  %s13 = inlined_call_operand.vmem [shape: f32[64,1], index: 13, kind: input, shape index: {}]
  %s14 = inlined_call_operand.vmem [shape: f32[1,64], index: 14, kind: input, shape index: {}]
  %s15 = inlined_call_operand.<no memory space> [shape: f32[1,1], index: 15, kind: input, shape index: {}]
  %s16 = inlined_call_operand.hbm [shape: f32[3,256], index: 16, kind: output, shape index: {0}]
  %s17 = inlined_call_operand.hbm [shape: f32[1,256], index: 17, kind: output, shape index: {1}]
  %18 = xla_tuple %s16, %s17
  %s19 = sld [smem:[#allocation0]]
  $region82: #{decoder_forward.1} parent=0
    _
  %s21 = ssub.s32 1, %s19
  %s22 = scalar_select 0, %s21, %s19
  %v23 = vstv %s15
  %24 = vst [vmem:[#allocation2] sm:$0x1] %v23
  $region1: #{decoder_forward.1} parent=0
    #allocation3 [shape = 'u8[4096]{0}', space=vmem, size = 0x1000, scoped, tag = 'output window, operand 0, single buffered']
    #allocation4 [shape = 's32[1]{0}', space=sflag, size = 0x4, scoped, tag = 'scoped memory for decoder_forward.1']
    #allocation5 [shape = 'u8[1024]{0}', space=vmem, size = 0x400, scoped, tag = 'output window, operand 1, single buffered']
    #allocation6 [shape = 's32[1]{0}', space=sflag, size = 0x4, scoped, tag = 'scoped memory for decoder_forward.1']
    %25 = vsyncpa [#allocation4], 0
    %26 = vsyncpa [#allocation6], 0
    // Predicated region
    $region2: #{decoder_forward.1} parent=1 // pred_check
      _
    $region3: #{decoder_forward.1} parent=1 // pred_check_branch
      %28 = sbr.rel (0) target = $region5
    $region4: #{decoder_forward.1} parent=1 // pred_region
      _
    $region5: #{decoder_forward.1} parent=1 // pred_fallthru
      _
    // Predicated region
    $region6: #{decoder_forward.1} parent=1 // pred_check
      _
    $region7: #{decoder_forward.1} parent=1 // pred_check_branch
      %30 = sbr.rel (0) target = $region9
    $region8: #{decoder_forward.1} parent=1 // pred_region
      _
    $region9: #{decoder_forward.1} parent=1 // pred_fallthru
      _
    // Predicated region
    $region10: #{decoder_forward.1} parent=1 // pred_check
      _
    $region11: #{decoder_forward.1} parent=1 // pred_check_branch
      %32 = sbr.rel (0) target = $region13
    $region12: #{decoder_forward.1} parent=1 // pred_region
      _
    $region13: #{decoder_forward.1} parent=1 // pred_fallthru
      _
    // Predicated region
    $region14: #{decoder_forward.1} parent=1 // pred_check
      _
    $region15: #{decoder_forward.1} parent=1 // pred_check_branch
      %34 = sbr.rel (0) target = $region17
    $region16: #{decoder_forward.1} parent=1 // pred_region
      _
    $region17: #{decoder_forward.1} parent=1 // pred_fallthru
      _
    // Predicated region
    $region18: #{decoder_forward.1} parent=1 // pred_check
      _
    $region19: #{decoder_forward.1} parent=1 // pred_check_branch
      %36 = sbr.rel (0) target = $region21
    $region20: #{decoder_forward.1} parent=1 // pred_region
      _
    $region21: #{decoder_forward.1} parent=1 // pred_fallthru
      _
    // Predicated region
    $region22: #{decoder_forward.1} parent=1 // pred_check
      _
    $region23: #{decoder_forward.1} parent=1 // pred_check_branch
      %38 = sbr.rel (0) target = $region25
    $region24: #{decoder_forward.1} parent=1 // pred_region
      _
    $region25: #{decoder_forward.1} parent=1 // pred_fallthru
      _
    // Predicated region
    $region26: #{decoder_forward.1} parent=1 // pred_check
      _
    $region27: #{decoder_forward.1} parent=1 // pred_check_branch
      %40 = sbr.rel (0) target = $region29
    $region28: #{decoder_forward.1} parent=1 // pred_region
      _
    $region29: #{decoder_forward.1} parent=1 // pred_fallthru
      _
    // Predicated region
    $region30: #{decoder_forward.1} parent=1 // pred_check
      _
    $region31: #{decoder_forward.1} parent=1 // pred_check_branch
      %42 = sbr.rel (0) target = $region33
    $region32: #{decoder_forward.1} parent=1 // pred_region
      _
    $region33: #{decoder_forward.1} parent=1 // pred_fallthru
      _
    // Predicated region
    $region34: #{decoder_forward.1} parent=1 // pred_check
      _
    $region35: #{decoder_forward.1} parent=1 // pred_check_branch
      %44 = sbr.rel (0) target = $region37
    $region36: #{decoder_forward.1} parent=1 // pred_region
      _
    $region37: #{decoder_forward.1} parent=1 // pred_fallthru
      _
    // Predicated region
    $region38: #{decoder_forward.1} parent=1 // pred_check
      _
    $region39: #{decoder_forward.1} parent=1 // pred_check_branch
      %46 = sbr.rel (0) target = $region41
    $region40: #{decoder_forward.1} parent=1 // pred_region
      _
    $region41: #{decoder_forward.1} parent=1 // pred_fallthru
      _
    // Predicated region
    $region42: #{decoder_forward.1} parent=1 // pred_check
      _
    $region43: #{decoder_forward.1} parent=1 // pred_check_branch
      %48 = sbr.rel (0) target = $region45
    $region44: #{decoder_forward.1} parent=1 // pred_region
      _
    $region45: #{decoder_forward.1} parent=1 // pred_fallthru
      _
    // Predicated region
    $region46: #{decoder_forward.1} parent=1 // pred_check
      _
    $region47: #{decoder_forward.1} parent=1 // pred_check_branch
      %50 = sbr.rel (0) target = $region49
    $region48: #{decoder_forward.1} parent=1 // pred_region
      _
    $region49: #{decoder_forward.1} parent=1 // pred_fallthru
      _
    // Predicated region
    $region50: #{decoder_forward.1} parent=1 // pred_check
      _
    $region51: #{decoder_forward.1} parent=1 // pred_check_branch
      %52 = sbr.rel (0) target = $region53
    $region52: #{decoder_forward.1} parent=1 // pred_region
      _
    $region53: #{decoder_forward.1} parent=1 // pred_fallthru
      _
    // Predicated region
    $region54: #{decoder_forward.1} parent=1 // pred_check
      _
    $region55: #{decoder_forward.1} parent=1 // pred_check_branch
      %54 = sbr.rel (0) target = $region57
    $region56: #{decoder_forward.1} parent=1 // pred_region
      _
    $region57: #{decoder_forward.1} parent=1 // pred_fallthru
      _
    // Predicated region
    $region58: #{decoder_forward.1} parent=1 // pred_check
      _
    $region59: #{decoder_forward.1} parent=1 // pred_check_branch
      %56 = sbr.rel (0) target = $region61
    $region60: #{decoder_forward.1} parent=1 // pred_region
      _
    $region61: #{decoder_forward.1} parent=1 // pred_fallthru
      _
    // Predicated region
    $region62: #{decoder_forward.1} parent=1 // pred_check
      _
    $region63: #{decoder_forward.1} parent=1 // pred_check_branch
      %58 = sbr.rel (0) target = $region65
    $region64: #{decoder_forward.1} parent=1 // pred_region
      _
    $region65: #{decoder_forward.1} parent=1 // pred_fallthru
      _
    %v59 = vld [vmem:[%s0] sm:$0xff]
    %v60 = vld [vmem:[%s0 + $0x8] sm:$0xff]
    %v61 = vld [vmem:[%s0 + $0x10] sm:$0xff]
    %v62 = vld [vmem:[%s0 + $0x18] sm:$0xff]
    %v63 = vld [vmem:[%s1] sm:$0x77]
    %v64 = vld [vmem:[%s2] sm:$0xff]
    %v65 = vld [vmem:[%s2 + $0x8] sm:$0xff]
    %v66 = vld [vmem:[%s2 + $0x10] sm:$0xff]
    %v67 = vld [vmem:[%s2 + $0x18] sm:$0xff]
    %v68 = vld [vmem:[%s3] sm:$0xff]
    %v69 = vld [vmem:[%s3 + $0x8] sm:$0xff]
    %v70 = vld [vmem:[%s3 + $0x10] sm:$0xff]
    %v71 = vld [vmem:[%s3 + $0x18] sm:$0xff]
    %v72 = vld [vmem:[%s4] sm:$0xff]
    %v73 = vld [vmem:[%s4 + $0x8] sm:$0xff]
    %v74 = vld [vmem:[%s4 + $0x10] sm:$0xff]
    %v75 = vld [vmem:[%s4 + $0x18] sm:$0xff]
    %v76 = vld [vmem:[%s5] sm:$0xff]
    %v77 = vld [vmem:[%s5 + $0x8] sm:$0xff]
    %v78 = vld [vmem:[%s5 + $0x10] sm:$0xff]
    %v79 = vld [vmem:[%s5 + $0x18] sm:$0xff]
    %v80 = vld [vmem:[%s6] sm:$0xff]
    %v81 = vld [vmem:[%s6 + $0x8] sm:$0xff]
    %v82 = vld [vmem:[%s6 + $0x10] sm:$0xff]
    %v83 = vld [vmem:[%s6 + $0x18] sm:$0xff]
    %v84 = vld [vmem:[%s7] sm:$0xff]
    %v85 = vld [vmem:[%s7 + $0x8] sm:$0xff]
    %v86 = vld [vmem:[%s7 + $0x10] sm:$0xff]
    %v87 = vld [vmem:[%s7 + $0x18] sm:$0xff]
    %v88 = vld [vmem:[%s8] sm:$0x7]
    %v89 = vld [vmem:[%s9] sm:$0x7]
    %91 = vset.pattern.permute.xlu0 0
    %92 = vperm.xlu0 %91, %v76
    %v93 = vpop.permute.xlu0 %92
    %96 = vset.pattern.permute.xlu0 0
    %97 = vperm.xlu0 %96, %v77
    %v98 = vpop.permute.xlu0 %97
    %101 = vset.pattern.permute.xlu0 0
    %102 = vperm.xlu0 %101, %v78
    %v103 = vpop.permute.xlu0 %102
    %106 = vset.pattern.permute.xlu0 0
    %107 = vperm.xlu0 %106, %v79
    %v108 = vpop.permute.xlu0 %107
    %vm110 = vcmask 130048
    %v112 = vsel %vm110, %v72, 0
    %v115 = vsel %vm110, %v73, 0
    %v118 = vsel %vm110, %v74, 0
    %v121 = vsel %vm110, %v75, 0
    %123 = vmatprep.subr.mxu0 %v60
    %124 = vmatpush1.msra.mxu0 %v59
    %125 = vmatprep.subr.mxu0 %v62
    %126 = vmatpush1.msra.mxu0 %v61
    %127 = vmatprep.subr.mxu0 0.0
    %128 = vmatpush1.msra.mxu0 0.0
    %129 = vmatprep.subr.mxu0 0.0
    %130 = vmatpush1.msra.mxu0 0.0
    %131 = vmatprep.subr.mxu0 0.0
    %132 = vmatpush1.msra.mxu0 0.0
    %133 = vmatprep.subr.mxu0 0.0
    %134 = vmatpush1.msra.mxu0 0.0
    %135 = vmatprep.subr.mxu0 0.0
    %136 = vmatpush1.msra.mxu0 0.0
    %137 = vmatprep.subr.mxu0 0.0
    %138 = vmatpush1.msra.mxu0 0.0
    %139 = vmatprep.subr.mxu0 0.0
    %140 = vmatpush1.msra.mxu0 0.0
    %141 = vmatprep.subr.mxu0 0.0
    %142 = vmatpush1.msra.mxu0 0.0
    %143 = vmatprep.subr.mxu0 0.0
    %144 = vmatpush1.msra.mxu0 0.0
    %145 = vmatprep.subr.mxu0 0.0
    %146 = vmatpush1.msra.mxu0 0.0
    %147 = vmatprep.subr.mxu0 0.0
    %148 = vmatpush1.msra.mxu0 0.0
    %149 = vmatprep.subr.mxu0 0.0
    %150 = vmatpush1.msra.mxu0 0.0
    %151 = vmatprep.subr.mxu0 0.0
    %152 = vmatpush1.msra.mxu0 0.0
    %153 = vmatprep.subr.mxu0 0.0
    %154 = vmatpush1.msra.mxu0 0.0
    %155 = vmatprep.subr.mxu0 0.0
    %156 = vmatpush1.msra.mxu0 0.0
    %157 = vmatprep.subr.mxu0 0.0
    %158 = vmatpush1.msra.mxu0 0.0
    %159 = vmatprep.subr.mxu0 0.0
    %160 = vmatpush1.msra.mxu0 0.0
    %161 = vmatprep.subr.mxu0 0.0
    %162 = vmatpush1.msra.mxu0 0.0
    %163 = vmatprep.subr.mxu0 0.0
    %164 = vmatpush1.msra.mxu0 0.0
    %165 = vmatprep.subr.mxu0 0.0
    %166 = vmatpush1.msra.mxu0 0.0
    %167 = vmatprep.subr.mxu0 0.0
    %168 = vmatpush1.msra.mxu0 0.0
    %169 = vmatprep.subr.mxu0 0.0
    %170 = vmatpush1.msra.mxu0 0.0
    %171 = vmatprep.subr.mxu0 0.0
    %172 = vmatpush1.msra.mxu0 0.0
    %173 = vmatprep.subr.mxu0 0.0
    %174 = vmatpush1.msra.mxu0 0.0
    %175 = vmatprep.subr.mxu0 0.0
    %176 = vmatpush1.msra.mxu0 0.0
    %177 = vmatprep.subr.mxu0 0.0
    %178 = vmatpush1.msra.mxu0 0.0
    %179 = vmatprep.subr.mxu0 0.0
    %180 = vmatpush1.msra.mxu0 0.0
    %181 = vmatprep.subr.mxu0 0.0
    %182 = vmatpush1.msra.mxu0 0.0
    %183 = vmatprep.subr.mxu0 0.0
    %184 = vmatpush1.msra.mxu0 0.0
    %185 = vmatprep.subr.mxu0 0.0
    %186 = vmatpush1.msra.mxu0 0.0
    %187 = vmatprep.mubr.f32.mxu0 0.0
    %188 = vmatmul.mubr.f32.gmra.mrb[0].mxu0 %v112
    %v189 = vpop.f32.mrb[0].mxu0
    %v190 = vadd.f32 %v93, %v189
    %v191 = vpop.f32.mrb[0].mxu0
    %v192 = vadd.f32 %v93, %v191
    %193 = vmatprep.mubr.f32.mxu0 0.0
    %194 = vmatmul.mubr.f32.gmra.mrb[0].mxu0 %v115
    %v195 = vpop.f32.mrb[0].mxu0
    %v196 = vadd.f32 %v98, %v195
    %v197 = vpop.f32.mrb[0].mxu0
    %v198 = vadd.f32 %v98, %v197
    %199 = vmatprep.mubr.f32.mxu0 0.0
    %200 = vmatmul.mubr.f32.gmra.mrb[0].mxu0 %v118
    %v201 = vpop.f32.mrb[0].mxu0
    %v202 = vadd.f32 %v103, %v201
    %v203 = vpop.f32.mrb[0].mxu0
    %v204 = vadd.f32 %v103, %v203
    %205 = vmatprep.mubr.f32.mxu0 0.0
    %206 = vmatmul.mubr.f32.gmra.mrb[0].mxu0 %v121
    %v207 = vpop.f32.mrb[0].mxu0
    %v208 = vadd.f32 %v108, %v207
    %v209 = vpop.f32.mrb[0].mxu0
    %v210 = vadd.f32 %v108, %v209
    %211 = vdwg.mxu0
    %v212 = vtanh.pop %v190
    %v213 = vtanh.pop %v192
    %v214 = vtanh.pop %v196
    %v215 = vtanh.pop %v198
    %v216 = vtanh.pop %v202
    %v217 = vtanh.pop %v204
    %v218 = vtanh.pop %v208
    %v219 = vtanh.pop %v210
    %221 = vset.pattern.permute.xlu0 0
    %222 = vperm.xlu0 %221, %v68
    %v223 = vpop.permute.xlu0 %222
    %226 = vset.pattern.permute.xlu0 0
    %227 = vperm.xlu0 %226, %v69
    %v228 = vpop.permute.xlu0 %227
    %231 = vset.pattern.permute.xlu0 0
    %232 = vperm.xlu0 %231, %v70
    %v233 = vpop.permute.xlu0 %232
    %236 = vset.pattern.permute.xlu0 0
    %237 = vperm.xlu0 %236, %v71
    %v238 = vpop.permute.xlu0 %237
    %v241 = vcombine.high %v63, %v63
    %vm242 = vcmask 23552
    %v244 = vsel %vm242, %v64, 0
    %v247 = vsel %vm242, %v65, 0
    %v250 = vsel %vm242, %v66, 0
    %v253 = vsel %vm242, %v67, 0
    %vm255 = vcmask 1042432
    %v256 = vsel %vm255, %v63, 0
    %v258 = vsel %vm255, %v241, 0
    %260 = vmatprep.subr.mxu0 %v258
    %261 = vmatpush1.msra.mxu0 %v256
    %262 = vmatprep.subr.mxu0 0.0
    %263 = vmatpush1.msra.mxu0 0.0
    %264 = vmatprep.subr.mxu0 0.0
    %265 = vmatpush1.msra.mxu0 0.0
    %266 = vmatprep.subr.mxu0 0.0
    %267 = vmatpush1.msra.mxu0 0.0
    %268 = vmatprep.subr.mxu0 0.0
    %269 = vmatpush1.msra.mxu0 0.0
    %270 = vmatprep.subr.mxu0 0.0
    %271 = vmatpush1.msra.mxu0 0.0
    %272 = vmatprep.subr.mxu0 0.0
    %273 = vmatpush1.msra.mxu0 0.0
    %274 = vmatprep.subr.mxu0 0.0
    %275 = vmatpush1.msra.mxu0 0.0
    %276 = vmatprep.subr.mxu0 0.0
    %277 = vmatpush1.msra.mxu0 0.0
    %278 = vmatprep.subr.mxu0 0.0
    %279 = vmatpush1.msra.mxu0 0.0
    %280 = vmatprep.subr.mxu0 0.0
    %281 = vmatpush1.msra.mxu0 0.0
    %282 = vmatprep.subr.mxu0 0.0
    %283 = vmatpush1.msra.mxu0 0.0
    %284 = vmatprep.subr.mxu0 0.0
    %285 = vmatpush1.msra.mxu0 0.0
    %286 = vmatprep.subr.mxu0 0.0
    %287 = vmatpush1.msra.mxu0 0.0
    %288 = vmatprep.subr.mxu0 0.0
    %289 = vmatpush1.msra.mxu0 0.0
    %290 = vmatprep.subr.mxu0 0.0
    %291 = vmatpush1.msra.mxu0 0.0
    %292 = vmatprep.subr.mxu0 0.0
    %293 = vmatpush1.msra.mxu0 0.0
    %294 = vmatprep.subr.mxu0 0.0
    %295 = vmatpush1.msra.mxu0 0.0
    %296 = vmatprep.subr.mxu0 0.0
    %297 = vmatpush1.msra.mxu0 0.0
    %298 = vmatprep.subr.mxu0 0.0
    %299 = vmatpush1.msra.mxu0 0.0
    %300 = vmatprep.subr.mxu0 0.0
    %301 = vmatpush1.msra.mxu0 0.0
    %302 = vmatprep.subr.mxu0 0.0
    %303 = vmatpush1.msra.mxu0 0.0
    %304 = vmatprep.subr.mxu0 0.0
    %305 = vmatpush1.msra.mxu0 0.0
    %306 = vmatprep.subr.mxu0 0.0
    %307 = vmatpush1.msra.mxu0 0.0
    %308 = vmatprep.subr.mxu0 0.0
    %309 = vmatpush1.msra.mxu0 0.0
    %310 = vmatprep.subr.mxu0 0.0
    %311 = vmatpush1.msra.mxu0 0.0
    %312 = vmatprep.subr.mxu0 0.0
    %313 = vmatpush1.msra.mxu0 0.0
    %314 = vmatprep.subr.mxu0 0.0
    %315 = vmatpush1.msra.mxu0 0.0
    %316 = vmatprep.subr.mxu0 0.0
    %317 = vmatpush1.msra.mxu0 0.0
    %318 = vmatprep.subr.mxu0 0.0
    %319 = vmatpush1.msra.mxu0 0.0
    %320 = vmatprep.subr.mxu0 0.0
    %321 = vmatpush1.msra.mxu0 0.0
    %322 = vmatprep.subr.mxu0 0.0
    %323 = vmatpush1.msra.mxu0 0.0
    %324 = vmatprep.mubr.f32.mxu0 0.0
    %325 = vmatmul.mubr.f32.gmra.mrb[0].mxu0 %v244
    %v326 = vpop.f32.mrb[0].mxu0
    %v327 = vadd.f32 %v223, %v326
    %v328 = vpop.f32.mrb[0].mxu0
    %v329 = vadd.f32 %v223, %v328
    %330 = vmatprep.mubr.f32.mxu0 0.0
    %331 = vmatmul.mubr.f32.gmra.mrb[0].mxu0 %v247
    %v332 = vpop.f32.mrb[0].mxu0
    %v333 = vadd.f32 %v228, %v332
    %v334 = vpop.f32.mrb[0].mxu0
    %v335 = vadd.f32 %v228, %v334
    %336 = vmatprep.mubr.f32.mxu0 0.0
    %337 = vmatmul.mubr.f32.gmra.mrb[0].mxu0 %v250
    %v338 = vpop.f32.mrb[0].mxu0
    %v339 = vadd.f32 %v233, %v338
    %v340 = vpop.f32.mrb[0].mxu0
    %v341 = vadd.f32 %v233, %v340
    %342 = vmatprep.mubr.f32.mxu0 0.0
    %343 = vmatmul.mubr.f32.gmra.mrb[0].mxu0 %v253
    %v344 = vpop.f32.mrb[0].mxu0
    %v345 = vadd.f32 %v238, %v344
    %v346 = vpop.f32.mrb[0].mxu0
    %v347 = vadd.f32 %v238, %v346
    %348 = vdwg.mxu0
    %v349 = vmax.f32 %v327, 0.0
    %v350 = vmax.f32 %v329, 0.0
    %v351 = vmax.f32 %v333, 0.0
    %v352 = vmax.f32 %v335, 0.0
    %v353 = vmax.f32 %v339, 0.0
    %v354 = vmax.f32 %v341, 0.0
    %v355 = vmax.f32 %v345, 0.0
    %v356 = vmax.f32 %v347, 0.0
    %v357 = vmul.f32 %v349, %v212
    %v358 = vmul.f32 %v350, %v213
    %v359 = vmul.f32 %v351, %v214
    %v360 = vmul.f32 %v352, %v215
    %v361 = vmul.f32 %v353, %v216
    %v362 = vmul.f32 %v354, %v217
    %v363 = vmul.f32 %v355, %v218
    %v364 = vmul.f32 %v356, %v219
    %366 = vset.pattern.permute.xlu0 0
    %367 = vperm.xlu0 %366, %v84
    %v368 = vpop.permute.xlu0 %367
    %371 = vset.pattern.permute.xlu0 0
    %372 = vperm.xlu0 %371, %v85
    %v373 = vpop.permute.xlu0 %372
    %376 = vset.pattern.permute.xlu0 0
    %377 = vperm.xlu0 %376, %v86
    %v378 = vpop.permute.xlu0 %377
    %381 = vset.pattern.permute.xlu0 0
    %382 = vperm.xlu0 %381, %v87
    %v383 = vpop.permute.xlu0 %382
    %vm385 = vcmask 261120
    %v387 = vsel %vm385, %v80, 0
    %v390 = vsel %vm385, %v81, 0
    %v393 = vsel %vm385, %v82, 0
    %v396 = vsel %vm385, %v83, 0
    %398 = vmatprep.subr.mxu0 %v358
    %399 = vmatpush1.msra.mxu0 %v357
    %400 = vmatprep.subr.mxu0 %v360
    %401 = vmatpush1.msra.mxu0 %v359
    %402 = vmatprep.subr.mxu0 %v362
    %403 = vmatpush1.msra.mxu0 %v361
    %404 = vmatprep.subr.mxu0 %v364
    %405 = vmatpush1.msra.mxu0 %v363
    %406 = vmatprep.subr.mxu0 0.0
    %407 = vmatpush1.msra.mxu0 0.0
    %408 = vmatprep.subr.mxu0 0.0
    %409 = vmatpush1.msra.mxu0 0.0
    %410 = vmatprep.subr.mxu0 0.0
    %411 = vmatpush1.msra.mxu0 0.0
    %412 = vmatprep.subr.mxu0 0.0
    %413 = vmatpush1.msra.mxu0 0.0
    %414 = vmatprep.subr.mxu0 0.0
    %415 = vmatpush1.msra.mxu0 0.0
    %416 = vmatprep.subr.mxu0 0.0
    %417 = vmatpush1.msra.mxu0 0.0
    %418 = vmatprep.subr.mxu0 0.0
    %419 = vmatpush1.msra.mxu0 0.0
    %420 = vmatprep.subr.mxu0 0.0
    %421 = vmatpush1.msra.mxu0 0.0
    %422 = vmatprep.subr.mxu0 0.0
    %423 = vmatpush1.msra.mxu0 0.0
    %424 = vmatprep.subr.mxu0 0.0
    %425 = vmatpush1.msra.mxu0 0.0
    %426 = vmatprep.subr.mxu0 0.0
    %427 = vmatpush1.msra.mxu0 0.0
    %428 = vmatprep.subr.mxu0 0.0
    %429 = vmatpush1.msra.mxu0 0.0
    %430 = vmatprep.subr.mxu0 0.0
    %431 = vmatpush1.msra.mxu0 0.0
    %432 = vmatprep.subr.mxu0 0.0
    %433 = vmatpush1.msra.mxu0 0.0
    %434 = vmatprep.subr.mxu0 0.0
    %435 = vmatpush1.msra.mxu0 0.0
    %436 = vmatprep.subr.mxu0 0.0
    %437 = vmatpush1.msra.mxu0 0.0
    %438 = vmatprep.subr.mxu0 0.0
    %439 = vmatpush1.msra.mxu0 0.0
    %440 = vmatprep.subr.mxu0 0.0
    %441 = vmatpush1.msra.mxu0 0.0
    %442 = vmatprep.subr.mxu0 0.0
    %443 = vmatpush1.msra.mxu0 0.0
    %444 = vmatprep.subr.mxu0 0.0
    %445 = vmatpush1.msra.mxu0 0.0
    %446 = vmatprep.subr.mxu0 0.0
    %447 = vmatpush1.msra.mxu0 0.0
    %448 = vmatprep.subr.mxu0 0.0
    %449 = vmatpush1.msra.mxu0 0.0
    %450 = vmatprep.subr.mxu0 0.0
    %451 = vmatpush1.msra.mxu0 0.0
    %452 = vmatprep.subr.mxu0 0.0
    %453 = vmatpush1.msra.mxu0 0.0
    %454 = vmatprep.subr.mxu0 0.0
    %455 = vmatpush1.msra.mxu0 0.0
    %456 = vmatprep.subr.mxu0 0.0
    %457 = vmatpush1.msra.mxu0 0.0
    %458 = vmatprep.subr.mxu0 0.0
    %459 = vmatpush1.msra.mxu0 0.0
    %460 = vmatprep.subr.mxu0 0.0
    %461 = vmatpush1.msra.mxu0 0.0
    %462 = vmatprep.mubr.f32.mxu0 0.0
    %463 = vmatmul.mubr.f32.gmra.mrb[0].mxu0 %v387
    %v464 = vpop.f32.mrb[0].mxu0
    %v465 = vadd.f32 %v368, %v464
    %v466 = vpop.f32.mrb[0].mxu0
    %v467 = vadd.f32 %v368, %v466
    %468 = vmatprep.mubr.f32.mxu0 0.0
    %469 = vmatmul.mubr.f32.gmra.mrb[0].mxu0 %v390
    %v470 = vpop.f32.mrb[0].mxu0
    %v471 = vadd.f32 %v373, %v470
    %v472 = vpop.f32.mrb[0].mxu0
    %v473 = vadd.f32 %v373, %v472
    %474 = vmatprep.mubr.f32.mxu0 0.0
    %475 = vmatmul.mubr.f32.gmra.mrb[0].mxu0 %v393
    %v476 = vpop.f32.mrb[0].mxu0
    %v477 = vadd.f32 %v378, %v476
    %v478 = vpop.f32.mrb[0].mxu0
    %v479 = vadd.f32 %v378, %v478
    %480 = vmatprep.mubr.f32.mxu0 0.0
    %481 = vmatmul.mubr.f32.gmra.mrb[0].mxu0 %v396
    %v482 = vpop.f32.mrb[0].mxu0
    %v483 = vadd.f32 %v383, %v482
    %v484 = vpop.f32.mrb[0].mxu0
    %v485 = vadd.f32 %v383, %v484
    %486 = vdwg.mxu0
    %v487 = vmax.f32 %v465, 0.0
    %v488 = vmax.f32 %v467, 0.0
    %v489 = vmax.f32 %v471, 0.0
    %v490 = vmax.f32 %v473, 0.0
    %v491 = vmax.f32 %v477, 0.0
    %v492 = vmax.f32 %v479, 0.0
    %v493 = vmax.f32 %v483, 0.0
    %v494 = vmax.f32 %v485, 0.0
    %v495 = vadd.f32 %v487, %v357
    %v496 = vadd.f32 %v488, %v358
    %v497 = vadd.f32 %v489, %v359
    %v498 = vadd.f32 %v490, %v360
    %v499 = vadd.f32 %v491, %v361
    %v500 = vadd.f32 %v492, %v362
    %v501 = vadd.f32 %v493, %v363
    %v502 = vadd.f32 %v494, %v364
    %504 = vset.pattern.permute.xlu0 0
    %505 = vperm.xlu0 %504, %v89
    %v506 = vpop.permute.xlu0 %505
    %v509 = vsel %vm385, %v88, 0
    %511 = vmatprep.subr.mxu0 %v496
    %512 = vmatpush1.msra.mxu0 %v495
    %513 = vmatprep.subr.mxu0 %v498
    %514 = vmatpush1.msra.mxu0 %v497
    %515 = vmatprep.subr.mxu0 %v500
    %516 = vmatpush1.msra.mxu0 %v499
    %517 = vmatprep.subr.mxu0 %v502
    %518 = vmatpush1.msra.mxu0 %v501
    %519 = vmatprep.subr.mxu0 0.0
    %520 = vmatpush1.msra.mxu0 0.0
    %521 = vmatprep.subr.mxu0 0.0
    %522 = vmatpush1.msra.mxu0 0.0
    %523 = vmatprep.subr.mxu0 0.0
    %524 = vmatpush1.msra.mxu0 0.0
    %525 = vmatprep.subr.mxu0 0.0
    %526 = vmatpush1.msra.mxu0 0.0
    %527 = vmatprep.subr.mxu0 0.0
    %528 = vmatpush1.msra.mxu0 0.0
    %529 = vmatprep.subr.mxu0 0.0
    %530 = vmatpush1.msra.mxu0 0.0
    %531 = vmatprep.subr.mxu0 0.0
    %532 = vmatpush1.msra.mxu0 0.0
    %533 = vmatprep.subr.mxu0 0.0
    %534 = vmatpush1.msra.mxu0 0.0
    %535 = vmatprep.subr.mxu0 0.0
    %536 = vmatpush1.msra.mxu0 0.0
    %537 = vmatprep.subr.mxu0 0.0
    %538 = vmatpush1.msra.mxu0 0.0
    %539 = vmatprep.subr.mxu0 0.0
    %540 = vmatpush1.msra.mxu0 0.0
    %541 = vmatprep.subr.mxu0 0.0
    %542 = vmatpush1.msra.mxu0 0.0
    %543 = vmatprep.subr.mxu0 0.0
    %544 = vmatpush1.msra.mxu0 0.0
    %545 = vmatprep.subr.mxu0 0.0
    %546 = vmatpush1.msra.mxu0 0.0
    %547 = vmatprep.subr.mxu0 0.0
    %548 = vmatpush1.msra.mxu0 0.0
    %549 = vmatprep.subr.mxu0 0.0
    %550 = vmatpush1.msra.mxu0 0.0
    %551 = vmatprep.subr.mxu0 0.0
    %552 = vmatpush1.msra.mxu0 0.0
    %553 = vmatprep.subr.mxu0 0.0
    %554 = vmatpush1.msra.mxu0 0.0
    %555 = vmatprep.subr.mxu0 0.0
    %556 = vmatpush1.msra.mxu0 0.0
    %557 = vmatprep.subr.mxu0 0.0
    %558 = vmatpush1.msra.mxu0 0.0
    %559 = vmatprep.subr.mxu0 0.0
    %560 = vmatpush1.msra.mxu0 0.0
    %561 = vmatprep.subr.mxu0 0.0
    %562 = vmatpush1.msra.mxu0 0.0
    %563 = vmatprep.subr.mxu0 0.0
    %564 = vmatpush1.msra.mxu0 0.0
    %565 = vmatprep.subr.mxu0 0.0
    %566 = vmatpush1.msra.mxu0 0.0
    %567 = vmatprep.subr.mxu0 0.0
    %568 = vmatpush1.msra.mxu0 0.0
    %569 = vmatprep.subr.mxu0 0.0
    %570 = vmatpush1.msra.mxu0 0.0
    %571 = vmatprep.subr.mxu0 0.0
    %572 = vmatpush1.msra.mxu0 0.0
    %573 = vmatprep.subr.mxu0 0.0
    %574 = vmatpush1.msra.mxu0 0.0
    %575 = vmatprep.mubr.f32.mxu0 0.0
    %576 = vmatmul.mubr.f32.gmra.mrb[0].mxu0 %v509
    %v577 = vpop.f32.mrb[0].mxu0
    %v578 = vadd.f32 %v506, %v577
    %v579 = vpop.f32.mrb[0].mxu0
    %v580 = vadd.f32 %v506, %v579
    %581 = vdwg.mxu0
    %v582 = vtanh.pop %v578
    %v583 = vtanh.pop %v580
    %v584 = vmul.f32 %v582, 0.041666668
    %v585 = vmul.f32 %v583, 0.041666668
    %v588 = vcombine.low %v584, %v585
    %v590 = vadd.f32 %v63, %v588
    %v591 = vmul.f32 %v582, 0.125
    %v592 = vmul.f32 %v583, 0.125
    %v595 = vcombine.low %v591, %v592
    %v597 = vadd.f32 %v63, %v595
    %v599 = vcombine.high %v597, %v597
    %v600 = vsel %vm255, %v597, 0
    %v602 = vsel %vm255, %v599, 0
    %604 = vmatprep.subr.mxu0 %v602
    %605 = vmatpush1.msra.mxu0 %v600
    %606 = vmatprep.subr.mxu0 0.0
    %607 = vmatpush1.msra.mxu0 0.0
    %608 = vmatprep.subr.mxu0 0.0
    %609 = vmatpush1.msra.mxu0 0.0
    %610 = vmatprep.subr.mxu0 0.0
    %611 = vmatpush1.msra.mxu0 0.0
    %612 = vmatprep.subr.mxu0 0.0
    %613 = vmatpush1.msra.mxu0 0.0
    %614 = vmatprep.subr.mxu0 0.0
    %615 = vmatpush1.msra.mxu0 0.0
    %616 = vmatprep.subr.mxu0 0.0
    %617 = vmatpush1.msra.mxu0 0.0
    %618 = vmatprep.subr.mxu0 0.0
    %619 = vmatpush1.msra.mxu0 0.0
    %620 = vmatprep.subr.mxu0 0.0
    %621 = vmatpush1.msra.mxu0 0.0
    %622 = vmatprep.subr.mxu0 0.0
    %623 = vmatpush1.msra.mxu0 0.0
    %624 = vmatprep.subr.mxu0 0.0
    %625 = vmatpush1.msra.mxu0 0.0
    %626 = vmatprep.subr.mxu0 0.0
    %627 = vmatpush1.msra.mxu0 0.0
    %628 = vmatprep.subr.mxu0 0.0
    %629 = vmatpush1.msra.mxu0 0.0
    %630 = vmatprep.subr.mxu0 0.0
    %631 = vmatpush1.msra.mxu0 0.0
    %632 = vmatprep.subr.mxu0 0.0
    %633 = vmatpush1.msra.mxu0 0.0
    %634 = vmatprep.subr.mxu0 0.0
    %635 = vmatpush1.msra.mxu0 0.0
    %636 = vmatprep.subr.mxu0 0.0
    %637 = vmatpush1.msra.mxu0 0.0
    %638 = vmatprep.subr.mxu0 0.0
    %639 = vmatpush1.msra.mxu0 0.0
    %640 = vmatprep.subr.mxu0 0.0
    %641 = vmatpush1.msra.mxu0 0.0
    %642 = vmatprep.subr.mxu0 0.0
    %643 = vmatpush1.msra.mxu0 0.0
    %644 = vmatprep.subr.mxu0 0.0
    %645 = vmatpush1.msra.mxu0 0.0
    %646 = vmatprep.subr.mxu0 0.0
    %647 = vmatpush1.msra.mxu0 0.0
    %648 = vmatprep.subr.mxu0 0.0
    %649 = vmatpush1.msra.mxu0 0.0
    %650 = vmatprep.subr.mxu0 0.0
    %651 = vmatpush1.msra.mxu0 0.0
    %652 = vmatprep.subr.mxu0 0.0
    %653 = vmatpush1.msra.mxu0 0.0
    %654 = vmatprep.subr.mxu0 0.0
    %655 = vmatpush1.msra.mxu0 0.0
    %656 = vmatprep.subr.mxu0 0.0
    %657 = vmatpush1.msra.mxu0 0.0
    %658 = vmatprep.subr.mxu0 0.0
    %659 = vmatpush1.msra.mxu0 0.0
    %660 = vmatprep.subr.mxu0 0.0
    %661 = vmatpush1.msra.mxu0 0.0
    %662 = vmatprep.subr.mxu0 0.0
    %663 = vmatpush1.msra.mxu0 0.0
    %664 = vmatprep.subr.mxu0 0.0
    %665 = vmatpush1.msra.mxu0 0.0
    %666 = vmatprep.subr.mxu0 0.0
    %667 = vmatpush1.msra.mxu0 0.0
    %668 = vmatprep.mubr.f32.mxu0 0.0
    %669 = vmatmul.mubr.f32.gmra.mrb[0].mxu0 %v244
    %v670 = vpop.f32.mrb[0].mxu0
    %v671 = vadd.f32 %v223, %v670
    %v672 = vpop.f32.mrb[0].mxu0
    %v673 = vadd.f32 %v223, %v672
    %674 = vmatprep.mubr.f32.mxu0 0.0
    %675 = vmatmul.mubr.f32.gmra.mrb[0].mxu0 %v247
    %v676 = vpop.f32.mrb[0].mxu0
    %v677 = vadd.f32 %v228, %v676
    %v678 = vpop.f32.mrb[0].mxu0
    %v679 = vadd.f32 %v228, %v678
    %680 = vmatprep.mubr.f32.mxu0 0.0
    %681 = vmatmul.mubr.f32.gmra.mrb[0].mxu0 %v250
    %v682 = vpop.f32.mrb[0].mxu0
    %v683 = vadd.f32 %v233, %v682
    %v684 = vpop.f32.mrb[0].mxu0
    %v685 = vadd.f32 %v233, %v684
    %686 = vmatprep.mubr.f32.mxu0 0.0
    %687 = vmatmul.mubr.f32.gmra.mrb[0].mxu0 %v253
    %v688 = vpop.f32.mrb[0].mxu0
    %v689 = vadd.f32 %v238, %v688
    %v690 = vpop.f32.mrb[0].mxu0
    %v691 = vadd.f32 %v238, %v690
    %692 = vdwg.mxu0
    %v693 = vmax.f32 %v671, 0.0
    %v694 = vmax.f32 %v673, 0.0
    %v695 = vmax.f32 %v677, 0.0
    %v696 = vmax.f32 %v679, 0.0
    %v697 = vmax.f32 %v683, 0.0
    %v698 = vmax.f32 %v685, 0.0
    %v699 = vmax.f32 %v689, 0.0
    %v700 = vmax.f32 %v691, 0.0
    %v701 = vmul.f32 %v693, %v212
    %v702 = vmul.f32 %v694, %v213
    %v703 = vmul.f32 %v695, %v214
    %v704 = vmul.f32 %v696, %v215
    %v705 = vmul.f32 %v697, %v216
    %v706 = vmul.f32 %v698, %v217
    %v707 = vmul.f32 %v699, %v218
    %v708 = vmul.f32 %v700, %v219
    %709 = vmatprep.subr.mxu0 %v702
    %710 = vmatpush1.msra.mxu0 %v701
    %711 = vmatprep.subr.mxu0 %v704
    %712 = vmatpush1.msra.mxu0 %v703
    %713 = vmatprep.subr.mxu0 %v706
    %714 = vmatpush1.msra.mxu0 %v705
    %715 = vmatprep.subr.mxu0 %v708
    %716 = vmatpush1.msra.mxu0 %v707
    %717 = vmatprep.subr.mxu0 0.0
    %718 = vmatpush1.msra.mxu0 0.0
    %719 = vmatprep.subr.mxu0 0.0
    %720 = vmatpush1.msra.mxu0 0.0
    %721 = vmatprep.subr.mxu0 0.0
    %722 = vmatpush1.msra.mxu0 0.0
    %723 = vmatprep.subr.mxu0 0.0
    %724 = vmatpush1.msra.mxu0 0.0
    %725 = vmatprep.subr.mxu0 0.0
    %726 = vmatpush1.msra.mxu0 0.0
    %727 = vmatprep.subr.mxu0 0.0
    %728 = vmatpush1.msra.mxu0 0.0
    %729 = vmatprep.subr.mxu0 0.0
    %730 = vmatpush1.msra.mxu0 0.0
    %731 = vmatprep.subr.mxu0 0.0
    %732 = vmatpush1.msra.mxu0 0.0
    %733 = vmatprep.subr.mxu0 0.0
    %734 = vmatpush1.msra.mxu0 0.0
    %735 = vmatprep.subr.mxu0 0.0
    %736 = vmatpush1.msra.mxu0 0.0
    %737 = vmatprep.subr.mxu0 0.0
    %738 = vmatpush1.msra.mxu0 0.0
    %739 = vmatprep.subr.mxu0 0.0
    %740 = vmatpush1.msra.mxu0 0.0
    %741 = vmatprep.subr.mxu0 0.0
    %742 = vmatpush1.msra.mxu0 0.0
    %743 = vmatprep.subr.mxu0 0.0
    %744 = vmatpush1.msra.mxu0 0.0
    %745 = vmatprep.subr.mxu0 0.0
    %746 = vmatpush1.msra.mxu0 0.0
    %747 = vmatprep.subr.mxu0 0.0
    %748 = vmatpush1.msra.mxu0 0.0
    %749 = vmatprep.subr.mxu0 0.0
    %750 = vmatpush1.msra.mxu0 0.0
    %751 = vmatprep.subr.mxu0 0.0
    %752 = vmatpush1.msra.mxu0 0.0
    %753 = vmatprep.subr.mxu0 0.0
    %754 = vmatpush1.msra.mxu0 0.0
    %755 = vmatprep.subr.mxu0 0.0
    %756 = vmatpush1.msra.mxu0 0.0
    %757 = vmatprep.subr.mxu0 0.0
    %758 = vmatpush1.msra.mxu0 0.0
    %759 = vmatprep.subr.mxu0 0.0
    %760 = vmatpush1.msra.mxu0 0.0
    %761 = vmatprep.subr.mxu0 0.0
    %762 = vmatpush1.msra.mxu0 0.0
    %763 = vmatprep.subr.mxu0 0.0
    %764 = vmatpush1.msra.mxu0 0.0
    %765 = vmatprep.subr.mxu0 0.0
    %766 = vmatpush1.msra.mxu0 0.0
    %767 = vmatprep.subr.mxu0 0.0
    %768 = vmatpush1.msra.mxu0 0.0
    %769 = vmatprep.subr.mxu0 0.0
    %770 = vmatpush1.msra.mxu0 0.0
    %771 = vmatprep.subr.mxu0 0.0
    %772 = vmatpush1.msra.mxu0 0.0
    %773 = vmatprep.mubr.f32.mxu0 0.0
    %774 = vmatmul.mubr.f32.gmra.mrb[0].mxu0 %v387
    %v775 = vpop.f32.mrb[0].mxu0
    %v776 = vadd.f32 %v368, %v775
    %v777 = vpop.f32.mrb[0].mxu0
    %v778 = vadd.f32 %v368, %v777
    %779 = vmatprep.mubr.f32.mxu0 0.0
    %780 = vmatmul.mubr.f32.gmra.mrb[0].mxu0 %v390
    %v781 = vpop.f32.mrb[0].mxu0
    %v782 = vadd.f32 %v373, %v781
    %v783 = vpop.f32.mrb[0].mxu0
    %v784 = vadd.f32 %v373, %v783
    %785 = vmatprep.mubr.f32.mxu0 0.0
    %786 = vmatmul.mubr.f32.gmra.mrb[0].mxu0 %v393
    %v787 = vpop.f32.mrb[0].mxu0
    %v788 = vadd.f32 %v378, %v787
    %v789 = vpop.f32.mrb[0].mxu0
    %v790 = vadd.f32 %v378, %v789
    %791 = vmatprep.mubr.f32.mxu0 0.0
    %792 = vmatmul.mubr.f32.gmra.mrb[0].mxu0 %v396
    %v793 = vpop.f32.mrb[0].mxu0
    %v794 = vadd.f32 %v383, %v793
    %v795 = vpop.f32.mrb[0].mxu0
    %v796 = vadd.f32 %v383, %v795
    %797 = vdwg.mxu0
    %v798 = vmax.f32 %v776, 0.0
    %v799 = vmax.f32 %v778, 0.0
    %v800 = vmax.f32 %v782, 0.0
    %v801 = vmax.f32 %v784, 0.0
    %v802 = vmax.f32 %v788, 0.0
    %v803 = vmax.f32 %v790, 0.0
    %v804 = vmax.f32 %v794, 0.0
    %v805 = vmax.f32 %v796, 0.0
    %v806 = vadd.f32 %v798, %v701
    %v807 = vadd.f32 %v799, %v702
    %v808 = vadd.f32 %v800, %v703
    %v809 = vadd.f32 %v801, %v704
    %v810 = vadd.f32 %v802, %v705
    %v811 = vadd.f32 %v803, %v706
    %v812 = vadd.f32 %v804, %v707
    %v813 = vadd.f32 %v805, %v708
    %814 = vmatprep.subr.mxu0 %v807
    %815 = vmatpush1.msra.mxu0 %v806
    %816 = vmatprep.subr.mxu0 %v809
    %817 = vmatpush1.msra.mxu0 %v808
    %818 = vmatprep.subr.mxu0 %v811
    %819 = vmatpush1.msra.mxu0 %v810
    %820 = vmatprep.subr.mxu0 %v813
    %821 = vmatpush1.msra.mxu0 %v812
    %822 = vmatprep.subr.mxu0 0.0
    %823 = vmatpush1.msra.mxu0 0.0
    %824 = vmatprep.subr.mxu0 0.0
    %825 = vmatpush1.msra.mxu0 0.0
    %826 = vmatprep.subr.mxu0 0.0
    %827 = vmatpush1.msra.mxu0 0.0
    %828 = vmatprep.subr.mxu0 0.0
    %829 = vmatpush1.msra.mxu0 0.0
    %830 = vmatprep.subr.mxu0 0.0
    %831 = vmatpush1.msra.mxu0 0.0
    %832 = vmatprep.subr.mxu0 0.0
    %833 = vmatpush1.msra.mxu0 0.0
    %834 = vmatprep.subr.mxu0 0.0
    %835 = vmatpush1.msra.mxu0 0.0
    %836 = vmatprep.subr.mxu0 0.0
    %837 = vmatpush1.msra.mxu0 0.0
    %838 = vmatprep.subr.mxu0 0.0
    %839 = vmatpush1.msra.mxu0 0.0
    %840 = vmatprep.subr.mxu0 0.0
    %841 = vmatpush1.msra.mxu0 0.0
    %842 = vmatprep.subr.mxu0 0.0
    %843 = vmatpush1.msra.mxu0 0.0
    %844 = vmatprep.subr.mxu0 0.0
    %845 = vmatpush1.msra.mxu0 0.0
    %846 = vmatprep.subr.mxu0 0.0
    %847 = vmatpush1.msra.mxu0 0.0
    %848 = vmatprep.subr.mxu0 0.0
    %849 = vmatpush1.msra.mxu0 0.0
    %850 = vmatprep.subr.mxu0 0.0
    %851 = vmatpush1.msra.mxu0 0.0
    %852 = vmatprep.subr.mxu0 0.0
    %853 = vmatpush1.msra.mxu0 0.0
    %854 = vmatprep.subr.mxu0 0.0
    %855 = vmatpush1.msra.mxu0 0.0
    %856 = vmatprep.subr.mxu0 0.0
    %857 = vmatpush1.msra.mxu0 0.0
    %858 = vmatprep.subr.mxu0 0.0
    %859 = vmatpush1.msra.mxu0 0.0
    %860 = vmatprep.subr.mxu0 0.0
    %861 = vmatpush1.msra.mxu0 0.0
    %862 = vmatprep.subr.mxu0 0.0
    %863 = vmatpush1.msra.mxu0 0.0
    %864 = vmatprep.subr.mxu0 0.0
    %865 = vmatpush1.msra.mxu0 0.0
    %866 = vmatprep.subr.mxu0 0.0
    %867 = vmatpush1.msra.mxu0 0.0
    %868 = vmatprep.subr.mxu0 0.0
    %869 = vmatpush1.msra.mxu0 0.0
    %870 = vmatprep.subr.mxu0 0.0
    %871 = vmatpush1.msra.mxu0 0.0
    %872 = vmatprep.subr.mxu0 0.0
    %873 = vmatpush1.msra.mxu0 0.0
    %874 = vmatprep.subr.mxu0 0.0
    %875 = vmatpush1.msra.mxu0 0.0
    %876 = vmatprep.subr.mxu0 0.0
    %877 = vmatpush1.msra.mxu0 0.0
    %878 = vmatprep.mubr.f32.mxu0 0.0
    %879 = vmatmul.mubr.f32.gmra.mrb[0].mxu0 %v509
    %v880 = vpop.f32.mrb[0].mxu0
    %v881 = vadd.f32 %v506, %v880
    %v882 = vpop.f32.mrb[0].mxu0
    %v883 = vadd.f32 %v506, %v882
    %884 = vdwg.mxu0
    %v885 = vtanh.pop %v881
    %v886 = vtanh.pop %v883
    %v887 = vmul.f32 %v885, 0.083333336
    %v888 = vmul.f32 %v886, 0.083333336
    %v891 = vcombine.low %v887, %v888
    %v893 = vadd.f32 %v590, %v891
    %v894 = vmul.f32 %v885, 0.125
    %v895 = vmul.f32 %v886, 0.125
    %v898 = vcombine.low %v894, %v895
    %v900 = vadd.f32 %v63, %v898
    %v902 = vcombine.high %v900, %v900
    %v903 = vsel %vm255, %v900, 0
    %v905 = vsel %vm255, %v902, 0
    %907 = vmatprep.subr.mxu0 %v905
    %908 = vmatpush1.msra.mxu0 %v903
    %909 = vmatprep.subr.mxu0 0.0
    %910 = vmatpush1.msra.mxu0 0.0
    %911 = vmatprep.subr.mxu0 0.0
    %912 = vmatpush1.msra.mxu0 0.0
    %913 = vmatprep.subr.mxu0 0.0
    %914 = vmatpush1.msra.mxu0 0.0
    %915 = vmatprep.subr.mxu0 0.0
    %916 = vmatpush1.msra.mxu0 0.0
    %917 = vmatprep.subr.mxu0 0.0
    %918 = vmatpush1.msra.mxu0 0.0
    %919 = vmatprep.subr.mxu0 0.0
    %920 = vmatpush1.msra.mxu0 0.0
    %921 = vmatprep.subr.mxu0 0.0
    %922 = vmatpush1.msra.mxu0 0.0
    %923 = vmatprep.subr.mxu0 0.0
    %924 = vmatpush1.msra.mxu0 0.0
    %925 = vmatprep.subr.mxu0 0.0
    %926 = vmatpush1.msra.mxu0 0.0
    %927 = vmatprep.subr.mxu0 0.0
    %928 = vmatpush1.msra.mxu0 0.0
    %929 = vmatprep.subr.mxu0 0.0
    %930 = vmatpush1.msra.mxu0 0.0
    %931 = vmatprep.subr.mxu0 0.0
    %932 = vmatpush1.msra.mxu0 0.0
    %933 = vmatprep.subr.mxu0 0.0
    %934 = vmatpush1.msra.mxu0 0.0
    %935 = vmatprep.subr.mxu0 0.0
    %936 = vmatpush1.msra.mxu0 0.0
    %937 = vmatprep.subr.mxu0 0.0
    %938 = vmatpush1.msra.mxu0 0.0
    %939 = vmatprep.subr.mxu0 0.0
    %940 = vmatpush1.msra.mxu0 0.0
    %941 = vmatprep.subr.mxu0 0.0
    %942 = vmatpush1.msra.mxu0 0.0
    %943 = vmatprep.subr.mxu0 0.0
    %944 = vmatpush1.msra.mxu0 0.0
    %945 = vmatprep.subr.mxu0 0.0
    %946 = vmatpush1.msra.mxu0 0.0
    %947 = vmatprep.subr.mxu0 0.0
    %948 = vmatpush1.msra.mxu0 0.0
    %949 = vmatprep.subr.mxu0 0.0
    %950 = vmatpush1.msra.mxu0 0.0
    %951 = vmatprep.subr.mxu0 0.0
    %952 = vmatpush1.msra.mxu0 0.0
    %953 = vmatprep.subr.mxu0 0.0
    %954 = vmatpush1.msra.mxu0 0.0
    %955 = vmatprep.subr.mxu0 0.0
    %956 = vmatpush1.msra.mxu0 0.0
    %957 = vmatprep.subr.mxu0 0.0
    %958 = vmatpush1.msra.mxu0 0.0
    %959 = vmatprep.subr.mxu0 0.0
    %960 = vmatpush1.msra.mxu0 0.0
    %961 = vmatprep.subr.mxu0 0.0
    %962 = vmatpush1.msra.mxu0 0.0
    %963 = vmatprep.subr.mxu0 0.0
    %964 = vmatpush1.msra.mxu0 0.0
    %965 = vmatprep.subr.mxu0 0.0
    %966 = vmatpush1.msra.mxu0 0.0
    %967 = vmatprep.subr.mxu0 0.0
    %968 = vmatpush1.msra.mxu0 0.0
    %969 = vmatprep.subr.mxu0 0.0
    %970 = vmatpush1.msra.mxu0 0.0
    %971 = vmatprep.mubr.f32.mxu0 0.0
    %972 = vmatmul.mubr.f32.gmra.mrb[0].mxu0 %v244
    %v973 = vpop.f32.mrb[0].mxu0
    %v974 = vadd.f32 %v223, %v973
    %v975 = vpop.f32.mrb[0].mxu0
    %v976 = vadd.f32 %v223, %v975
    %977 = vmatprep.mubr.f32.mxu0 0.0
    %978 = vmatmul.mubr.f32.gmra.mrb[0].mxu0 %v247
    %v979 = vpop.f32.mrb[0].mxu0
    %v980 = vadd.f32 %v228, %v979
    %v981 = vpop.f32.mrb[0].mxu0
    %v982 = vadd.f32 %v228, %v981
    %983 = vmatprep.mubr.f32.mxu0 0.0
    %984 = vmatmul.mubr.f32.gmra.mrb[0].mxu0 %v250
    %v985 = vpop.f32.mrb[0].mxu0
    %v986 = vadd.f32 %v233, %v985
    %v987 = vpop.f32.mrb[0].mxu0
    %v988 = vadd.f32 %v233, %v987
    %989 = vmatprep.mubr.f32.mxu0 0.0
    %990 = vmatmul.mubr.f32.gmra.mrb[0].mxu0 %v253
    %v991 = vpop.f32.mrb[0].mxu0
    %v992 = vadd.f32 %v238, %v991
    %v993 = vpop.f32.mrb[0].mxu0
    %v994 = vadd.f32 %v238, %v993
    %995 = vdwg.mxu0
    %v996 = vmax.f32 %v974, 0.0
    %v997 = vmax.f32 %v976, 0.0
    %v998 = vmax.f32 %v980, 0.0
    %v999 = vmax.f32 %v982, 0.0
    %v1000 = vmax.f32 %v986, 0.0
    %v1001 = vmax.f32 %v988, 0.0
    %v1002 = vmax.f32 %v992, 0.0
    %v1003 = vmax.f32 %v994, 0.0
    %v1004 = vmul.f32 %v996, %v212
    %v1005 = vmul.f32 %v997, %v213
    %v1006 = vmul.f32 %v998, %v214
    %v1007 = vmul.f32 %v999, %v215
    %v1008 = vmul.f32 %v1000, %v216
    %v1009 = vmul.f32 %v1001, %v217
    %v1010 = vmul.f32 %v1002, %v218
    %v1011 = vmul.f32 %v1003, %v219
    %1012 = vmatprep.subr.mxu0 %v1005
    %1013 = vmatpush1.msra.mxu0 %v1004
    %1014 = vmatprep.subr.mxu0 %v1007
    %1015 = vmatpush1.msra.mxu0 %v1006
    %1016 = vmatprep.subr.mxu0 %v1009
    %1017 = vmatpush1.msra.mxu0 %v1008
    %1018 = vmatprep.subr.mxu0 %v1011
    %1019 = vmatpush1.msra.mxu0 %v1010
    %1020 = vmatprep.subr.mxu0 0.0
    %1021 = vmatpush1.msra.mxu0 0.0
    %1022 = vmatprep.subr.mxu0 0.0
    %1023 = vmatpush1.msra.mxu0 0.0
    %1024 = vmatprep.subr.mxu0 0.0
    %1025 = vmatpush1.msra.mxu0 0.0
    %1026 = vmatprep.subr.mxu0 0.0
    %1027 = vmatpush1.msra.mxu0 0.0
    %1028 = vmatprep.subr.mxu0 0.0
    %1029 = vmatpush1.msra.mxu0 0.0
    %1030 = vmatprep.subr.mxu0 0.0
    %1031 = vmatpush1.msra.mxu0 0.0
    %1032 = vmatprep.subr.mxu0 0.0
    %1033 = vmatpush1.msra.mxu0 0.0
    %1034 = vmatprep.subr.mxu0 0.0
    %1035 = vmatpush1.msra.mxu0 0.0
    %1036 = vmatprep.subr.mxu0 0.0
    %1037 = vmatpush1.msra.mxu0 0.0
    %1038 = vmatprep.subr.mxu0 0.0
    %1039 = vmatpush1.msra.mxu0 0.0
    %1040 = vmatprep.subr.mxu0 0.0
    %1041 = vmatpush1.msra.mxu0 0.0
    %1042 = vmatprep.subr.mxu0 0.0
    %1043 = vmatpush1.msra.mxu0 0.0
    %1044 = vmatprep.subr.mxu0 0.0
    %1045 = vmatpush1.msra.mxu0 0.0
    %1046 = vmatprep.subr.mxu0 0.0
    %1047 = vmatpush1.msra.mxu0 0.0
    %1048 = vmatprep.subr.mxu0 0.0
    %1049 = vmatpush1.msra.mxu0 0.0
    %1050 = vmatprep.subr.mxu0 0.0
    %1051 = vmatpush1.msra.mxu0 0.0
    %1052 = vmatprep.subr.mxu0 0.0
    %1053 = vmatpush1.msra.mxu0 0.0
    %1054 = vmatprep.subr.mxu0 0.0
    %1055 = vmatpush1.msra.mxu0 0.0
    %1056 = vmatprep.subr.mxu0 0.0
    %1057 = vmatpush1.msra.mxu0 0.0
    %1058 = vmatprep.subr.mxu0 0.0
    %1059 = vmatpush1.msra.mxu0 0.0
    %1060 = vmatprep.subr.mxu0 0.0
    %1061 = vmatpush1.msra.mxu0 0.0
    %1062 = vmatprep.subr.mxu0 0.0
    %1063 = vmatpush1.msra.mxu0 0.0
    %1064 = vmatprep.subr.mxu0 0.0
    %1065 = vmatpush1.msra.mxu0 0.0
    %1066 = vmatprep.subr.mxu0 0.0
    %1067 = vmatpush1.msra.mxu0 0.0
    %1068 = vmatprep.subr.mxu0 0.0
    %1069 = vmatpush1.msra.mxu0 0.0
    %1070 = vmatprep.subr.mxu0 0.0
    %1071 = vmatpush1.msra.mxu0 0.0
    %1072 = vmatprep.subr.mxu0 0.0
    %1073 = vmatpush1.msra.mxu0 0.0
    %1074 = vmatprep.subr.mxu0 0.0
    %1075 = vmatpush1.msra.mxu0 0.0
    %1076 = vmatprep.mubr.f32.mxu0 0.0
    %1077 = vmatmul.mubr.f32.gmra.mrb[0].mxu0 %v387
    %v1078 = vpop.f32.mrb[0].mxu0
    %v1079 = vadd.f32 %v368, %v1078
    %v1080 = vpop.f32.mrb[0].mxu0
    %v1081 = vadd.f32 %v368, %v1080
    %1082 = vmatprep.mubr.f32.mxu0 0.0
    %1083 = vmatmul.mubr.f32.gmra.mrb[0].mxu0 %v390
    %v1084 = vpop.f32.mrb[0].mxu0
    %v1085 = vadd.f32 %v373, %v1084
    %v1086 = vpop.f32.mrb[0].mxu0
    %v1087 = vadd.f32 %v373, %v1086
    %1088 = vmatprep.mubr.f32.mxu0 0.0
    %1089 = vmatmul.mubr.f32.gmra.mrb[0].mxu0 %v393
    %v1090 = vpop.f32.mrb[0].mxu0
    %v1091 = vadd.f32 %v378, %v1090
    %v1092 = vpop.f32.mrb[0].mxu0
    %v1093 = vadd.f32 %v378, %v1092
    %1094 = vmatprep.mubr.f32.mxu0 0.0
    %1095 = vmatmul.mubr.f32.gmra.mrb[0].mxu0 %v396
    %v1096 = vpop.f32.mrb[0].mxu0
    %v1097 = vadd.f32 %v383, %v1096
    %v1098 = vpop.f32.mrb[0].mxu0
    %v1099 = vadd.f32 %v383, %v1098
    %1100 = vdwg.mxu0
    %v1101 = vmax.f32 %v1079, 0.0
    %v1102 = vmax.f32 %v1081, 0.0
    %v1103 = vmax.f32 %v1085, 0.0
    %v1104 = vmax.f32 %v1087, 0.0
    %v1105 = vmax.f32 %v1091, 0.0
    %v1106 = vmax.f32 %v1093, 0.0
    %v1107 = vmax.f32 %v1097, 0.0
    %v1108 = vmax.f32 %v1099, 0.0
    %v1109 = vadd.f32 %v1101, %v1004
    %v1110 = vadd.f32 %v1102, %v1005
    %v1111 = vadd.f32 %v1103, %v1006
    %v1112 = vadd.f32 %v1104, %v1007
    %v1113 = vadd.f32 %v1105, %v1008
    %v1114 = vadd.f32 %v1106, %v1009
    %v1115 = vadd.f32 %v1107, %v1010
    %v1116 = vadd.f32 %v1108, %v1011
    %1117 = vmatprep.subr.mxu0 %v1110
    %1118 = vmatpush1.msra.mxu0 %v1109
    %1119 = vmatprep.subr.mxu0 %v1112
    %1120 = vmatpush1.msra.mxu0 %v1111
    %1121 = vmatprep.subr.mxu0 %v1114
    %1122 = vmatpush1.msra.mxu0 %v1113
    %1123 = vmatprep.subr.mxu0 %v1116
    %1124 = vmatpush1.msra.mxu0 %v1115
    %1125 = vmatprep.subr.mxu0 0.0
    %1126 = vmatpush1.msra.mxu0 0.0
    %1127 = vmatprep.subr.mxu0 0.0
    %1128 = vmatpush1.msra.mxu0 0.0
    %1129 = vmatprep.subr.mxu0 0.0
    %1130 = vmatpush1.msra.mxu0 0.0
    %1131 = vmatprep.subr.mxu0 0.0
    %1132 = vmatpush1.msra.mxu0 0.0
    %1133 = vmatprep.subr.mxu0 0.0
    %1134 = vmatpush1.msra.mxu0 0.0
    %1135 = vmatprep.subr.mxu0 0.0
    %1136 = vmatpush1.msra.mxu0 0.0
    %1137 = vmatprep.subr.mxu0 0.0
    %1138 = vmatpush1.msra.mxu0 0.0
    %1139 = vmatprep.subr.mxu0 0.0
    %1140 = vmatpush1.msra.mxu0 0.0
    %1141 = vmatprep.subr.mxu0 0.0
    %1142 = vmatpush1.msra.mxu0 0.0
    %1143 = vmatprep.subr.mxu0 0.0
    %1144 = vmatpush1.msra.mxu0 0.0
    %1145 = vmatprep.subr.mxu0 0.0
    %1146 = vmatpush1.msra.mxu0 0.0
    %1147 = vmatprep.subr.mxu0 0.0
    %1148 = vmatpush1.msra.mxu0 0.0
    %1149 = vmatprep.subr.mxu0 0.0
    %1150 = vmatpush1.msra.mxu0 0.0
    %1151 = vmatprep.subr.mxu0 0.0
    %1152 = vmatpush1.msra.mxu0 0.0
    %1153 = vmatprep.subr.mxu0 0.0
    %1154 = vmatpush1.msra.mxu0 0.0
    %1155 = vmatprep.subr.mxu0 0.0
    %1156 = vmatpush1.msra.mxu0 0.0
    %1157 = vmatprep.subr.mxu0 0.0
    %1158 = vmatpush1.msra.mxu0 0.0
    %1159 = vmatprep.subr.mxu0 0.0
    %1160 = vmatpush1.msra.mxu0 0.0
    %1161 = vmatprep.subr.mxu0 0.0
    %1162 = vmatpush1.msra.mxu0 0.0
    %1163 = vmatprep.subr.mxu0 0.0
    %1164 = vmatpush1.msra.mxu0 0.0
    %1165 = vmatprep.subr.mxu0 0.0
    %1166 = vmatpush1.msra.mxu0 0.0
    %1167 = vmatprep.subr.mxu0 0.0
    %1168 = vmatpush1.msra.mxu0 0.0
    %1169 = vmatprep.subr.mxu0 0.0
    %1170 = vmatpush1.msra.mxu0 0.0
    %1171 = vmatprep.subr.mxu0 0.0
    %1172 = vmatpush1.msra.mxu0 0.0
    %1173 = vmatprep.subr.mxu0 0.0
    %1174 = vmatpush1.msra.mxu0 0.0
    %1175 = vmatprep.subr.mxu0 0.0
    %1176 = vmatpush1.msra.mxu0 0.0
    %1177 = vmatprep.subr.mxu0 0.0
    %1178 = vmatpush1.msra.mxu0 0.0
    %1179 = vmatprep.subr.mxu0 0.0
    %1180 = vmatpush1.msra.mxu0 0.0
    %1181 = vmatprep.mubr.f32.mxu0 0.0
    %1182 = vmatmul.mubr.f32.gmra.mrb[0].mxu0 %v509
    %v1183 = vpop.f32.mrb[0].mxu0
    %v1184 = vadd.f32 %v506, %v1183
    %v1185 = vpop.f32.mrb[0].mxu0
    %v1186 = vadd.f32 %v506, %v1185
    %1187 = vdwg.mxu0
    %v1188 = vtanh.pop %v1184
    %v1189 = vtanh.pop %v1186
    %v1190 = vmul.f32 %v1188, 0.083333336
    %v1191 = vmul.f32 %v1189, 0.083333336
    %v1194 = vcombine.low %v1190, %v1191
    %v1196 = vadd.f32 %v893, %v1194
    %v1197 = vmul.f32 %v1188, 0.25
    %v1198 = vmul.f32 %v1189, 0.25
    %v1201 = vcombine.low %v1197, %v1198
    %v1203 = vadd.f32 %v63, %v1201
    %v1205 = vcombine.high %v1203, %v1203
    %v1206 = vsel %vm255, %v1203, 0
    %v1208 = vsel %vm255, %v1205, 0
    %1210 = vmatprep.subr.mxu0 %v1208
    %1211 = vmatpush1.msra.mxu0 %v1206
    %1212 = vmatprep.subr.mxu0 0.0
    %1213 = vmatpush1.msra.mxu0 0.0
    %1214 = vmatprep.subr.mxu0 0.0
    %1215 = vmatpush1.msra.mxu0 0.0
    %1216 = vmatprep.subr.mxu0 0.0
    %1217 = vmatpush1.msra.mxu0 0.0
    %1218 = vmatprep.subr.mxu0 0.0
    %1219 = vmatpush1.msra.mxu0 0.0
    %1220 = vmatprep.subr.mxu0 0.0
    %1221 = vmatpush1.msra.mxu0 0.0
    %1222 = vmatprep.subr.mxu0 0.0
    %1223 = vmatpush1.msra.mxu0 0.0
    %1224 = vmatprep.subr.mxu0 0.0
    %1225 = vmatpush1.msra.mxu0 0.0
    %1226 = vmatprep.subr.mxu0 0.0
    %1227 = vmatpush1.msra.mxu0 0.0
    %1228 = vmatprep.subr.mxu0 0.0
    %1229 = vmatpush1.msra.mxu0 0.0
    %1230 = vmatprep.subr.mxu0 0.0
    %1231 = vmatpush1.msra.mxu0 0.0
    %1232 = vmatprep.subr.mxu0 0.0
    %1233 = vmatpush1.msra.mxu0 0.0
    %1234 = vmatprep.subr.mxu0 0.0
    %1235 = vmatpush1.msra.mxu0 0.0
    %1236 = vmatprep.subr.mxu0 0.0
    %1237 = vmatpush1.msra.mxu0 0.0
    %1238 = vmatprep.subr.mxu0 0.0
    %1239 = vmatpush1.msra.mxu0 0.0
    %1240 = vmatprep.subr.mxu0 0.0
    %1241 = vmatpush1.msra.mxu0 0.0
    %1242 = vmatprep.subr.mxu0 0.0
    %1243 = vmatpush1.msra.mxu0 0.0
    %1244 = vmatprep.subr.mxu0 0.0
    %1245 = vmatpush1.msra.mxu0 0.0
    %1246 = vmatprep.subr.mxu0 0.0
    %1247 = vmatpush1.msra.mxu0 0.0
    %1248 = vmatprep.subr.mxu0 0.0
    %1249 = vmatpush1.msra.mxu0 0.0
    %1250 = vmatprep.subr.mxu0 0.0
    %1251 = vmatpush1.msra.mxu0 0.0
    %1252 = vmatprep.subr.mxu0 0.0
    %1253 = vmatpush1.msra.mxu0 0.0
    %1254 = vmatprep.subr.mxu0 0.0
    %1255 = vmatpush1.msra.mxu0 0.0
    %1256 = vmatprep.subr.mxu0 0.0
    %1257 = vmatpush1.msra.mxu0 0.0
    %1258 = vmatprep.subr.mxu0 0.0
    %1259 = vmatpush1.msra.mxu0 0.0
    %1260 = vmatprep.subr.mxu0 0.0
    %1261 = vmatpush1.msra.mxu0 0.0
    %1262 = vmatprep.subr.mxu0 0.0
    %1263 = vmatpush1.msra.mxu0 0.0
    %1264 = vmatprep.subr.mxu0 0.0
    %1265 = vmatpush1.msra.mxu0 0.0
    %1266 = vmatprep.subr.mxu0 0.0
    %1267 = vmatpush1.msra.mxu0 0.0
    %1268 = vmatprep.subr.mxu0 0.0
    %1269 = vmatpush1.msra.mxu0 0.0
    %1270 = vmatprep.subr.mxu0 0.0
    %1271 = vmatpush1.msra.mxu0 0.0
    %1272 = vmatprep.subr.mxu0 0.0
    %1273 = vmatpush1.msra.mxu0 0.0
    %1274 = vmatprep.mubr.f32.mxu0 0.0
    %1275 = vmatmul.mubr.f32.gmra.mrb[0].mxu0 %v244
    %v1276 = vpop.f32.mrb[0].mxu0
    %v1277 = vadd.f32 %v223, %v1276
    %v1278 = vpop.f32.mrb[0].mxu0
    %v1279 = vadd.f32 %v223, %v1278
    %1280 = vmatprep.mubr.f32.mxu0 0.0
    %1281 = vmatmul.mubr.f32.gmra.mrb[0].mxu0 %v247
    %v1282 = vpop.f32.mrb[0].mxu0
    %v1283 = vadd.f32 %v228, %v1282
    %v1284 = vpop.f32.mrb[0].mxu0
    %v1285 = vadd.f32 %v228, %v1284
    %1286 = vmatprep.mubr.f32.mxu0 0.0
    %1287 = vmatmul.mubr.f32.gmra.mrb[0].mxu0 %v250
    %v1288 = vpop.f32.mrb[0].mxu0
    %v1289 = vadd.f32 %v233, %v1288
    %v1290 = vpop.f32.mrb[0].mxu0
    %v1291 = vadd.f32 %v233, %v1290
    %1292 = vmatprep.mubr.f32.mxu0 0.0
    %1293 = vmatmul.mubr.f32.gmra.mrb[0].mxu0 %v253
    %v1294 = vpop.f32.mrb[0].mxu0
    %v1295 = vadd.f32 %v238, %v1294
    %v1296 = vpop.f32.mrb[0].mxu0
    %v1297 = vadd.f32 %v238, %v1296
    %1298 = vdwg.mxu0
    %v1299 = vmax.f32 %v1277, 0.0
    %v1300 = vmax.f32 %v1279, 0.0
    %v1301 = vmax.f32 %v1283, 0.0
    %v1302 = vmax.f32 %v1285, 0.0
    %v1303 = vmax.f32 %v1289, 0.0
    %v1304 = vmax.f32 %v1291, 0.0
    %v1305 = vmax.f32 %v1295, 0.0
    %v1306 = vmax.f32 %v1297, 0.0
    %v1307 = vmul.f32 %v1299, %v212
    %v1308 = vmul.f32 %v1300, %v213
    %v1309 = vmul.f32 %v1301, %v214
    %v1310 = vmul.f32 %v1302, %v215
    %v1311 = vmul.f32 %v1303, %v216
    %v1312 = vmul.f32 %v1304, %v217
    %v1313 = vmul.f32 %v1305, %v218
    %v1314 = vmul.f32 %v1306, %v219
    %1315 = vmatprep.subr.mxu0 %v1308
    %1316 = vmatpush1.msra.mxu0 %v1307
    %1317 = vmatprep.subr.mxu0 %v1310
    %1318 = vmatpush1.msra.mxu0 %v1309
    %1319 = vmatprep.subr.mxu0 %v1312
    %1320 = vmatpush1.msra.mxu0 %v1311
    %1321 = vmatprep.subr.mxu0 %v1314
    %1322 = vmatpush1.msra.mxu0 %v1313
    %1323 = vmatprep.subr.mxu0 0.0
    %1324 = vmatpush1.msra.mxu0 0.0
    %1325 = vmatprep.subr.mxu0 0.0
    %1326 = vmatpush1.msra.mxu0 0.0
    %1327 = vmatprep.subr.mxu0 0.0
    %1328 = vmatpush1.msra.mxu0 0.0
    %1329 = vmatprep.subr.mxu0 0.0
    %1330 = vmatpush1.msra.mxu0 0.0
    %1331 = vmatprep.subr.mxu0 0.0
    %1332 = vmatpush1.msra.mxu0 0.0
    %1333 = vmatprep.subr.mxu0 0.0
    %1334 = vmatpush1.msra.mxu0 0.0
    %1335 = vmatprep.subr.mxu0 0.0
    %1336 = vmatpush1.msra.mxu0 0.0
    %1337 = vmatprep.subr.mxu0 0.0
    %1338 = vmatpush1.msra.mxu0 0.0
    %1339 = vmatprep.subr.mxu0 0.0
    %1340 = vmatpush1.msra.mxu0 0.0
    %1341 = vmatprep.subr.mxu0 0.0
    %1342 = vmatpush1.msra.mxu0 0.0
    %1343 = vmatprep.subr.mxu0 0.0
    %1344 = vmatpush1.msra.mxu0 0.0
    %1345 = vmatprep.subr.mxu0 0.0
    %1346 = vmatpush1.msra.mxu0 0.0
    %1347 = vmatprep.subr.mxu0 0.0
    %1348 = vmatpush1.msra.mxu0 0.0
    %1349 = vmatprep.subr.mxu0 0.0
    %1350 = vmatpush1.msra.mxu0 0.0
    %1351 = vmatprep.subr.mxu0 0.0
    %1352 = vmatpush1.msra.mxu0 0.0
    %1353 = vmatprep.subr.mxu0 0.0
    %1354 = vmatpush1.msra.mxu0 0.0
    %1355 = vmatprep.subr.mxu0 0.0
    %1356 = vmatpush1.msra.mxu0 0.0
    %1357 = vmatprep.subr.mxu0 0.0
    %1358 = vmatpush1.msra.mxu0 0.0
    %1359 = vmatprep.subr.mxu0 0.0
    %1360 = vmatpush1.msra.mxu0 0.0
    %1361 = vmatprep.subr.mxu0 0.0
    %1362 = vmatpush1.msra.mxu0 0.0
    %1363 = vmatprep.subr.mxu0 0.0
    %1364 = vmatpush1.msra.mxu0 0.0
    %1365 = vmatprep.subr.mxu0 0.0
    %1366 = vmatpush1.msra.mxu0 0.0
    %1367 = vmatprep.subr.mxu0 0.0
    %1368 = vmatpush1.msra.mxu0 0.0
    %1369 = vmatprep.subr.mxu0 0.0
    %1370 = vmatpush1.msra.mxu0 0.0
    %1371 = vmatprep.subr.mxu0 0.0
    %1372 = vmatpush1.msra.mxu0 0.0
    %1373 = vmatprep.subr.mxu0 0.0
    %1374 = vmatpush1.msra.mxu0 0.0
    %1375 = vmatprep.subr.mxu0 0.0
    %1376 = vmatpush1.msra.mxu0 0.0
    %1377 = vmatprep.subr.mxu0 0.0
    %1378 = vmatpush1.msra.mxu0 0.0
    %1379 = vmatprep.mubr.f32.mxu0 0.0
    %1380 = vmatmul.mubr.f32.gmra.mrb[0].mxu0 %v387
    %v1381 = vpop.f32.mrb[0].mxu0
    %v1382 = vadd.f32 %v368, %v1381
    %v1383 = vpop.f32.mrb[0].mxu0
    %v1384 = vadd.f32 %v368, %v1383
    %1385 = vmatprep.mubr.f32.mxu0 0.0
    %1386 = vmatmul.mubr.f32.gmra.mrb[0].mxu0 %v390
    %v1387 = vpop.f32.mrb[0].mxu0
    %v1388 = vadd.f32 %v373, %v1387
    %v1389 = vpop.f32.mrb[0].mxu0
    %v1390 = vadd.f32 %v373, %v1389
    %1391 = vmatprep.mubr.f32.mxu0 0.0
    %1392 = vmatmul.mubr.f32.gmra.mrb[0].mxu0 %v393
    %v1393 = vpop.f32.mrb[0].mxu0
    %v1394 = vadd.f32 %v378, %v1393
    %v1395 = vpop.f32.mrb[0].mxu0
    %v1396 = vadd.f32 %v378, %v1395
    %1397 = vmatprep.mubr.f32.mxu0 0.0
    %1398 = vmatmul.mubr.f32.gmra.mrb[0].mxu0 %v396
    %v1399 = vpop.f32.mrb[0].mxu0
    %v1400 = vadd.f32 %v383, %v1399
    %v1401 = vpop.f32.mrb[0].mxu0
    %v1402 = vadd.f32 %v383, %v1401
    %1403 = vdwg.mxu0
    %v1404 = vmax.f32 %v1382, 0.0
    %v1405 = vmax.f32 %v1384, 0.0
    %v1406 = vmax.f32 %v1388, 0.0
    %v1407 = vmax.f32 %v1390, 0.0
    %v1408 = vmax.f32 %v1394, 0.0
    %v1409 = vmax.f32 %v1396, 0.0
    %v1410 = vmax.f32 %v1400, 0.0
    %v1411 = vmax.f32 %v1402, 0.0
    %v1412 = vadd.f32 %v1404, %v1307
    %v1413 = vadd.f32 %v1405, %v1308
    %v1414 = vadd.f32 %v1406, %v1309
    %v1415 = vadd.f32 %v1407, %v1310
    %v1416 = vadd.f32 %v1408, %v1311
    %v1417 = vadd.f32 %v1409, %v1312
    %v1418 = vadd.f32 %v1410, %v1313
    %v1419 = vadd.f32 %v1411, %v1314
    %1420 = vmatprep.subr.mxu0 %v1413
    %1421 = vmatpush1.msra.mxu0 %v1412
    %1422 = vmatprep.subr.mxu0 %v1415
    %1423 = vmatpush1.msra.mxu0 %v1414
    %1424 = vmatprep.subr.mxu0 %v1417
    %1425 = vmatpush1.msra.mxu0 %v1416
    %1426 = vmatprep.subr.mxu0 %v1419
    %1427 = vmatpush1.msra.mxu0 %v1418
    %1428 = vmatprep.subr.mxu0 0.0
    %1429 = vmatpush1.msra.mxu0 0.0
    %1430 = vmatprep.subr.mxu0 0.0
    %1431 = vmatpush1.msra.mxu0 0.0
    %1432 = vmatprep.subr.mxu0 0.0
    %1433 = vmatpush1.msra.mxu0 0.0
    %1434 = vmatprep.subr.mxu0 0.0
    %1435 = vmatpush1.msra.mxu0 0.0
    %1436 = vmatprep.subr.mxu0 0.0
    %1437 = vmatpush1.msra.mxu0 0.0
    %1438 = vmatprep.subr.mxu0 0.0
    %1439 = vmatpush1.msra.mxu0 0.0
    %1440 = vmatprep.subr.mxu0 0.0
    %1441 = vmatpush1.msra.mxu0 0.0
    %1442 = vmatprep.subr.mxu0 0.0
    %1443 = vmatpush1.msra.mxu0 0.0
    %1444 = vmatprep.subr.mxu0 0.0
    %1445 = vmatpush1.msra.mxu0 0.0
    %1446 = vmatprep.subr.mxu0 0.0
    %1447 = vmatpush1.msra.mxu0 0.0
    %1448 = vmatprep.subr.mxu0 0.0
    %1449 = vmatpush1.msra.mxu0 0.0
    %1450 = vmatprep.subr.mxu0 0.0
    %1451 = vmatpush1.msra.mxu0 0.0
    %1452 = vmatprep.subr.mxu0 0.0
    %1453 = vmatpush1.msra.mxu0 0.0
    %1454 = vmatprep.subr.mxu0 0.0
    %1455 = vmatpush1.msra.mxu0 0.0
    %1456 = vmatprep.subr.mxu0 0.0
    %1457 = vmatpush1.msra.mxu0 0.0
    %1458 = vmatprep.subr.mxu0 0.0
    %1459 = vmatpush1.msra.mxu0 0.0
    %1460 = vmatprep.subr.mxu0 0.0
    %1461 = vmatpush1.msra.mxu0 0.0
    %1462 = vmatprep.subr.mxu0 0.0
    %1463 = vmatpush1.msra.mxu0 0.0
    %1464 = vmatprep.subr.mxu0 0.0
    %1465 = vmatpush1.msra.mxu0 0.0
    %1466 = vmatprep.subr.mxu0 0.0
    %1467 = vmatpush1.msra.mxu0 0.0
    %1468 = vmatprep.subr.mxu0 0.0
    %1469 = vmatpush1.msra.mxu0 0.0
    %1470 = vmatprep.subr.mxu0 0.0
    %1471 = vmatpush1.msra.mxu0 0.0
    %1472 = vmatprep.subr.mxu0 0.0
    %1473 = vmatpush1.msra.mxu0 0.0
    %1474 = vmatprep.subr.mxu0 0.0
    %1475 = vmatpush1.msra.mxu0 0.0
    %1476 = vmatprep.subr.mxu0 0.0
    %1477 = vmatpush1.msra.mxu0 0.0
    %1478 = vmatprep.subr.mxu0 0.0
    %1479 = vmatpush1.msra.mxu0 0.0
    %1480 = vmatprep.subr.mxu0 0.0
    %1481 = vmatpush1.msra.mxu0 0.0
    %1482 = vmatprep.subr.mxu0 0.0
    %1483 = vmatpush1.msra.mxu0 0.0
    %1484 = vmatprep.mubr.f32.mxu0 0.0
    %1485 = vmatmul.mubr.f32.gmra.mrb[0].mxu0 %v509
    %v1486 = vpop.f32.mrb[0].mxu0
    %v1487 = vadd.f32 %v506, %v1486
    %v1488 = vpop.f32.mrb[0].mxu0
    %v1489 = vadd.f32 %v506, %v1488
    %1490 = vdwg.mxu0
    %v1491 = vtanh.pop %v1487
    %v1492 = vtanh.pop %v1489
    %v1493 = vmul.f32 %v1491, 0.041666668
    %v1494 = vmul.f32 %v1492, 0.041666668
    %v1497 = vcombine.low %v1493, %v1494
    %v1499 = vadd.f32 %v1196, %v1497
    %s1500 = scalar_lea.vmem %s2, 32
    %v1501 = vld [vmem:[%s1500] sm:$0xff]
    %v1502 = vld [vmem:[%s1500 + $0x8] sm:$0xff]
    %v1503 = vld [vmem:[%s1500 + $0x10] sm:$0xff]
    %v1504 = vld [vmem:[%s1500 + $0x18] sm:$0xff]
    %s1505 = scalar_lea.vmem %s3, 32
    %v1506 = vld [vmem:[%s1505] sm:$0xff]
    %v1507 = vld [vmem:[%s1505 + $0x8] sm:$0xff]
    %v1508 = vld [vmem:[%s1505 + $0x10] sm:$0xff]
    %v1509 = vld [vmem:[%s1505 + $0x18] sm:$0xff]
    %s1510 = scalar_lea.vmem %s4, 32
    %v1511 = vld [vmem:[%s1510] sm:$0xff]
    %v1512 = vld [vmem:[%s1510 + $0x8] sm:$0xff]
    %v1513 = vld [vmem:[%s1510 + $0x10] sm:$0xff]
    %v1514 = vld [vmem:[%s1510 + $0x18] sm:$0xff]
    %s1515 = scalar_lea.vmem %s5, 32
    %v1516 = vld [vmem:[%s1515] sm:$0xff]
    %v1517 = vld [vmem:[%s1515 + $0x8] sm:$0xff]
    %v1518 = vld [vmem:[%s1515 + $0x10] sm:$0xff]
    %v1519 = vld [vmem:[%s1515 + $0x18] sm:$0xff]
    %s1520 = scalar_lea.vmem %s6, 32
    %v1521 = vld [vmem:[%s1520] sm:$0xff]
    %v1522 = vld [vmem:[%s1520 + $0x8] sm:$0xff]
    %v1523 = vld [vmem:[%s1520 + $0x10] sm:$0xff]
    %v1524 = vld [vmem:[%s1520 + $0x18] sm:$0xff]
    %s1525 = scalar_lea.vmem %s7, 32
    %v1526 = vld [vmem:[%s1525] sm:$0xff]
    %v1527 = vld [vmem:[%s1525 + $0x8] sm:$0xff]
    %v1528 = vld [vmem:[%s1525 + $0x10] sm:$0xff]
    %v1529 = vld [vmem:[%s1525 + $0x18] sm:$0xff]
    %s1530 = scalar_lea.vmem %s8, 4
    %v1531 = vld [vmem:[%s1530] sm:$0x7]
    %s1532 = scalar_lea.vmem %s9, 4
    %v1533 = vld [vmem:[%s1532] sm:$0x7]
    %1535 = vset.pattern.permute.xlu0 0
    %1536 = vperm.xlu0 %1535, %v1516
    %v1537 = vpop.permute.xlu0 %1536
    %1540 = vset.pattern.permute.xlu0 0
    %1541 = vperm.xlu0 %1540, %v1517
    %v1542 = vpop.permute.xlu0 %1541
    %1545 = vset.pattern.permute.xlu0 0
    %1546 = vperm.xlu0 %1545, %v1518
    %v1547 = vpop.permute.xlu0 %1546
    %1550 = vset.pattern.permute.xlu0 0
    %1551 = vperm.xlu0 %1550, %v1519
    %v1552 = vpop.permute.xlu0 %1551
    %v1555 = vsel %vm110, %v1511, 0
    %v1558 = vsel %vm110, %v1512, 0
    %v1561 = vsel %vm110, %v1513, 0
    %v1564 = vsel %vm110, %v1514, 0
    %1566 = vmatprep.subr.mxu0 %v60
    %1567 = vmatpush1.msra.mxu0 %v59
    %1568 = vmatprep.subr.mxu0 %v62
    %1569 = vmatpush1.msra.mxu0 %v61
    %1570 = vmatprep.subr.mxu0 0.0
    %1571 = vmatpush1.msra.mxu0 0.0
    %1572 = vmatprep.subr.mxu0 0.0
    %1573 = vmatpush1.msra.mxu0 0.0
    %1574 = vmatprep.subr.mxu0 0.0
    %1575 = vmatpush1.msra.mxu0 0.0
    %1576 = vmatprep.subr.mxu0 0.0
    %1577 = vmatpush1.msra.mxu0 0.0
    %1578 = vmatprep.subr.mxu0 0.0
    %1579 = vmatpush1.msra.mxu0 0.0
    %1580 = vmatprep.subr.mxu0 0.0
    %1581 = vmatpush1.msra.mxu0 0.0
    %1582 = vmatprep.subr.mxu0 0.0
    %1583 = vmatpush1.msra.mxu0 0.0
    %1584 = vmatprep.subr.mxu0 0.0
    %1585 = vmatpush1.msra.mxu0 0.0
    %1586 = vmatprep.subr.mxu0 0.0
    %1587 = vmatpush1.msra.mxu0 0.0
    %1588 = vmatprep.subr.mxu0 0.0
    %1589 = vmatpush1.msra.mxu0 0.0
    %1590 = vmatprep.subr.mxu0 0.0
    %1591 = vmatpush1.msra.mxu0 0.0
    %1592 = vmatprep.subr.mxu0 0.0
    %1593 = vmatpush1.msra.mxu0 0.0
    %1594 = vmatprep.subr.mxu0 0.0
    %1595 = vmatpush1.msra.mxu0 0.0
    %1596 = vmatprep.subr.mxu0 0.0
    %1597 = vmatpush1.msra.mxu0 0.0
    %1598 = vmatprep.subr.mxu0 0.0
    %1599 = vmatpush1.msra.mxu0 0.0
    %1600 = vmatprep.subr.mxu0 0.0
    %1601 = vmatpush1.msra.mxu0 0.0
    %1602 = vmatprep.subr.mxu0 0.0
    %1603 = vmatpush1.msra.mxu0 0.0
    %1604 = vmatprep.subr.mxu0 0.0
    %1605 = vmatpush1.msra.mxu0 0.0
    %1606 = vmatprep.subr.mxu0 0.0
    %1607 = vmatpush1.msra.mxu0 0.0
    %1608 = vmatprep.subr.mxu0 0.0
    %1609 = vmatpush1.msra.mxu0 0.0
    %1610 = vmatprep.subr.mxu0 0.0
    %1611 = vmatpush1.msra.mxu0 0.0
    %1612 = vmatprep.subr.mxu0 0.0
    %1613 = vmatpush1.msra.mxu0 0.0
    %1614 = vmatprep.subr.mxu0 0.0
    %1615 = vmatpush1.msra.mxu0 0.0
    %1616 = vmatprep.subr.mxu0 0.0
    %1617 = vmatpush1.msra.mxu0 0.0
    %1618 = vmatprep.subr.mxu0 0.0
    %1619 = vmatpush1.msra.mxu0 0.0
    %1620 = vmatprep.subr.mxu0 0.0
    %1621 = vmatpush1.msra.mxu0 0.0
    %1622 = vmatprep.subr.mxu0 0.0
    %1623 = vmatpush1.msra.mxu0 0.0
    %1624 = vmatprep.subr.mxu0 0.0
    %1625 = vmatpush1.msra.mxu0 0.0
    %1626 = vmatprep.subr.mxu0 0.0
    %1627 = vmatpush1.msra.mxu0 0.0
    %1628 = vmatprep.subr.mxu0 0.0
    %1629 = vmatpush1.msra.mxu0 0.0
    %1630 = vmatprep.mubr.f32.mxu0 0.0
    %1631 = vmatmul.mubr.f32.gmra.mrb[0].mxu0 %v1555
    %v1632 = vpop.f32.mrb[0].mxu0
    %v1633 = vadd.f32 %v1537, %v1632
    %v1634 = vpop.f32.mrb[0].mxu0
    %v1635 = vadd.f32 %v1537, %v1634
    %1636 = vmatprep.mubr.f32.mxu0 0.0
    %1637 = vmatmul.mubr.f32.gmra.mrb[0].mxu0 %v1558
    %v1638 = vpop.f32.mrb[0].mxu0
    %v1639 = vadd.f32 %v1542, %v1638
    %v1640 = vpop.f32.mrb[0].mxu0
    %v1641 = vadd.f32 %v1542, %v1640
    %1642 = vmatprep.mubr.f32.mxu0 0.0
    %1643 = vmatmul.mubr.f32.gmra.mrb[0].mxu0 %v1561
    %v1644 = vpop.f32.mrb[0].mxu0
    %v1645 = vadd.f32 %v1547, %v1644
    %v1646 = vpop.f32.mrb[0].mxu0
    %v1647 = vadd.f32 %v1547, %v1646
    %1648 = vmatprep.mubr.f32.mxu0 0.0
    %1649 = vmatmul.mubr.f32.gmra.mrb[0].mxu0 %v1564
    %v1650 = vpop.f32.mrb[0].mxu0
    %v1651 = vadd.f32 %v1552, %v1650
    %v1652 = vpop.f32.mrb[0].mxu0
    %v1653 = vadd.f32 %v1552, %v1652
    %1654 = vdwg.mxu0
    %v1655 = vtanh.pop %v1633
    %v1656 = vtanh.pop %v1635
    %v1657 = vtanh.pop %v1639
    %v1658 = vtanh.pop %v1641
    %v1659 = vtanh.pop %v1645
    %v1660 = vtanh.pop %v1647
    %v1661 = vtanh.pop %v1651
    %v1662 = vtanh.pop %v1653
    %1664 = vset.pattern.permute.xlu0 0
    %1665 = vperm.xlu0 %1664, %v1506
    %v1666 = vpop.permute.xlu0 %1665
    %1669 = vset.pattern.permute.xlu0 0
    %1670 = vperm.xlu0 %1669, %v1507
    %v1671 = vpop.permute.xlu0 %1670
    %1674 = vset.pattern.permute.xlu0 0
    %1675 = vperm.xlu0 %1674, %v1508
    %v1676 = vpop.permute.xlu0 %1675
    %1679 = vset.pattern.permute.xlu0 0
    %1680 = vperm.xlu0 %1679, %v1509
    %v1681 = vpop.permute.xlu0 %1680
    %v1684 = vcombine.high %v1499, %v1499
    %v1686 = vsel %vm242, %v1501, 0
    %v1689 = vsel %vm242, %v1502, 0
    %v1692 = vsel %vm242, %v1503, 0
    %v1695 = vsel %vm242, %v1504, 0
    %v1697 = vsel %vm255, %v1499, 0
    %v1699 = vsel %vm255, %v1684, 0
    %1701 = vmatprep.subr.mxu0 %v1699
    %1702 = vmatpush1.msra.mxu0 %v1697
    %1703 = vmatprep.subr.mxu0 0.0
    %1704 = vmatpush1.msra.mxu0 0.0
    %1705 = vmatprep.subr.mxu0 0.0
    %1706 = vmatpush1.msra.mxu0 0.0
    %1707 = vmatprep.subr.mxu0 0.0
    %1708 = vmatpush1.msra.mxu0 0.0
    %1709 = vmatprep.subr.mxu0 0.0
    %1710 = vmatpush1.msra.mxu0 0.0
    %1711 = vmatprep.subr.mxu0 0.0
    %1712 = vmatpush1.msra.mxu0 0.0
    %1713 = vmatprep.subr.mxu0 0.0
    %1714 = vmatpush1.msra.mxu0 0.0
    %1715 = vmatprep.subr.mxu0 0.0
    %1716 = vmatpush1.msra.mxu0 0.0
    %1717 = vmatprep.subr.mxu0 0.0
    %1718 = vmatpush1.msra.mxu0 0.0
    %1719 = vmatprep.subr.mxu0 0.0
    %1720 = vmatpush1.msra.mxu0 0.0
    %1721 = vmatprep.subr.mxu0 0.0
    %1722 = vmatpush1.msra.mxu0 0.0
    %1723 = vmatprep.subr.mxu0 0.0
    %1724 = vmatpush1.msra.mxu0 0.0
    %1725 = vmatprep.subr.mxu0 0.0
    %1726 = vmatpush1.msra.mxu0 0.0
    %1727 = vmatprep.subr.mxu0 0.0
    %1728 = vmatpush1.msra.mxu0 0.0
    %1729 = vmatprep.subr.mxu0 0.0
    %1730 = vmatpush1.msra.mxu0 0.0
    %1731 = vmatprep.subr.mxu0 0.0
    %1732 = vmatpush1.msra.mxu0 0.0
    %1733 = vmatprep.subr.mxu0 0.0
    %1734 = vmatpush1.msra.mxu0 0.0
    %1735 = vmatprep.subr.mxu0 0.0
    %1736 = vmatpush1.msra.mxu0 0.0
    %1737 = vmatprep.subr.mxu0 0.0
    %1738 = vmatpush1.msra.mxu0 0.0
    %1739 = vmatprep.subr.mxu0 0.0
    %1740 = vmatpush1.msra.mxu0 0.0
    %1741 = vmatprep.subr.mxu0 0.0
    %1742 = vmatpush1.msra.mxu0 0.0
    %1743 = vmatprep.subr.mxu0 0.0
    %1744 = vmatpush1.msra.mxu0 0.0
    %1745 = vmatprep.subr.mxu0 0.0
    %1746 = vmatpush1.msra.mxu0 0.0
    %1747 = vmatprep.subr.mxu0 0.0
    %1748 = vmatpush1.msra.mxu0 0.0
    %1749 = vmatprep.subr.mxu0 0.0
    %1750 = vmatpush1.msra.mxu0 0.0
    %1751 = vmatprep.subr.mxu0 0.0
    %1752 = vmatpush1.msra.mxu0 0.0
    %1753 = vmatprep.subr.mxu0 0.0
    %1754 = vmatpush1.msra.mxu0 0.0
    %1755 = vmatprep.subr.mxu0 0.0
    %1756 = vmatpush1.msra.mxu0 0.0
    %1757 = vmatprep.subr.mxu0 0.0
    %1758 = vmatpush1.msra.mxu0 0.0
    %1759 = vmatprep.subr.mxu0 0.0
    %1760 = vmatpush1.msra.mxu0 0.0
    %1761 = vmatprep.subr.mxu0 0.0
    %1762 = vmatpush1.msra.mxu0 0.0
    %1763 = vmatprep.subr.mxu0 0.0
    %1764 = vmatpush1.msra.mxu0 0.0
    %1765 = vmatprep.mubr.f32.mxu0 0.0
    %1766 = vmatmul.mubr.f32.gmra.mrb[0].mxu0 %v1686
    %v1767 = vpop.f32.mrb[0].mxu0
    %v1768 = vadd.f32 %v1666, %v1767
    %v1769 = vpop.f32.mrb[0].mxu0
    %v1770 = vadd.f32 %v1666, %v1769
    %1771 = vmatprep.mubr.f32.mxu0 0.0
    %1772 = vmatmul.mubr.f32.gmra.mrb[0].mxu0 %v1689
    %v1773 = vpop.f32.mrb[0].mxu0
    %v1774 = vadd.f32 %v1671, %v1773
    %v1775 = vpop.f32.mrb[0].mxu0
    %v1776 = vadd.f32 %v1671, %v1775
    %1777 = vmatprep.mubr.f32.mxu0 0.0
    %1778 = vmatmul.mubr.f32.gmra.mrb[0].mxu0 %v1692
    %v1779 = vpop.f32.mrb[0].mxu0
    %v1780 = vadd.f32 %v1676, %v1779
    %v1781 = vpop.f32.mrb[0].mxu0
    %v1782 = vadd.f32 %v1676, %v1781
    %1783 = vmatprep.mubr.f32.mxu0 0.0
    %1784 = vmatmul.mubr.f32.gmra.mrb[0].mxu0 %v1695
    %v1785 = vpop.f32.mrb[0].mxu0
    %v1786 = vadd.f32 %v1681, %v1785
    %v1787 = vpop.f32.mrb[0].mxu0
    %v1788 = vadd.f32 %v1681, %v1787
    %1789 = vdwg.mxu0
    %v1790 = vmax.f32 %v1768, 0.0
    %v1791 = vmax.f32 %v1770, 0.0
    %v1792 = vmax.f32 %v1774, 0.0
    %v1793 = vmax.f32 %v1776, 0.0
    %v1794 = vmax.f32 %v1780, 0.0
    %v1795 = vmax.f32 %v1782, 0.0
    %v1796 = vmax.f32 %v1786, 0.0
    %v1797 = vmax.f32 %v1788, 0.0
    %v1798 = vmul.f32 %v1790, %v1655
    %v1799 = vmul.f32 %v1791, %v1656
    %v1800 = vmul.f32 %v1792, %v1657
    %v1801 = vmul.f32 %v1793, %v1658
    %v1802 = vmul.f32 %v1794, %v1659
    %v1803 = vmul.f32 %v1795, %v1660
    %v1804 = vmul.f32 %v1796, %v1661
    %v1805 = vmul.f32 %v1797, %v1662
    %1807 = vset.pattern.permute.xlu0 0
    %1808 = vperm.xlu0 %1807, %v1526
    %v1809 = vpop.permute.xlu0 %1808
    %1812 = vset.pattern.permute.xlu0 0
    %1813 = vperm.xlu0 %1812, %v1527
    %v1814 = vpop.permute.xlu0 %1813
    %1817 = vset.pattern.permute.xlu0 0
    %1818 = vperm.xlu0 %1817, %v1528
    %v1819 = vpop.permute.xlu0 %1818
    %1822 = vset.pattern.permute.xlu0 0
    %1823 = vperm.xlu0 %1822, %v1529
    %v1824 = vpop.permute.xlu0 %1823
    %v1827 = vsel %vm385, %v1521, 0
    %v1830 = vsel %vm385, %v1522, 0
    %v1833 = vsel %vm385, %v1523, 0
    %v1836 = vsel %vm385, %v1524, 0
    %1838 = vmatprep.subr.mxu0 %v1799
    %1839 = vmatpush1.msra.mxu0 %v1798
    %1840 = vmatprep.subr.mxu0 %v1801
    %1841 = vmatpush1.msra.mxu0 %v1800
    %1842 = vmatprep.subr.mxu0 %v1803
    %1843 = vmatpush1.msra.mxu0 %v1802
    %1844 = vmatprep.subr.mxu0 %v1805
    %1845 = vmatpush1.msra.mxu0 %v1804
    %1846 = vmatprep.subr.mxu0 0.0
    %1847 = vmatpush1.msra.mxu0 0.0
    %1848 = vmatprep.subr.mxu0 0.0
    %1849 = vmatpush1.msra.mxu0 0.0
    %1850 = vmatprep.subr.mxu0 0.0
    %1851 = vmatpush1.msra.mxu0 0.0
    %1852 = vmatprep.subr.mxu0 0.0
    %1853 = vmatpush1.msra.mxu0 0.0
    %1854 = vmatprep.subr.mxu0 0.0
    %1855 = vmatpush1.msra.mxu0 0.0
    %1856 = vmatprep.subr.mxu0 0.0
    %1857 = vmatpush1.msra.mxu0 0.0
    %1858 = vmatprep.subr.mxu0 0.0
    %1859 = vmatpush1.msra.mxu0 0.0
    %1860 = vmatprep.subr.mxu0 0.0
    %1861 = vmatpush1.msra.mxu0 0.0
    %1862 = vmatprep.subr.mxu0 0.0
    %1863 = vmatpush1.msra.mxu0 0.0
    %1864 = vmatprep.subr.mxu0 0.0
    %1865 = vmatpush1.msra.mxu0 0.0
    %1866 = vmatprep.subr.mxu0 0.0
    %1867 = vmatpush1.msra.mxu0 0.0
    %1868 = vmatprep.subr.mxu0 0.0
    %1869 = vmatpush1.msra.mxu0 0.0
    %1870 = vmatprep.subr.mxu0 0.0
    %1871 = vmatpush1.msra.mxu0 0.0
    %1872 = vmatprep.subr.mxu0 0.0
    %1873 = vmatpush1.msra.mxu0 0.0
    %1874 = vmatprep.subr.mxu0 0.0
    %1875 = vmatpush1.msra.mxu0 0.0
    %1876 = vmatprep.subr.mxu0 0.0
    %1877 = vmatpush1.msra.mxu0 0.0
    %1878 = vmatprep.subr.mxu0 0.0
    %1879 = vmatpush1.msra.mxu0 0.0
    %1880 = vmatprep.subr.mxu0 0.0
    %1881 = vmatpush1.msra.mxu0 0.0
    %1882 = vmatprep.subr.mxu0 0.0
    %1883 = vmatpush1.msra.mxu0 0.0
    %1884 = vmatprep.subr.mxu0 0.0
    %1885 = vmatpush1.msra.mxu0 0.0
    %1886 = vmatprep.subr.mxu0 0.0
    %1887 = vmatpush1.msra.mxu0 0.0
    %1888 = vmatprep.subr.mxu0 0.0
    %1889 = vmatpush1.msra.mxu0 0.0
    %1890 = vmatprep.subr.mxu0 0.0
    %1891 = vmatpush1.msra.mxu0 0.0
    %1892 = vmatprep.subr.mxu0 0.0
    %1893 = vmatpush1.msra.mxu0 0.0
    %1894 = vmatprep.subr.mxu0 0.0
    %1895 = vmatpush1.msra.mxu0 0.0
    %1896 = vmatprep.subr.mxu0 0.0
    %1897 = vmatpush1.msra.mxu0 0.0
    %1898 = vmatprep.subr.mxu0 0.0
    %1899 = vmatpush1.msra.mxu0 0.0
    %1900 = vmatprep.subr.mxu0 0.0
    %1901 = vmatpush1.msra.mxu0 0.0
    %1902 = vmatprep.mubr.f32.mxu0 0.0
    %1903 = vmatmul.mubr.f32.gmra.mrb[0].mxu0 %v1827
    %v1904 = vpop.f32.mrb[0].mxu0
    %v1905 = vadd.f32 %v1809, %v1904
    %v1906 = vpop.f32.mrb[0].mxu0
    %v1907 = vadd.f32 %v1809, %v1906
    %1908 = vmatprep.mubr.f32.mxu0 0.0
    %1909 = vmatmul.mubr.f32.gmra.mrb[0].mxu0 %v1830
    %v1910 = vpop.f32.mrb[0].mxu0
    %v1911 = vadd.f32 %v1814, %v1910
    %v1912 = vpop.f32.mrb[0].mxu0
    %v1913 = vadd.f32 %v1814, %v1912
    %1914 = vmatprep.mubr.f32.mxu0 0.0
    %1915 = vmatmul.mubr.f32.gmra.mrb[0].mxu0 %v1833
    %v1916 = vpop.f32.mrb[0].mxu0
    %v1917 = vadd.f32 %v1819, %v1916
    %v1918 = vpop.f32.mrb[0].mxu0
    %v1919 = vadd.f32 %v1819, %v1918
    %1920 = vmatprep.mubr.f32.mxu0 0.0
    %1921 = vmatmul.mubr.f32.gmra.mrb[0].mxu0 %v1836
    %v1922 = vpop.f32.mrb[0].mxu0
    %v1923 = vadd.f32 %v1824, %v1922
    %v1924 = vpop.f32.mrb[0].mxu0
    %v1925 = vadd.f32 %v1824, %v1924
    %1926 = vdwg.mxu0
    %v1927 = vmax.f32 %v1905, 0.0
    %v1928 = vmax.f32 %v1907, 0.0
    %v1929 = vmax.f32 %v1911, 0.0
    %v1930 = vmax.f32 %v1913, 0.0
    %v1931 = vmax.f32 %v1917, 0.0
    %v1932 = vmax.f32 %v1919, 0.0
    %v1933 = vmax.f32 %v1923, 0.0
    %v1934 = vmax.f32 %v1925, 0.0
    %v1935 = vadd.f32 %v1927, %v1798
    %v1936 = vadd.f32 %v1928, %v1799
    %v1937 = vadd.f32 %v1929, %v1800
    %v1938 = vadd.f32 %v1930, %v1801
    %v1939 = vadd.f32 %v1931, %v1802
    %v1940 = vadd.f32 %v1932, %v1803
    %v1941 = vadd.f32 %v1933, %v1804
    %v1942 = vadd.f32 %v1934, %v1805
    %1944 = vset.pattern.permute.xlu0 0
    %1945 = vperm.xlu0 %1944, %v1533
    %v1946 = vpop.permute.xlu0 %1945
    %v1949 = vsel %vm385, %v1531, 0
    %1951 = vmatprep.subr.mxu0 %v1936
    %1952 = vmatpush1.msra.mxu0 %v1935
    %1953 = vmatprep.subr.mxu0 %v1938
    %1954 = vmatpush1.msra.mxu0 %v1937
    %1955 = vmatprep.subr.mxu0 %v1940
    %1956 = vmatpush1.msra.mxu0 %v1939
    %1957 = vmatprep.subr.mxu0 %v1942
    %1958 = vmatpush1.msra.mxu0 %v1941
    %1959 = vmatprep.subr.mxu0 0.0
    %1960 = vmatpush1.msra.mxu0 0.0
    %1961 = vmatprep.subr.mxu0 0.0
    %1962 = vmatpush1.msra.mxu0 0.0
    %1963 = vmatprep.subr.mxu0 0.0
    %1964 = vmatpush1.msra.mxu0 0.0
    %1965 = vmatprep.subr.mxu0 0.0
    %1966 = vmatpush1.msra.mxu0 0.0
    %1967 = vmatprep.subr.mxu0 0.0
    %1968 = vmatpush1.msra.mxu0 0.0
    %1969 = vmatprep.subr.mxu0 0.0
    %1970 = vmatpush1.msra.mxu0 0.0
    %1971 = vmatprep.subr.mxu0 0.0
    %1972 = vmatpush1.msra.mxu0 0.0
    %1973 = vmatprep.subr.mxu0 0.0
    %1974 = vmatpush1.msra.mxu0 0.0
    %1975 = vmatprep.subr.mxu0 0.0
    %1976 = vmatpush1.msra.mxu0 0.0
    %1977 = vmatprep.subr.mxu0 0.0
    %1978 = vmatpush1.msra.mxu0 0.0
    %1979 = vmatprep.subr.mxu0 0.0
    %1980 = vmatpush1.msra.mxu0 0.0
    %1981 = vmatprep.subr.mxu0 0.0
    %1982 = vmatpush1.msra.mxu0 0.0
    %1983 = vmatprep.subr.mxu0 0.0
    %1984 = vmatpush1.msra.mxu0 0.0
    %1985 = vmatprep.subr.mxu0 0.0
    %1986 = vmatpush1.msra.mxu0 0.0
    %1987 = vmatprep.subr.mxu0 0.0
    %1988 = vmatpush1.msra.mxu0 0.0
    %1989 = vmatprep.subr.mxu0 0.0
    %1990 = vmatpush1.msra.mxu0 0.0
    %1991 = vmatprep.subr.mxu0 0.0
    %1992 = vmatpush1.msra.mxu0 0.0
    %1993 = vmatprep.subr.mxu0 0.0
    %1994 = vmatpush1.msra.mxu0 0.0
    %1995 = vmatprep.subr.mxu0 0.0
    %1996 = vmatpush1.msra.mxu0 0.0
    %1997 = vmatprep.subr.mxu0 0.0
    %1998 = vmatpush1.msra.mxu0 0.0
    %1999 = vmatprep.subr.mxu0 0.0
    %2000 = vmatpush1.msra.mxu0 0.0
    %2001 = vmatprep.subr.mxu0 0.0
    %2002 = vmatpush1.msra.mxu0 0.0
    %2003 = vmatprep.subr.mxu0 0.0
    %2004 = vmatpush1.msra.mxu0 0.0
    %2005 = vmatprep.subr.mxu0 0.0
    %2006 = vmatpush1.msra.mxu0 0.0
    %2007 = vmatprep.subr.mxu0 0.0
    %2008 = vmatpush1.msra.mxu0 0.0
    %2009 = vmatprep.subr.mxu0 0.0
    %2010 = vmatpush1.msra.mxu0 0.0
    %2011 = vmatprep.subr.mxu0 0.0
    %2012 = vmatpush1.msra.mxu0 0.0
    %2013 = vmatprep.subr.mxu0 0.0
    %2014 = vmatpush1.msra.mxu0 0.0
    %2015 = vmatprep.mubr.f32.mxu0 0.0
    %2016 = vmatmul.mubr.f32.gmra.mrb[0].mxu0 %v1949
    %v2017 = vpop.f32.mrb[0].mxu0
    %v2018 = vadd.f32 %v1946, %v2017
    %v2019 = vpop.f32.mrb[0].mxu0
    %v2020 = vadd.f32 %v1946, %v2019
    %2021 = vdwg.mxu0
    %v2022 = vtanh.pop %v2018
    %v2023 = vtanh.pop %v2020
    %v2024 = vmul.f32 %v2022, 0.041666668
    %v2025 = vmul.f32 %v2023, 0.041666668
    %v2028 = vcombine.low %v2024, %v2025
    %v2030 = vadd.f32 %v1499, %v2028
    %v2031 = vmul.f32 %v2022, 0.125
    %v2032 = vmul.f32 %v2023, 0.125
    %v2035 = vcombine.low %v2031, %v2032
    %v2037 = vadd.f32 %v1499, %v2035
    %v2039 = vcombine.high %v2037, %v2037
    %v2040 = vsel %vm255, %v2037, 0
    %v2042 = vsel %vm255, %v2039, 0
    %2044 = vmatprep.subr.mxu0 %v2042
    %2045 = vmatpush1.msra.mxu0 %v2040
    %2046 = vmatprep.subr.mxu0 0.0
    %2047 = vmatpush1.msra.mxu0 0.0
    %2048 = vmatprep.subr.mxu0 0.0
    %2049 = vmatpush1.msra.mxu0 0.0
    %2050 = vmatprep.subr.mxu0 0.0
    %2051 = vmatpush1.msra.mxu0 0.0
    %2052 = vmatprep.subr.mxu0 0.0
    %2053 = vmatpush1.msra.mxu0 0.0
    %2054 = vmatprep.subr.mxu0 0.0
    %2055 = vmatpush1.msra.mxu0 0.0
    %2056 = vmatprep.subr.mxu0 0.0
    %2057 = vmatpush1.msra.mxu0 0.0
    %2058 = vmatprep.subr.mxu0 0.0
    %2059 = vmatpush1.msra.mxu0 0.0
    %2060 = vmatprep.subr.mxu0 0.0
    %2061 = vmatpush1.msra.mxu0 0.0
    %2062 = vmatprep.subr.mxu0 0.0
    %2063 = vmatpush1.msra.mxu0 0.0
    %2064 = vmatprep.subr.mxu0 0.0
    %2065 = vmatpush1.msra.mxu0 0.0
    %2066 = vmatprep.subr.mxu0 0.0
    %2067 = vmatpush1.msra.mxu0 0.0
    %2068 = vmatprep.subr.mxu0 0.0
    %2069 = vmatpush1.msra.mxu0 0.0
    %2070 = vmatprep.subr.mxu0 0.0
    %2071 = vmatpush1.msra.mxu0 0.0
    %2072 = vmatprep.subr.mxu0 0.0
    %2073 = vmatpush1.msra.mxu0 0.0
    %2074 = vmatprep.subr.mxu0 0.0
    %2075 = vmatpush1.msra.mxu0 0.0
    %2076 = vmatprep.subr.mxu0 0.0
    %2077 = vmatpush1.msra.mxu0 0.0
    %2078 = vmatprep.subr.mxu0 0.0
    %2079 = vmatpush1.msra.mxu0 0.0
    %2080 = vmatprep.subr.mxu0 0.0
    %2081 = vmatpush1.msra.mxu0 0.0
    %2082 = vmatprep.subr.mxu0 0.0
    %2083 = vmatpush1.msra.mxu0 0.0
    %2084 = vmatprep.subr.mxu0 0.0
    %2085 = vmatpush1.msra.mxu0 0.0
    %2086 = vmatprep.subr.mxu0 0.0
    %2087 = vmatpush1.msra.mxu0 0.0
    %2088 = vmatprep.subr.mxu0 0.0
    %2089 = vmatpush1.msra.mxu0 0.0
    %2090 = vmatprep.subr.mxu0 0.0
    %2091 = vmatpush1.msra.mxu0 0.0
    %2092 = vmatprep.subr.mxu0 0.0
    %2093 = vmatpush1.msra.mxu0 0.0
    %2094 = vmatprep.subr.mxu0 0.0
    %2095 = vmatpush1.msra.mxu0 0.0
    %2096 = vmatprep.subr.mxu0 0.0
    %2097 = vmatpush1.msra.mxu0 0.0
    %2098 = vmatprep.subr.mxu0 0.0
    %2099 = vmatpush1.msra.mxu0 0.0
    %2100 = vmatprep.subr.mxu0 0.0
    %2101 = vmatpush1.msra.mxu0 0.0
    %2102 = vmatprep.subr.mxu0 0.0
    %2103 = vmatpush1.msra.mxu0 0.0
    %2104 = vmatprep.subr.mxu0 0.0
    %2105 = vmatpush1.msra.mxu0 0.0
    %2106 = vmatprep.subr.mxu0 0.0
    %2107 = vmatpush1.msra.mxu0 0.0
    %2108 = vmatprep.mubr.f32.mxu0 0.0
    %2109 = vmatmul.mubr.f32.gmra.mrb[0].mxu0 %v1686
    %v2110 = vpop.f32.mrb[0].mxu0
    %v2111 = vadd.f32 %v1666, %v2110
    %v2112 = vpop.f32.mrb[0].mxu0
    %v2113 = vadd.f32 %v1666, %v2112
    %2114 = vmatprep.mubr.f32.mxu0 0.0
    %2115 = vmatmul.mubr.f32.gmra.mrb[0].mxu0 %v1689
    %v2116 = vpop.f32.mrb[0].mxu0
    %v2117 = vadd.f32 %v1671, %v2116
    %v2118 = vpop.f32.mrb[0].mxu0
    %v2119 = vadd.f32 %v1671, %v2118
    %2120 = vmatprep.mubr.f32.mxu0 0.0
    %2121 = vmatmul.mubr.f32.gmra.mrb[0].mxu0 %v1692
    %v2122 = vpop.f32.mrb[0].mxu0
    %v2123 = vadd.f32 %v1676, %v2122
    %v2124 = vpop.f32.mrb[0].mxu0
    %v2125 = vadd.f32 %v1676, %v2124
    %2126 = vmatprep.mubr.f32.mxu0 0.0
    %2127 = vmatmul.mubr.f32.gmra.mrb[0].mxu0 %v1695
    %v2128 = vpop.f32.mrb[0].mxu0
    %v2129 = vadd.f32 %v1681, %v2128
    %v2130 = vpop.f32.mrb[0].mxu0
    %v2131 = vadd.f32 %v1681, %v2130
    %2132 = vdwg.mxu0
    %v2133 = vmax.f32 %v2111, 0.0
    %v2134 = vmax.f32 %v2113, 0.0
    %v2135 = vmax.f32 %v2117, 0.0
    %v2136 = vmax.f32 %v2119, 0.0
    %v2137 = vmax.f32 %v2123, 0.0
    %v2138 = vmax.f32 %v2125, 0.0
    %v2139 = vmax.f32 %v2129, 0.0
    %v2140 = vmax.f32 %v2131, 0.0
    %v2141 = vmul.f32 %v2133, %v1655
    %v2142 = vmul.f32 %v2134, %v1656
    %v2143 = vmul.f32 %v2135, %v1657
    %v2144 = vmul.f32 %v2136, %v1658
    %v2145 = vmul.f32 %v2137, %v1659
    %v2146 = vmul.f32 %v2138, %v1660
    %v2147 = vmul.f32 %v2139, %v1661
    %v2148 = vmul.f32 %v2140, %v1662
    %2149 = vmatprep.subr.mxu0 %v2142
    %2150 = vmatpush1.msra.mxu0 %v2141
    %2151 = vmatprep.subr.mxu0 %v2144
    %2152 = vmatpush1.msra.mxu0 %v2143
    %2153 = vmatprep.subr.mxu0 %v2146
    %2154 = vmatpush1.msra.mxu0 %v2145
    %2155 = vmatprep.subr.mxu0 %v2148
    %2156 = vmatpush1.msra.mxu0 %v2147
    %2157 = vmatprep.subr.mxu0 0.0
    %2158 = vmatpush1.msra.mxu0 0.0
    %2159 = vmatprep.subr.mxu0 0.0
    %2160 = vmatpush1.msra.mxu0 0.0
    %2161 = vmatprep.subr.mxu0 0.0
    %2162 = vmatpush1.msra.mxu0 0.0
    %2163 = vmatprep.subr.mxu0 0.0
    %2164 = vmatpush1.msra.mxu0 0.0
    %2165 = vmatprep.subr.mxu0 0.0
    %2166 = vmatpush1.msra.mxu0 0.0
    %2167 = vmatprep.subr.mxu0 0.0
    %2168 = vmatpush1.msra.mxu0 0.0
    %2169 = vmatprep.subr.mxu0 0.0
    %2170 = vmatpush1.msra.mxu0 0.0
    %2171 = vmatprep.subr.mxu0 0.0
    %2172 = vmatpush1.msra.mxu0 0.0
    %2173 = vmatprep.subr.mxu0 0.0
    %2174 = vmatpush1.msra.mxu0 0.0
    %2175 = vmatprep.subr.mxu0 0.0
    %2176 = vmatpush1.msra.mxu0 0.0
    %2177 = vmatprep.subr.mxu0 0.0
    %2178 = vmatpush1.msra.mxu0 0.0
    %2179 = vmatprep.subr.mxu0 0.0
    %2180 = vmatpush1.msra.mxu0 0.0
    %2181 = vmatprep.subr.mxu0 0.0
    %2182 = vmatpush1.msra.mxu0 0.0
    %2183 = vmatprep.subr.mxu0 0.0
    %2184 = vmatpush1.msra.mxu0 0.0
    %2185 = vmatprep.subr.mxu0 0.0
    %2186 = vmatpush1.msra.mxu0 0.0
    %2187 = vmatprep.subr.mxu0 0.0
    %2188 = vmatpush1.msra.mxu0 0.0
    %2189 = vmatprep.subr.mxu0 0.0
    %2190 = vmatpush1.msra.mxu0 0.0
    %2191 = vmatprep.subr.mxu0 0.0
    %2192 = vmatpush1.msra.mxu0 0.0
    %2193 = vmatprep.subr.mxu0 0.0
    %2194 = vmatpush1.msra.mxu0 0.0
    %2195 = vmatprep.subr.mxu0 0.0
    %2196 = vmatpush1.msra.mxu0 0.0
    %2197 = vmatprep.subr.mxu0 0.0
    %2198 = vmatpush1.msra.mxu0 0.0
    %2199 = vmatprep.subr.mxu0 0.0
    %2200 = vmatpush1.msra.mxu0 0.0
    %2201 = vmatprep.subr.mxu0 0.0
    %2202 = vmatpush1.msra.mxu0 0.0
    %2203 = vmatprep.subr.mxu0 0.0
    %2204 = vmatpush1.msra.mxu0 0.0
    %2205 = vmatprep.subr.mxu0 0.0
    %2206 = vmatpush1.msra.mxu0 0.0
    %2207 = vmatprep.subr.mxu0 0.0
    %2208 = vmatpush1.msra.mxu0 0.0
    %2209 = vmatprep.subr.mxu0 0.0
    %2210 = vmatpush1.msra.mxu0 0.0
    %2211 = vmatprep.subr.mxu0 0.0
    %2212 = vmatpush1.msra.mxu0 0.0
    %2213 = vmatprep.mubr.f32.mxu0 0.0
    %2214 = vmatmul.mubr.f32.gmra.mrb[0].mxu0 %v1827
    %v2215 = vpop.f32.mrb[0].mxu0
    %v2216 = vadd.f32 %v1809, %v2215
    %v2217 = vpop.f32.mrb[0].mxu0
    %v2218 = vadd.f32 %v1809, %v2217
    %2219 = vmatprep.mubr.f32.mxu0 0.0
    %2220 = vmatmul.mubr.f32.gmra.mrb[0].mxu0 %v1830
    %v2221 = vpop.f32.mrb[0].mxu0
    %v2222 = vadd.f32 %v1814, %v2221
    %v2223 = vpop.f32.mrb[0].mxu0
    %v2224 = vadd.f32 %v1814, %v2223
    %2225 = vmatprep.mubr.f32.mxu0 0.0
    %2226 = vmatmul.mubr.f32.gmra.mrb[0].mxu0 %v1833
    %v2227 = vpop.f32.mrb[0].mxu0
    %v2228 = vadd.f32 %v1819, %v2227
    %v2229 = vpop.f32.mrb[0].mxu0
    %v2230 = vadd.f32 %v1819, %v2229
    %2231 = vmatprep.mubr.f32.mxu0 0.0
    %2232 = vmatmul.mubr.f32.gmra.mrb[0].mxu0 %v1836
    %v2233 = vpop.f32.mrb[0].mxu0
    %v2234 = vadd.f32 %v1824, %v2233
    %v2235 = vpop.f32.mrb[0].mxu0
    %v2236 = vadd.f32 %v1824, %v2235
    %2237 = vdwg.mxu0
    %v2238 = vmax.f32 %v2216, 0.0
    %v2239 = vmax.f32 %v2218, 0.0
    %v2240 = vmax.f32 %v2222, 0.0
    %v2241 = vmax.f32 %v2224, 0.0
    %v2242 = vmax.f32 %v2228, 0.0
    %v2243 = vmax.f32 %v2230, 0.0
    %v2244 = vmax.f32 %v2234, 0.0
    %v2245 = vmax.f32 %v2236, 0.0
    %v2246 = vadd.f32 %v2238, %v2141
    %v2247 = vadd.f32 %v2239, %v2142
    %v2248 = vadd.f32 %v2240, %v2143
    %v2249 = vadd.f32 %v2241, %v2144
    %v2250 = vadd.f32 %v2242, %v2145
    %v2251 = vadd.f32 %v2243, %v2146
    %v2252 = vadd.f32 %v2244, %v2147
    %v2253 = vadd.f32 %v2245, %v2148
    %2254 = vmatprep.subr.mxu0 %v2247
    %2255 = vmatpush1.msra.mxu0 %v2246
    %2256 = vmatprep.subr.mxu0 %v2249
    %2257 = vmatpush1.msra.mxu0 %v2248
    %2258 = vmatprep.subr.mxu0 %v2251
    %2259 = vmatpush1.msra.mxu0 %v2250
    %2260 = vmatprep.subr.mxu0 %v2253
    %2261 = vmatpush1.msra.mxu0 %v2252
    %2262 = vmatprep.subr.mxu0 0.0
    %2263 = vmatpush1.msra.mxu0 0.0
    %2264 = vmatprep.subr.mxu0 0.0
    %2265 = vmatpush1.msra.mxu0 0.0
    %2266 = vmatprep.subr.mxu0 0.0
    %2267 = vmatpush1.msra.mxu0 0.0
    %2268 = vmatprep.subr.mxu0 0.0
    %2269 = vmatpush1.msra.mxu0 0.0
    %2270 = vmatprep.subr.mxu0 0.0
    %2271 = vmatpush1.msra.mxu0 0.0
    %2272 = vmatprep.subr.mxu0 0.0
    %2273 = vmatpush1.msra.mxu0 0.0
    %2274 = vmatprep.subr.mxu0 0.0
    %2275 = vmatpush1.msra.mxu0 0.0
    %2276 = vmatprep.subr.mxu0 0.0
    %2277 = vmatpush1.msra.mxu0 0.0
    %2278 = vmatprep.subr.mxu0 0.0
    %2279 = vmatpush1.msra.mxu0 0.0
    %2280 = vmatprep.subr.mxu0 0.0
    %2281 = vmatpush1.msra.mxu0 0.0
    %2282 = vmatprep.subr.mxu0 0.0
    %2283 = vmatpush1.msra.mxu0 0.0
    %2284 = vmatprep.subr.mxu0 0.0
    %2285 = vmatpush1.msra.mxu0 0.0
    %2286 = vmatprep.subr.mxu0 0.0
    %2287 = vmatpush1.msra.mxu0 0.0
    %2288 = vmatprep.subr.mxu0 0.0
    %2289 = vmatpush1.msra.mxu0 0.0
    %2290 = vmatprep.subr.mxu0 0.0
    %2291 = vmatpush1.msra.mxu0 0.0
    %2292 = vmatprep.subr.mxu0 0.0
    %2293 = vmatpush1.msra.mxu0 0.0
    %2294 = vmatprep.subr.mxu0 0.0
    %2295 = vmatpush1.msra.mxu0 0.0
    %2296 = vmatprep.subr.mxu0 0.0
    %2297 = vmatpush1.msra.mxu0 0.0
    %2298 = vmatprep.subr.mxu0 0.0
    %2299 = vmatpush1.msra.mxu0 0.0
    %2300 = vmatprep.subr.mxu0 0.0
    %2301 = vmatpush1.msra.mxu0 0.0
    %2302 = vmatprep.subr.mxu0 0.0
    %2303 = vmatpush1.msra.mxu0 0.0
    %2304 = vmatprep.subr.mxu0 0.0
    %2305 = vmatpush1.msra.mxu0 0.0
    %2306 = vmatprep.subr.mxu0 0.0
    %2307 = vmatpush1.msra.mxu0 0.0
    %2308 = vmatprep.subr.mxu0 0.0
    %2309 = vmatpush1.msra.mxu0 0.0
    %2310 = vmatprep.subr.mxu0 0.0
    %2311 = vmatpush1.msra.mxu0 0.0
    %2312 = vmatprep.subr.mxu0 0.0
    %2313 = vmatpush1.msra.mxu0 0.0
    %2314 = vmatprep.subr.mxu0 0.0
    %2315 = vmatpush1.msra.mxu0 0.0
    %2316 = vmatprep.subr.mxu0 0.0
    %2317 = vmatpush1.msra.mxu0 0.0
    %2318 = vmatprep.mubr.f32.mxu0 0.0
    %2319 = vmatmul.mubr.f32.gmra.mrb[0].mxu0 %v1949
    %v2320 = vpop.f32.mrb[0].mxu0
    %v2321 = vadd.f32 %v1946, %v2320
    %v2322 = vpop.f32.mrb[0].mxu0
    %v2323 = vadd.f32 %v1946, %v2322
    %2324 = vdwg.mxu0
    %v2325 = vtanh.pop %v2321
    %v2326 = vtanh.pop %v2323
    %v2327 = vmul.f32 %v2325, 0.083333336
    %v2328 = vmul.f32 %v2326, 0.083333336
    %v2331 = vcombine.low %v2327, %v2328
    %v2333 = vadd.f32 %v2030, %v2331
    %v2334 = vmul.f32 %v2325, 0.125
    %v2335 = vmul.f32 %v2326, 0.125
    %v2338 = vcombine.low %v2334, %v2335
    %v2340 = vadd.f32 %v1499, %v2338
    %v2342 = vcombine.high %v2340, %v2340
    %v2343 = vsel %vm255, %v2340, 0
    %v2345 = vsel %vm255, %v2342, 0
    %2347 = vmatprep.subr.mxu0 %v2345
    %2348 = vmatpush1.msra.mxu0 %v2343
    %2349 = vmatprep.subr.mxu0 0.0
    %2350 = vmatpush1.msra.mxu0 0.0
    %2351 = vmatprep.subr.mxu0 0.0
    %2352 = vmatpush1.msra.mxu0 0.0
    %2353 = vmatprep.subr.mxu0 0.0
    %2354 = vmatpush1.msra.mxu0 0.0
    %2355 = vmatprep.subr.mxu0 0.0
    %2356 = vmatpush1.msra.mxu0 0.0
    %2357 = vmatprep.subr.mxu0 0.0
    %2358 = vmatpush1.msra.mxu0 0.0
    %2359 = vmatprep.subr.mxu0 0.0
    %2360 = vmatpush1.msra.mxu0 0.0
    %2361 = vmatprep.subr.mxu0 0.0
    %2362 = vmatpush1.msra.mxu0 0.0
    %2363 = vmatprep.subr.mxu0 0.0
    %2364 = vmatpush1.msra.mxu0 0.0
    %2365 = vmatprep.subr.mxu0 0.0
    %2366 = vmatpush1.msra.mxu0 0.0
    %2367 = vmatprep.subr.mxu0 0.0
    %2368 = vmatpush1.msra.mxu0 0.0
    %2369 = vmatprep.subr.mxu0 0.0
    %2370 = vmatpush1.msra.mxu0 0.0
    %2371 = vmatprep.subr.mxu0 0.0
    %2372 = vmatpush1.msra.mxu0 0.0
    %2373 = vmatprep.subr.mxu0 0.0
    %2374 = vmatpush1.msra.mxu0 0.0
    %2375 = vmatprep.subr.mxu0 0.0
    %2376 = vmatpush1.msra.mxu0 0.0
    %2377 = vmatprep.subr.mxu0 0.0
    %2378 = vmatpush1.msra.mxu0 0.0
    %2379 = vmatprep.subr.mxu0 0.0
    %2380 = vmatpush1.msra.mxu0 0.0
    %2381 = vmatprep.subr.mxu0 0.0
    %2382 = vmatpush1.msra.mxu0 0.0
    %2383 = vmatprep.subr.mxu0 0.0
    %2384 = vmatpush1.msra.mxu0 0.0
    %2385 = vmatprep.subr.mxu0 0.0
    %2386 = vmatpush1.msra.mxu0 0.0
    %2387 = vmatprep.subr.mxu0 0.0
    %2388 = vmatpush1.msra.mxu0 0.0
    %2389 = vmatprep.subr.mxu0 0.0
    %2390 = vmatpush1.msra.mxu0 0.0
    %2391 = vmatprep.subr.mxu0 0.0
    %2392 = vmatpush1.msra.mxu0 0.0
    %2393 = vmatprep.subr.mxu0 0.0
    %2394 = vmatpush1.msra.mxu0 0.0
    %2395 = vmatprep.subr.mxu0 0.0
    %2396 = vmatpush1.msra.mxu0 0.0
    %2397 = vmatprep.subr.mxu0 0.0
    %2398 = vmatpush1.msra.mxu0 0.0
    %2399 = vmatprep.subr.mxu0 0.0
    %2400 = vmatpush1.msra.mxu0 0.0
    %2401 = vmatprep.subr.mxu0 0.0
    %2402 = vmatpush1.msra.mxu0 0.0
    %2403 = vmatprep.subr.mxu0 0.0
    %2404 = vmatpush1.msra.mxu0 0.0
    %2405 = vmatprep.subr.mxu0 0.0
    %2406 = vmatpush1.msra.mxu0 0.0
    %2407 = vmatprep.subr.mxu0 0.0
    %2408 = vmatpush1.msra.mxu0 0.0
    %2409 = vmatprep.subr.mxu0 0.0
    %2410 = vmatpush1.msra.mxu0 0.0
    %2411 = vmatprep.mubr.f32.mxu0 0.0
    %2412 = vmatmul.mubr.f32.gmra.mrb[0].mxu0 %v1686
    %v2413 = vpop.f32.mrb[0].mxu0
    %v2414 = vadd.f32 %v1666, %v2413
    %v2415 = vpop.f32.mrb[0].mxu0
    %v2416 = vadd.f32 %v1666, %v2415
    %2417 = vmatprep.mubr.f32.mxu0 0.0
    %2418 = vmatmul.mubr.f32.gmra.mrb[0].mxu0 %v1689
    %v2419 = vpop.f32.mrb[0].mxu0
    %v2420 = vadd.f32 %v1671, %v2419
    %v2421 = vpop.f32.mrb[0].mxu0
    %v2422 = vadd.f32 %v1671, %v2421
    %2423 = vmatprep.mubr.f32.mxu0 0.0
    %2424 = vmatmul.mubr.f32.gmra.mrb[0].mxu0 %v1692
    %v2425 = vpop.f32.mrb[0].mxu0
    %v2426 = vadd.f32 %v1676, %v2425
    %v2427 = vpop.f32.mrb[0].mxu0
    %v2428 = vadd.f32 %v1676, %v2427
    %2429 = vmatprep.mubr.f32.mxu0 0.0
    %2430 = vmatmul.mubr.f32.gmra.mrb[0].mxu0 %v1695
    %v2431 = vpop.f32.mrb[0].mxu0
    %v2432 = vadd.f32 %v1681, %v2431
    %v2433 = vpop.f32.mrb[0].mxu0
    %v2434 = vadd.f32 %v1681, %v2433
    %2435 = vdwg.mxu0
    %v2436 = vmax.f32 %v2414, 0.0
    %v2437 = vmax.f32 %v2416, 0.0
    %v2438 = vmax.f32 %v2420, 0.0
    %v2439 = vmax.f32 %v2422, 0.0
    %v2440 = vmax.f32 %v2426, 0.0
    %v2441 = vmax.f32 %v2428, 0.0
    %v2442 = vmax.f32 %v2432, 0.0
    %v2443 = vmax.f32 %v2434, 0.0
    %v2444 = vmul.f32 %v2436, %v1655
    %v2445 = vmul.f32 %v2437, %v1656
    %v2446 = vmul.f32 %v2438, %v1657
    %v2447 = vmul.f32 %v2439, %v1658
    %v2448 = vmul.f32 %v2440, %v1659
    %v2449 = vmul.f32 %v2441, %v1660
    %v2450 = vmul.f32 %v2442, %v1661
    %v2451 = vmul.f32 %v2443, %v1662
    %2452 = vmatprep.subr.mxu0 %v2445
    %2453 = vmatpush1.msra.mxu0 %v2444
    %2454 = vmatprep.subr.mxu0 %v2447
    %2455 = vmatpush1.msra.mxu0 %v2446
    %2456 = vmatprep.subr.mxu0 %v2449
    %2457 = vmatpush1.msra.mxu0 %v2448
    %2458 = vmatprep.subr.mxu0 %v2451
    %2459 = vmatpush1.msra.mxu0 %v2450
    %2460 = vmatprep.subr.mxu0 0.0
    %2461 = vmatpush1.msra.mxu0 0.0
    %2462 = vmatprep.subr.mxu0 0.0
    %2463 = vmatpush1.msra.mxu0 0.0
    %2464 = vmatprep.subr.mxu0 0.0
    %2465 = vmatpush1.msra.mxu0 0.0
    %2466 = vmatprep.subr.mxu0 0.0
    %2467 = vmatpush1.msra.mxu0 0.0
    %2468 = vmatprep.subr.mxu0 0.0
    %2469 = vmatpush1.msra.mxu0 0.0
    %2470 = vmatprep.subr.mxu0 0.0
    %2471 = vmatpush1.msra.mxu0 0.0
    %2472 = vmatprep.subr.mxu0 0.0
    %2473 = vmatpush1.msra.mxu0 0.0
    %2474 = vmatprep.subr.mxu0 0.0
    %2475 = vmatpush1.msra.mxu0 0.0
    %2476 = vmatprep.subr.mxu0 0.0
    %2477 = vmatpush1.msra.mxu0 0.0
    %2478 = vmatprep.subr.mxu0 0.0
    %2479 = vmatpush1.msra.mxu0 0.0
    %2480 = vmatprep.subr.mxu0 0.0
    %2481 = vmatpush1.msra.mxu0 0.0
    %2482 = vmatprep.subr.mxu0 0.0
    %2483 = vmatpush1.msra.mxu0 0.0
    %2484 = vmatprep.subr.mxu0 0.0
    %2485 = vmatpush1.msra.mxu0 0.0
    %2486 = vmatprep.subr.mxu0 0.0
    %2487 = vmatpush1.msra.mxu0 0.0
    %2488 = vmatprep.subr.mxu0 0.0
    %2489 = vmatpush1.msra.mxu0 0.0
    %2490 = vmatprep.subr.mxu0 0.0
    %2491 = vmatpush1.msra.mxu0 0.0
    %2492 = vmatprep.subr.mxu0 0.0
    %2493 = vmatpush1.msra.mxu0 0.0
    %2494 = vmatprep.subr.mxu0 0.0
    %2495 = vmatpush1.msra.mxu0 0.0
    %2496 = vmatprep.subr.mxu0 0.0
    %2497 = vmatpush1.msra.mxu0 0.0
    %2498 = vmatprep.subr.mxu0 0.0
    %2499 = vmatpush1.msra.mxu0 0.0
    %2500 = vmatprep.subr.mxu0 0.0
    %2501 = vmatpush1.msra.mxu0 0.0
    %2502 = vmatprep.subr.mxu0 0.0
    %2503 = vmatpush1.msra.mxu0 0.0
    %2504 = vmatprep.subr.mxu0 0.0
    %2505 = vmatpush1.msra.mxu0 0.0
    %2506 = vmatprep.subr.mxu0 0.0
    %2507 = vmatpush1.msra.mxu0 0.0
    %2508 = vmatprep.subr.mxu0 0.0
    %2509 = vmatpush1.msra.mxu0 0.0
    %2510 = vmatprep.subr.mxu0 0.0
    %2511 = vmatpush1.msra.mxu0 0.0
    %2512 = vmatprep.subr.mxu0 0.0
    %2513 = vmatpush1.msra.mxu0 0.0
    %2514 = vmatprep.subr.mxu0 0.0
    %2515 = vmatpush1.msra.mxu0 0.0
    %2516 = vmatprep.mubr.f32.mxu0 0.0
    %2517 = vmatmul.mubr.f32.gmra.mrb[0].mxu0 %v1827
    %v2518 = vpop.f32.mrb[0].mxu0
    %v2519 = vadd.f32 %v1809, %v2518
    %v2520 = vpop.f32.mrb[0].mxu0
    %v2521 = vadd.f32 %v1809, %v2520
    %2522 = vmatprep.mubr.f32.mxu0 0.0
    %2523 = vmatmul.mubr.f32.gmra.mrb[0].mxu0 %v1830
    %v2524 = vpop.f32.mrb[0].mxu0
    %v2525 = vadd.f32 %v1814, %v2524
    %v2526 = vpop.f32.mrb[0].mxu0
    %v2527 = vadd.f32 %v1814, %v2526
    %2528 = vmatprep.mubr.f32.mxu0 0.0
    %2529 = vmatmul.mubr.f32.gmra.mrb[0].mxu0 %v1833
    %v2530 = vpop.f32.mrb[0].mxu0
    %v2531 = vadd.f32 %v1819, %v2530
    %v2532 = vpop.f32.mrb[0].mxu0
    %v2533 = vadd.f32 %v1819, %v2532
    %2534 = vmatprep.mubr.f32.mxu0 0.0
    %2535 = vmatmul.mubr.f32.gmra.mrb[0].mxu0 %v1836
    %v2536 = vpop.f32.mrb[0].mxu0
    %v2537 = vadd.f32 %v1824, %v2536
    %v2538 = vpop.f32.mrb[0].mxu0
    %v2539 = vadd.f32 %v1824, %v2538
    %2540 = vdwg.mxu0
    %v2541 = vmax.f32 %v2519, 0.0
    %v2542 = vmax.f32 %v2521, 0.0
    %v2543 = vmax.f32 %v2525, 0.0
    %v2544 = vmax.f32 %v2527, 0.0
    %v2545 = vmax.f32 %v2531, 0.0
    %v2546 = vmax.f32 %v2533, 0.0
    %v2547 = vmax.f32 %v2537, 0.0
    %v2548 = vmax.f32 %v2539, 0.0
    %v2549 = vadd.f32 %v2541, %v2444
    %v2550 = vadd.f32 %v2542, %v2445
    %v2551 = vadd.f32 %v2543, %v2446
    %v2552 = vadd.f32 %v2544, %v2447
    %v2553 = vadd.f32 %v2545, %v2448
    %v2554 = vadd.f32 %v2546, %v2449
    %v2555 = vadd.f32 %v2547, %v2450
    %v2556 = vadd.f32 %v2548, %v2451
    %2557 = vmatprep.subr.mxu0 %v2550
    %2558 = vmatpush1.msra.mxu0 %v2549
    %2559 = vmatprep.subr.mxu0 %v2552
    %2560 = vmatpush1.msra.mxu0 %v2551
    %2561 = vmatprep.subr.mxu0 %v2554
    %2562 = vmatpush1.msra.mxu0 %v2553
    %2563 = vmatprep.subr.mxu0 %v2556
    %2564 = vmatpush1.msra.mxu0 %v2555
    %2565 = vmatprep.subr.mxu0 0.0
    %2566 = vmatpush1.msra.mxu0 0.0
    %2567 = vmatprep.subr.mxu0 0.0
    %2568 = vmatpush1.msra.mxu0 0.0
    %2569 = vmatprep.subr.mxu0 0.0
    %2570 = vmatpush1.msra.mxu0 0.0
    %2571 = vmatprep.subr.mxu0 0.0
    %2572 = vmatpush1.msra.mxu0 0.0
    %2573 = vmatprep.subr.mxu0 0.0
    %2574 = vmatpush1.msra.mxu0 0.0
    %2575 = vmatprep.subr.mxu0 0.0
    %2576 = vmatpush1.msra.mxu0 0.0
    %2577 = vmatprep.subr.mxu0 0.0
    %2578 = vmatpush1.msra.mxu0 0.0
    %2579 = vmatprep.subr.mxu0 0.0
    %2580 = vmatpush1.msra.mxu0 0.0
    %2581 = vmatprep.subr.mxu0 0.0
    %2582 = vmatpush1.msra.mxu0 0.0
    %2583 = vmatprep.subr.mxu0 0.0
    %2584 = vmatpush1.msra.mxu0 0.0
    %2585 = vmatprep.subr.mxu0 0.0
    %2586 = vmatpush1.msra.mxu0 0.0
    %2587 = vmatprep.subr.mxu0 0.0
    %2588 = vmatpush1.msra.mxu0 0.0
    %2589 = vmatprep.subr.mxu0 0.0
    %2590 = vmatpush1.msra.mxu0 0.0
    %2591 = vmatprep.subr.mxu0 0.0
    %2592 = vmatpush1.msra.mxu0 0.0
    %2593 = vmatprep.subr.mxu0 0.0
    %2594 = vmatpush1.msra.mxu0 0.0
    %2595 = vmatprep.subr.mxu0 0.0
    %2596 = vmatpush1.msra.mxu0 0.0
    %2597 = vmatprep.subr.mxu0 0.0
    %2598 = vmatpush1.msra.mxu0 0.0
    %2599 = vmatprep.subr.mxu0 0.0
    %2600 = vmatpush1.msra.mxu0 0.0
    %2601 = vmatprep.subr.mxu0 0.0
    %2602 = vmatpush1.msra.mxu0 0.0
    %2603 = vmatprep.subr.mxu0 0.0
    %2604 = vmatpush1.msra.mxu0 0.0
    %2605 = vmatprep.subr.mxu0 0.0
    %2606 = vmatpush1.msra.mxu0 0.0
    %2607 = vmatprep.subr.mxu0 0.0
    %2608 = vmatpush1.msra.mxu0 0.0
    %2609 = vmatprep.subr.mxu0 0.0
    %2610 = vmatpush1.msra.mxu0 0.0
    %2611 = vmatprep.subr.mxu0 0.0
    %2612 = vmatpush1.msra.mxu0 0.0
    %2613 = vmatprep.subr.mxu0 0.0
    %2614 = vmatpush1.msra.mxu0 0.0
    %2615 = vmatprep.subr.mxu0 0.0
    %2616 = vmatpush1.msra.mxu0 0.0
    %2617 = vmatprep.subr.mxu0 0.0
    %2618 = vmatpush1.msra.mxu0 0.0
    %2619 = vmatprep.subr.mxu0 0.0
    %2620 = vmatpush1.msra.mxu0 0.0
    %2621 = vmatprep.mubr.f32.mxu0 0.0
    %2622 = vmatmul.mubr.f32.gmra.mrb[0].mxu0 %v1949
    %v2623 = vpop.f32.mrb[0].mxu0
    %v2624 = vadd.f32 %v1946, %v2623
    %v2625 = vpop.f32.mrb[0].mxu0
    %v2626 = vadd.f32 %v1946, %v2625
    %2627 = vdwg.mxu0
    %v2628 = vtanh.pop %v2624
    %v2629 = vtanh.pop %v2626
    %v2630 = vmul.f32 %v2628, 0.083333336
    %v2631 = vmul.f32 %v2629, 0.083333336
    %v2634 = vcombine.low %v2630, %v2631
    %v2636 = vadd.f32 %v2333, %v2634
    %v2637 = vmul.f32 %v2628, 0.25
    %v2638 = vmul.f32 %v2629, 0.25
    %v2641 = vcombine.low %v2637, %v2638
    %v2643 = vadd.f32 %v1499, %v2641
    %v2645 = vcombine.high %v2643, %v2643
    %v2646 = vsel %vm255, %v2643, 0
    %v2648 = vsel %vm255, %v2645, 0
    %2650 = vmatprep.subr.mxu0 %v2648
    %2651 = vmatpush1.msra.mxu0 %v2646
    %2652 = vmatprep.subr.mxu0 0.0
    %2653 = vmatpush1.msra.mxu0 0.0
    %2654 = vmatprep.subr.mxu0 0.0
    %2655 = vmatpush1.msra.mxu0 0.0
    %2656 = vmatprep.subr.mxu0 0.0
    %2657 = vmatpush1.msra.mxu0 0.0
    %2658 = vmatprep.subr.mxu0 0.0
    %2659 = vmatpush1.msra.mxu0 0.0
    %2660 = vmatprep.subr.mxu0 0.0
    %2661 = vmatpush1.msra.mxu0 0.0
    %2662 = vmatprep.subr.mxu0 0.0
    %2663 = vmatpush1.msra.mxu0 0.0
    %2664 = vmatprep.subr.mxu0 0.0
    %2665 = vmatpush1.msra.mxu0 0.0
    %2666 = vmatprep.subr.mxu0 0.0
    %2667 = vmatpush1.msra.mxu0 0.0
    %2668 = vmatprep.subr.mxu0 0.0
    %2669 = vmatpush1.msra.mxu0 0.0
    %2670 = vmatprep.subr.mxu0 0.0
    %2671 = vmatpush1.msra.mxu0 0.0
    %2672 = vmatprep.subr.mxu0 0.0
    %2673 = vmatpush1.msra.mxu0 0.0
    %2674 = vmatprep.subr.mxu0 0.0
    %2675 = vmatpush1.msra.mxu0 0.0
    %2676 = vmatprep.subr.mxu0 0.0
    %2677 = vmatpush1.msra.mxu0 0.0
    %2678 = vmatprep.subr.mxu0 0.0
    %2679 = vmatpush1.msra.mxu0 0.0
    %2680 = vmatprep.subr.mxu0 0.0
    %2681 = vmatpush1.msra.mxu0 0.0
    %2682 = vmatprep.subr.mxu0 0.0
    %2683 = vmatpush1.msra.mxu0 0.0
    %2684 = vmatprep.subr.mxu0 0.0
    %2685 = vmatpush1.msra.mxu0 0.0
    %2686 = vmatprep.subr.mxu0 0.0
    %2687 = vmatpush1.msra.mxu0 0.0
    %2688 = vmatprep.subr.mxu0 0.0
    %2689 = vmatpush1.msra.mxu0 0.0
    %2690 = vmatprep.subr.mxu0 0.0
    %2691 = vmatpush1.msra.mxu0 0.0
    %2692 = vmatprep.subr.mxu0 0.0
    %2693 = vmatpush1.msra.mxu0 0.0
    %2694 = vmatprep.subr.mxu0 0.0
    %2695 = vmatpush1.msra.mxu0 0.0
    %2696 = vmatprep.subr.mxu0 0.0
    %2697 = vmatpush1.msra.mxu0 0.0
    %2698 = vmatprep.subr.mxu0 0.0
    %2699 = vmatpush1.msra.mxu0 0.0
    %2700 = vmatprep.subr.mxu0 0.0
    %2701 = vmatpush1.msra.mxu0 0.0
    %2702 = vmatprep.subr.mxu0 0.0
    %2703 = vmatpush1.msra.mxu0 0.0
    %2704 = vmatprep.subr.mxu0 0.0
    %2705 = vmatpush1.msra.mxu0 0.0
    %2706 = vmatprep.subr.mxu0 0.0
    %2707 = vmatpush1.msra.mxu0 0.0
    %2708 = vmatprep.subr.mxu0 0.0
    %2709 = vmatpush1.msra.mxu0 0.0
    %2710 = vmatprep.subr.mxu0 0.0
    %2711 = vmatpush1.msra.mxu0 0.0
    %2712 = vmatprep.subr.mxu0 0.0
    %2713 = vmatpush1.msra.mxu0 0.0
    %2714 = vmatprep.mubr.f32.mxu0 0.0
    %2715 = vmatmul.mubr.f32.gmra.mrb[0].mxu0 %v1686
    %v2716 = vpop.f32.mrb[0].mxu0
    %v2717 = vadd.f32 %v1666, %v2716
    %v2718 = vpop.f32.mrb[0].mxu0
    %v2719 = vadd.f32 %v1666, %v2718
    %2720 = vmatprep.mubr.f32.mxu0 0.0
    %2721 = vmatmul.mubr.f32.gmra.mrb[0].mxu0 %v1689
    %v2722 = vpop.f32.mrb[0].mxu0
    %v2723 = vadd.f32 %v1671, %v2722
    %v2724 = vpop.f32.mrb[0].mxu0
    %v2725 = vadd.f32 %v1671, %v2724
    %2726 = vmatprep.mubr.f32.mxu0 0.0
    %2727 = vmatmul.mubr.f32.gmra.mrb[0].mxu0 %v1692
    %v2728 = vpop.f32.mrb[0].mxu0
    %v2729 = vadd.f32 %v1676, %v2728
    %v2730 = vpop.f32.mrb[0].mxu0
    %v2731 = vadd.f32 %v1676, %v2730
    %2732 = vmatprep.mubr.f32.mxu0 0.0
    %2733 = vmatmul.mubr.f32.gmra.mrb[0].mxu0 %v1695
    %v2734 = vpop.f32.mrb[0].mxu0
    %v2735 = vadd.f32 %v1681, %v2734
    %v2736 = vpop.f32.mrb[0].mxu0
    %v2737 = vadd.f32 %v1681, %v2736
    %2738 = vdwg.mxu0
    %v2739 = vmax.f32 %v2717, 0.0
    %v2740 = vmax.f32 %v2719, 0.0
    %v2741 = vmax.f32 %v2723, 0.0
    %v2742 = vmax.f32 %v2725, 0.0
    %v2743 = vmax.f32 %v2729, 0.0
    %v2744 = vmax.f32 %v2731, 0.0
    %v2745 = vmax.f32 %v2735, 0.0
    %v2746 = vmax.f32 %v2737, 0.0
    %v2747 = vmul.f32 %v2739, %v1655
    %v2748 = vmul.f32 %v2740, %v1656
    %v2749 = vmul.f32 %v2741, %v1657
    %v2750 = vmul.f32 %v2742, %v1658
    %v2751 = vmul.f32 %v2743, %v1659
    %v2752 = vmul.f32 %v2744, %v1660
    %v2753 = vmul.f32 %v2745, %v1661
    %v2754 = vmul.f32 %v2746, %v1662
    %2755 = vmatprep.subr.mxu0 %v2748
    %2756 = vmatpush1.msra.mxu0 %v2747
    %2757 = vmatprep.subr.mxu0 %v2750
    %2758 = vmatpush1.msra.mxu0 %v2749
    %2759 = vmatprep.subr.mxu0 %v2752
    %2760 = vmatpush1.msra.mxu0 %v2751
    %2761 = vmatprep.subr.mxu0 %v2754
    %2762 = vmatpush1.msra.mxu0 %v2753
    %2763 = vmatprep.subr.mxu0 0.0
    %2764 = vmatpush1.msra.mxu0 0.0
    %2765 = vmatprep.subr.mxu0 0.0
    %2766 = vmatpush1.msra.mxu0 0.0
    %2767 = vmatprep.subr.mxu0 0.0
    %2768 = vmatpush1.msra.mxu0 0.0
    %2769 = vmatprep.subr.mxu0 0.0
    %2770 = vmatpush1.msra.mxu0 0.0
    %2771 = vmatprep.subr.mxu0 0.0
    %2772 = vmatpush1.msra.mxu0 0.0
    %2773 = vmatprep.subr.mxu0 0.0
    %2774 = vmatpush1.msra.mxu0 0.0
    %2775 = vmatprep.subr.mxu0 0.0
    %2776 = vmatpush1.msra.mxu0 0.0
    %2777 = vmatprep.subr.mxu0 0.0
    %2778 = vmatpush1.msra.mxu0 0.0
    %2779 = vmatprep.subr.mxu0 0.0
    %2780 = vmatpush1.msra.mxu0 0.0
    %2781 = vmatprep.subr.mxu0 0.0
    %2782 = vmatpush1.msra.mxu0 0.0
    %2783 = vmatprep.subr.mxu0 0.0
    %2784 = vmatpush1.msra.mxu0 0.0
    %2785 = vmatprep.subr.mxu0 0.0
    %2786 = vmatpush1.msra.mxu0 0.0
    %2787 = vmatprep.subr.mxu0 0.0
    %2788 = vmatpush1.msra.mxu0 0.0
    %2789 = vmatprep.subr.mxu0 0.0
    %2790 = vmatpush1.msra.mxu0 0.0
    %2791 = vmatprep.subr.mxu0 0.0
    %2792 = vmatpush1.msra.mxu0 0.0
    %2793 = vmatprep.subr.mxu0 0.0
    %2794 = vmatpush1.msra.mxu0 0.0
    %2795 = vmatprep.subr.mxu0 0.0
    %2796 = vmatpush1.msra.mxu0 0.0
    %2797 = vmatprep.subr.mxu0 0.0
    %2798 = vmatpush1.msra.mxu0 0.0
    %2799 = vmatprep.subr.mxu0 0.0
    %2800 = vmatpush1.msra.mxu0 0.0
    %2801 = vmatprep.subr.mxu0 0.0
    %2802 = vmatpush1.msra.mxu0 0.0
    %2803 = vmatprep.subr.mxu0 0.0
    %2804 = vmatpush1.msra.mxu0 0.0
    %2805 = vmatprep.subr.mxu0 0.0
    %2806 = vmatpush1.msra.mxu0 0.0
    %2807 = vmatprep.subr.mxu0 0.0
    %2808 = vmatpush1.msra.mxu0 0.0
    %2809 = vmatprep.subr.mxu0 0.0
    %2810 = vmatpush1.msra.mxu0 0.0
    %2811 = vmatprep.subr.mxu0 0.0
    %2812 = vmatpush1.msra.mxu0 0.0
    %2813 = vmatprep.subr.mxu0 0.0
    %2814 = vmatpush1.msra.mxu0 0.0
    %2815 = vmatprep.subr.mxu0 0.0
    %2816 = vmatpush1.msra.mxu0 0.0
    %2817 = vmatprep.subr.mxu0 0.0
    %2818 = vmatpush1.msra.mxu0 0.0
    %2819 = vmatprep.mubr.f32.mxu0 0.0
    %2820 = vmatmul.mubr.f32.gmra.mrb[0].mxu0 %v1827
    %v2821 = vpop.f32.mrb[0].mxu0
    %v2822 = vadd.f32 %v1809, %v2821
    %v2823 = vpop.f32.mrb[0].mxu0
    %v2824 = vadd.f32 %v1809, %v2823
    %2825 = vmatprep.mubr.f32.mxu0 0.0
    %2826 = vmatmul.mubr.f32.gmra.mrb[0].mxu0 %v1830
    %v2827 = vpop.f32.mrb[0].mxu0
    %v2828 = vadd.f32 %v1814, %v2827
    %v2829 = vpop.f32.mrb[0].mxu0
    %v2830 = vadd.f32 %v1814, %v2829
    %2831 = vmatprep.mubr.f32.mxu0 0.0
    %2832 = vmatmul.mubr.f32.gmra.mrb[0].mxu0 %v1833
    %v2833 = vpop.f32.mrb[0].mxu0
    %v2834 = vadd.f32 %v1819, %v2833
    %v2835 = vpop.f32.mrb[0].mxu0
    %v2836 = vadd.f32 %v1819, %v2835
    %2837 = vmatprep.mubr.f32.mxu0 0.0
    %2838 = vmatmul.mubr.f32.gmra.mrb[0].mxu0 %v1836
    %v2839 = vpop.f32.mrb[0].mxu0
    %v2840 = vadd.f32 %v1824, %v2839
    %v2841 = vpop.f32.mrb[0].mxu0
    %v2842 = vadd.f32 %v1824, %v2841
    %2843 = vdwg.mxu0
    %v2844 = vmax.f32 %v2822, 0.0
    %v2845 = vmax.f32 %v2824, 0.0
    %v2846 = vmax.f32 %v2828, 0.0
    %v2847 = vmax.f32 %v2830, 0.0
    %v2848 = vmax.f32 %v2834, 0.0
    %v2849 = vmax.f32 %v2836, 0.0
    %v2850 = vmax.f32 %v2840, 0.0
    %v2851 = vmax.f32 %v2842, 0.0
    %v2852 = vadd.f32 %v2844, %v2747
    %v2853 = vadd.f32 %v2845, %v2748
    %v2854 = vadd.f32 %v2846, %v2749
    %v2855 = vadd.f32 %v2847, %v2750
    %v2856 = vadd.f32 %v2848, %v2751
    %v2857 = vadd.f32 %v2849, %v2752
    %v2858 = vadd.f32 %v2850, %v2753
    %v2859 = vadd.f32 %v2851, %v2754
    %2860 = vmatprep.subr.mxu0 %v2853
    %2861 = vmatpush1.msra.mxu0 %v2852
    %2862 = vmatprep.subr.mxu0 %v2855
    %2863 = vmatpush1.msra.mxu0 %v2854
    %2864 = vmatprep.subr.mxu0 %v2857
    %2865 = vmatpush1.msra.mxu0 %v2856
    %2866 = vmatprep.subr.mxu0 %v2859
    %2867 = vmatpush1.msra.mxu0 %v2858
    %2868 = vmatprep.subr.mxu0 0.0
    %2869 = vmatpush1.msra.mxu0 0.0
    %2870 = vmatprep.subr.mxu0 0.0
    %2871 = vmatpush1.msra.mxu0 0.0
    %2872 = vmatprep.subr.mxu0 0.0
    %2873 = vmatpush1.msra.mxu0 0.0
    %2874 = vmatprep.subr.mxu0 0.0
    %2875 = vmatpush1.msra.mxu0 0.0
    %2876 = vmatprep.subr.mxu0 0.0
    %2877 = vmatpush1.msra.mxu0 0.0
    %2878 = vmatprep.subr.mxu0 0.0
    %2879 = vmatpush1.msra.mxu0 0.0
    %2880 = vmatprep.subr.mxu0 0.0
    %2881 = vmatpush1.msra.mxu0 0.0
    %2882 = vmatprep.subr.mxu0 0.0
    %2883 = vmatpush1.msra.mxu0 0.0
    %2884 = vmatprep.subr.mxu0 0.0
    %2885 = vmatpush1.msra.mxu0 0.0
    %2886 = vmatprep.subr.mxu0 0.0
    %2887 = vmatpush1.msra.mxu0 0.0
    %2888 = vmatprep.subr.mxu0 0.0
    %2889 = vmatpush1.msra.mxu0 0.0
    %2890 = vmatprep.subr.mxu0 0.0
    %2891 = vmatpush1.msra.mxu0 0.0
    %2892 = vmatprep.subr.mxu0 0.0
    %2893 = vmatpush1.msra.mxu0 0.0
    %2894 = vmatprep.subr.mxu0 0.0
    %2895 = vmatpush1.msra.mxu0 0.0
    %2896 = vmatprep.subr.mxu0 0.0
    %2897 = vmatpush1.msra.mxu0 0.0
    %2898 = vmatprep.subr.mxu0 0.0
    %2899 = vmatpush1.msra.mxu0 0.0
    %2900 = vmatprep.subr.mxu0 0.0
    %2901 = vmatpush1.msra.mxu0 0.0
    %2902 = vmatprep.subr.mxu0 0.0
    %2903 = vmatpush1.msra.mxu0 0.0
    %2904 = vmatprep.subr.mxu0 0.0
    %2905 = vmatpush1.msra.mxu0 0.0
    %2906 = vmatprep.subr.mxu0 0.0
    %2907 = vmatpush1.msra.mxu0 0.0
    %2908 = vmatprep.subr.mxu0 0.0
    %2909 = vmatpush1.msra.mxu0 0.0
    %2910 = vmatprep.subr.mxu0 0.0
    %2911 = vmatpush1.msra.mxu0 0.0
    %2912 = vmatprep.subr.mxu0 0.0
    %2913 = vmatpush1.msra.mxu0 0.0
    %2914 = vmatprep.subr.mxu0 0.0
    %2915 = vmatpush1.msra.mxu0 0.0
    %2916 = vmatprep.subr.mxu0 0.0
    %2917 = vmatpush1.msra.mxu0 0.0
    %2918 = vmatprep.subr.mxu0 0.0
    %2919 = vmatpush1.msra.mxu0 0.0
    %2920 = vmatprep.subr.mxu0 0.0
    %2921 = vmatpush1.msra.mxu0 0.0
    %2922 = vmatprep.subr.mxu0 0.0
    %2923 = vmatpush1.msra.mxu0 0.0
    %2924 = vmatprep.mubr.f32.mxu0 0.0
    %2925 = vmatmul.mubr.f32.gmra.mrb[0].mxu0 %v1949
    %v2926 = vpop.f32.mrb[0].mxu0
    %v2927 = vadd.f32 %v1946, %v2926
    %v2928 = vpop.f32.mrb[0].mxu0
    %v2929 = vadd.f32 %v1946, %v2928
    %2930 = vdwg.mxu0
    %v2931 = vtanh.pop %v2927
    %v2932 = vtanh.pop %v2929
    %v2933 = vmul.f32 %v2931, 0.041666668
    %v2934 = vmul.f32 %v2932, 0.041666668
    %v2937 = vcombine.low %v2933, %v2934
    %v2939 = vadd.f32 %v2636, %v2937
    %s2940 = scalar_lea.vmem %s2, 64
    %v2941 = vld [vmem:[%s2940] sm:$0xff]
    %v2942 = vld [vmem:[%s2940 + $0x8] sm:$0xff]
    %v2943 = vld [vmem:[%s2940 + $0x10] sm:$0xff]
    %v2944 = vld [vmem:[%s2940 + $0x18] sm:$0xff]
    %s2945 = scalar_lea.vmem %s3, 64
    %v2946 = vld [vmem:[%s2945] sm:$0xff]
    %v2947 = vld [vmem:[%s2945 + $0x8] sm:$0xff]
    %v2948 = vld [vmem:[%s2945 + $0x10] sm:$0xff]
    %v2949 = vld [vmem:[%s2945 + $0x18] sm:$0xff]
    %s2950 = scalar_lea.vmem %s4, 64
    %v2951 = vld [vmem:[%s2950] sm:$0xff]
    %v2952 = vld [vmem:[%s2950 + $0x8] sm:$0xff]
    %v2953 = vld [vmem:[%s2950 + $0x10] sm:$0xff]
    %v2954 = vld [vmem:[%s2950 + $0x18] sm:$0xff]
    %s2955 = scalar_lea.vmem %s5, 64
    %v2956 = vld [vmem:[%s2955] sm:$0xff]
    %v2957 = vld [vmem:[%s2955 + $0x8] sm:$0xff]
    %v2958 = vld [vmem:[%s2955 + $0x10] sm:$0xff]
    %v2959 = vld [vmem:[%s2955 + $0x18] sm:$0xff]
    %s2960 = scalar_lea.vmem %s6, 64
    %v2961 = vld [vmem:[%s2960] sm:$0xff]
    %v2962 = vld [vmem:[%s2960 + $0x8] sm:$0xff]
    %v2963 = vld [vmem:[%s2960 + $0x10] sm:$0xff]
    %v2964 = vld [vmem:[%s2960 + $0x18] sm:$0xff]
    %s2965 = scalar_lea.vmem %s7, 64
    %v2966 = vld [vmem:[%s2965] sm:$0xff]
    %v2967 = vld [vmem:[%s2965 + $0x8] sm:$0xff]
    %v2968 = vld [vmem:[%s2965 + $0x10] sm:$0xff]
    %v2969 = vld [vmem:[%s2965 + $0x18] sm:$0xff]
    %s2970 = scalar_lea.vmem %s8, 8
    %v2971 = vld [vmem:[%s2970] sm:$0x7]
    %s2972 = scalar_lea.vmem %s9, 8
    %v2973 = vld [vmem:[%s2972] sm:$0x7]
    %2975 = vset.pattern.permute.xlu0 0
    %2976 = vperm.xlu0 %2975, %v2956
    %v2977 = vpop.permute.xlu0 %2976
    %2980 = vset.pattern.permute.xlu0 0
    %2981 = vperm.xlu0 %2980, %v2957
    %v2982 = vpop.permute.xlu0 %2981
    %2985 = vset.pattern.permute.xlu0 0
    %2986 = vperm.xlu0 %2985, %v2958
    %v2987 = vpop.permute.xlu0 %2986
    %2990 = vset.pattern.permute.xlu0 0
    %2991 = vperm.xlu0 %2990, %v2959
    %v2992 = vpop.permute.xlu0 %2991
    %v2995 = vsel %vm110, %v2951, 0
    %v2998 = vsel %vm110, %v2952, 0
    %v3001 = vsel %vm110, %v2953, 0
    %v3004 = vsel %vm110, %v2954, 0
    %3006 = vmatprep.subr.mxu0 %v60
    %3007 = vmatpush1.msra.mxu0 %v59
    %3008 = vmatprep.subr.mxu0 %v62
    %3009 = vmatpush1.msra.mxu0 %v61
    %3010 = vmatprep.subr.mxu0 0.0
    %3011 = vmatpush1.msra.mxu0 0.0
    %3012 = vmatprep.subr.mxu0 0.0
    %3013 = vmatpush1.msra.mxu0 0.0
    %3014 = vmatprep.subr.mxu0 0.0
    %3015 = vmatpush1.msra.mxu0 0.0
    %3016 = vmatprep.subr.mxu0 0.0
    %3017 = vmatpush1.msra.mxu0 0.0
    %3018 = vmatprep.subr.mxu0 0.0
    %3019 = vmatpush1.msra.mxu0 0.0
    %3020 = vmatprep.subr.mxu0 0.0
    %3021 = vmatpush1.msra.mxu0 0.0
    %3022 = vmatprep.subr.mxu0 0.0
    %3023 = vmatpush1.msra.mxu0 0.0
    %3024 = vmatprep.subr.mxu0 0.0
    %3025 = vmatpush1.msra.mxu0 0.0
    %3026 = vmatprep.subr.mxu0 0.0
    %3027 = vmatpush1.msra.mxu0 0.0
    %3028 = vmatprep.subr.mxu0 0.0
    %3029 = vmatpush1.msra.mxu0 0.0
    %3030 = vmatprep.subr.mxu0 0.0
    %3031 = vmatpush1.msra.mxu0 0.0
    %3032 = vmatprep.subr.mxu0 0.0
    %3033 = vmatpush1.msra.mxu0 0.0
    %3034 = vmatprep.subr.mxu0 0.0
    %3035 = vmatpush1.msra.mxu0 0.0
    %3036 = vmatprep.subr.mxu0 0.0
    %3037 = vmatpush1.msra.mxu0 0.0
    %3038 = vmatprep.subr.mxu0 0.0
    %3039 = vmatpush1.msra.mxu0 0.0
    %3040 = vmatprep.subr.mxu0 0.0
    %3041 = vmatpush1.msra.mxu0 0.0
    %3042 = vmatprep.subr.mxu0 0.0
    %3043 = vmatpush1.msra.mxu0 0.0
    %3044 = vmatprep.subr.mxu0 0.0
    %3045 = vmatpush1.msra.mxu0 0.0
    %3046 = vmatprep.subr.mxu0 0.0
    %3047 = vmatpush1.msra.mxu0 0.0
    %3048 = vmatprep.subr.mxu0 0.0
    %3049 = vmatpush1.msra.mxu0 0.0
    %3050 = vmatprep.subr.mxu0 0.0
    %3051 = vmatpush1.msra.mxu0 0.0
    %3052 = vmatprep.subr.mxu0 0.0
    %3053 = vmatpush1.msra.mxu0 0.0
    %3054 = vmatprep.subr.mxu0 0.0
    %3055 = vmatpush1.msra.mxu0 0.0
    %3056 = vmatprep.subr.mxu0 0.0
    %3057 = vmatpush1.msra.mxu0 0.0
    %3058 = vmatprep.subr.mxu0 0.0
    %3059 = vmatpush1.msra.mxu0 0.0
    %3060 = vmatprep.subr.mxu0 0.0
    %3061 = vmatpush1.msra.mxu0 0.0
    %3062 = vmatprep.subr.mxu0 0.0
    %3063 = vmatpush1.msra.mxu0 0.0
    %3064 = vmatprep.subr.mxu0 0.0
    %3065 = vmatpush1.msra.mxu0 0.0
    %3066 = vmatprep.subr.mxu0 0.0
    %3067 = vmatpush1.msra.mxu0 0.0
    %3068 = vmatprep.subr.mxu0 0.0
    %3069 = vmatpush1.msra.mxu0 0.0
    %3070 = vmatprep.mubr.f32.mxu0 0.0
    %3071 = vmatmul.mubr.f32.gmra.mrb[0].mxu0 %v2995
    %v3072 = vpop.f32.mrb[0].mxu0
    %v3073 = vadd.f32 %v2977, %v3072
    %v3074 = vpop.f32.mrb[0].mxu0
    %v3075 = vadd.f32 %v2977, %v3074
    %3076 = vmatprep.mubr.f32.mxu0 0.0
    %3077 = vmatmul.mubr.f32.gmra.mrb[0].mxu0 %v2998
    %v3078 = vpop.f32.mrb[0].mxu0
    %v3079 = vadd.f32 %v2982, %v3078
    %v3080 = vpop.f32.mrb[0].mxu0
    %v3081 = vadd.f32 %v2982, %v3080
    %3082 = vmatprep.mubr.f32.mxu0 0.0
    %3083 = vmatmul.mubr.f32.gmra.mrb[0].mxu0 %v3001
    %v3084 = vpop.f32.mrb[0].mxu0
    %v3085 = vadd.f32 %v2987, %v3084
    %v3086 = vpop.f32.mrb[0].mxu0
    %v3087 = vadd.f32 %v2987, %v3086
    %3088 = vmatprep.mubr.f32.mxu0 0.0
    %3089 = vmatmul.mubr.f32.gmra.mrb[0].mxu0 %v3004
    %v3090 = vpop.f32.mrb[0].mxu0
    %v3091 = vadd.f32 %v2992, %v3090
    %v3092 = vpop.f32.mrb[0].mxu0
    %v3093 = vadd.f32 %v2992, %v3092
    %3094 = vdwg.mxu0
    %v3095 = vtanh.pop %v3073
    %v3096 = vtanh.pop %v3075
    %v3097 = vtanh.pop %v3079
    %v3098 = vtanh.pop %v3081
    %v3099 = vtanh.pop %v3085
    %v3100 = vtanh.pop %v3087
    %v3101 = vtanh.pop %v3091
    %v3102 = vtanh.pop %v3093
    %3104 = vset.pattern.permute.xlu0 0
    %3105 = vperm.xlu0 %3104, %v2946
    %v3106 = vpop.permute.xlu0 %3105
    %3109 = vset.pattern.permute.xlu0 0
    %3110 = vperm.xlu0 %3109, %v2947
    %v3111 = vpop.permute.xlu0 %3110
    %3114 = vset.pattern.permute.xlu0 0
    %3115 = vperm.xlu0 %3114, %v2948
    %v3116 = vpop.permute.xlu0 %3115
    %3119 = vset.pattern.permute.xlu0 0
    %3120 = vperm.xlu0 %3119, %v2949
    %v3121 = vpop.permute.xlu0 %3120
    %v3124 = vcombine.high %v2939, %v2939
    %v3126 = vsel %vm242, %v2941, 0
    %v3129 = vsel %vm242, %v2942, 0
    %v3132 = vsel %vm242, %v2943, 0
    %v3135 = vsel %vm242, %v2944, 0
    %v3137 = vsel %vm255, %v2939, 0
    %v3139 = vsel %vm255, %v3124, 0
    %3141 = vmatprep.subr.mxu0 %v3139
    %3142 = vmatpush1.msra.mxu0 %v3137
    %3143 = vmatprep.subr.mxu0 0.0
    %3144 = vmatpush1.msra.mxu0 0.0
    %3145 = vmatprep.subr.mxu0 0.0
    %3146 = vmatpush1.msra.mxu0 0.0
    %3147 = vmatprep.subr.mxu0 0.0
    %3148 = vmatpush1.msra.mxu0 0.0
    %3149 = vmatprep.subr.mxu0 0.0
    %3150 = vmatpush1.msra.mxu0 0.0
    %3151 = vmatprep.subr.mxu0 0.0
    %3152 = vmatpush1.msra.mxu0 0.0
    %3153 = vmatprep.subr.mxu0 0.0
    %3154 = vmatpush1.msra.mxu0 0.0
    %3155 = vmatprep.subr.mxu0 0.0
    %3156 = vmatpush1.msra.mxu0 0.0
    %3157 = vmatprep.subr.mxu0 0.0
    %3158 = vmatpush1.msra.mxu0 0.0
    %3159 = vmatprep.subr.mxu0 0.0
    %3160 = vmatpush1.msra.mxu0 0.0
    %3161 = vmatprep.subr.mxu0 0.0
    %3162 = vmatpush1.msra.mxu0 0.0
    %3163 = vmatprep.subr.mxu0 0.0
    %3164 = vmatpush1.msra.mxu0 0.0
    %3165 = vmatprep.subr.mxu0 0.0
    %3166 = vmatpush1.msra.mxu0 0.0
    %3167 = vmatprep.subr.mxu0 0.0
    %3168 = vmatpush1.msra.mxu0 0.0
    %3169 = vmatprep.subr.mxu0 0.0
    %3170 = vmatpush1.msra.mxu0 0.0
    %3171 = vmatprep.subr.mxu0 0.0
    %3172 = vmatpush1.msra.mxu0 0.0
    %3173 = vmatprep.subr.mxu0 0.0
    %3174 = vmatpush1.msra.mxu0 0.0
    %3175 = vmatprep.subr.mxu0 0.0
    %3176 = vmatpush1.msra.mxu0 0.0
    %3177 = vmatprep.subr.mxu0 0.0
    %3178 = vmatpush1.msra.mxu0 0.0
    %3179 = vmatprep.subr.mxu0 0.0
    %3180 = vmatpush1.msra.mxu0 0.0
    %3181 = vmatprep.subr.mxu0 0.0
    %3182 = vmatpush1.msra.mxu0 0.0
    %3183 = vmatprep.subr.mxu0 0.0
    %3184 = vmatpush1.msra.mxu0 0.0
    %3185 = vmatprep.subr.mxu0 0.0
    %3186 = vmatpush1.msra.mxu0 0.0
    %3187 = vmatprep.subr.mxu0 0.0
    %3188 = vmatpush1.msra.mxu0 0.0
    %3189 = vmatprep.subr.mxu0 0.0
    %3190 = vmatpush1.msra.mxu0 0.0
    %3191 = vmatprep.subr.mxu0 0.0
    %3192 = vmatpush1.msra.mxu0 0.0
    %3193 = vmatprep.subr.mxu0 0.0
    %3194 = vmatpush1.msra.mxu0 0.0
    %3195 = vmatprep.subr.mxu0 0.0
    %3196 = vmatpush1.msra.mxu0 0.0
    %3197 = vmatprep.subr.mxu0 0.0
    %3198 = vmatpush1.msra.mxu0 0.0
    %3199 = vmatprep.subr.mxu0 0.0
    %3200 = vmatpush1.msra.mxu0 0.0
    %3201 = vmatprep.subr.mxu0 0.0
    %3202 = vmatpush1.msra.mxu0 0.0
    %3203 = vmatprep.subr.mxu0 0.0
    %3204 = vmatpush1.msra.mxu0 0.0
    %3205 = vmatprep.mubr.f32.mxu0 0.0
    %3206 = vmatmul.mubr.f32.gmra.mrb[0].mxu0 %v3126
    %v3207 = vpop.f32.mrb[0].mxu0
    %v3208 = vadd.f32 %v3106, %v3207
    %v3209 = vpop.f32.mrb[0].mxu0
    %v3210 = vadd.f32 %v3106, %v3209
    %3211 = vmatprep.mubr.f32.mxu0 0.0
    %3212 = vmatmul.mubr.f32.gmra.mrb[0].mxu0 %v3129
    %v3213 = vpop.f32.mrb[0].mxu0
    %v3214 = vadd.f32 %v3111, %v3213
    %v3215 = vpop.f32.mrb[0].mxu0
    %v3216 = vadd.f32 %v3111, %v3215
    %3217 = vmatprep.mubr.f32.mxu0 0.0
    %3218 = vmatmul.mubr.f32.gmra.mrb[0].mxu0 %v3132
    %v3219 = vpop.f32.mrb[0].mxu0
    %v3220 = vadd.f32 %v3116, %v3219
    %v3221 = vpop.f32.mrb[0].mxu0
    %v3222 = vadd.f32 %v3116, %v3221
    %3223 = vmatprep.mubr.f32.mxu0 0.0
    %3224 = vmatmul.mubr.f32.gmra.mrb[0].mxu0 %v3135
    %v3225 = vpop.f32.mrb[0].mxu0
    %v3226 = vadd.f32 %v3121, %v3225
    %v3227 = vpop.f32.mrb[0].mxu0
    %v3228 = vadd.f32 %v3121, %v3227
    %3229 = vdwg.mxu0
    %v3230 = vmax.f32 %v3208, 0.0
    %v3231 = vmax.f32 %v3210, 0.0
    %v3232 = vmax.f32 %v3214, 0.0
    %v3233 = vmax.f32 %v3216, 0.0
    %v3234 = vmax.f32 %v3220, 0.0
    %v3235 = vmax.f32 %v3222, 0.0
    %v3236 = vmax.f32 %v3226, 0.0
    %v3237 = vmax.f32 %v3228, 0.0
    %v3238 = vmul.f32 %v3230, %v3095
    %v3239 = vmul.f32 %v3231, %v3096
    %v3240 = vmul.f32 %v3232, %v3097
    %v3241 = vmul.f32 %v3233, %v3098
    %v3242 = vmul.f32 %v3234, %v3099
    %v3243 = vmul.f32 %v3235, %v3100
    %v3244 = vmul.f32 %v3236, %v3101
    %v3245 = vmul.f32 %v3237, %v3102
    %3247 = vset.pattern.permute.xlu0 0
    %3248 = vperm.xlu0 %3247, %v2966
    %v3249 = vpop.permute.xlu0 %3248
    %3252 = vset.pattern.permute.xlu0 0
    %3253 = vperm.xlu0 %3252, %v2967
    %v3254 = vpop.permute.xlu0 %3253
    %3257 = vset.pattern.permute.xlu0 0
    %3258 = vperm.xlu0 %3257, %v2968
    %v3259 = vpop.permute.xlu0 %3258
    %3262 = vset.pattern.permute.xlu0 0
    %3263 = vperm.xlu0 %3262, %v2969
    %v3264 = vpop.permute.xlu0 %3263
    %v3267 = vsel %vm385, %v2961, 0
    %v3270 = vsel %vm385, %v2962, 0
    %v3273 = vsel %vm385, %v2963, 0
    %v3276 = vsel %vm385, %v2964, 0
    %3278 = vmatprep.subr.mxu0 %v3239
    %3279 = vmatpush1.msra.mxu0 %v3238
    %3280 = vmatprep.subr.mxu0 %v3241
    %3281 = vmatpush1.msra.mxu0 %v3240
    %3282 = vmatprep.subr.mxu0 %v3243
    %3283 = vmatpush1.msra.mxu0 %v3242
    %3284 = vmatprep.subr.mxu0 %v3245
    %3285 = vmatpush1.msra.mxu0 %v3244
    %3286 = vmatprep.subr.mxu0 0.0
    %3287 = vmatpush1.msra.mxu0 0.0
    %3288 = vmatprep.subr.mxu0 0.0
    %3289 = vmatpush1.msra.mxu0 0.0
    %3290 = vmatprep.subr.mxu0 0.0
    %3291 = vmatpush1.msra.mxu0 0.0
    %3292 = vmatprep.subr.mxu0 0.0
    %3293 = vmatpush1.msra.mxu0 0.0
    %3294 = vmatprep.subr.mxu0 0.0
    %3295 = vmatpush1.msra.mxu0 0.0
    %3296 = vmatprep.subr.mxu0 0.0
    %3297 = vmatpush1.msra.mxu0 0.0
    %3298 = vmatprep.subr.mxu0 0.0
    %3299 = vmatpush1.msra.mxu0 0.0
    %3300 = vmatprep.subr.mxu0 0.0
    %3301 = vmatpush1.msra.mxu0 0.0
    %3302 = vmatprep.subr.mxu0 0.0
    %3303 = vmatpush1.msra.mxu0 0.0
    %3304 = vmatprep.subr.mxu0 0.0
    %3305 = vmatpush1.msra.mxu0 0.0
    %3306 = vmatprep.subr.mxu0 0.0
    %3307 = vmatpush1.msra.mxu0 0.0
    %3308 = vmatprep.subr.mxu0 0.0
    %3309 = vmatpush1.msra.mxu0 0.0
    %3310 = vmatprep.subr.mxu0 0.0
    %3311 = vmatpush1.msra.mxu0 0.0
    %3312 = vmatprep.subr.mxu0 0.0
    %3313 = vmatpush1.msra.mxu0 0.0
    %3314 = vmatprep.subr.mxu0 0.0
    %3315 = vmatpush1.msra.mxu0 0.0
    %3316 = vmatprep.subr.mxu0 0.0
    %3317 = vmatpush1.msra.mxu0 0.0
    %3318 = vmatprep.subr.mxu0 0.0
    %3319 = vmatpush1.msra.mxu0 0.0
    %3320 = vmatprep.subr.mxu0 0.0
    %3321 = vmatpush1.msra.mxu0 0.0
    %3322 = vmatprep.subr.mxu0 0.0
    %3323 = vmatpush1.msra.mxu0 0.0
    %3324 = vmatprep.subr.mxu0 0.0
    %3325 = vmatpush1.msra.mxu0 0.0
    %3326 = vmatprep.subr.mxu0 0.0
    %3327 = vmatpush1.msra.mxu0 0.0
    %3328 = vmatprep.subr.mxu0 0.0
    %3329 = vmatpush1.msra.mxu0 0.0
    %3330 = vmatprep.subr.mxu0 0.0
    %3331 = vmatpush1.msra.mxu0 0.0
    %3332 = vmatprep.subr.mxu0 0.0
    %3333 = vmatpush1.msra.mxu0 0.0
    %3334 = vmatprep.subr.mxu0 0.0
    %3335 = vmatpush1.msra.mxu0 0.0
    %3336 = vmatprep.subr.mxu0 0.0
    %3337 = vmatpush1.msra.mxu0 0.0
    %3338 = vmatprep.subr.mxu0 0.0
    %3339 = vmatpush1.msra.mxu0 0.0
    %3340 = vmatprep.subr.mxu0 0.0
    %3341 = vmatpush1.msra.mxu0 0.0
    %3342 = vmatprep.mubr.f32.mxu0 0.0
    %3343 = vmatmul.mubr.f32.gmra.mrb[0].mxu0 %v3267
    %v3344 = vpop.f32.mrb[0].mxu0
    %v3345 = vadd.f32 %v3249, %v3344
    %v3346 = vpop.f32.mrb[0].mxu0
    %v3347 = vadd.f32 %v3249, %v3346
    %3348 = vmatprep.mubr.f32.mxu0 0.0
    %3349 = vmatmul.mubr.f32.gmra.mrb[0].mxu0 %v3270
    %v3350 = vpop.f32.mrb[0].mxu0
    %v3351 = vadd.f32 %v3254, %v3350
    %v3352 = vpop.f32.mrb[0].mxu0
    %v3353 = vadd.f32 %v3254, %v3352
    %3354 = vmatprep.mubr.f32.mxu0 0.0
    %3355 = vmatmul.mubr.f32.gmra.mrb[0].mxu0 %v3273
    %v3356 = vpop.f32.mrb[0].mxu0
    %v3357 = vadd.f32 %v3259, %v3356
    %v3358 = vpop.f32.mrb[0].mxu0
    %v3359 = vadd.f32 %v3259, %v3358
    %3360 = vmatprep.mubr.f32.mxu0 0.0
    %3361 = vmatmul.mubr.f32.gmra.mrb[0].mxu0 %v3276
    %v3362 = vpop.f32.mrb[0].mxu0
    %v3363 = vadd.f32 %v3264, %v3362
    %v3364 = vpop.f32.mrb[0].mxu0
    %v3365 = vadd.f32 %v3264, %v3364
    %3366 = vdwg.mxu0
    %v3367 = vmax.f32 %v3345, 0.0
    %v3368 = vmax.f32 %v3347, 0.0
    %v3369 = vmax.f32 %v3351, 0.0
    %v3370 = vmax.f32 %v3353, 0.0
    %v3371 = vmax.f32 %v3357, 0.0
    %v3372 = vmax.f32 %v3359, 0.0
    %v3373 = vmax.f32 %v3363, 0.0
    %v3374 = vmax.f32 %v3365, 0.0
    %v3375 = vadd.f32 %v3367, %v3238
    %v3376 = vadd.f32 %v3368, %v3239
    %v3377 = vadd.f32 %v3369, %v3240
    %v3378 = vadd.f32 %v3370, %v3241
    %v3379 = vadd.f32 %v3371, %v3242
    %v3380 = vadd.f32 %v3372, %v3243
    %v3381 = vadd.f32 %v3373, %v3244
    %v3382 = vadd.f32 %v3374, %v3245
    %3384 = vset.pattern.permute.xlu0 0
    %3385 = vperm.xlu0 %3384, %v2973
    %v3386 = vpop.permute.xlu0 %3385
    %v3389 = vsel %vm385, %v2971, 0
    %3391 = vmatprep.subr.mxu0 %v3376
    %3392 = vmatpush1.msra.mxu0 %v3375
    %3393 = vmatprep.subr.mxu0 %v3378
    %3394 = vmatpush1.msra.mxu0 %v3377
    %3395 = vmatprep.subr.mxu0 %v3380
    %3396 = vmatpush1.msra.mxu0 %v3379
    %3397 = vmatprep.subr.mxu0 %v3382
    %3398 = vmatpush1.msra.mxu0 %v3381
    %3399 = vmatprep.subr.mxu0 0.0
    %3400 = vmatpush1.msra.mxu0 0.0
    %3401 = vmatprep.subr.mxu0 0.0
    %3402 = vmatpush1.msra.mxu0 0.0
    %3403 = vmatprep.subr.mxu0 0.0
    %3404 = vmatpush1.msra.mxu0 0.0
    %3405 = vmatprep.subr.mxu0 0.0
    %3406 = vmatpush1.msra.mxu0 0.0
    %3407 = vmatprep.subr.mxu0 0.0
    %3408 = vmatpush1.msra.mxu0 0.0
    %3409 = vmatprep.subr.mxu0 0.0
    %3410 = vmatpush1.msra.mxu0 0.0
    %3411 = vmatprep.subr.mxu0 0.0
    %3412 = vmatpush1.msra.mxu0 0.0
    %3413 = vmatprep.subr.mxu0 0.0
    %3414 = vmatpush1.msra.mxu0 0.0
    %3415 = vmatprep.subr.mxu0 0.0
    %3416 = vmatpush1.msra.mxu0 0.0
    %3417 = vmatprep.subr.mxu0 0.0
    %3418 = vmatpush1.msra.mxu0 0.0
    %3419 = vmatprep.subr.mxu0 0.0
    %3420 = vmatpush1.msra.mxu0 0.0
    %3421 = vmatprep.subr.mxu0 0.0
    %3422 = vmatpush1.msra.mxu0 0.0
    %3423 = vmatprep.subr.mxu0 0.0
    %3424 = vmatpush1.msra.mxu0 0.0
    %3425 = vmatprep.subr.mxu0 0.0
    %3426 = vmatpush1.msra.mxu0 0.0
    %3427 = vmatprep.subr.mxu0 0.0
    %3428 = vmatpush1.msra.mxu0 0.0
    %3429 = vmatprep.subr.mxu0 0.0
    %3430 = vmatpush1.msra.mxu0 0.0
    %3431 = vmatprep.subr.mxu0 0.0
    %3432 = vmatpush1.msra.mxu0 0.0
    %3433 = vmatprep.subr.mxu0 0.0
    %3434 = vmatpush1.msra.mxu0 0.0
    %3435 = vmatprep.subr.mxu0 0.0
    %3436 = vmatpush1.msra.mxu0 0.0
    %3437 = vmatprep.subr.mxu0 0.0
    %3438 = vmatpush1.msra.mxu0 0.0
    %3439 = vmatprep.subr.mxu0 0.0
    %3440 = vmatpush1.msra.mxu0 0.0
    %3441 = vmatprep.subr.mxu0 0.0
    %3442 = vmatpush1.msra.mxu0 0.0
    %3443 = vmatprep.subr.mxu0 0.0
    %3444 = vmatpush1.msra.mxu0 0.0
    %3445 = vmatprep.subr.mxu0 0.0
    %3446 = vmatpush1.msra.mxu0 0.0
    %3447 = vmatprep.subr.mxu0 0.0
    %3448 = vmatpush1.msra.mxu0 0.0
    %3449 = vmatprep.subr.mxu0 0.0
    %3450 = vmatpush1.msra.mxu0 0.0
    %3451 = vmatprep.subr.mxu0 0.0
    %3452 = vmatpush1.msra.mxu0 0.0
    %3453 = vmatprep.subr.mxu0 0.0
    %3454 = vmatpush1.msra.mxu0 0.0
    %3455 = vmatprep.mubr.f32.mxu0 0.0
    %3456 = vmatmul.mubr.f32.gmra.mrb[0].mxu0 %v3389
    %v3457 = vpop.f32.mrb[0].mxu0
    %v3458 = vadd.f32 %v3386, %v3457
    %v3459 = vpop.f32.mrb[0].mxu0
    %v3460 = vadd.f32 %v3386, %v3459
    %3461 = vdwg.mxu0
    %v3462 = vtanh.pop %v3458
    %v3463 = vtanh.pop %v3460
    %v3464 = vmul.f32 %v3462, 0.041666668
    %v3465 = vmul.f32 %v3463, 0.041666668
    %v3468 = vcombine.low %v3464, %v3465
    %v3470 = vadd.f32 %v2939, %v3468
    %v3471 = vmul.f32 %v3462, 0.125
    %v3472 = vmul.f32 %v3463, 0.125
    %v3475 = vcombine.low %v3471, %v3472
    %v3477 = vadd.f32 %v2939, %v3475
    %v3479 = vcombine.high %v3477, %v3477
    %v3480 = vsel %vm255, %v3477, 0
    %v3482 = vsel %vm255, %v3479, 0
    %3484 = vmatprep.subr.mxu0 %v3482
    %3485 = vmatpush1.msra.mxu0 %v3480
    %3486 = vmatprep.subr.mxu0 0.0
    %3487 = vmatpush1.msra.mxu0 0.0
    %3488 = vmatprep.subr.mxu0 0.0
    %3489 = vmatpush1.msra.mxu0 0.0
    %3490 = vmatprep.subr.mxu0 0.0
    %3491 = vmatpush1.msra.mxu0 0.0
    %3492 = vmatprep.subr.mxu0 0.0
    %3493 = vmatpush1.msra.mxu0 0.0
    %3494 = vmatprep.subr.mxu0 0.0
    %3495 = vmatpush1.msra.mxu0 0.0
    %3496 = vmatprep.subr.mxu0 0.0
    %3497 = vmatpush1.msra.mxu0 0.0
    %3498 = vmatprep.subr.mxu0 0.0
    %3499 = vmatpush1.msra.mxu0 0.0
    %3500 = vmatprep.subr.mxu0 0.0
    %3501 = vmatpush1.msra.mxu0 0.0
    %3502 = vmatprep.subr.mxu0 0.0
    %3503 = vmatpush1.msra.mxu0 0.0
    %3504 = vmatprep.subr.mxu0 0.0
    %3505 = vmatpush1.msra.mxu0 0.0
    %3506 = vmatprep.subr.mxu0 0.0
    %3507 = vmatpush1.msra.mxu0 0.0
    %3508 = vmatprep.subr.mxu0 0.0
    %3509 = vmatpush1.msra.mxu0 0.0
    %3510 = vmatprep.subr.mxu0 0.0
    %3511 = vmatpush1.msra.mxu0 0.0
    %3512 = vmatprep.subr.mxu0 0.0
    %3513 = vmatpush1.msra.mxu0 0.0
    %3514 = vmatprep.subr.mxu0 0.0
    %3515 = vmatpush1.msra.mxu0 0.0
    %3516 = vmatprep.subr.mxu0 0.0
    %3517 = vmatpush1.msra.mxu0 0.0
    %3518 = vmatprep.subr.mxu0 0.0
    %3519 = vmatpush1.msra.mxu0 0.0
    %3520 = vmatprep.subr.mxu0 0.0
    %3521 = vmatpush1.msra.mxu0 0.0
    %3522 = vmatprep.subr.mxu0 0.0
    %3523 = vmatpush1.msra.mxu0 0.0
    %3524 = vmatprep.subr.mxu0 0.0
    %3525 = vmatpush1.msra.mxu0 0.0
    %3526 = vmatprep.subr.mxu0 0.0
    %3527 = vmatpush1.msra.mxu0 0.0
    %3528 = vmatprep.subr.mxu0 0.0
    %3529 = vmatpush1.msra.mxu0 0.0
    %3530 = vmatprep.subr.mxu0 0.0
    %3531 = vmatpush1.msra.mxu0 0.0
    %3532 = vmatprep.subr.mxu0 0.0
    %3533 = vmatpush1.msra.mxu0 0.0
    %3534 = vmatprep.subr.mxu0 0.0
    %3535 = vmatpush1.msra.mxu0 0.0
    %3536 = vmatprep.subr.mxu0 0.0
    %3537 = vmatpush1.msra.mxu0 0.0
    %3538 = vmatprep.subr.mxu0 0.0
    %3539 = vmatpush1.msra.mxu0 0.0
    %3540 = vmatprep.subr.mxu0 0.0
    %3541 = vmatpush1.msra.mxu0 0.0
    %3542 = vmatprep.subr.mxu0 0.0
    %3543 = vmatpush1.msra.mxu0 0.0
    %3544 = vmatprep.subr.mxu0 0.0
    %3545 = vmatpush1.msra.mxu0 0.0
    %3546 = vmatprep.subr.mxu0 0.0
    %3547 = vmatpush1.msra.mxu0 0.0
    %3548 = vmatprep.mubr.f32.mxu0 0.0
    %3549 = vmatmul.mubr.f32.gmra.mrb[0].mxu0 %v3126
    %v3550 = vpop.f32.mrb[0].mxu0
    %v3551 = vadd.f32 %v3106, %v3550
    %v3552 = vpop.f32.mrb[0].mxu0
    %v3553 = vadd.f32 %v3106, %v3552
    %3554 = vmatprep.mubr.f32.mxu0 0.0
    %3555 = vmatmul.mubr.f32.gmra.mrb[0].mxu0 %v3129
    %v3556 = vpop.f32.mrb[0].mxu0
    %v3557 = vadd.f32 %v3111, %v3556
    %v3558 = vpop.f32.mrb[0].mxu0
    %v3559 = vadd.f32 %v3111, %v3558
    %3560 = vmatprep.mubr.f32.mxu0 0.0
    %3561 = vmatmul.mubr.f32.gmra.mrb[0].mxu0 %v3132
    %v3562 = vpop.f32.mrb[0].mxu0
    %v3563 = vadd.f32 %v3116, %v3562
    %v3564 = vpop.f32.mrb[0].mxu0
    %v3565 = vadd.f32 %v3116, %v3564
    %3566 = vmatprep.mubr.f32.mxu0 0.0
    %3567 = vmatmul.mubr.f32.gmra.mrb[0].mxu0 %v3135
    %v3568 = vpop.f32.mrb[0].mxu0
    %v3569 = vadd.f32 %v3121, %v3568
    %v3570 = vpop.f32.mrb[0].mxu0
    %v3571 = vadd.f32 %v3121, %v3570
    %3572 = vdwg.mxu0
    %v3573 = vmax.f32 %v3551, 0.0
    %v3574 = vmax.f32 %v3553, 0.0
    %v3575 = vmax.f32 %v3557, 0.0
    %v3576 = vmax.f32 %v3559, 0.0
    %v3577 = vmax.f32 %v3563, 0.0
    %v3578 = vmax.f32 %v3565, 0.0
    %v3579 = vmax.f32 %v3569, 0.0
    %v3580 = vmax.f32 %v3571, 0.0
    %v3581 = vmul.f32 %v3573, %v3095
    %v3582 = vmul.f32 %v3574, %v3096
    %v3583 = vmul.f32 %v3575, %v3097
    %v3584 = vmul.f32 %v3576, %v3098
    %v3585 = vmul.f32 %v3577, %v3099
    %v3586 = vmul.f32 %v3578, %v3100
    %v3587 = vmul.f32 %v3579, %v3101
    %v3588 = vmul.f32 %v3580, %v3102
    %3589 = vmatprep.subr.mxu0 %v3582
    %3590 = vmatpush1.msra.mxu0 %v3581
    %3591 = vmatprep.subr.mxu0 %v3584
    %3592 = vmatpush1.msra.mxu0 %v3583
    %3593 = vmatprep.subr.mxu0 %v3586
    %3594 = vmatpush1.msra.mxu0 %v3585
    %3595 = vmatprep.subr.mxu0 %v3588
    %3596 = vmatpush1.msra.mxu0 %v3587
    %3597 = vmatprep.subr.mxu0 0.0
    %3598 = vmatpush1.msra.mxu0 0.0
    %3599 = vmatprep.subr.mxu0 0.0
    %3600 = vmatpush1.msra.mxu0 0.0
    %3601 = vmatprep.subr.mxu0 0.0
    %3602 = vmatpush1.msra.mxu0 0.0
    %3603 = vmatprep.subr.mxu0 0.0
    %3604 = vmatpush1.msra.mxu0 0.0
    %3605 = vmatprep.subr.mxu0 0.0
    %3606 = vmatpush1.msra.mxu0 0.0
    %3607 = vmatprep.subr.mxu0 0.0
    %3608 = vmatpush1.msra.mxu0 0.0
    %3609 = vmatprep.subr.mxu0 0.0
    %3610 = vmatpush1.msra.mxu0 0.0
    %3611 = vmatprep.subr.mxu0 0.0
    %3612 = vmatpush1.msra.mxu0 0.0
    %3613 = vmatprep.subr.mxu0 0.0
    %3614 = vmatpush1.msra.mxu0 0.0
    %3615 = vmatprep.subr.mxu0 0.0
    %3616 = vmatpush1.msra.mxu0 0.0
    %3617 = vmatprep.subr.mxu0 0.0
    %3618 = vmatpush1.msra.mxu0 0.0
    %3619 = vmatprep.subr.mxu0 0.0
    %3620 = vmatpush1.msra.mxu0 0.0
    %3621 = vmatprep.subr.mxu0 0.0
    %3622 = vmatpush1.msra.mxu0 0.0
    %3623 = vmatprep.subr.mxu0 0.0
    %3624 = vmatpush1.msra.mxu0 0.0
    %3625 = vmatprep.subr.mxu0 0.0
    %3626 = vmatpush1.msra.mxu0 0.0
    %3627 = vmatprep.subr.mxu0 0.0
    %3628 = vmatpush1.msra.mxu0 0.0
    %3629 = vmatprep.subr.mxu0 0.0
    %3630 = vmatpush1.msra.mxu0 0.0
    %3631 = vmatprep.subr.mxu0 0.0
    %3632 = vmatpush1.msra.mxu0 0.0
    %3633 = vmatprep.subr.mxu0 0.0
    %3634 = vmatpush1.msra.mxu0 0.0
    %3635 = vmatprep.subr.mxu0 0.0
    %3636 = vmatpush1.msra.mxu0 0.0
    %3637 = vmatprep.subr.mxu0 0.0
    %3638 = vmatpush1.msra.mxu0 0.0
    %3639 = vmatprep.subr.mxu0 0.0
    %3640 = vmatpush1.msra.mxu0 0.0
    %3641 = vmatprep.subr.mxu0 0.0
    %3642 = vmatpush1.msra.mxu0 0.0
    %3643 = vmatprep.subr.mxu0 0.0
    %3644 = vmatpush1.msra.mxu0 0.0
    %3645 = vmatprep.subr.mxu0 0.0
    %3646 = vmatpush1.msra.mxu0 0.0
    %3647 = vmatprep.subr.mxu0 0.0
    %3648 = vmatpush1.msra.mxu0 0.0
    %3649 = vmatprep.subr.mxu0 0.0
    %3650 = vmatpush1.msra.mxu0 0.0
    %3651 = vmatprep.subr.mxu0 0.0
    %3652 = vmatpush1.msra.mxu0 0.0
    %3653 = vmatprep.mubr.f32.mxu0 0.0
    %3654 = vmatmul.mubr.f32.gmra.mrb[0].mxu0 %v3267
    %v3655 = vpop.f32.mrb[0].mxu0
    %v3656 = vadd.f32 %v3249, %v3655
    %v3657 = vpop.f32.mrb[0].mxu0
    %v3658 = vadd.f32 %v3249, %v3657
    %3659 = vmatprep.mubr.f32.mxu0 0.0
    %3660 = vmatmul.mubr.f32.gmra.mrb[0].mxu0 %v3270
    %v3661 = vpop.f32.mrb[0].mxu0
    %v3662 = vadd.f32 %v3254, %v3661
    %v3663 = vpop.f32.mrb[0].mxu0
    %v3664 = vadd.f32 %v3254, %v3663
    %3665 = vmatprep.mubr.f32.mxu0 0.0
    %3666 = vmatmul.mubr.f32.gmra.mrb[0].mxu0 %v3273
    %v3667 = vpop.f32.mrb[0].mxu0
    %v3668 = vadd.f32 %v3259, %v3667
    %v3669 = vpop.f32.mrb[0].mxu0
    %v3670 = vadd.f32 %v3259, %v3669
    %3671 = vmatprep.mubr.f32.mxu0 0.0
    %3672 = vmatmul.mubr.f32.gmra.mrb[0].mxu0 %v3276
    %v3673 = vpop.f32.mrb[0].mxu0
    %v3674 = vadd.f32 %v3264, %v3673
    %v3675 = vpop.f32.mrb[0].mxu0
    %v3676 = vadd.f32 %v3264, %v3675
    %3677 = vdwg.mxu0
    %v3678 = vmax.f32 %v3656, 0.0
    %v3679 = vmax.f32 %v3658, 0.0
    %v3680 = vmax.f32 %v3662, 0.0
    %v3681 = vmax.f32 %v3664, 0.0
    %v3682 = vmax.f32 %v3668, 0.0
    %v3683 = vmax.f32 %v3670, 0.0
    %v3684 = vmax.f32 %v3674, 0.0
    %v3685 = vmax.f32 %v3676, 0.0
    %v3686 = vadd.f32 %v3678, %v3581
    %v3687 = vadd.f32 %v3679, %v3582
    %v3688 = vadd.f32 %v3680, %v3583
    %v3689 = vadd.f32 %v3681, %v3584
    %v3690 = vadd.f32 %v3682, %v3585
    %v3691 = vadd.f32 %v3683, %v3586
    %v3692 = vadd.f32 %v3684, %v3587
    %v3693 = vadd.f32 %v3685, %v3588
    %3694 = vmatprep.subr.mxu0 %v3687
    %3695 = vmatpush1.msra.mxu0 %v3686
    %3696 = vmatprep.subr.mxu0 %v3689
    %3697 = vmatpush1.msra.mxu0 %v3688
    %3698 = vmatprep.subr.mxu0 %v3691
    %3699 = vmatpush1.msra.mxu0 %v3690
    %3700 = vmatprep.subr.mxu0 %v3693
    %3701 = vmatpush1.msra.mxu0 %v3692
    %3702 = vmatprep.subr.mxu0 0.0
    %3703 = vmatpush1.msra.mxu0 0.0
    %3704 = vmatprep.subr.mxu0 0.0
    %3705 = vmatpush1.msra.mxu0 0.0
    %3706 = vmatprep.subr.mxu0 0.0
    %3707 = vmatpush1.msra.mxu0 0.0
    %3708 = vmatprep.subr.mxu0 0.0
    %3709 = vmatpush1.msra.mxu0 0.0
    %3710 = vmatprep.subr.mxu0 0.0
    %3711 = vmatpush1.msra.mxu0 0.0
    %3712 = vmatprep.subr.mxu0 0.0
    %3713 = vmatpush1.msra.mxu0 0.0
    %3714 = vmatprep.subr.mxu0 0.0
    %3715 = vmatpush1.msra.mxu0 0.0
    %3716 = vmatprep.subr.mxu0 0.0
    %3717 = vmatpush1.msra.mxu0 0.0
    %3718 = vmatprep.subr.mxu0 0.0
    %3719 = vmatpush1.msra.mxu0 0.0
    %3720 = vmatprep.subr.mxu0 0.0
    %3721 = vmatpush1.msra.mxu0 0.0
    %3722 = vmatprep.subr.mxu0 0.0
    %3723 = vmatpush1.msra.mxu0 0.0
    %3724 = vmatprep.subr.mxu0 0.0
    %3725 = vmatpush1.msra.mxu0 0.0
    %3726 = vmatprep.subr.mxu0 0.0
    %3727 = vmatpush1.msra.mxu0 0.0
    %3728 = vmatprep.subr.mxu0 0.0
    %3729 = vmatpush1.msra.mxu0 0.0
    %3730 = vmatprep.subr.mxu0 0.0
    %3731 = vmatpush1.msra.mxu0 0.0
    %3732 = vmatprep.subr.mxu0 0.0
    %3733 = vmatpush1.msra.mxu0 0.0
    %3734 = vmatprep.subr.mxu0 0.0
    %3735 = vmatpush1.msra.mxu0 0.0
    %3736 = vmatprep.subr.mxu0 0.0
    %3737 = vmatpush1.msra.mxu0 0.0
    %3738 = vmatprep.subr.mxu0 0.0
    %3739 = vmatpush1.msra.mxu0 0.0
    %3740 = vmatprep.subr.mxu0 0.0
    %3741 = vmatpush1.msra.mxu0 0.0
    %3742 = vmatprep.subr.mxu0 0.0
    %3743 = vmatpush1.msra.mxu0 0.0
    %3744 = vmatprep.subr.mxu0 0.0
    %3745 = vmatpush1.msra.mxu0 0.0
    %3746 = vmatprep.subr.mxu0 0.0
    %3747 = vmatpush1.msra.mxu0 0.0
    %3748 = vmatprep.subr.mxu0 0.0
    %3749 = vmatpush1.msra.mxu0 0.0
    %3750 = vmatprep.subr.mxu0 0.0
    %3751 = vmatpush1.msra.mxu0 0.0
    %3752 = vmatprep.subr.mxu0 0.0
    %3753 = vmatpush1.msra.mxu0 0.0
    %3754 = vmatprep.subr.mxu0 0.0
    %3755 = vmatpush1.msra.mxu0 0.0
    %3756 = vmatprep.subr.mxu0 0.0
    %3757 = vmatpush1.msra.mxu0 0.0
    %3758 = vmatprep.mubr.f32.mxu0 0.0
    %3759 = vmatmul.mubr.f32.gmra.mrb[0].mxu0 %v3389
    %v3760 = vpop.f32.mrb[0].mxu0
    %v3761 = vadd.f32 %v3386, %v3760
    %v3762 = vpop.f32.mrb[0].mxu0
    %v3763 = vadd.f32 %v3386, %v3762
    %3764 = vdwg.mxu0
    %v3765 = vtanh.pop %v3761
    %v3766 = vtanh.pop %v3763
    %v3767 = vmul.f32 %v3765, 0.083333336
    %v3768 = vmul.f32 %v3766, 0.083333336
    %v3771 = vcombine.low %v3767, %v3768
    %v3773 = vadd.f32 %v3470, %v3771
    %v3774 = vmul.f32 %v3765, 0.125
    %v3775 = vmul.f32 %v3766, 0.125
    %v3778 = vcombine.low %v3774, %v3775
    %v3780 = vadd.f32 %v2939, %v3778
    %v3782 = vcombine.high %v3780, %v3780
    %v3783 = vsel %vm255, %v3780, 0
    %v3785 = vsel %vm255, %v3782, 0
    %3787 = vmatprep.subr.mxu0 %v3785
    %3788 = vmatpush1.msra.mxu0 %v3783
    %3789 = vmatprep.subr.mxu0 0.0
    %3790 = vmatpush1.msra.mxu0 0.0
    %3791 = vmatprep.subr.mxu0 0.0
    %3792 = vmatpush1.msra.mxu0 0.0
    %3793 = vmatprep.subr.mxu0 0.0
    %3794 = vmatpush1.msra.mxu0 0.0
    %3795 = vmatprep.subr.mxu0 0.0
    %3796 = vmatpush1.msra.mxu0 0.0
    %3797 = vmatprep.subr.mxu0 0.0
    %3798 = vmatpush1.msra.mxu0 0.0
    %3799 = vmatprep.subr.mxu0 0.0
    %3800 = vmatpush1.msra.mxu0 0.0
    %3801 = vmatprep.subr.mxu0 0.0
    %3802 = vmatpush1.msra.mxu0 0.0
    %3803 = vmatprep.subr.mxu0 0.0
    %3804 = vmatpush1.msra.mxu0 0.0
    %3805 = vmatprep.subr.mxu0 0.0
    %3806 = vmatpush1.msra.mxu0 0.0
    %3807 = vmatprep.subr.mxu0 0.0
    %3808 = vmatpush1.msra.mxu0 0.0
    %3809 = vmatprep.subr.mxu0 0.0
    %3810 = vmatpush1.msra.mxu0 0.0
    %3811 = vmatprep.subr.mxu0 0.0
    %3812 = vmatpush1.msra.mxu0 0.0
    %3813 = vmatprep.subr.mxu0 0.0
    %3814 = vmatpush1.msra.mxu0 0.0
    %3815 = vmatprep.subr.mxu0 0.0
    %3816 = vmatpush1.msra.mxu0 0.0
    %3817 = vmatprep.subr.mxu0 0.0
    %3818 = vmatpush1.msra.mxu0 0.0
    %3819 = vmatprep.subr.mxu0 0.0
    %3820 = vmatpush1.msra.mxu0 0.0
    %3821 = vmatprep.subr.mxu0 0.0
    %3822 = vmatpush1.msra.mxu0 0.0
    %3823 = vmatprep.subr.mxu0 0.0
    %3824 = vmatpush1.msra.mxu0 0.0
    %3825 = vmatprep.subr.mxu0 0.0
    %3826 = vmatpush1.msra.mxu0 0.0
    %3827 = vmatprep.subr.mxu0 0.0
    %3828 = vmatpush1.msra.mxu0 0.0
    %3829 = vmatprep.subr.mxu0 0.0
    %3830 = vmatpush1.msra.mxu0 0.0
    %3831 = vmatprep.subr.mxu0 0.0
    %3832 = vmatpush1.msra.mxu0 0.0
    %3833 = vmatprep.subr.mxu0 0.0
    %3834 = vmatpush1.msra.mxu0 0.0
    %3835 = vmatprep.subr.mxu0 0.0
    %3836 = vmatpush1.msra.mxu0 0.0
    %3837 = vmatprep.subr.mxu0 0.0
    %3838 = vmatpush1.msra.mxu0 0.0
    %3839 = vmatprep.subr.mxu0 0.0
    %3840 = vmatpush1.msra.mxu0 0.0
    %3841 = vmatprep.subr.mxu0 0.0
    %3842 = vmatpush1.msra.mxu0 0.0
    %3843 = vmatprep.subr.mxu0 0.0
    %3844 = vmatpush1.msra.mxu0 0.0
    %3845 = vmatprep.subr.mxu0 0.0
    %3846 = vmatpush1.msra.mxu0 0.0
    %3847 = vmatprep.subr.mxu0 0.0
    %3848 = vmatpush1.msra.mxu0 0.0
    %3849 = vmatprep.subr.mxu0 0.0
    %3850 = vmatpush1.msra.mxu0 0.0
    %3851 = vmatprep.mubr.f32.mxu0 0.0
    %3852 = vmatmul.mubr.f32.gmra.mrb[0].mxu0 %v3126
    %v3853 = vpop.f32.mrb[0].mxu0
    %v3854 = vadd.f32 %v3106, %v3853
    %v3855 = vpop.f32.mrb[0].mxu0
    %v3856 = vadd.f32 %v3106, %v3855
    %3857 = vmatprep.mubr.f32.mxu0 0.0
    %3858 = vmatmul.mubr.f32.gmra.mrb[0].mxu0 %v3129
    %v3859 = vpop.f32.mrb[0].mxu0
    %v3860 = vadd.f32 %v3111, %v3859
    %v3861 = vpop.f32.mrb[0].mxu0
    %v3862 = vadd.f32 %v3111, %v3861
    %3863 = vmatprep.mubr.f32.mxu0 0.0
    %3864 = vmatmul.mubr.f32.gmra.mrb[0].mxu0 %v3132
    %v3865 = vpop.f32.mrb[0].mxu0
    %v3866 = vadd.f32 %v3116, %v3865
    %v3867 = vpop.f32.mrb[0].mxu0
    %v3868 = vadd.f32 %v3116, %v3867
    %3869 = vmatprep.mubr.f32.mxu0 0.0
    %3870 = vmatmul.mubr.f32.gmra.mrb[0].mxu0 %v3135
    %v3871 = vpop.f32.mrb[0].mxu0
    %v3872 = vadd.f32 %v3121, %v3871
    %v3873 = vpop.f32.mrb[0].mxu0
    %v3874 = vadd.f32 %v3121, %v3873
    %3875 = vdwg.mxu0
    %v3876 = vmax.f32 %v3854, 0.0
    %v3877 = vmax.f32 %v3856, 0.0
    %v3878 = vmax.f32 %v3860, 0.0
    %v3879 = vmax.f32 %v3862, 0.0
    %v3880 = vmax.f32 %v3866, 0.0
    %v3881 = vmax.f32 %v3868, 0.0
    %v3882 = vmax.f32 %v3872, 0.0
    %v3883 = vmax.f32 %v3874, 0.0
    %v3884 = vmul.f32 %v3876, %v3095
    %v3885 = vmul.f32 %v3877, %v3096
    %v3886 = vmul.f32 %v3878, %v3097
    %v3887 = vmul.f32 %v3879, %v3098
    %v3888 = vmul.f32 %v3880, %v3099
    %v3889 = vmul.f32 %v3881, %v3100
    %v3890 = vmul.f32 %v3882, %v3101
    %v3891 = vmul.f32 %v3883, %v3102
    %3892 = vmatprep.subr.mxu0 %v3885
    %3893 = vmatpush1.msra.mxu0 %v3884
    %3894 = vmatprep.subr.mxu0 %v3887
    %3895 = vmatpush1.msra.mxu0 %v3886
    %3896 = vmatprep.subr.mxu0 %v3889
    %3897 = vmatpush1.msra.mxu0 %v3888
    %3898 = vmatprep.subr.mxu0 %v3891
    %3899 = vmatpush1.msra.mxu0 %v3890
    %3900 = vmatprep.subr.mxu0 0.0
    %3901 = vmatpush1.msra.mxu0 0.0
    %3902 = vmatprep.subr.mxu0 0.0
    %3903 = vmatpush1.msra.mxu0 0.0
    %3904 = vmatprep.subr.mxu0 0.0
    %3905 = vmatpush1.msra.mxu0 0.0
    %3906 = vmatprep.subr.mxu0 0.0
    %3907 = vmatpush1.msra.mxu0 0.0
    %3908 = vmatprep.subr.mxu0 0.0
    %3909 = vmatpush1.msra.mxu0 0.0
    %3910 = vmatprep.subr.mxu0 0.0
    %3911 = vmatpush1.msra.mxu0 0.0
    %3912 = vmatprep.subr.mxu0 0.0
    %3913 = vmatpush1.msra.mxu0 0.0
    %3914 = vmatprep.subr.mxu0 0.0
    %3915 = vmatpush1.msra.mxu0 0.0
    %3916 = vmatprep.subr.mxu0 0.0
    %3917 = vmatpush1.msra.mxu0 0.0
    %3918 = vmatprep.subr.mxu0 0.0
    %3919 = vmatpush1.msra.mxu0 0.0
    %3920 = vmatprep.subr.mxu0 0.0
    %3921 = vmatpush1.msra.mxu0 0.0
    %3922 = vmatprep.subr.mxu0 0.0
    %3923 = vmatpush1.msra.mxu0 0.0
    %3924 = vmatprep.subr.mxu0 0.0
    %3925 = vmatpush1.msra.mxu0 0.0
    %3926 = vmatprep.subr.mxu0 0.0
    %3927 = vmatpush1.msra.mxu0 0.0
    %3928 = vmatprep.subr.mxu0 0.0
    %3929 = vmatpush1.msra.mxu0 0.0
    %3930 = vmatprep.subr.mxu0 0.0
    %3931 = vmatpush1.msra.mxu0 0.0
    %3932 = vmatprep.subr.mxu0 0.0
    %3933 = vmatpush1.msra.mxu0 0.0
    %3934 = vmatprep.subr.mxu0 0.0
    %3935 = vmatpush1.msra.mxu0 0.0
    %3936 = vmatprep.subr.mxu0 0.0
    %3937 = vmatpush1.msra.mxu0 0.0
    %3938 = vmatprep.subr.mxu0 0.0
    %3939 = vmatpush1.msra.mxu0 0.0
    %3940 = vmatprep.subr.mxu0 0.0
    %3941 = vmatpush1.msra.mxu0 0.0
    %3942 = vmatprep.subr.mxu0 0.0
    %3943 = vmatpush1.msra.mxu0 0.0
    %3944 = vmatprep.subr.mxu0 0.0
    %3945 = vmatpush1.msra.mxu0 0.0
    %3946 = vmatprep.subr.mxu0 0.0
    %3947 = vmatpush1.msra.mxu0 0.0
    %3948 = vmatprep.subr.mxu0 0.0
    %3949 = vmatpush1.msra.mxu0 0.0
    %3950 = vmatprep.subr.mxu0 0.0
    %3951 = vmatpush1.msra.mxu0 0.0
    %3952 = vmatprep.subr.mxu0 0.0
    %3953 = vmatpush1.msra.mxu0 0.0
    %3954 = vmatprep.subr.mxu0 0.0
    %3955 = vmatpush1.msra.mxu0 0.0
    %3956 = vmatprep.mubr.f32.mxu0 0.0
    %3957 = vmatmul.mubr.f32.gmra.mrb[0].mxu0 %v3267
    %v3958 = vpop.f32.mrb[0].mxu0
    %v3959 = vadd.f32 %v3249, %v3958
    %v3960 = vpop.f32.mrb[0].mxu0
    %v3961 = vadd.f32 %v3249, %v3960
    %3962 = vmatprep.mubr.f32.mxu0 0.0
    %3963 = vmatmul.mubr.f32.gmra.mrb[0].mxu0 %v3270
    %v3964 = vpop.f32.mrb[0].mxu0
    %v3965 = vadd.f32 %v3254, %v3964
    %v3966 = vpop.f32.mrb[0].mxu0
    %v3967 = vadd.f32 %v3254, %v3966
    %3968 = vmatprep.mubr.f32.mxu0 0.0
    %3969 = vmatmul.mubr.f32.gmra.mrb[0].mxu0 %v3273
    %v3970 = vpop.f32.mrb[0].mxu0
    %v3971 = vadd.f32 %v3259, %v3970
    %v3972 = vpop.f32.mrb[0].mxu0
    %v3973 = vadd.f32 %v3259, %v3972
    %3974 = vmatprep.mubr.f32.mxu0 0.0
    %3975 = vmatmul.mubr.f32.gmra.mrb[0].mxu0 %v3276
    %v3976 = vpop.f32.mrb[0].mxu0
    %v3977 = vadd.f32 %v3264, %v3976
    %v3978 = vpop.f32.mrb[0].mxu0
    %v3979 = vadd.f32 %v3264, %v3978
    %3980 = vdwg.mxu0
    %v3981 = vmax.f32 %v3959, 0.0
    %v3982 = vmax.f32 %v3961, 0.0
    %v3983 = vmax.f32 %v3965, 0.0
    %v3984 = vmax.f32 %v3967, 0.0
    %v3985 = vmax.f32 %v3971, 0.0
    %v3986 = vmax.f32 %v3973, 0.0
    %v3987 = vmax.f32 %v3977, 0.0
    %v3988 = vmax.f32 %v3979, 0.0
    %v3989 = vadd.f32 %v3981, %v3884
    %v3990 = vadd.f32 %v3982, %v3885
    %v3991 = vadd.f32 %v3983, %v3886
    %v3992 = vadd.f32 %v3984, %v3887
    %v3993 = vadd.f32 %v3985, %v3888
    %v3994 = vadd.f32 %v3986, %v3889
    %v3995 = vadd.f32 %v3987, %v3890
    %v3996 = vadd.f32 %v3988, %v3891
    %3997 = vmatprep.subr.mxu0 %v3990
    %3998 = vmatpush1.msra.mxu0 %v3989
    %3999 = vmatprep.subr.mxu0 %v3992
    %4000 = vmatpush1.msra.mxu0 %v3991
    %4001 = vmatprep.subr.mxu0 %v3994
    %4002 = vmatpush1.msra.mxu0 %v3993
    %4003 = vmatprep.subr.mxu0 %v3996
    %4004 = vmatpush1.msra.mxu0 %v3995
    %4005 = vmatprep.subr.mxu0 0.0
    %4006 = vmatpush1.msra.mxu0 0.0
    %4007 = vmatprep.subr.mxu0 0.0
    %4008 = vmatpush1.msra.mxu0 0.0
    %4009 = vmatprep.subr.mxu0 0.0
    %4010 = vmatpush1.msra.mxu0 0.0
    %4011 = vmatprep.subr.mxu0 0.0
    %4012 = vmatpush1.msra.mxu0 0.0
    %4013 = vmatprep.subr.mxu0 0.0
    %4014 = vmatpush1.msra.mxu0 0.0
    %4015 = vmatprep.subr.mxu0 0.0
    %4016 = vmatpush1.msra.mxu0 0.0
    %4017 = vmatprep.subr.mxu0 0.0
    %4018 = vmatpush1.msra.mxu0 0.0
    %4019 = vmatprep.subr.mxu0 0.0
    %4020 = vmatpush1.msra.mxu0 0.0
    %4021 = vmatprep.subr.mxu0 0.0
    %4022 = vmatpush1.msra.mxu0 0.0
    %4023 = vmatprep.subr.mxu0 0.0
    %4024 = vmatpush1.msra.mxu0 0.0
    %4025 = vmatprep.subr.mxu0 0.0
    %4026 = vmatpush1.msra.mxu0 0.0
    %4027 = vmatprep.subr.mxu0 0.0
    %4028 = vmatpush1.msra.mxu0 0.0
    %4029 = vmatprep.subr.mxu0 0.0
    %4030 = vmatpush1.msra.mxu0 0.0
    %4031 = vmatprep.subr.mxu0 0.0
    %4032 = vmatpush1.msra.mxu0 0.0
    %4033 = vmatprep.subr.mxu0 0.0
    %4034 = vmatpush1.msra.mxu0 0.0
    %4035 = vmatprep.subr.mxu0 0.0
    %4036 = vmatpush1.msra.mxu0 0.0
    %4037 = vmatprep.subr.mxu0 0.0
    %4038 = vmatpush1.msra.mxu0 0.0
    %4039 = vmatprep.subr.mxu0 0.0
    %4040 = vmatpush1.msra.mxu0 0.0
    %4041 = vmatprep.subr.mxu0 0.0
    %4042 = vmatpush1.msra.mxu0 0.0
    %4043 = vmatprep.subr.mxu0 0.0
    %4044 = vmatpush1.msra.mxu0 0.0
    %4045 = vmatprep.subr.mxu0 0.0
    %4046 = vmatpush1.msra.mxu0 0.0
    %4047 = vmatprep.subr.mxu0 0.0
    %4048 = vmatpush1.msra.mxu0 0.0
    %4049 = vmatprep.subr.mxu0 0.0
    %4050 = vmatpush1.msra.mxu0 0.0
    %4051 = vmatprep.subr.mxu0 0.0
    %4052 = vmatpush1.msra.mxu0 0.0
    %4053 = vmatprep.subr.mxu0 0.0
    %4054 = vmatpush1.msra.mxu0 0.0
    %4055 = vmatprep.subr.mxu0 0.0
    %4056 = vmatpush1.msra.mxu0 0.0
    %4057 = vmatprep.subr.mxu0 0.0
    %4058 = vmatpush1.msra.mxu0 0.0
    %4059 = vmatprep.subr.mxu0 0.0
    %4060 = vmatpush1.msra.mxu0 0.0
    %4061 = vmatprep.mubr.f32.mxu0 0.0
    %4062 = vmatmul.mubr.f32.gmra.mrb[0].mxu0 %v3389
    %v4063 = vpop.f32.mrb[0].mxu0
    %v4064 = vadd.f32 %v3386, %v4063
    %v4065 = vpop.f32.mrb[0].mxu0
    %v4066 = vadd.f32 %v3386, %v4065
    %4067 = vdwg.mxu0
    %v4068 = vtanh.pop %v4064
    %v4069 = vtanh.pop %v4066
    %v4070 = vmul.f32 %v4068, 0.083333336
    %v4071 = vmul.f32 %v4069, 0.083333336
    %v4074 = vcombine.low %v4070, %v4071
    %v4076 = vadd.f32 %v3773, %v4074
    %v4077 = vmul.f32 %v4068, 0.25
    %v4078 = vmul.f32 %v4069, 0.25
    %v4081 = vcombine.low %v4077, %v4078
    %v4083 = vadd.f32 %v2939, %v4081
    %v4085 = vcombine.high %v4083, %v4083
    %v4086 = vsel %vm255, %v4083, 0
    %v4088 = vsel %vm255, %v4085, 0
    %4090 = vmatprep.subr.mxu0 %v4088
    %4091 = vmatpush1.msra.mxu0 %v4086
    %4092 = vmatprep.subr.mxu0 0.0
    %4093 = vmatpush1.msra.mxu0 0.0
    %4094 = vmatprep.subr.mxu0 0.0
    %4095 = vmatpush1.msra.mxu0 0.0
    %4096 = vmatprep.subr.mxu0 0.0
    %4097 = vmatpush1.msra.mxu0 0.0
    %4098 = vmatprep.subr.mxu0 0.0
    %4099 = vmatpush1.msra.mxu0 0.0
    %4100 = vmatprep.subr.mxu0 0.0
    %4101 = vmatpush1.msra.mxu0 0.0
    %4102 = vmatprep.subr.mxu0 0.0
    %4103 = vmatpush1.msra.mxu0 0.0
    %4104 = vmatprep.subr.mxu0 0.0
    %4105 = vmatpush1.msra.mxu0 0.0
    %4106 = vmatprep.subr.mxu0 0.0
    %4107 = vmatpush1.msra.mxu0 0.0
    %4108 = vmatprep.subr.mxu0 0.0
    %4109 = vmatpush1.msra.mxu0 0.0
    %4110 = vmatprep.subr.mxu0 0.0
    %4111 = vmatpush1.msra.mxu0 0.0
    %4112 = vmatprep.subr.mxu0 0.0
    %4113 = vmatpush1.msra.mxu0 0.0
    %4114 = vmatprep.subr.mxu0 0.0
    %4115 = vmatpush1.msra.mxu0 0.0
    %4116 = vmatprep.subr.mxu0 0.0
    %4117 = vmatpush1.msra.mxu0 0.0
    %4118 = vmatprep.subr.mxu0 0.0
    %4119 = vmatpush1.msra.mxu0 0.0
    %4120 = vmatprep.subr.mxu0 0.0
    %4121 = vmatpush1.msra.mxu0 0.0
    %4122 = vmatprep.subr.mxu0 0.0
    %4123 = vmatpush1.msra.mxu0 0.0
    %4124 = vmatprep.subr.mxu0 0.0
    %4125 = vmatpush1.msra.mxu0 0.0
    %4126 = vmatprep.subr.mxu0 0.0
    %4127 = vmatpush1.msra.mxu0 0.0
    %4128 = vmatprep.subr.mxu0 0.0
    %4129 = vmatpush1.msra.mxu0 0.0
    %4130 = vmatprep.subr.mxu0 0.0
    %4131 = vmatpush1.msra.mxu0 0.0
    %4132 = vmatprep.subr.mxu0 0.0
    %4133 = vmatpush1.msra.mxu0 0.0
    %4134 = vmatprep.subr.mxu0 0.0
    %4135 = vmatpush1.msra.mxu0 0.0
    %4136 = vmatprep.subr.mxu0 0.0
    %4137 = vmatpush1.msra.mxu0 0.0
    %4138 = vmatprep.subr.mxu0 0.0
    %4139 = vmatpush1.msra.mxu0 0.0
    %4140 = vmatprep.subr.mxu0 0.0
    %4141 = vmatpush1.msra.mxu0 0.0
    %4142 = vmatprep.subr.mxu0 0.0
    %4143 = vmatpush1.msra.mxu0 0.0
    %4144 = vmatprep.subr.mxu0 0.0
    %4145 = vmatpush1.msra.mxu0 0.0
    %4146 = vmatprep.subr.mxu0 0.0
    %4147 = vmatpush1.msra.mxu0 0.0
    %4148 = vmatprep.subr.mxu0 0.0
    %4149 = vmatpush1.msra.mxu0 0.0
    %4150 = vmatprep.subr.mxu0 0.0
    %4151 = vmatpush1.msra.mxu0 0.0
    %4152 = vmatprep.subr.mxu0 0.0
    %4153 = vmatpush1.msra.mxu0 0.0
    %4154 = vmatprep.mubr.f32.mxu0 0.0
    %4155 = vmatmul.mubr.f32.gmra.mrb[0].mxu0 %v3126
    %v4156 = vpop.f32.mrb[0].mxu0
    %v4157 = vadd.f32 %v3106, %v4156
    %v4158 = vpop.f32.mrb[0].mxu0
    %v4159 = vadd.f32 %v3106, %v4158
    %4160 = vmatprep.mubr.f32.mxu0 0.0
    %4161 = vmatmul.mubr.f32.gmra.mrb[0].mxu0 %v3129
    %v4162 = vpop.f32.mrb[0].mxu0
    %v4163 = vadd.f32 %v3111, %v4162
    %v4164 = vpop.f32.mrb[0].mxu0
    %v4165 = vadd.f32 %v3111, %v4164
    %4166 = vmatprep.mubr.f32.mxu0 0.0
    %4167 = vmatmul.mubr.f32.gmra.mrb[0].mxu0 %v3132
    %v4168 = vpop.f32.mrb[0].mxu0
    %v4169 = vadd.f32 %v3116, %v4168
    %v4170 = vpop.f32.mrb[0].mxu0
    %v4171 = vadd.f32 %v3116, %v4170
    %4172 = vmatprep.mubr.f32.mxu0 0.0
    %4173 = vmatmul.mubr.f32.gmra.mrb[0].mxu0 %v3135
    %v4174 = vpop.f32.mrb[0].mxu0
    %v4175 = vadd.f32 %v3121, %v4174
    %v4176 = vpop.f32.mrb[0].mxu0
    %v4177 = vadd.f32 %v3121, %v4176
    %4178 = vdwg.mxu0
    %v4179 = vmax.f32 %v4157, 0.0
    %v4180 = vmax.f32 %v4159, 0.0
    %v4181 = vmax.f32 %v4163, 0.0
    %v4182 = vmax.f32 %v4165, 0.0
    %v4183 = vmax.f32 %v4169, 0.0
    %v4184 = vmax.f32 %v4171, 0.0
    %v4185 = vmax.f32 %v4175, 0.0
    %v4186 = vmax.f32 %v4177, 0.0
    %v4187 = vmul.f32 %v4179, %v3095
    %v4188 = vmul.f32 %v4180, %v3096
    %v4189 = vmul.f32 %v4181, %v3097
    %v4190 = vmul.f32 %v4182, %v3098
    %v4191 = vmul.f32 %v4183, %v3099
    %v4192 = vmul.f32 %v4184, %v3100
    %v4193 = vmul.f32 %v4185, %v3101
    %v4194 = vmul.f32 %v4186, %v3102
    %4195 = vmatprep.subr.mxu0 %v4188
    %4196 = vmatpush1.msra.mxu0 %v4187
    %4197 = vmatprep.subr.mxu0 %v4190
    %4198 = vmatpush1.msra.mxu0 %v4189
    %4199 = vmatprep.subr.mxu0 %v4192
    %4200 = vmatpush1.msra.mxu0 %v4191
    %4201 = vmatprep.subr.mxu0 %v4194
    %4202 = vmatpush1.msra.mxu0 %v4193
    %4203 = vmatprep.subr.mxu0 0.0
    %4204 = vmatpush1.msra.mxu0 0.0
    %4205 = vmatprep.subr.mxu0 0.0
    %4206 = vmatpush1.msra.mxu0 0.0
    %4207 = vmatprep.subr.mxu0 0.0
    %4208 = vmatpush1.msra.mxu0 0.0
    %4209 = vmatprep.subr.mxu0 0.0
    %4210 = vmatpush1.msra.mxu0 0.0
    %4211 = vmatprep.subr.mxu0 0.0
    %4212 = vmatpush1.msra.mxu0 0.0
    %4213 = vmatprep.subr.mxu0 0.0
    %4214 = vmatpush1.msra.mxu0 0.0
    %4215 = vmatprep.subr.mxu0 0.0
    %4216 = vmatpush1.msra.mxu0 0.0
    %4217 = vmatprep.subr.mxu0 0.0
    %4218 = vmatpush1.msra.mxu0 0.0
    %4219 = vmatprep.subr.mxu0 0.0
    %4220 = vmatpush1.msra.mxu0 0.0
    %4221 = vmatprep.subr.mxu0 0.0
    %4222 = vmatpush1.msra.mxu0 0.0
    %4223 = vmatprep.subr.mxu0 0.0
    %4224 = vmatpush1.msra.mxu0 0.0
    %4225 = vmatprep.subr.mxu0 0.0
    %4226 = vmatpush1.msra.mxu0 0.0
    %4227 = vmatprep.subr.mxu0 0.0
    %4228 = vmatpush1.msra.mxu0 0.0
    %4229 = vmatprep.subr.mxu0 0.0
    %4230 = vmatpush1.msra.mxu0 0.0
    %4231 = vmatprep.subr.mxu0 0.0
    %4232 = vmatpush1.msra.mxu0 0.0
    %4233 = vmatprep.subr.mxu0 0.0
    %4234 = vmatpush1.msra.mxu0 0.0
    %4235 = vmatprep.subr.mxu0 0.0
    %4236 = vmatpush1.msra.mxu0 0.0
    %4237 = vmatprep.subr.mxu0 0.0
    %4238 = vmatpush1.msra.mxu0 0.0
    %4239 = vmatprep.subr.mxu0 0.0
    %4240 = vmatpush1.msra.mxu0 0.0
    %4241 = vmatprep.subr.mxu0 0.0
    %4242 = vmatpush1.msra.mxu0 0.0
    %4243 = vmatprep.subr.mxu0 0.0
    %4244 = vmatpush1.msra.mxu0 0.0
    %4245 = vmatprep.subr.mxu0 0.0
    %4246 = vmatpush1.msra.mxu0 0.0
    %4247 = vmatprep.subr.mxu0 0.0
    %4248 = vmatpush1.msra.mxu0 0.0
    %4249 = vmatprep.subr.mxu0 0.0
    %4250 = vmatpush1.msra.mxu0 0.0
    %4251 = vmatprep.subr.mxu0 0.0
    %4252 = vmatpush1.msra.mxu0 0.0
    %4253 = vmatprep.subr.mxu0 0.0
    %4254 = vmatpush1.msra.mxu0 0.0
    %4255 = vmatprep.subr.mxu0 0.0
    %4256 = vmatpush1.msra.mxu0 0.0
    %4257 = vmatprep.subr.mxu0 0.0
    %4258 = vmatpush1.msra.mxu0 0.0
    %4259 = vmatprep.mubr.f32.mxu0 0.0
    %4260 = vmatmul.mubr.f32.gmra.mrb[0].mxu0 %v3267
    %v4261 = vpop.f32.mrb[0].mxu0
    %v4262 = vadd.f32 %v3249, %v4261
    %v4263 = vpop.f32.mrb[0].mxu0
    %v4264 = vadd.f32 %v3249, %v4263
    %4265 = vmatprep.mubr.f32.mxu0 0.0
    %4266 = vmatmul.mubr.f32.gmra.mrb[0].mxu0 %v3270
    %v4267 = vpop.f32.mrb[0].mxu0
    %v4268 = vadd.f32 %v3254, %v4267
    %v4269 = vpop.f32.mrb[0].mxu0
    %v4270 = vadd.f32 %v3254, %v4269
    %4271 = vmatprep.mubr.f32.mxu0 0.0
    %4272 = vmatmul.mubr.f32.gmra.mrb[0].mxu0 %v3273
    %v4273 = vpop.f32.mrb[0].mxu0
    %v4274 = vadd.f32 %v3259, %v4273
    %v4275 = vpop.f32.mrb[0].mxu0
    %v4276 = vadd.f32 %v3259, %v4275
    %4277 = vmatprep.mubr.f32.mxu0 0.0
    %4278 = vmatmul.mubr.f32.gmra.mrb[0].mxu0 %v3276
    %v4279 = vpop.f32.mrb[0].mxu0
    %v4280 = vadd.f32 %v3264, %v4279
    %v4281 = vpop.f32.mrb[0].mxu0
    %v4282 = vadd.f32 %v3264, %v4281
    %4283 = vdwg.mxu0
    %v4284 = vmax.f32 %v4262, 0.0
    %v4285 = vmax.f32 %v4264, 0.0
    %v4286 = vmax.f32 %v4268, 0.0
    %v4287 = vmax.f32 %v4270, 0.0
    %v4288 = vmax.f32 %v4274, 0.0
    %v4289 = vmax.f32 %v4276, 0.0
    %v4290 = vmax.f32 %v4280, 0.0
    %v4291 = vmax.f32 %v4282, 0.0
    %v4292 = vadd.f32 %v4284, %v4187
    %v4293 = vadd.f32 %v4285, %v4188
    %v4294 = vadd.f32 %v4286, %v4189
    %v4295 = vadd.f32 %v4287, %v4190
    %v4296 = vadd.f32 %v4288, %v4191
    %v4297 = vadd.f32 %v4289, %v4192
    %v4298 = vadd.f32 %v4290, %v4193
    %v4299 = vadd.f32 %v4291, %v4194
    %4300 = vmatprep.subr.mxu0 %v4293
    %4301 = vmatpush1.msra.mxu0 %v4292
    %4302 = vmatprep.subr.mxu0 %v4295
    %4303 = vmatpush1.msra.mxu0 %v4294
    %4304 = vmatprep.subr.mxu0 %v4297
    %4305 = vmatpush1.msra.mxu0 %v4296
    %4306 = vmatprep.subr.mxu0 %v4299
    %4307 = vmatpush1.msra.mxu0 %v4298
    %4308 = vmatprep.subr.mxu0 0.0
    %4309 = vmatpush1.msra.mxu0 0.0
    %4310 = vmatprep.subr.mxu0 0.0
    %4311 = vmatpush1.msra.mxu0 0.0
    %4312 = vmatprep.subr.mxu0 0.0
    %4313 = vmatpush1.msra.mxu0 0.0
    %4314 = vmatprep.subr.mxu0 0.0
    %4315 = vmatpush1.msra.mxu0 0.0
    %4316 = vmatprep.subr.mxu0 0.0
    %4317 = vmatpush1.msra.mxu0 0.0
    %4318 = vmatprep.subr.mxu0 0.0
    %4319 = vmatpush1.msra.mxu0 0.0
    %4320 = vmatprep.subr.mxu0 0.0
    %4321 = vmatpush1.msra.mxu0 0.0
    %4322 = vmatprep.subr.mxu0 0.0
    %4323 = vmatpush1.msra.mxu0 0.0
    %4324 = vmatprep.subr.mxu0 0.0
    %4325 = vmatpush1.msra.mxu0 0.0
    %4326 = vmatprep.subr.mxu0 0.0
    %4327 = vmatpush1.msra.mxu0 0.0
    %4328 = vmatprep.subr.mxu0 0.0
    %4329 = vmatpush1.msra.mxu0 0.0
    %4330 = vmatprep.subr.mxu0 0.0
    %4331 = vmatpush1.msra.mxu0 0.0
    %4332 = vmatprep.subr.mxu0 0.0
    %4333 = vmatpush1.msra.mxu0 0.0
    %4334 = vmatprep.subr.mxu0 0.0
    %4335 = vmatpush1.msra.mxu0 0.0
    %4336 = vmatprep.subr.mxu0 0.0
    %4337 = vmatpush1.msra.mxu0 0.0
    %4338 = vmatprep.subr.mxu0 0.0
    %4339 = vmatpush1.msra.mxu0 0.0
    %4340 = vmatprep.subr.mxu0 0.0
    %4341 = vmatpush1.msra.mxu0 0.0
    %4342 = vmatprep.subr.mxu0 0.0
    %4343 = vmatpush1.msra.mxu0 0.0
    %4344 = vmatprep.subr.mxu0 0.0
    %4345 = vmatpush1.msra.mxu0 0.0
    %4346 = vmatprep.subr.mxu0 0.0
    %4347 = vmatpush1.msra.mxu0 0.0
    %4348 = vmatprep.subr.mxu0 0.0
    %4349 = vmatpush1.msra.mxu0 0.0
    %4350 = vmatprep.subr.mxu0 0.0
    %4351 = vmatpush1.msra.mxu0 0.0
    %4352 = vmatprep.subr.mxu0 0.0
    %4353 = vmatpush1.msra.mxu0 0.0
    %4354 = vmatprep.subr.mxu0 0.0
    %4355 = vmatpush1.msra.mxu0 0.0
    %4356 = vmatprep.subr.mxu0 0.0
    %4357 = vmatpush1.msra.mxu0 0.0
    %4358 = vmatprep.subr.mxu0 0.0
    %4359 = vmatpush1.msra.mxu0 0.0
    %4360 = vmatprep.subr.mxu0 0.0
    %4361 = vmatpush1.msra.mxu0 0.0
    %4362 = vmatprep.subr.mxu0 0.0
    %4363 = vmatpush1.msra.mxu0 0.0
    %4364 = vmatprep.mubr.f32.mxu0 0.0
    %4365 = vmatmul.mubr.f32.gmra.mrb[0].mxu0 %v3389
    %v4366 = vpop.f32.mrb[0].mxu0
    %v4367 = vadd.f32 %v3386, %v4366
    %v4368 = vpop.f32.mrb[0].mxu0
    %v4369 = vadd.f32 %v3386, %v4368
    %4370 = vdwg.mxu0
    %v4371 = vtanh.pop %v4367
    %v4372 = vtanh.pop %v4369
    %v4373 = vmul.f32 %v4371, 0.041666668
    %v4374 = vmul.f32 %v4372, 0.041666668
    %v4377 = vcombine.low %v4373, %v4374
    %v4379 = vadd.f32 %v4076, %v4377
    %s4380 = scalar_lea.vmem %s2, 96
    %v4381 = vld [vmem:[%s4380] sm:$0xff]
    %v4382 = vld [vmem:[%s4380 + $0x8] sm:$0xff]
    %v4383 = vld [vmem:[%s4380 + $0x10] sm:$0xff]
    %v4384 = vld [vmem:[%s4380 + $0x18] sm:$0xff]
    %s4385 = scalar_lea.vmem %s3, 96
    %v4386 = vld [vmem:[%s4385] sm:$0xff]
    %v4387 = vld [vmem:[%s4385 + $0x8] sm:$0xff]
    %v4388 = vld [vmem:[%s4385 + $0x10] sm:$0xff]
    %v4389 = vld [vmem:[%s4385 + $0x18] sm:$0xff]
    %s4390 = scalar_lea.vmem %s4, 96
    %v4391 = vld [vmem:[%s4390] sm:$0xff]
    %v4392 = vld [vmem:[%s4390 + $0x8] sm:$0xff]
    %v4393 = vld [vmem:[%s4390 + $0x10] sm:$0xff]
    %v4394 = vld [vmem:[%s4390 + $0x18] sm:$0xff]
    %s4395 = scalar_lea.vmem %s5, 96
    %v4396 = vld [vmem:[%s4395] sm:$0xff]
    %v4397 = vld [vmem:[%s4395 + $0x8] sm:$0xff]
    %v4398 = vld [vmem:[%s4395 + $0x10] sm:$0xff]
    %v4399 = vld [vmem:[%s4395 + $0x18] sm:$0xff]
    %s4400 = scalar_lea.vmem %s6, 96
    %v4401 = vld [vmem:[%s4400] sm:$0xff]
    %v4402 = vld [vmem:[%s4400 + $0x8] sm:$0xff]
    %v4403 = vld [vmem:[%s4400 + $0x10] sm:$0xff]
    %v4404 = vld [vmem:[%s4400 + $0x18] sm:$0xff]
    %s4405 = scalar_lea.vmem %s7, 96
    %v4406 = vld [vmem:[%s4405] sm:$0xff]
    %v4407 = vld [vmem:[%s4405 + $0x8] sm:$0xff]
    %v4408 = vld [vmem:[%s4405 + $0x10] sm:$0xff]
    %v4409 = vld [vmem:[%s4405 + $0x18] sm:$0xff]
    %s4410 = scalar_lea.vmem %s8, 12
    %v4411 = vld [vmem:[%s4410] sm:$0x7]
    %s4412 = scalar_lea.vmem %s9, 12
    %v4413 = vld [vmem:[%s4412] sm:$0x7]
    %4415 = vset.pattern.permute.xlu0 0
    %4416 = vperm.xlu0 %4415, %v4396
    %v4417 = vpop.permute.xlu0 %4416
    %4420 = vset.pattern.permute.xlu0 0
    %4421 = vperm.xlu0 %4420, %v4397
    %v4422 = vpop.permute.xlu0 %4421
    %4425 = vset.pattern.permute.xlu0 0
    %4426 = vperm.xlu0 %4425, %v4398
    %v4427 = vpop.permute.xlu0 %4426
    %4430 = vset.pattern.permute.xlu0 0
    %4431 = vperm.xlu0 %4430, %v4399
    %v4432 = vpop.permute.xlu0 %4431
    %v4435 = vsel %vm110, %v4391, 0
    %v4438 = vsel %vm110, %v4392, 0
    %v4441 = vsel %vm110, %v4393, 0
    %v4444 = vsel %vm110, %v4394, 0
    %4446 = vmatprep.subr.mxu0 %v60
    %4447 = vmatpush1.msra.mxu0 %v59
    %4448 = vmatprep.subr.mxu0 %v62
    %4449 = vmatpush1.msra.mxu0 %v61
    %4450 = vmatprep.subr.mxu0 0.0
    %4451 = vmatpush1.msra.mxu0 0.0
    %4452 = vmatprep.subr.mxu0 0.0
    %4453 = vmatpush1.msra.mxu0 0.0
    %4454 = vmatprep.subr.mxu0 0.0
    %4455 = vmatpush1.msra.mxu0 0.0
    %4456 = vmatprep.subr.mxu0 0.0
    %4457 = vmatpush1.msra.mxu0 0.0
    %4458 = vmatprep.subr.mxu0 0.0
    %4459 = vmatpush1.msra.mxu0 0.0
    %4460 = vmatprep.subr.mxu0 0.0
    %4461 = vmatpush1.msra.mxu0 0.0
    %4462 = vmatprep.subr.mxu0 0.0
    %4463 = vmatpush1.msra.mxu0 0.0
    %4464 = vmatprep.subr.mxu0 0.0
    %4465 = vmatpush1.msra.mxu0 0.0
    %4466 = vmatprep.subr.mxu0 0.0
    %4467 = vmatpush1.msra.mxu0 0.0
    %4468 = vmatprep.subr.mxu0 0.0
    %4469 = vmatpush1.msra.mxu0 0.0
    %4470 = vmatprep.subr.mxu0 0.0
    %4471 = vmatpush1.msra.mxu0 0.0
    %4472 = vmatprep.subr.mxu0 0.0
    %4473 = vmatpush1.msra.mxu0 0.0
    %4474 = vmatprep.subr.mxu0 0.0
    %4475 = vmatpush1.msra.mxu0 0.0
    %4476 = vmatprep.subr.mxu0 0.0
    %4477 = vmatpush1.msra.mxu0 0.0
    %4478 = vmatprep.subr.mxu0 0.0
    %4479 = vmatpush1.msra.mxu0 0.0
    %4480 = vmatprep.subr.mxu0 0.0
    %4481 = vmatpush1.msra.mxu0 0.0
    %4482 = vmatprep.subr.mxu0 0.0
    %4483 = vmatpush1.msra.mxu0 0.0
    %4484 = vmatprep.subr.mxu0 0.0
    %4485 = vmatpush1.msra.mxu0 0.0
    %4486 = vmatprep.subr.mxu0 0.0
    %4487 = vmatpush1.msra.mxu0 0.0
    %4488 = vmatprep.subr.mxu0 0.0
    %4489 = vmatpush1.msra.mxu0 0.0
    %4490 = vmatprep.subr.mxu0 0.0
    %4491 = vmatpush1.msra.mxu0 0.0
    %4492 = vmatprep.subr.mxu0 0.0
    %4493 = vmatpush1.msra.mxu0 0.0
    %4494 = vmatprep.subr.mxu0 0.0
    %4495 = vmatpush1.msra.mxu0 0.0
    %4496 = vmatprep.subr.mxu0 0.0
    %4497 = vmatpush1.msra.mxu0 0.0
    %4498 = vmatprep.subr.mxu0 0.0
    %4499 = vmatpush1.msra.mxu0 0.0
    %4500 = vmatprep.subr.mxu0 0.0
    %4501 = vmatpush1.msra.mxu0 0.0
    %4502 = vmatprep.subr.mxu0 0.0
    %4503 = vmatpush1.msra.mxu0 0.0
    %4504 = vmatprep.subr.mxu0 0.0
    %4505 = vmatpush1.msra.mxu0 0.0
    %4506 = vmatprep.subr.mxu0 0.0
    %4507 = vmatpush1.msra.mxu0 0.0
    %4508 = vmatprep.subr.mxu0 0.0
    %4509 = vmatpush1.msra.mxu0 0.0
    %4510 = vmatprep.mubr.f32.mxu0 0.0
    %4511 = vmatmul.mubr.f32.gmra.mrb[0].mxu0 %v4435
    %v4512 = vpop.f32.mrb[0].mxu0
    %v4513 = vadd.f32 %v4417, %v4512
    %v4514 = vpop.f32.mrb[0].mxu0
    %v4515 = vadd.f32 %v4417, %v4514
    %4516 = vmatprep.mubr.f32.mxu0 0.0
    %4517 = vmatmul.mubr.f32.gmra.mrb[0].mxu0 %v4438
    %v4518 = vpop.f32.mrb[0].mxu0
    %v4519 = vadd.f32 %v4422, %v4518
    %v4520 = vpop.f32.mrb[0].mxu0
    %v4521 = vadd.f32 %v4422, %v4520
    %4522 = vmatprep.mubr.f32.mxu0 0.0
    %4523 = vmatmul.mubr.f32.gmra.mrb[0].mxu0 %v4441
    %v4524 = vpop.f32.mrb[0].mxu0
    %v4525 = vadd.f32 %v4427, %v4524
    %v4526 = vpop.f32.mrb[0].mxu0
    %v4527 = vadd.f32 %v4427, %v4526
    %4528 = vmatprep.mubr.f32.mxu0 0.0
    %4529 = vmatmul.mubr.f32.gmra.mrb[0].mxu0 %v4444
    %v4530 = vpop.f32.mrb[0].mxu0
    %v4531 = vadd.f32 %v4432, %v4530
    %v4532 = vpop.f32.mrb[0].mxu0
    %v4533 = vadd.f32 %v4432, %v4532
    %4534 = vdwg.mxu0
    %v4535 = vtanh.pop %v4513
    %v4536 = vtanh.pop %v4515
    %v4537 = vtanh.pop %v4519
    %v4538 = vtanh.pop %v4521
    %v4539 = vtanh.pop %v4525
    %v4540 = vtanh.pop %v4527
    %v4541 = vtanh.pop %v4531
    %v4542 = vtanh.pop %v4533
    %4544 = vset.pattern.permute.xlu0 0
    %4545 = vperm.xlu0 %4544, %v4386
    %v4546 = vpop.permute.xlu0 %4545
    %4549 = vset.pattern.permute.xlu0 0
    %4550 = vperm.xlu0 %4549, %v4387
    %v4551 = vpop.permute.xlu0 %4550
    %4554 = vset.pattern.permute.xlu0 0
    %4555 = vperm.xlu0 %4554, %v4388
    %v4556 = vpop.permute.xlu0 %4555
    %4559 = vset.pattern.permute.xlu0 0
    %4560 = vperm.xlu0 %4559, %v4389
    %v4561 = vpop.permute.xlu0 %4560
    %v4564 = vcombine.high %v4379, %v4379
    %v4566 = vsel %vm242, %v4381, 0
    %v4569 = vsel %vm242, %v4382, 0
    %v4572 = vsel %vm242, %v4383, 0
    %v4575 = vsel %vm242, %v4384, 0
    %v4577 = vsel %vm255, %v4379, 0
    %v4579 = vsel %vm255, %v4564, 0
    %4581 = vmatprep.subr.mxu0 %v4579
    %4582 = vmatpush1.msra.mxu0 %v4577
    %4583 = vmatprep.subr.mxu0 0.0
    %4584 = vmatpush1.msra.mxu0 0.0
    %4585 = vmatprep.subr.mxu0 0.0
    %4586 = vmatpush1.msra.mxu0 0.0
    %4587 = vmatprep.subr.mxu0 0.0
    %4588 = vmatpush1.msra.mxu0 0.0
    %4589 = vmatprep.subr.mxu0 0.0
    %4590 = vmatpush1.msra.mxu0 0.0
    %4591 = vmatprep.subr.mxu0 0.0
    %4592 = vmatpush1.msra.mxu0 0.0
    %4593 = vmatprep.subr.mxu0 0.0
    %4594 = vmatpush1.msra.mxu0 0.0
    %4595 = vmatprep.subr.mxu0 0.0
    %4596 = vmatpush1.msra.mxu0 0.0
    %4597 = vmatprep.subr.mxu0 0.0
    %4598 = vmatpush1.msra.mxu0 0.0
    %4599 = vmatprep.subr.mxu0 0.0
    %4600 = vmatpush1.msra.mxu0 0.0
    %4601 = vmatprep.subr.mxu0 0.0
    %4602 = vmatpush1.msra.mxu0 0.0
    %4603 = vmatprep.subr.mxu0 0.0
    %4604 = vmatpush1.msra.mxu0 0.0
    %4605 = vmatprep.subr.mxu0 0.0
    %4606 = vmatpush1.msra.mxu0 0.0
    %4607 = vmatprep.subr.mxu0 0.0
    %4608 = vmatpush1.msra.mxu0 0.0
    %4609 = vmatprep.subr.mxu0 0.0
    %4610 = vmatpush1.msra.mxu0 0.0
    %4611 = vmatprep.subr.mxu0 0.0
    %4612 = vmatpush1.msra.mxu0 0.0
    %4613 = vmatprep.subr.mxu0 0.0
    %4614 = vmatpush1.msra.mxu0 0.0
    %4615 = vmatprep.subr.mxu0 0.0
    %4616 = vmatpush1.msra.mxu0 0.0
    %4617 = vmatprep.subr.mxu0 0.0
    %4618 = vmatpush1.msra.mxu0 0.0
    %4619 = vmatprep.subr.mxu0 0.0
    %4620 = vmatpush1.msra.mxu0 0.0
    %4621 = vmatprep.subr.mxu0 0.0
    %4622 = vmatpush1.msra.mxu0 0.0
    %4623 = vmatprep.subr.mxu0 0.0
    %4624 = vmatpush1.msra.mxu0 0.0
    %4625 = vmatprep.subr.mxu0 0.0
    %4626 = vmatpush1.msra.mxu0 0.0
    %4627 = vmatprep.subr.mxu0 0.0
    %4628 = vmatpush1.msra.mxu0 0.0
    %4629 = vmatprep.subr.mxu0 0.0
    %4630 = vmatpush1.msra.mxu0 0.0
    %4631 = vmatprep.subr.mxu0 0.0
    %4632 = vmatpush1.msra.mxu0 0.0
    %4633 = vmatprep.subr.mxu0 0.0
    %4634 = vmatpush1.msra.mxu0 0.0
    %4635 = vmatprep.subr.mxu0 0.0
    %4636 = vmatpush1.msra.mxu0 0.0
    %4637 = vmatprep.subr.mxu0 0.0
    %4638 = vmatpush1.msra.mxu0 0.0
    %4639 = vmatprep.subr.mxu0 0.0
    %4640 = vmatpush1.msra.mxu0 0.0
    %4641 = vmatprep.subr.mxu0 0.0
    %4642 = vmatpush1.msra.mxu0 0.0
    %4643 = vmatprep.subr.mxu0 0.0
    %4644 = vmatpush1.msra.mxu0 0.0
    %4645 = vmatprep.mubr.f32.mxu0 0.0
    %4646 = vmatmul.mubr.f32.gmra.mrb[0].mxu0 %v4566
    %v4647 = vpop.f32.mrb[0].mxu0
    %v4648 = vadd.f32 %v4546, %v4647
    %v4649 = vpop.f32.mrb[0].mxu0
    %v4650 = vadd.f32 %v4546, %v4649
    %4651 = vmatprep.mubr.f32.mxu0 0.0
    %4652 = vmatmul.mubr.f32.gmra.mrb[0].mxu0 %v4569
    %v4653 = vpop.f32.mrb[0].mxu0
    %v4654 = vadd.f32 %v4551, %v4653
    %v4655 = vpop.f32.mrb[0].mxu0
    %v4656 = vadd.f32 %v4551, %v4655
    %4657 = vmatprep.mubr.f32.mxu0 0.0
    %4658 = vmatmul.mubr.f32.gmra.mrb[0].mxu0 %v4572
    %v4659 = vpop.f32.mrb[0].mxu0
    %v4660 = vadd.f32 %v4556, %v4659
    %v4661 = vpop.f32.mrb[0].mxu0
    %v4662 = vadd.f32 %v4556, %v4661
    %4663 = vmatprep.mubr.f32.mxu0 0.0
    %4664 = vmatmul.mubr.f32.gmra.mrb[0].mxu0 %v4575
    %v4665 = vpop.f32.mrb[0].mxu0
    %v4666 = vadd.f32 %v4561, %v4665
    %v4667 = vpop.f32.mrb[0].mxu0
    %v4668 = vadd.f32 %v4561, %v4667
    %4669 = vdwg.mxu0
    %v4670 = vmax.f32 %v4648, 0.0
    %v4671 = vmax.f32 %v4650, 0.0
    %v4672 = vmax.f32 %v4654, 0.0
    %v4673 = vmax.f32 %v4656, 0.0
    %v4674 = vmax.f32 %v4660, 0.0
    %v4675 = vmax.f32 %v4662, 0.0
    %v4676 = vmax.f32 %v4666, 0.0
    %v4677 = vmax.f32 %v4668, 0.0
    %v4678 = vmul.f32 %v4670, %v4535
    %v4679 = vmul.f32 %v4671, %v4536
    %v4680 = vmul.f32 %v4672, %v4537
    %v4681 = vmul.f32 %v4673, %v4538
    %v4682 = vmul.f32 %v4674, %v4539
    %v4683 = vmul.f32 %v4675, %v4540
    %v4684 = vmul.f32 %v4676, %v4541
    %v4685 = vmul.f32 %v4677, %v4542
    %4687 = vset.pattern.permute.xlu0 0
    %4688 = vperm.xlu0 %4687, %v4406
    %v4689 = vpop.permute.xlu0 %4688
    %4692 = vset.pattern.permute.xlu0 0
    %4693 = vperm.xlu0 %4692, %v4407
    %v4694 = vpop.permute.xlu0 %4693
    %4697 = vset.pattern.permute.xlu0 0
    %4698 = vperm.xlu0 %4697, %v4408
    %v4699 = vpop.permute.xlu0 %4698
    %4702 = vset.pattern.permute.xlu0 0
    %4703 = vperm.xlu0 %4702, %v4409
    %v4704 = vpop.permute.xlu0 %4703
    %v4707 = vsel %vm385, %v4401, 0
    %v4710 = vsel %vm385, %v4402, 0
    %v4713 = vsel %vm385, %v4403, 0
    %v4716 = vsel %vm385, %v4404, 0
    %4718 = vmatprep.subr.mxu0 %v4679
    %4719 = vmatpush1.msra.mxu0 %v4678
    %4720 = vmatprep.subr.mxu0 %v4681
    %4721 = vmatpush1.msra.mxu0 %v4680
    %4722 = vmatprep.subr.mxu0 %v4683
    %4723 = vmatpush1.msra.mxu0 %v4682
    %4724 = vmatprep.subr.mxu0 %v4685
    %4725 = vmatpush1.msra.mxu0 %v4684
    %4726 = vmatprep.subr.mxu0 0.0
    %4727 = vmatpush1.msra.mxu0 0.0
    %4728 = vmatprep.subr.mxu0 0.0
    %4729 = vmatpush1.msra.mxu0 0.0
    %4730 = vmatprep.subr.mxu0 0.0
    %4731 = vmatpush1.msra.mxu0 0.0
    %4732 = vmatprep.subr.mxu0 0.0
    %4733 = vmatpush1.msra.mxu0 0.0
    %4734 = vmatprep.subr.mxu0 0.0
    %4735 = vmatpush1.msra.mxu0 0.0
    %4736 = vmatprep.subr.mxu0 0.0
    %4737 = vmatpush1.msra.mxu0 0.0
    %4738 = vmatprep.subr.mxu0 0.0
    %4739 = vmatpush1.msra.mxu0 0.0
    %4740 = vmatprep.subr.mxu0 0.0
    %4741 = vmatpush1.msra.mxu0 0.0
    %4742 = vmatprep.subr.mxu0 0.0
    %4743 = vmatpush1.msra.mxu0 0.0
    %4744 = vmatprep.subr.mxu0 0.0
    %4745 = vmatpush1.msra.mxu0 0.0
    %4746 = vmatprep.subr.mxu0 0.0
    %4747 = vmatpush1.msra.mxu0 0.0
    %4748 = vmatprep.subr.mxu0 0.0
    %4749 = vmatpush1.msra.mxu0 0.0
    %4750 = vmatprep.subr.mxu0 0.0
    %4751 = vmatpush1.msra.mxu0 0.0
    %4752 = vmatprep.subr.mxu0 0.0
    %4753 = vmatpush1.msra.mxu0 0.0
    %4754 = vmatprep.subr.mxu0 0.0
    %4755 = vmatpush1.msra.mxu0 0.0
    %4756 = vmatprep.subr.mxu0 0.0
    %4757 = vmatpush1.msra.mxu0 0.0
    %4758 = vmatprep.subr.mxu0 0.0
    %4759 = vmatpush1.msra.mxu0 0.0
    %4760 = vmatprep.subr.mxu0 0.0
    %4761 = vmatpush1.msra.mxu0 0.0
    %4762 = vmatprep.subr.mxu0 0.0
    %4763 = vmatpush1.msra.mxu0 0.0
    %4764 = vmatprep.subr.mxu0 0.0
    %4765 = vmatpush1.msra.mxu0 0.0
    %4766 = vmatprep.subr.mxu0 0.0
    %4767 = vmatpush1.msra.mxu0 0.0
    %4768 = vmatprep.subr.mxu0 0.0
    %4769 = vmatpush1.msra.mxu0 0.0
    %4770 = vmatprep.subr.mxu0 0.0
    %4771 = vmatpush1.msra.mxu0 0.0
    %4772 = vmatprep.subr.mxu0 0.0
    %4773 = vmatpush1.msra.mxu0 0.0
    %4774 = vmatprep.subr.mxu0 0.0
    %4775 = vmatpush1.msra.mxu0 0.0
    %4776 = vmatprep.subr.mxu0 0.0
    %4777 = vmatpush1.msra.mxu0 0.0
    %4778 = vmatprep.subr.mxu0 0.0
    %4779 = vmatpush1.msra.mxu0 0.0
    %4780 = vmatprep.subr.mxu0 0.0
    %4781 = vmatpush1.msra.mxu0 0.0
    %4782 = vmatprep.mubr.f32.mxu0 0.0
    %4783 = vmatmul.mubr.f32.gmra.mrb[0].mxu0 %v4707
    %v4784 = vpop.f32.mrb[0].mxu0
    %v4785 = vadd.f32 %v4689, %v4784
    %v4786 = vpop.f32.mrb[0].mxu0
    %v4787 = vadd.f32 %v4689, %v4786
    %4788 = vmatprep.mubr.f32.mxu0 0.0
    %4789 = vmatmul.mubr.f32.gmra.mrb[0].mxu0 %v4710
    %v4790 = vpop.f32.mrb[0].mxu0
    %v4791 = vadd.f32 %v4694, %v4790
    %v4792 = vpop.f32.mrb[0].mxu0
    %v4793 = vadd.f32 %v4694, %v4792
    %4794 = vmatprep.mubr.f32.mxu0 0.0
    %4795 = vmatmul.mubr.f32.gmra.mrb[0].mxu0 %v4713
    %v4796 = vpop.f32.mrb[0].mxu0
    %v4797 = vadd.f32 %v4699, %v4796
    %v4798 = vpop.f32.mrb[0].mxu0
    %v4799 = vadd.f32 %v4699, %v4798
    %4800 = vmatprep.mubr.f32.mxu0 0.0
    %4801 = vmatmul.mubr.f32.gmra.mrb[0].mxu0 %v4716
    %v4802 = vpop.f32.mrb[0].mxu0
    %v4803 = vadd.f32 %v4704, %v4802
    %v4804 = vpop.f32.mrb[0].mxu0
    %v4805 = vadd.f32 %v4704, %v4804
    %4806 = vdwg.mxu0
    %v4807 = vmax.f32 %v4785, 0.0
    %v4808 = vmax.f32 %v4787, 0.0
    %v4809 = vmax.f32 %v4791, 0.0
    %v4810 = vmax.f32 %v4793, 0.0
    %v4811 = vmax.f32 %v4797, 0.0
    %v4812 = vmax.f32 %v4799, 0.0
    %v4813 = vmax.f32 %v4803, 0.0
    %v4814 = vmax.f32 %v4805, 0.0
    %v4815 = vadd.f32 %v4807, %v4678
    %v4816 = vadd.f32 %v4808, %v4679
    %v4817 = vadd.f32 %v4809, %v4680
    %v4818 = vadd.f32 %v4810, %v4681
    %v4819 = vadd.f32 %v4811, %v4682
    %v4820 = vadd.f32 %v4812, %v4683
    %v4821 = vadd.f32 %v4813, %v4684
    %v4822 = vadd.f32 %v4814, %v4685
    %4824 = vset.pattern.permute.xlu0 0
    %4825 = vperm.xlu0 %4824, %v4413
    %v4826 = vpop.permute.xlu0 %4825
    %v4829 = vsel %vm385, %v4411, 0
    %4831 = vmatprep.subr.mxu0 %v4816
    %4832 = vmatpush1.msra.mxu0 %v4815
    %4833 = vmatprep.subr.mxu0 %v4818
    %4834 = vmatpush1.msra.mxu0 %v4817
    %4835 = vmatprep.subr.mxu0 %v4820
    %4836 = vmatpush1.msra.mxu0 %v4819
    %4837 = vmatprep.subr.mxu0 %v4822
    %4838 = vmatpush1.msra.mxu0 %v4821
    %4839 = vmatprep.subr.mxu0 0.0
    %4840 = vmatpush1.msra.mxu0 0.0
    %4841 = vmatprep.subr.mxu0 0.0
    %4842 = vmatpush1.msra.mxu0 0.0
    %4843 = vmatprep.subr.mxu0 0.0
    %4844 = vmatpush1.msra.mxu0 0.0
    %4845 = vmatprep.subr.mxu0 0.0
    %4846 = vmatpush1.msra.mxu0 0.0
    %4847 = vmatprep.subr.mxu0 0.0
    %4848 = vmatpush1.msra.mxu0 0.0
    %4849 = vmatprep.subr.mxu0 0.0
    %4850 = vmatpush1.msra.mxu0 0.0
    %4851 = vmatprep.subr.mxu0 0.0
    %4852 = vmatpush1.msra.mxu0 0.0
    %4853 = vmatprep.subr.mxu0 0.0
    %4854 = vmatpush1.msra.mxu0 0.0
    %4855 = vmatprep.subr.mxu0 0.0
    %4856 = vmatpush1.msra.mxu0 0.0
    %4857 = vmatprep.subr.mxu0 0.0
    %4858 = vmatpush1.msra.mxu0 0.0
    %4859 = vmatprep.subr.mxu0 0.0
    %4860 = vmatpush1.msra.mxu0 0.0
    %4861 = vmatprep.subr.mxu0 0.0
    %4862 = vmatpush1.msra.mxu0 0.0
    %4863 = vmatprep.subr.mxu0 0.0
    %4864 = vmatpush1.msra.mxu0 0.0
    %4865 = vmatprep.subr.mxu0 0.0
    %4866 = vmatpush1.msra.mxu0 0.0
    %4867 = vmatprep.subr.mxu0 0.0
    %4868 = vmatpush1.msra.mxu0 0.0
    %4869 = vmatprep.subr.mxu0 0.0
    %4870 = vmatpush1.msra.mxu0 0.0
    %4871 = vmatprep.subr.mxu0 0.0
    %4872 = vmatpush1.msra.mxu0 0.0
    %4873 = vmatprep.subr.mxu0 0.0
    %4874 = vmatpush1.msra.mxu0 0.0
    %4875 = vmatprep.subr.mxu0 0.0
    %4876 = vmatpush1.msra.mxu0 0.0
    %4877 = vmatprep.subr.mxu0 0.0
    %4878 = vmatpush1.msra.mxu0 0.0
    %4879 = vmatprep.subr.mxu0 0.0
    %4880 = vmatpush1.msra.mxu0 0.0
    %4881 = vmatprep.subr.mxu0 0.0
    %4882 = vmatpush1.msra.mxu0 0.0
    %4883 = vmatprep.subr.mxu0 0.0
    %4884 = vmatpush1.msra.mxu0 0.0
    %4885 = vmatprep.subr.mxu0 0.0
    %4886 = vmatpush1.msra.mxu0 0.0
    %4887 = vmatprep.subr.mxu0 0.0
    %4888 = vmatpush1.msra.mxu0 0.0
    %4889 = vmatprep.subr.mxu0 0.0
    %4890 = vmatpush1.msra.mxu0 0.0
    %4891 = vmatprep.subr.mxu0 0.0
    %4892 = vmatpush1.msra.mxu0 0.0
    %4893 = vmatprep.subr.mxu0 0.0
    %4894 = vmatpush1.msra.mxu0 0.0
    %4895 = vmatprep.mubr.f32.mxu0 0.0
    %4896 = vmatmul.mubr.f32.gmra.mrb[0].mxu0 %v4829
    %v4897 = vpop.f32.mrb[0].mxu0
    %v4898 = vadd.f32 %v4826, %v4897
    %v4899 = vpop.f32.mrb[0].mxu0
    %v4900 = vadd.f32 %v4826, %v4899
    %4901 = vdwg.mxu0
    %v4902 = vtanh.pop %v4898
    %v4903 = vtanh.pop %v4900
    %v4904 = vmul.f32 %v4902, 0.041666668
    %v4905 = vmul.f32 %v4903, 0.041666668
    %v4908 = vcombine.low %v4904, %v4905
    %v4910 = vadd.f32 %v4379, %v4908
    %v4911 = vmul.f32 %v4902, 0.125
    %v4912 = vmul.f32 %v4903, 0.125
    %v4915 = vcombine.low %v4911, %v4912
    %v4917 = vadd.f32 %v4379, %v4915
    %v4919 = vcombine.high %v4917, %v4917
    %v4920 = vsel %vm255, %v4917, 0
    %v4922 = vsel %vm255, %v4919, 0
    %4924 = vmatprep.subr.mxu0 %v4922
    %4925 = vmatpush1.msra.mxu0 %v4920
    %4926 = vmatprep.subr.mxu0 0.0
    %4927 = vmatpush1.msra.mxu0 0.0
    %4928 = vmatprep.subr.mxu0 0.0
    %4929 = vmatpush1.msra.mxu0 0.0
    %4930 = vmatprep.subr.mxu0 0.0
    %4931 = vmatpush1.msra.mxu0 0.0
    %4932 = vmatprep.subr.mxu0 0.0
    %4933 = vmatpush1.msra.mxu0 0.0
    %4934 = vmatprep.subr.mxu0 0.0
    %4935 = vmatpush1.msra.mxu0 0.0
    %4936 = vmatprep.subr.mxu0 0.0
    %4937 = vmatpush1.msra.mxu0 0.0
    %4938 = vmatprep.subr.mxu0 0.0
    %4939 = vmatpush1.msra.mxu0 0.0
    %4940 = vmatprep.subr.mxu0 0.0
    %4941 = vmatpush1.msra.mxu0 0.0
    %4942 = vmatprep.subr.mxu0 0.0
    %4943 = vmatpush1.msra.mxu0 0.0
    %4944 = vmatprep.subr.mxu0 0.0
    %4945 = vmatpush1.msra.mxu0 0.0
    %4946 = vmatprep.subr.mxu0 0.0
    %4947 = vmatpush1.msra.mxu0 0.0
    %4948 = vmatprep.subr.mxu0 0.0
    %4949 = vmatpush1.msra.mxu0 0.0
    %4950 = vmatprep.subr.mxu0 0.0
    %4951 = vmatpush1.msra.mxu0 0.0
    %4952 = vmatprep.subr.mxu0 0.0
    %4953 = vmatpush1.msra.mxu0 0.0
    %4954 = vmatprep.subr.mxu0 0.0
    %4955 = vmatpush1.msra.mxu0 0.0
    %4956 = vmatprep.subr.mxu0 0.0
    %4957 = vmatpush1.msra.mxu0 0.0
    %4958 = vmatprep.subr.mxu0 0.0
    %4959 = vmatpush1.msra.mxu0 0.0
    %4960 = vmatprep.subr.mxu0 0.0
    %4961 = vmatpush1.msra.mxu0 0.0
    %4962 = vmatprep.subr.mxu0 0.0
    %4963 = vmatpush1.msra.mxu0 0.0
    %4964 = vmatprep.subr.mxu0 0.0
    %4965 = vmatpush1.msra.mxu0 0.0
    %4966 = vmatprep.subr.mxu0 0.0
    %4967 = vmatpush1.msra.mxu0 0.0
    %4968 = vmatprep.subr.mxu0 0.0
    %4969 = vmatpush1.msra.mxu0 0.0
    %4970 = vmatprep.subr.mxu0 0.0
    %4971 = vmatpush1.msra.mxu0 0.0
    %4972 = vmatprep.subr.mxu0 0.0
    %4973 = vmatpush1.msra.mxu0 0.0
    %4974 = vmatprep.subr.mxu0 0.0
    %4975 = vmatpush1.msra.mxu0 0.0
    %4976 = vmatprep.subr.mxu0 0.0
    %4977 = vmatpush1.msra.mxu0 0.0
    %4978 = vmatprep.subr.mxu0 0.0
    %4979 = vmatpush1.msra.mxu0 0.0
    %4980 = vmatprep.subr.mxu0 0.0
    %4981 = vmatpush1.msra.mxu0 0.0
    %4982 = vmatprep.subr.mxu0 0.0
    %4983 = vmatpush1.msra.mxu0 0.0
    %4984 = vmatprep.subr.mxu0 0.0
    %4985 = vmatpush1.msra.mxu0 0.0
    %4986 = vmatprep.subr.mxu0 0.0
    %4987 = vmatpush1.msra.mxu0 0.0
    %4988 = vmatprep.mubr.f32.mxu0 0.0
    %4989 = vmatmul.mubr.f32.gmra.mrb[0].mxu0 %v4566
    %v4990 = vpop.f32.mrb[0].mxu0
    %v4991 = vadd.f32 %v4546, %v4990
    %v4992 = vpop.f32.mrb[0].mxu0
    %v4993 = vadd.f32 %v4546, %v4992
    %4994 = vmatprep.mubr.f32.mxu0 0.0
    %4995 = vmatmul.mubr.f32.gmra.mrb[0].mxu0 %v4569
    %v4996 = vpop.f32.mrb[0].mxu0
    %v4997 = vadd.f32 %v4551, %v4996
    %v4998 = vpop.f32.mrb[0].mxu0
    %v4999 = vadd.f32 %v4551, %v4998
    %5000 = vmatprep.mubr.f32.mxu0 0.0
    %5001 = vmatmul.mubr.f32.gmra.mrb[0].mxu0 %v4572
    %v5002 = vpop.f32.mrb[0].mxu0
    %v5003 = vadd.f32 %v4556, %v5002
    %v5004 = vpop.f32.mrb[0].mxu0
    %v5005 = vadd.f32 %v4556, %v5004
    %5006 = vmatprep.mubr.f32.mxu0 0.0
    %5007 = vmatmul.mubr.f32.gmra.mrb[0].mxu0 %v4575
    %v5008 = vpop.f32.mrb[0].mxu0
    %v5009 = vadd.f32 %v4561, %v5008
    %v5010 = vpop.f32.mrb[0].mxu0
    %v5011 = vadd.f32 %v4561, %v5010
    %5012 = vdwg.mxu0
    %v5013 = vmax.f32 %v4991, 0.0
    %v5014 = vmax.f32 %v4993, 0.0
    %v5015 = vmax.f32 %v4997, 0.0
    %v5016 = vmax.f32 %v4999, 0.0
    %v5017 = vmax.f32 %v5003, 0.0
    %v5018 = vmax.f32 %v5005, 0.0
    %v5019 = vmax.f32 %v5009, 0.0
    %v5020 = vmax.f32 %v5011, 0.0
    %v5021 = vmul.f32 %v5013, %v4535
    %v5022 = vmul.f32 %v5014, %v4536
    %v5023 = vmul.f32 %v5015, %v4537
    %v5024 = vmul.f32 %v5016, %v4538
    %v5025 = vmul.f32 %v5017, %v4539
    %v5026 = vmul.f32 %v5018, %v4540
    %v5027 = vmul.f32 %v5019, %v4541
    %v5028 = vmul.f32 %v5020, %v4542
    %5029 = vmatprep.subr.mxu0 %v5022
    %5030 = vmatpush1.msra.mxu0 %v5021
    %5031 = vmatprep.subr.mxu0 %v5024
    %5032 = vmatpush1.msra.mxu0 %v5023
    %5033 = vmatprep.subr.mxu0 %v5026
    %5034 = vmatpush1.msra.mxu0 %v5025
    %5035 = vmatprep.subr.mxu0 %v5028
    %5036 = vmatpush1.msra.mxu0 %v5027
    %5037 = vmatprep.subr.mxu0 0.0
    %5038 = vmatpush1.msra.mxu0 0.0
    %5039 = vmatprep.subr.mxu0 0.0
    %5040 = vmatpush1.msra.mxu0 0.0
    %5041 = vmatprep.subr.mxu0 0.0
    %5042 = vmatpush1.msra.mxu0 0.0
    %5043 = vmatprep.subr.mxu0 0.0
    %5044 = vmatpush1.msra.mxu0 0.0
    %5045 = vmatprep.subr.mxu0 0.0
    %5046 = vmatpush1.msra.mxu0 0.0
    %5047 = vmatprep.subr.mxu0 0.0
    %5048 = vmatpush1.msra.mxu0 0.0
    %5049 = vmatprep.subr.mxu0 0.0
    %5050 = vmatpush1.msra.mxu0 0.0
    %5051 = vmatprep.subr.mxu0 0.0
    %5052 = vmatpush1.msra.mxu0 0.0
    %5053 = vmatprep.subr.mxu0 0.0
    %5054 = vmatpush1.msra.mxu0 0.0
    %5055 = vmatprep.subr.mxu0 0.0
    %5056 = vmatpush1.msra.mxu0 0.0
    %5057 = vmatprep.subr.mxu0 0.0
    %5058 = vmatpush1.msra.mxu0 0.0
    %5059 = vmatprep.subr.mxu0 0.0
    %5060 = vmatpush1.msra.mxu0 0.0
    %5061 = vmatprep.subr.mxu0 0.0
    %5062 = vmatpush1.msra.mxu0 0.0
    %5063 = vmatprep.subr.mxu0 0.0
    %5064 = vmatpush1.msra.mxu0 0.0
    %5065 = vmatprep.subr.mxu0 0.0
    %5066 = vmatpush1.msra.mxu0 0.0
    %5067 = vmatprep.subr.mxu0 0.0
    %5068 = vmatpush1.msra.mxu0 0.0
    %5069 = vmatprep.subr.mxu0 0.0
    %5070 = vmatpush1.msra.mxu0 0.0
    %5071 = vmatprep.subr.mxu0 0.0
    %5072 = vmatpush1.msra.mxu0 0.0
    %5073 = vmatprep.subr.mxu0 0.0
    %5074 = vmatpush1.msra.mxu0 0.0
    %5075 = vmatprep.subr.mxu0 0.0
    %5076 = vmatpush1.msra.mxu0 0.0
    %5077 = vmatprep.subr.mxu0 0.0
    %5078 = vmatpush1.msra.mxu0 0.0
    %5079 = vmatprep.subr.mxu0 0.0
    %5080 = vmatpush1.msra.mxu0 0.0
    %5081 = vmatprep.subr.mxu0 0.0
    %5082 = vmatpush1.msra.mxu0 0.0
    %5083 = vmatprep.subr.mxu0 0.0
    %5084 = vmatpush1.msra.mxu0 0.0
    %5085 = vmatprep.subr.mxu0 0.0
    %5086 = vmatpush1.msra.mxu0 0.0
    %5087 = vmatprep.subr.mxu0 0.0
    %5088 = vmatpush1.msra.mxu0 0.0
    %5089 = vmatprep.subr.mxu0 0.0
    %5090 = vmatpush1.msra.mxu0 0.0
    %5091 = vmatprep.subr.mxu0 0.0
    %5092 = vmatpush1.msra.mxu0 0.0
    %5093 = vmatprep.mubr.f32.mxu0 0.0
    %5094 = vmatmul.mubr.f32.gmra.mrb[0].mxu0 %v4707
    %v5095 = vpop.f32.mrb[0].mxu0
    %v5096 = vadd.f32 %v4689, %v5095
    %v5097 = vpop.f32.mrb[0].mxu0
    %v5098 = vadd.f32 %v4689, %v5097
    %5099 = vmatprep.mubr.f32.mxu0 0.0
    %5100 = vmatmul.mubr.f32.gmra.mrb[0].mxu0 %v4710
    %v5101 = vpop.f32.mrb[0].mxu0
    %v5102 = vadd.f32 %v4694, %v5101
    %v5103 = vpop.f32.mrb[0].mxu0
    %v5104 = vadd.f32 %v4694, %v5103
    %5105 = vmatprep.mubr.f32.mxu0 0.0
    %5106 = vmatmul.mubr.f32.gmra.mrb[0].mxu0 %v4713
    %v5107 = vpop.f32.mrb[0].mxu0
    %v5108 = vadd.f32 %v4699, %v5107
    %v5109 = vpop.f32.mrb[0].mxu0
    %v5110 = vadd.f32 %v4699, %v5109
    %5111 = vmatprep.mubr.f32.mxu0 0.0
    %5112 = vmatmul.mubr.f32.gmra.mrb[0].mxu0 %v4716
    %v5113 = vpop.f32.mrb[0].mxu0
    %v5114 = vadd.f32 %v4704, %v5113
    %v5115 = vpop.f32.mrb[0].mxu0
    %v5116 = vadd.f32 %v4704, %v5115
    %5117 = vdwg.mxu0
    %v5118 = vmax.f32 %v5096, 0.0
    %v5119 = vmax.f32 %v5098, 0.0
    %v5120 = vmax.f32 %v5102, 0.0
    %v5121 = vmax.f32 %v5104, 0.0
    %v5122 = vmax.f32 %v5108, 0.0
    %v5123 = vmax.f32 %v5110, 0.0
    %v5124 = vmax.f32 %v5114, 0.0
    %v5125 = vmax.f32 %v5116, 0.0
    %v5126 = vadd.f32 %v5118, %v5021
    %v5127 = vadd.f32 %v5119, %v5022
    %v5128 = vadd.f32 %v5120, %v5023
    %v5129 = vadd.f32 %v5121, %v5024
    %v5130 = vadd.f32 %v5122, %v5025
    %v5131 = vadd.f32 %v5123, %v5026
    %v5132 = vadd.f32 %v5124, %v5027
    %v5133 = vadd.f32 %v5125, %v5028
    %5134 = vmatprep.subr.mxu0 %v5127
    %5135 = vmatpush1.msra.mxu0 %v5126
    %5136 = vmatprep.subr.mxu0 %v5129
    %5137 = vmatpush1.msra.mxu0 %v5128
    %5138 = vmatprep.subr.mxu0 %v5131
    %5139 = vmatpush1.msra.mxu0 %v5130
    %5140 = vmatprep.subr.mxu0 %v5133
    %5141 = vmatpush1.msra.mxu0 %v5132
    %5142 = vmatprep.subr.mxu0 0.0
    %5143 = vmatpush1.msra.mxu0 0.0
    %5144 = vmatprep.subr.mxu0 0.0
    %5145 = vmatpush1.msra.mxu0 0.0
    %5146 = vmatprep.subr.mxu0 0.0
    %5147 = vmatpush1.msra.mxu0 0.0
    %5148 = vmatprep.subr.mxu0 0.0
    %5149 = vmatpush1.msra.mxu0 0.0
    %5150 = vmatprep.subr.mxu0 0.0
    %5151 = vmatpush1.msra.mxu0 0.0
    %5152 = vmatprep.subr.mxu0 0.0
    %5153 = vmatpush1.msra.mxu0 0.0
    %5154 = vmatprep.subr.mxu0 0.0
    %5155 = vmatpush1.msra.mxu0 0.0
    %5156 = vmatprep.subr.mxu0 0.0
    %5157 = vmatpush1.msra.mxu0 0.0
    %5158 = vmatprep.subr.mxu0 0.0
    %5159 = vmatpush1.msra.mxu0 0.0
    %5160 = vmatprep.subr.mxu0 0.0
    %5161 = vmatpush1.msra.mxu0 0.0
    %5162 = vmatprep.subr.mxu0 0.0
    %5163 = vmatpush1.msra.mxu0 0.0
    %5164 = vmatprep.subr.mxu0 0.0
    %5165 = vmatpush1.msra.mxu0 0.0
    %5166 = vmatprep.subr.mxu0 0.0
    %5167 = vmatpush1.msra.mxu0 0.0
    %5168 = vmatprep.subr.mxu0 0.0
    %5169 = vmatpush1.msra.mxu0 0.0
    %5170 = vmatprep.subr.mxu0 0.0
    %5171 = vmatpush1.msra.mxu0 0.0
    %5172 = vmatprep.subr.mxu0 0.0
    %5173 = vmatpush1.msra.mxu0 0.0
    %5174 = vmatprep.subr.mxu0 0.0
    %5175 = vmatpush1.msra.mxu0 0.0
    %5176 = vmatprep.subr.mxu0 0.0
    %5177 = vmatpush1.msra.mxu0 0.0
    %5178 = vmatprep.subr.mxu0 0.0
    %5179 = vmatpush1.msra.mxu0 0.0
    %5180 = vmatprep.subr.mxu0 0.0
    %5181 = vmatpush1.msra.mxu0 0.0
    %5182 = vmatprep.subr.mxu0 0.0
    %5183 = vmatpush1.msra.mxu0 0.0
    %5184 = vmatprep.subr.mxu0 0.0
    %5185 = vmatpush1.msra.mxu0 0.0
    %5186 = vmatprep.subr.mxu0 0.0
    %5187 = vmatpush1.msra.mxu0 0.0
    %5188 = vmatprep.subr.mxu0 0.0
    %5189 = vmatpush1.msra.mxu0 0.0
    %5190 = vmatprep.subr.mxu0 0.0
    %5191 = vmatpush1.msra.mxu0 0.0
    %5192 = vmatprep.subr.mxu0 0.0
    %5193 = vmatpush1.msra.mxu0 0.0
    %5194 = vmatprep.subr.mxu0 0.0
    %5195 = vmatpush1.msra.mxu0 0.0
    %5196 = vmatprep.subr.mxu0 0.0
    %5197 = vmatpush1.msra.mxu0 0.0
    %5198 = vmatprep.mubr.f32.mxu0 0.0
    %5199 = vmatmul.mubr.f32.gmra.mrb[0].mxu0 %v4829
    %v5200 = vpop.f32.mrb[0].mxu0
    %v5201 = vadd.f32 %v4826, %v5200
    %v5202 = vpop.f32.mrb[0].mxu0
    %v5203 = vadd.f32 %v4826, %v5202
    %5204 = vdwg.mxu0
    %v5205 = vtanh.pop %v5201
    %v5206 = vtanh.pop %v5203
    %v5207 = vmul.f32 %v5205, 0.083333336
    %v5208 = vmul.f32 %v5206, 0.083333336
    %v5211 = vcombine.low %v5207, %v5208
    %v5213 = vadd.f32 %v4910, %v5211
    %v5214 = vmul.f32 %v5205, 0.125
    %v5215 = vmul.f32 %v5206, 0.125
    %v5218 = vcombine.low %v5214, %v5215
    %v5220 = vadd.f32 %v4379, %v5218
    %v5222 = vcombine.high %v5220, %v5220
    %v5223 = vsel %vm255, %v5220, 0
    %v5225 = vsel %vm255, %v5222, 0
    %5227 = vmatprep.subr.mxu0 %v5225
    %5228 = vmatpush1.msra.mxu0 %v5223
    %5229 = vmatprep.subr.mxu0 0.0
    %5230 = vmatpush1.msra.mxu0 0.0
    %5231 = vmatprep.subr.mxu0 0.0
    %5232 = vmatpush1.msra.mxu0 0.0
    %5233 = vmatprep.subr.mxu0 0.0
    %5234 = vmatpush1.msra.mxu0 0.0
    %5235 = vmatprep.subr.mxu0 0.0
    %5236 = vmatpush1.msra.mxu0 0.0
    %5237 = vmatprep.subr.mxu0 0.0
    %5238 = vmatpush1.msra.mxu0 0.0
    %5239 = vmatprep.subr.mxu0 0.0
    %5240 = vmatpush1.msra.mxu0 0.0
    %5241 = vmatprep.subr.mxu0 0.0
    %5242 = vmatpush1.msra.mxu0 0.0
    %5243 = vmatprep.subr.mxu0 0.0
    %5244 = vmatpush1.msra.mxu0 0.0
    %5245 = vmatprep.subr.mxu0 0.0
    %5246 = vmatpush1.msra.mxu0 0.0
    %5247 = vmatprep.subr.mxu0 0.0
    %5248 = vmatpush1.msra.mxu0 0.0
    %5249 = vmatprep.subr.mxu0 0.0
    %5250 = vmatpush1.msra.mxu0 0.0
    %5251 = vmatprep.subr.mxu0 0.0
    %5252 = vmatpush1.msra.mxu0 0.0
    %5253 = vmatprep.subr.mxu0 0.0
    %5254 = vmatpush1.msra.mxu0 0.0
    %5255 = vmatprep.subr.mxu0 0.0
    %5256 = vmatpush1.msra.mxu0 0.0
    %5257 = vmatprep.subr.mxu0 0.0
    %5258 = vmatpush1.msra.mxu0 0.0
    %5259 = vmatprep.subr.mxu0 0.0
    %5260 = vmatpush1.msra.mxu0 0.0
    %5261 = vmatprep.subr.mxu0 0.0
    %5262 = vmatpush1.msra.mxu0 0.0
    %5263 = vmatprep.subr.mxu0 0.0
    %5264 = vmatpush1.msra.mxu0 0.0
    %5265 = vmatprep.subr.mxu0 0.0
    %5266 = vmatpush1.msra.mxu0 0.0
    %5267 = vmatprep.subr.mxu0 0.0
    %5268 = vmatpush1.msra.mxu0 0.0
    %5269 = vmatprep.subr.mxu0 0.0
    %5270 = vmatpush1.msra.mxu0 0.0
    %5271 = vmatprep.subr.mxu0 0.0
    %5272 = vmatpush1.msra.mxu0 0.0
    %5273 = vmatprep.subr.mxu0 0.0
    %5274 = vmatpush1.msra.mxu0 0.0
    %5275 = vmatprep.subr.mxu0 0.0
    %5276 = vmatpush1.msra.mxu0 0.0
    %5277 = vmatprep.subr.mxu0 0.0
    %5278 = vmatpush1.msra.mxu0 0.0
    %5279 = vmatprep.subr.mxu0 0.0
    %5280 = vmatpush1.msra.mxu0 0.0
    %5281 = vmatprep.subr.mxu0 0.0
    %5282 = vmatpush1.msra.mxu0 0.0
    %5283 = vmatprep.subr.mxu0 0.0
    %5284 = vmatpush1.msra.mxu0 0.0
    %5285 = vmatprep.subr.mxu0 0.0
    %5286 = vmatpush1.msra.mxu0 0.0
    %5287 = vmatprep.subr.mxu0 0.0
    %5288 = vmatpush1.msra.mxu0 0.0
    %5289 = vmatprep.subr.mxu0 0.0
    %5290 = vmatpush1.msra.mxu0 0.0
    %5291 = vmatprep.mubr.f32.mxu0 0.0
    %5292 = vmatmul.mubr.f32.gmra.mrb[0].mxu0 %v4566
    %v5293 = vpop.f32.mrb[0].mxu0
    %v5294 = vadd.f32 %v4546, %v5293
    %v5295 = vpop.f32.mrb[0].mxu0
    %v5296 = vadd.f32 %v4546, %v5295
    %5297 = vmatprep.mubr.f32.mxu0 0.0
    %5298 = vmatmul.mubr.f32.gmra.mrb[0].mxu0 %v4569
    %v5299 = vpop.f32.mrb[0].mxu0
    %v5300 = vadd.f32 %v4551, %v5299
    %v5301 = vpop.f32.mrb[0].mxu0
    %v5302 = vadd.f32 %v4551, %v5301
    %5303 = vmatprep.mubr.f32.mxu0 0.0
    %5304 = vmatmul.mubr.f32.gmra.mrb[0].mxu0 %v4572
    %v5305 = vpop.f32.mrb[0].mxu0
    %v5306 = vadd.f32 %v4556, %v5305
    %v5307 = vpop.f32.mrb[0].mxu0
    %v5308 = vadd.f32 %v4556, %v5307
    %5309 = vmatprep.mubr.f32.mxu0 0.0
    %5310 = vmatmul.mubr.f32.gmra.mrb[0].mxu0 %v4575
    %v5311 = vpop.f32.mrb[0].mxu0
    %v5312 = vadd.f32 %v4561, %v5311
    %v5313 = vpop.f32.mrb[0].mxu0
    %v5314 = vadd.f32 %v4561, %v5313
    %5315 = vdwg.mxu0
    %v5316 = vmax.f32 %v5294, 0.0
    %v5317 = vmax.f32 %v5296, 0.0
    %v5318 = vmax.f32 %v5300, 0.0
    %v5319 = vmax.f32 %v5302, 0.0
    %v5320 = vmax.f32 %v5306, 0.0
    %v5321 = vmax.f32 %v5308, 0.0
    %v5322 = vmax.f32 %v5312, 0.0
    %v5323 = vmax.f32 %v5314, 0.0
    %v5324 = vmul.f32 %v5316, %v4535
    %v5325 = vmul.f32 %v5317, %v4536
    %v5326 = vmul.f32 %v5318, %v4537
    %v5327 = vmul.f32 %v5319, %v4538
    %v5328 = vmul.f32 %v5320, %v4539
    %v5329 = vmul.f32 %v5321, %v4540
    %v5330 = vmul.f32 %v5322, %v4541
    %v5331 = vmul.f32 %v5323, %v4542
    %5332 = vmatprep.subr.mxu0 %v5325
    %5333 = vmatpush1.msra.mxu0 %v5324
    %5334 = vmatprep.subr.mxu0 %v5327
    %5335 = vmatpush1.msra.mxu0 %v5326
    %5336 = vmatprep.subr.mxu0 %v5329
    %5337 = vmatpush1.msra.mxu0 %v5328
    %5338 = vmatprep.subr.mxu0 %v5331
    %5339 = vmatpush1.msra.mxu0 %v5330
    %5340 = vmatprep.subr.mxu0 0.0
    %5341 = vmatpush1.msra.mxu0 0.0
    %5342 = vmatprep.subr.mxu0 0.0
    %5343 = vmatpush1.msra.mxu0 0.0
    %5344 = vmatprep.subr.mxu0 0.0
    %5345 = vmatpush1.msra.mxu0 0.0
    %5346 = vmatprep.subr.mxu0 0.0
    %5347 = vmatpush1.msra.mxu0 0.0
    %5348 = vmatprep.subr.mxu0 0.0
    %5349 = vmatpush1.msra.mxu0 0.0
    %5350 = vmatprep.subr.mxu0 0.0
    %5351 = vmatpush1.msra.mxu0 0.0
    %5352 = vmatprep.subr.mxu0 0.0
    %5353 = vmatpush1.msra.mxu0 0.0
    %5354 = vmatprep.subr.mxu0 0.0
    %5355 = vmatpush1.msra.mxu0 0.0
    %5356 = vmatprep.subr.mxu0 0.0
    %5357 = vmatpush1.msra.mxu0 0.0
    %5358 = vmatprep.subr.mxu0 0.0
    %5359 = vmatpush1.msra.mxu0 0.0
    %5360 = vmatprep.subr.mxu0 0.0
    %5361 = vmatpush1.msra.mxu0 0.0
    %5362 = vmatprep.subr.mxu0 0.0
    %5363 = vmatpush1.msra.mxu0 0.0
    %5364 = vmatprep.subr.mxu0 0.0
    %5365 = vmatpush1.msra.mxu0 0.0
    %5366 = vmatprep.subr.mxu0 0.0
    %5367 = vmatpush1.msra.mxu0 0.0
    %5368 = vmatprep.subr.mxu0 0.0
    %5369 = vmatpush1.msra.mxu0 0.0
    %5370 = vmatprep.subr.mxu0 0.0
    %5371 = vmatpush1.msra.mxu0 0.0
    %5372 = vmatprep.subr.mxu0 0.0
    %5373 = vmatpush1.msra.mxu0 0.0
    %5374 = vmatprep.subr.mxu0 0.0
    %5375 = vmatpush1.msra.mxu0 0.0
    %5376 = vmatprep.subr.mxu0 0.0
    %5377 = vmatpush1.msra.mxu0 0.0
    %5378 = vmatprep.subr.mxu0 0.0
    %5379 = vmatpush1.msra.mxu0 0.0
    %5380 = vmatprep.subr.mxu0 0.0
    %5381 = vmatpush1.msra.mxu0 0.0
    %5382 = vmatprep.subr.mxu0 0.0
    %5383 = vmatpush1.msra.mxu0 0.0
    %5384 = vmatprep.subr.mxu0 0.0
    %5385 = vmatpush1.msra.mxu0 0.0
    %5386 = vmatprep.subr.mxu0 0.0
    %5387 = vmatpush1.msra.mxu0 0.0
    %5388 = vmatprep.subr.mxu0 0.0
    %5389 = vmatpush1.msra.mxu0 0.0
    %5390 = vmatprep.subr.mxu0 0.0
    %5391 = vmatpush1.msra.mxu0 0.0
    %5392 = vmatprep.subr.mxu0 0.0
    %5393 = vmatpush1.msra.mxu0 0.0
    %5394 = vmatprep.subr.mxu0 0.0
    %5395 = vmatpush1.msra.mxu0 0.0
    %5396 = vmatprep.mubr.f32.mxu0 0.0
    %5397 = vmatmul.mubr.f32.gmra.mrb[0].mxu0 %v4707
    %v5398 = vpop.f32.mrb[0].mxu0
    %v5399 = vadd.f32 %v4689, %v5398
    %v5400 = vpop.f32.mrb[0].mxu0
    %v5401 = vadd.f32 %v4689, %v5400
    %5402 = vmatprep.mubr.f32.mxu0 0.0
    %5403 = vmatmul.mubr.f32.gmra.mrb[0].mxu0 %v4710
    %v5404 = vpop.f32.mrb[0].mxu0
    %v5405 = vadd.f32 %v4694, %v5404
    %v5406 = vpop.f32.mrb[0].mxu0
    %v5407 = vadd.f32 %v4694, %v5406
    %5408 = vmatprep.mubr.f32.mxu0 0.0
    %5409 = vmatmul.mubr.f32.gmra.mrb[0].mxu0 %v4713
    %v5410 = vpop.f32.mrb[0].mxu0
    %v5411 = vadd.f32 %v4699, %v5410
    %v5412 = vpop.f32.mrb[0].mxu0
    %v5413 = vadd.f32 %v4699, %v5412
    %5414 = vmatprep.mubr.f32.mxu0 0.0
    %5415 = vmatmul.mubr.f32.gmra.mrb[0].mxu0 %v4716
    %v5416 = vpop.f32.mrb[0].mxu0
    %v5417 = vadd.f32 %v4704, %v5416
    %v5418 = vpop.f32.mrb[0].mxu0
    %v5419 = vadd.f32 %v4704, %v5418
    %5420 = vdwg.mxu0
    %v5421 = vmax.f32 %v5399, 0.0
    %v5422 = vmax.f32 %v5401, 0.0
    %v5423 = vmax.f32 %v5405, 0.0
    %v5424 = vmax.f32 %v5407, 0.0
    %v5425 = vmax.f32 %v5411, 0.0
    %v5426 = vmax.f32 %v5413, 0.0
    %v5427 = vmax.f32 %v5417, 0.0
    %v5428 = vmax.f32 %v5419, 0.0
    %v5429 = vadd.f32 %v5421, %v5324
    %v5430 = vadd.f32 %v5422, %v5325
    %v5431 = vadd.f32 %v5423, %v5326
    %v5432 = vadd.f32 %v5424, %v5327
    %v5433 = vadd.f32 %v5425, %v5328
    %v5434 = vadd.f32 %v5426, %v5329
    %v5435 = vadd.f32 %v5427, %v5330
    %v5436 = vadd.f32 %v5428, %v5331
    %5437 = vmatprep.subr.mxu0 %v5430
    %5438 = vmatpush1.msra.mxu0 %v5429
    %5439 = vmatprep.subr.mxu0 %v5432
    %5440 = vmatpush1.msra.mxu0 %v5431
    %5441 = vmatprep.subr.mxu0 %v5434
    %5442 = vmatpush1.msra.mxu0 %v5433
    %5443 = vmatprep.subr.mxu0 %v5436
    %5444 = vmatpush1.msra.mxu0 %v5435
    %5445 = vmatprep.subr.mxu0 0.0
    %5446 = vmatpush1.msra.mxu0 0.0
    %5447 = vmatprep.subr.mxu0 0.0
    %5448 = vmatpush1.msra.mxu0 0.0
    %5449 = vmatprep.subr.mxu0 0.0
    %5450 = vmatpush1.msra.mxu0 0.0
    %5451 = vmatprep.subr.mxu0 0.0
    %5452 = vmatpush1.msra.mxu0 0.0
    %5453 = vmatprep.subr.mxu0 0.0
    %5454 = vmatpush1.msra.mxu0 0.0
    %5455 = vmatprep.subr.mxu0 0.0
    %5456 = vmatpush1.msra.mxu0 0.0
    %5457 = vmatprep.subr.mxu0 0.0
    %5458 = vmatpush1.msra.mxu0 0.0
    %5459 = vmatprep.subr.mxu0 0.0
    %5460 = vmatpush1.msra.mxu0 0.0
    %5461 = vmatprep.subr.mxu0 0.0
    %5462 = vmatpush1.msra.mxu0 0.0
    %5463 = vmatprep.subr.mxu0 0.0
    %5464 = vmatpush1.msra.mxu0 0.0
    %5465 = vmatprep.subr.mxu0 0.0
    %5466 = vmatpush1.msra.mxu0 0.0
    %5467 = vmatprep.subr.mxu0 0.0
    %5468 = vmatpush1.msra.mxu0 0.0
    %5469 = vmatprep.subr.mxu0 0.0
    %5470 = vmatpush1.msra.mxu0 0.0
    %5471 = vmatprep.subr.mxu0 0.0
    %5472 = vmatpush1.msra.mxu0 0.0
    %5473 = vmatprep.subr.mxu0 0.0
    %5474 = vmatpush1.msra.mxu0 0.0
    %5475 = vmatprep.subr.mxu0 0.0
    %5476 = vmatpush1.msra.mxu0 0.0
    %5477 = vmatprep.subr.mxu0 0.0
    %5478 = vmatpush1.msra.mxu0 0.0
    %5479 = vmatprep.subr.mxu0 0.0
    %5480 = vmatpush1.msra.mxu0 0.0
    %5481 = vmatprep.subr.mxu0 0.0
    %5482 = vmatpush1.msra.mxu0 0.0
    %5483 = vmatprep.subr.mxu0 0.0
    %5484 = vmatpush1.msra.mxu0 0.0
    %5485 = vmatprep.subr.mxu0 0.0
    %5486 = vmatpush1.msra.mxu0 0.0
    %5487 = vmatprep.subr.mxu0 0.0
    %5488 = vmatpush1.msra.mxu0 0.0
    %5489 = vmatprep.subr.mxu0 0.0
    %5490 = vmatpush1.msra.mxu0 0.0
    %5491 = vmatprep.subr.mxu0 0.0
    %5492 = vmatpush1.msra.mxu0 0.0
    %5493 = vmatprep.subr.mxu0 0.0
    %5494 = vmatpush1.msra.mxu0 0.0
    %5495 = vmatprep.subr.mxu0 0.0
    %5496 = vmatpush1.msra.mxu0 0.0
    %5497 = vmatprep.subr.mxu0 0.0
    %5498 = vmatpush1.msra.mxu0 0.0
    %5499 = vmatprep.subr.mxu0 0.0
    %5500 = vmatpush1.msra.mxu0 0.0
    %5501 = vmatprep.mubr.f32.mxu0 0.0
    %5502 = vmatmul.mubr.f32.gmra.mrb[0].mxu0 %v4829
    %v5503 = vpop.f32.mrb[0].mxu0
    %v5504 = vadd.f32 %v4826, %v5503
    %v5505 = vpop.f32.mrb[0].mxu0
    %v5506 = vadd.f32 %v4826, %v5505
    %5507 = vdwg.mxu0
    %v5508 = vtanh.pop %v5504
    %v5509 = vtanh.pop %v5506
    %v5510 = vmul.f32 %v5508, 0.083333336
    %v5511 = vmul.f32 %v5509, 0.083333336
    %v5514 = vcombine.low %v5510, %v5511
    %v5516 = vadd.f32 %v5213, %v5514
    %v5517 = vmul.f32 %v5508, 0.25
    %v5518 = vmul.f32 %v5509, 0.25
    %v5521 = vcombine.low %v5517, %v5518
    %v5523 = vadd.f32 %v4379, %v5521
    %v5525 = vcombine.high %v5523, %v5523
    %v5526 = vsel %vm255, %v5523, 0
    %v5528 = vsel %vm255, %v5525, 0
    %5530 = vmatprep.subr.mxu0 %v5528
    %5531 = vmatpush1.msra.mxu0 %v5526
    %5532 = vmatprep.subr.mxu0 0.0
    %5533 = vmatpush1.msra.mxu0 0.0
    %5534 = vmatprep.subr.mxu0 0.0
    %5535 = vmatpush1.msra.mxu0 0.0
    %5536 = vmatprep.subr.mxu0 0.0
    %5537 = vmatpush1.msra.mxu0 0.0
    %5538 = vmatprep.subr.mxu0 0.0
    %5539 = vmatpush1.msra.mxu0 0.0
    %5540 = vmatprep.subr.mxu0 0.0
    %5541 = vmatpush1.msra.mxu0 0.0
    %5542 = vmatprep.subr.mxu0 0.0
    %5543 = vmatpush1.msra.mxu0 0.0
    %5544 = vmatprep.subr.mxu0 0.0
    %5545 = vmatpush1.msra.mxu0 0.0
    %5546 = vmatprep.subr.mxu0 0.0
    %5547 = vmatpush1.msra.mxu0 0.0
    %5548 = vmatprep.subr.mxu0 0.0
    %5549 = vmatpush1.msra.mxu0 0.0
    %5550 = vmatprep.subr.mxu0 0.0
    %5551 = vmatpush1.msra.mxu0 0.0
    %5552 = vmatprep.subr.mxu0 0.0
    %5553 = vmatpush1.msra.mxu0 0.0
    %5554 = vmatprep.subr.mxu0 0.0
    %5555 = vmatpush1.msra.mxu0 0.0
    %5556 = vmatprep.subr.mxu0 0.0
    %5557 = vmatpush1.msra.mxu0 0.0
    %5558 = vmatprep.subr.mxu0 0.0
    %5559 = vmatpush1.msra.mxu0 0.0
    %5560 = vmatprep.subr.mxu0 0.0
    %5561 = vmatpush1.msra.mxu0 0.0
    %5562 = vmatprep.subr.mxu0 0.0
    %5563 = vmatpush1.msra.mxu0 0.0
    %5564 = vmatprep.subr.mxu0 0.0
    %5565 = vmatpush1.msra.mxu0 0.0
    %5566 = vmatprep.subr.mxu0 0.0
    %5567 = vmatpush1.msra.mxu0 0.0
    %5568 = vmatprep.subr.mxu0 0.0
    %5569 = vmatpush1.msra.mxu0 0.0
    %5570 = vmatprep.subr.mxu0 0.0
    %5571 = vmatpush1.msra.mxu0 0.0
    %5572 = vmatprep.subr.mxu0 0.0
    %5573 = vmatpush1.msra.mxu0 0.0
    %5574 = vmatprep.subr.mxu0 0.0
    %5575 = vmatpush1.msra.mxu0 0.0
    %5576 = vmatprep.subr.mxu0 0.0
    %5577 = vmatpush1.msra.mxu0 0.0
    %5578 = vmatprep.subr.mxu0 0.0
    %5579 = vmatpush1.msra.mxu0 0.0
    %5580 = vmatprep.subr.mxu0 0.0
    %5581 = vmatpush1.msra.mxu0 0.0
    %5582 = vmatprep.subr.mxu0 0.0
    %5583 = vmatpush1.msra.mxu0 0.0
    %5584 = vmatprep.subr.mxu0 0.0
    %5585 = vmatpush1.msra.mxu0 0.0
    %5586 = vmatprep.subr.mxu0 0.0
    %5587 = vmatpush1.msra.mxu0 0.0
    %5588 = vmatprep.subr.mxu0 0.0
    %5589 = vmatpush1.msra.mxu0 0.0
    %5590 = vmatprep.subr.mxu0 0.0
    %5591 = vmatpush1.msra.mxu0 0.0
    %5592 = vmatprep.subr.mxu0 0.0
    %5593 = vmatpush1.msra.mxu0 0.0
    %5594 = vmatprep.mubr.f32.mxu0 0.0
    %5595 = vmatmul.mubr.f32.gmra.mrb[0].mxu0 %v4566
    %v5596 = vpop.f32.mrb[0].mxu0
    %v5597 = vadd.f32 %v4546, %v5596
    %v5598 = vpop.f32.mrb[0].mxu0
    %v5599 = vadd.f32 %v4546, %v5598
    %5600 = vmatprep.mubr.f32.mxu0 0.0
    %5601 = vmatmul.mubr.f32.gmra.mrb[0].mxu0 %v4569
    %v5602 = vpop.f32.mrb[0].mxu0
    %v5603 = vadd.f32 %v4551, %v5602
    %v5604 = vpop.f32.mrb[0].mxu0
    %v5605 = vadd.f32 %v4551, %v5604
    %5606 = vmatprep.mubr.f32.mxu0 0.0
    %5607 = vmatmul.mubr.f32.gmra.mrb[0].mxu0 %v4572
    %v5608 = vpop.f32.mrb[0].mxu0
    %v5609 = vadd.f32 %v4556, %v5608
    %v5610 = vpop.f32.mrb[0].mxu0
    %v5611 = vadd.f32 %v4556, %v5610
    %5612 = vmatprep.mubr.f32.mxu0 0.0
    %5613 = vmatmul.mubr.f32.gmra.mrb[0].mxu0 %v4575
    %v5614 = vpop.f32.mrb[0].mxu0
    %v5615 = vadd.f32 %v4561, %v5614
    %v5616 = vpop.f32.mrb[0].mxu0
    %v5617 = vadd.f32 %v4561, %v5616
    %5618 = vdwg.mxu0
    %v5619 = vmax.f32 %v5597, 0.0
    %v5620 = vmax.f32 %v5599, 0.0
    %v5621 = vmax.f32 %v5603, 0.0
    %v5622 = vmax.f32 %v5605, 0.0
    %v5623 = vmax.f32 %v5609, 0.0
    %v5624 = vmax.f32 %v5611, 0.0
    %v5625 = vmax.f32 %v5615, 0.0
    %v5626 = vmax.f32 %v5617, 0.0
    %v5627 = vmul.f32 %v5619, %v4535
    %v5628 = vmul.f32 %v5620, %v4536
    %v5629 = vmul.f32 %v5621, %v4537
    %v5630 = vmul.f32 %v5622, %v4538
    %v5631 = vmul.f32 %v5623, %v4539
    %v5632 = vmul.f32 %v5624, %v4540
    %v5633 = vmul.f32 %v5625, %v4541
    %v5634 = vmul.f32 %v5626, %v4542
    %5635 = vmatprep.subr.mxu0 %v5628
    %5636 = vmatpush1.msra.mxu0 %v5627
    %5637 = vmatprep.subr.mxu0 %v5630
    %5638 = vmatpush1.msra.mxu0 %v5629
    %5639 = vmatprep.subr.mxu0 %v5632
    %5640 = vmatpush1.msra.mxu0 %v5631
    %5641 = vmatprep.subr.mxu0 %v5634
    %5642 = vmatpush1.msra.mxu0 %v5633
    %5643 = vmatprep.subr.mxu0 0.0
    %5644 = vmatpush1.msra.mxu0 0.0
    %5645 = vmatprep.subr.mxu0 0.0
    %5646 = vmatpush1.msra.mxu0 0.0
    %5647 = vmatprep.subr.mxu0 0.0
    %5648 = vmatpush1.msra.mxu0 0.0
    %5649 = vmatprep.subr.mxu0 0.0
    %5650 = vmatpush1.msra.mxu0 0.0
    %5651 = vmatprep.subr.mxu0 0.0
    %5652 = vmatpush1.msra.mxu0 0.0
    %5653 = vmatprep.subr.mxu0 0.0
    %5654 = vmatpush1.msra.mxu0 0.0
    %5655 = vmatprep.subr.mxu0 0.0
    %5656 = vmatpush1.msra.mxu0 0.0
    %5657 = vmatprep.subr.mxu0 0.0
    %5658 = vmatpush1.msra.mxu0 0.0
    %5659 = vmatprep.subr.mxu0 0.0
    %5660 = vmatpush1.msra.mxu0 0.0
    %5661 = vmatprep.subr.mxu0 0.0
    %5662 = vmatpush1.msra.mxu0 0.0
    %5663 = vmatprep.subr.mxu0 0.0
    %5664 = vmatpush1.msra.mxu0 0.0
    %5665 = vmatprep.subr.mxu0 0.0
    %5666 = vmatpush1.msra.mxu0 0.0
    %5667 = vmatprep.subr.mxu0 0.0
    %5668 = vmatpush1.msra.mxu0 0.0
    %5669 = vmatprep.subr.mxu0 0.0
    %5670 = vmatpush1.msra.mxu0 0.0
    %5671 = vmatprep.subr.mxu0 0.0
    %5672 = vmatpush1.msra.mxu0 0.0
    %5673 = vmatprep.subr.mxu0 0.0
    %5674 = vmatpush1.msra.mxu0 0.0
    %5675 = vmatprep.subr.mxu0 0.0
    %5676 = vmatpush1.msra.mxu0 0.0
    %5677 = vmatprep.subr.mxu0 0.0
    %5678 = vmatpush1.msra.mxu0 0.0
    %5679 = vmatprep.subr.mxu0 0.0
    %5680 = vmatpush1.msra.mxu0 0.0
    %5681 = vmatprep.subr.mxu0 0.0
    %5682 = vmatpush1.msra.mxu0 0.0
    %5683 = vmatprep.subr.mxu0 0.0
    %5684 = vmatpush1.msra.mxu0 0.0
    %5685 = vmatprep.subr.mxu0 0.0
    %5686 = vmatpush1.msra.mxu0 0.0
    %5687 = vmatprep.subr.mxu0 0.0
    %5688 = vmatpush1.msra.mxu0 0.0
    %5689 = vmatprep.subr.mxu0 0.0
    %5690 = vmatpush1.msra.mxu0 0.0
    %5691 = vmatprep.subr.mxu0 0.0
    %5692 = vmatpush1.msra.mxu0 0.0
    %5693 = vmatprep.subr.mxu0 0.0
    %5694 = vmatpush1.msra.mxu0 0.0
    %5695 = vmatprep.subr.mxu0 0.0
    %5696 = vmatpush1.msra.mxu0 0.0
    %5697 = vmatprep.subr.mxu0 0.0
    %5698 = vmatpush1.msra.mxu0 0.0
    %5699 = vmatprep.mubr.f32.mxu0 0.0
    %5700 = vmatmul.mubr.f32.gmra.mrb[0].mxu0 %v4707
    %v5701 = vpop.f32.mrb[0].mxu0
    %v5702 = vadd.f32 %v4689, %v5701
    %v5703 = vpop.f32.mrb[0].mxu0
    %v5704 = vadd.f32 %v4689, %v5703
    %5705 = vmatprep.mubr.f32.mxu0 0.0
    %5706 = vmatmul.mubr.f32.gmra.mrb[0].mxu0 %v4710
    %v5707 = vpop.f32.mrb[0].mxu0
    %v5708 = vadd.f32 %v4694, %v5707
    %v5709 = vpop.f32.mrb[0].mxu0
    %v5710 = vadd.f32 %v4694, %v5709
    %5711 = vmatprep.mubr.f32.mxu0 0.0
    %5712 = vmatmul.mubr.f32.gmra.mrb[0].mxu0 %v4713
    %v5713 = vpop.f32.mrb[0].mxu0
    %v5714 = vadd.f32 %v4699, %v5713
    %v5715 = vpop.f32.mrb[0].mxu0
    %v5716 = vadd.f32 %v4699, %v5715
    %5717 = vmatprep.mubr.f32.mxu0 0.0
    %5718 = vmatmul.mubr.f32.gmra.mrb[0].mxu0 %v4716
    %v5719 = vpop.f32.mrb[0].mxu0
    %v5720 = vadd.f32 %v4704, %v5719
    %v5721 = vpop.f32.mrb[0].mxu0
    %v5722 = vadd.f32 %v4704, %v5721
    %5723 = vdwg.mxu0
    %v5724 = vmax.f32 %v5702, 0.0
    %v5725 = vmax.f32 %v5704, 0.0
    %v5726 = vmax.f32 %v5708, 0.0
    %v5727 = vmax.f32 %v5710, 0.0
    %v5728 = vmax.f32 %v5714, 0.0
    %v5729 = vmax.f32 %v5716, 0.0
    %v5730 = vmax.f32 %v5720, 0.0
    %v5731 = vmax.f32 %v5722, 0.0
    %v5732 = vadd.f32 %v5724, %v5627
    %v5733 = vadd.f32 %v5725, %v5628
    %v5734 = vadd.f32 %v5726, %v5629
    %v5735 = vadd.f32 %v5727, %v5630
    %v5736 = vadd.f32 %v5728, %v5631
    %v5737 = vadd.f32 %v5729, %v5632
    %v5738 = vadd.f32 %v5730, %v5633
    %v5739 = vadd.f32 %v5731, %v5634
    %5740 = vmatprep.subr.mxu0 %v5733
    %5741 = vmatpush1.msra.mxu0 %v5732
    %5742 = vmatprep.subr.mxu0 %v5735
    %5743 = vmatpush1.msra.mxu0 %v5734
    %5744 = vmatprep.subr.mxu0 %v5737
    %5745 = vmatpush1.msra.mxu0 %v5736
    %5746 = vmatprep.subr.mxu0 %v5739
    %5747 = vmatpush1.msra.mxu0 %v5738
    %5748 = vmatprep.subr.mxu0 0.0
    %5749 = vmatpush1.msra.mxu0 0.0
    %5750 = vmatprep.subr.mxu0 0.0
    %5751 = vmatpush1.msra.mxu0 0.0
    %5752 = vmatprep.subr.mxu0 0.0
    %5753 = vmatpush1.msra.mxu0 0.0
    %5754 = vmatprep.subr.mxu0 0.0
    %5755 = vmatpush1.msra.mxu0 0.0
    %5756 = vmatprep.subr.mxu0 0.0
    %5757 = vmatpush1.msra.mxu0 0.0
    %5758 = vmatprep.subr.mxu0 0.0
    %5759 = vmatpush1.msra.mxu0 0.0
    %5760 = vmatprep.subr.mxu0 0.0
    %5761 = vmatpush1.msra.mxu0 0.0
    %5762 = vmatprep.subr.mxu0 0.0
    %5763 = vmatpush1.msra.mxu0 0.0
    %5764 = vmatprep.subr.mxu0 0.0
    %5765 = vmatpush1.msra.mxu0 0.0
    %5766 = vmatprep.subr.mxu0 0.0
    %5767 = vmatpush1.msra.mxu0 0.0
    %5768 = vmatprep.subr.mxu0 0.0
    %5769 = vmatpush1.msra.mxu0 0.0
    %5770 = vmatprep.subr.mxu0 0.0
    %5771 = vmatpush1.msra.mxu0 0.0
    %5772 = vmatprep.subr.mxu0 0.0
    %5773 = vmatpush1.msra.mxu0 0.0
    %5774 = vmatprep.subr.mxu0 0.0
    %5775 = vmatpush1.msra.mxu0 0.0
    %5776 = vmatprep.subr.mxu0 0.0
    %5777 = vmatpush1.msra.mxu0 0.0
    %5778 = vmatprep.subr.mxu0 0.0
    %5779 = vmatpush1.msra.mxu0 0.0
    %5780 = vmatprep.subr.mxu0 0.0
    %5781 = vmatpush1.msra.mxu0 0.0
    %5782 = vmatprep.subr.mxu0 0.0
    %5783 = vmatpush1.msra.mxu0 0.0
    %5784 = vmatprep.subr.mxu0 0.0
    %5785 = vmatpush1.msra.mxu0 0.0
    %5786 = vmatprep.subr.mxu0 0.0
    %5787 = vmatpush1.msra.mxu0 0.0
    %5788 = vmatprep.subr.mxu0 0.0
    %5789 = vmatpush1.msra.mxu0 0.0
    %5790 = vmatprep.subr.mxu0 0.0
    %5791 = vmatpush1.msra.mxu0 0.0
    %5792 = vmatprep.subr.mxu0 0.0
    %5793 = vmatpush1.msra.mxu0 0.0
    %5794 = vmatprep.subr.mxu0 0.0
    %5795 = vmatpush1.msra.mxu0 0.0
    %5796 = vmatprep.subr.mxu0 0.0
    %5797 = vmatpush1.msra.mxu0 0.0
    %5798 = vmatprep.subr.mxu0 0.0
    %5799 = vmatpush1.msra.mxu0 0.0
    %5800 = vmatprep.subr.mxu0 0.0
    %5801 = vmatpush1.msra.mxu0 0.0
    %5802 = vmatprep.subr.mxu0 0.0
    %5803 = vmatpush1.msra.mxu0 0.0
    %5804 = vmatprep.mubr.f32.mxu0 0.0
    %5805 = vmatmul.mubr.f32.gmra.mrb[0].mxu0 %v4829
    %v5806 = vpop.f32.mrb[0].mxu0
    %v5807 = vadd.f32 %v4826, %v5806
    %v5808 = vpop.f32.mrb[0].mxu0
    %v5809 = vadd.f32 %v4826, %v5808
    %5810 = vdwg.mxu0
    %v5811 = vtanh.pop %v5807
    %v5812 = vtanh.pop %v5809
    %v5813 = vmul.f32 %v5811, 0.041666668
    %v5814 = vmul.f32 %v5812, 0.041666668
    %v5817 = vcombine.low %v5813, %v5814
    %v5819 = vadd.f32 %v5516, %v5817
    %5820 = vst [vmem:[#allocation3] sm:$0x77] %v5819
    %v5821 = vld [vmem:[%s10] sm:$0xff]
    %v5822 = vld [vmem:[%s10 + $0x8] sm:$0xff]
    %v5823 = vld [vmem:[%s10 + $0x10] sm:$0xff]
    %v5824 = vld [vmem:[%s10 + $0x18] sm:$0xff]
    %v5825 = vld [vmem:[%s10 + $0x20] sm:$0xff]
    %v5826 = vld [vmem:[%s10 + $0x28] sm:$0xff]
    %v5827 = vld [vmem:[%s10 + $0x30] sm:$0xff]
    %v5828 = vld [vmem:[%s10 + $0x38] sm:$0xff]
    %v5829 = vld [vmem:[%s11] sm:$0xff]
    %v5830 = vld [vmem:[%s11 + $0x8] sm:$0xff]
    %v5831 = vld [vmem:[%s11 + $0x10] sm:$0xff]
    %v5832 = vld [vmem:[%s11 + $0x18] sm:$0xff]
    %v5833 = vld [vmem:[%s11 + $0x20] sm:$0xff]
    %v5834 = vld [vmem:[%s11 + $0x28] sm:$0xff]
    %v5835 = vld [vmem:[%s11 + $0x30] sm:$0xff]
    %v5836 = vld [vmem:[%s11 + $0x38] sm:$0xff]
    %5838 = vset.pattern.permute.xlu0 0
    %5839 = vperm.xlu0 %5838, %v5829
    %v5840 = vpop.permute.xlu0 %5839
    %5843 = vset.pattern.permute.xlu0 0
    %5844 = vperm.xlu0 %5843, %v5830
    %v5845 = vpop.permute.xlu0 %5844
    %5848 = vset.pattern.permute.xlu0 0
    %5849 = vperm.xlu0 %5848, %v5831
    %v5850 = vpop.permute.xlu0 %5849
    %5853 = vset.pattern.permute.xlu0 0
    %5854 = vperm.xlu0 %5853, %v5832
    %v5855 = vpop.permute.xlu0 %5854
    %5858 = vset.pattern.permute.xlu0 0
    %5859 = vperm.xlu0 %5858, %v5833
    %v5860 = vpop.permute.xlu0 %5859
    %5863 = vset.pattern.permute.xlu0 0
    %5864 = vperm.xlu0 %5863, %v5834
    %v5865 = vpop.permute.xlu0 %5864
    %5868 = vset.pattern.permute.xlu0 0
    %5869 = vperm.xlu0 %5868, %v5835
    %v5870 = vpop.permute.xlu0 %5869
    %5873 = vset.pattern.permute.xlu0 0
    %5874 = vperm.xlu0 %5873, %v5836
    %v5875 = vpop.permute.xlu0 %5874
    %v5878 = vcombine.high %v5819, %v5819
    %v5880 = vsel %vm242, %v5821, 0
    %v5883 = vsel %vm242, %v5822, 0
    %v5886 = vsel %vm242, %v5823, 0
    %v5889 = vsel %vm242, %v5824, 0
    %v5892 = vsel %vm242, %v5825, 0
    %v5895 = vsel %vm242, %v5826, 0
    %v5898 = vsel %vm242, %v5827, 0
    %v5901 = vsel %vm242, %v5828, 0
    %v5903 = vsel %vm255, %v5819, 0
    %v5905 = vsel %vm255, %v5878, 0
    %5907 = vmatprep.subr.mxu0 %v5905
    %5908 = vmatpush1.msra.mxu0 %v5903
    %5909 = vmatprep.subr.mxu0 0.0
    %5910 = vmatpush1.msra.mxu0 0.0
    %5911 = vmatprep.subr.mxu0 0.0
    %5912 = vmatpush1.msra.mxu0 0.0
    %5913 = vmatprep.subr.mxu0 0.0
    %5914 = vmatpush1.msra.mxu0 0.0
    %5915 = vmatprep.subr.mxu0 0.0
    %5916 = vmatpush1.msra.mxu0 0.0
    %5917 = vmatprep.subr.mxu0 0.0
    %5918 = vmatpush1.msra.mxu0 0.0
    %5919 = vmatprep.subr.mxu0 0.0
    %5920 = vmatpush1.msra.mxu0 0.0
    %5921 = vmatprep.subr.mxu0 0.0
    %5922 = vmatpush1.msra.mxu0 0.0
    %5923 = vmatprep.subr.mxu0 0.0
    %5924 = vmatpush1.msra.mxu0 0.0
    %5925 = vmatprep.subr.mxu0 0.0
    %5926 = vmatpush1.msra.mxu0 0.0
    %5927 = vmatprep.subr.mxu0 0.0
    %5928 = vmatpush1.msra.mxu0 0.0
    %5929 = vmatprep.subr.mxu0 0.0
    %5930 = vmatpush1.msra.mxu0 0.0
    %5931 = vmatprep.subr.mxu0 0.0
    %5932 = vmatpush1.msra.mxu0 0.0
    %5933 = vmatprep.subr.mxu0 0.0
    %5934 = vmatpush1.msra.mxu0 0.0
    %5935 = vmatprep.subr.mxu0 0.0
    %5936 = vmatpush1.msra.mxu0 0.0
    %5937 = vmatprep.subr.mxu0 0.0
    %5938 = vmatpush1.msra.mxu0 0.0
    %5939 = vmatprep.subr.mxu0 0.0
    %5940 = vmatpush1.msra.mxu0 0.0
    %5941 = vmatprep.subr.mxu0 0.0
    %5942 = vmatpush1.msra.mxu0 0.0
    %5943 = vmatprep.subr.mxu0 0.0
    %5944 = vmatpush1.msra.mxu0 0.0
    %5945 = vmatprep.subr.mxu0 0.0
    %5946 = vmatpush1.msra.mxu0 0.0
    %5947 = vmatprep.subr.mxu0 0.0
    %5948 = vmatpush1.msra.mxu0 0.0
    %5949 = vmatprep.subr.mxu0 0.0
    %5950 = vmatpush1.msra.mxu0 0.0
    %5951 = vmatprep.subr.mxu0 0.0
    %5952 = vmatpush1.msra.mxu0 0.0
    %5953 = vmatprep.subr.mxu0 0.0
    %5954 = vmatpush1.msra.mxu0 0.0
    %5955 = vmatprep.subr.mxu0 0.0
    %5956 = vmatpush1.msra.mxu0 0.0
    %5957 = vmatprep.subr.mxu0 0.0
    %5958 = vmatpush1.msra.mxu0 0.0
    %5959 = vmatprep.subr.mxu0 0.0
    %5960 = vmatpush1.msra.mxu0 0.0
    %5961 = vmatprep.subr.mxu0 0.0
    %5962 = vmatpush1.msra.mxu0 0.0
    %5963 = vmatprep.subr.mxu0 0.0
    %5964 = vmatpush1.msra.mxu0 0.0
    %5965 = vmatprep.subr.mxu0 0.0
    %5966 = vmatpush1.msra.mxu0 0.0
    %5967 = vmatprep.subr.mxu0 0.0
    %5968 = vmatpush1.msra.mxu0 0.0
    %5969 = vmatprep.subr.mxu0 0.0
    %5970 = vmatpush1.msra.mxu0 0.0
    %5971 = vmatprep.mubr.f32.mxu0 0.0
    %5972 = vmatmul.mubr.f32.gmra.mrb[0].mxu0 %v5880
    %v5973 = vpop.f32.mrb[0].mxu0
    %v5974 = vadd.f32 %v5840, %v5973
    %v5975 = vpop.f32.mrb[0].mxu0
    %v5976 = vadd.f32 %v5840, %v5975
    %5977 = vmatprep.mubr.f32.mxu0 0.0
    %5978 = vmatmul.mubr.f32.gmra.mrb[0].mxu0 %v5883
    %v5979 = vpop.f32.mrb[0].mxu0
    %v5980 = vadd.f32 %v5845, %v5979
    %v5981 = vpop.f32.mrb[0].mxu0
    %v5982 = vadd.f32 %v5845, %v5981
    %5983 = vmatprep.mubr.f32.mxu0 0.0
    %5984 = vmatmul.mubr.f32.gmra.mrb[0].mxu0 %v5886
    %v5985 = vpop.f32.mrb[0].mxu0
    %v5986 = vadd.f32 %v5850, %v5985
    %v5987 = vpop.f32.mrb[0].mxu0
    %v5988 = vadd.f32 %v5850, %v5987
    %5989 = vmatprep.mubr.f32.mxu0 0.0
    %5990 = vmatmul.mubr.f32.gmra.mrb[0].mxu0 %v5889
    %v5991 = vpop.f32.mrb[0].mxu0
    %v5992 = vadd.f32 %v5855, %v5991
    %v5993 = vpop.f32.mrb[0].mxu0
    %v5994 = vadd.f32 %v5855, %v5993
    %5995 = vmatprep.mubr.f32.mxu0 0.0
    %5996 = vmatmul.mubr.f32.gmra.mrb[0].mxu0 %v5892
    %v5997 = vpop.f32.mrb[0].mxu0
    %v5998 = vadd.f32 %v5860, %v5997
    %v5999 = vpop.f32.mrb[0].mxu0
    %v6000 = vadd.f32 %v5860, %v5999
    %6001 = vmatprep.mubr.f32.mxu0 0.0
    %6002 = vmatmul.mubr.f32.gmra.mrb[0].mxu0 %v5895
    %v6003 = vpop.f32.mrb[0].mxu0
    %v6004 = vadd.f32 %v5865, %v6003
    %v6005 = vpop.f32.mrb[0].mxu0
    %v6006 = vadd.f32 %v5865, %v6005
    %6007 = vmatprep.mubr.f32.mxu0 0.0
    %6008 = vmatmul.mubr.f32.gmra.mrb[0].mxu0 %v5898
    %v6009 = vpop.f32.mrb[0].mxu0
    %v6010 = vadd.f32 %v5870, %v6009
    %v6011 = vpop.f32.mrb[0].mxu0
    %v6012 = vadd.f32 %v5870, %v6011
    %6013 = vmatprep.mubr.f32.mxu0 0.0
    %6014 = vmatmul.mubr.f32.gmra.mrb[0].mxu0 %v5901
    %v6015 = vpop.f32.mrb[0].mxu0
    %v6016 = vadd.f32 %v5875, %v6015
    %v6017 = vpop.f32.mrb[0].mxu0
    %v6018 = vadd.f32 %v5875, %v6017
    %6019 = vdwg.mxu0
    %v6020 = vmax.f32 %v5974, 0.0
    %v6021 = vmax.f32 %v5976, 0.0
    %v6022 = vmax.f32 %v5980, 0.0
    %v6023 = vmax.f32 %v5982, 0.0
    %v6024 = vmax.f32 %v5986, 0.0
    %v6025 = vmax.f32 %v5988, 0.0
    %v6026 = vmax.f32 %v5992, 0.0
    %v6027 = vmax.f32 %v5994, 0.0
    %v6028 = vmax.f32 %v5998, 0.0
    %v6029 = vmax.f32 %v6000, 0.0
    %v6030 = vmax.f32 %v6004, 0.0
    %v6031 = vmax.f32 %v6006, 0.0
    %v6032 = vmax.f32 %v6010, 0.0
    %v6033 = vmax.f32 %v6012, 0.0
    %v6034 = vmax.f32 %v6016, 0.0
    %v6035 = vmax.f32 %v6018, 0.0
    %v6036 = vld [vmem:[%s12] sm:$0xff]
    %v6037 = vld [vmem:[%s12 + $0x8] sm:$0xff]
    %v6038 = vld [vmem:[%s12 + $0x10] sm:$0xff]
    %v6039 = vld [vmem:[%s12 + $0x18] sm:$0xff]
    %v6040 = vld [vmem:[%s12 + $0x20] sm:$0xff]
    %v6041 = vld [vmem:[%s12 + $0x28] sm:$0xff]
    %v6042 = vld [vmem:[%s12 + $0x30] sm:$0xff]
    %v6043 = vld [vmem:[%s12 + $0x38] sm:$0xff]
    %v6044 = vld [vmem:[%s13] sm:$0xff]
    %v6045 = vld [vmem:[%s13 + $0x8] sm:$0xff]
    %v6046 = vld [vmem:[%s13 + $0x10] sm:$0xff]
    %v6047 = vld [vmem:[%s13 + $0x18] sm:$0xff]
    %v6048 = vld [vmem:[%s13 + $0x20] sm:$0xff]
    %v6049 = vld [vmem:[%s13 + $0x28] sm:$0xff]
    %v6050 = vld [vmem:[%s13 + $0x30] sm:$0xff]
    %v6051 = vld [vmem:[%s13 + $0x38] sm:$0xff]
    %6053 = vset.pattern.permute.xlu0 0
    %6054 = vperm.xlu0 %6053, %v6044
    %v6055 = vpop.permute.xlu0 %6054
    %6058 = vset.pattern.permute.xlu0 0
    %6059 = vperm.xlu0 %6058, %v6045
    %v6060 = vpop.permute.xlu0 %6059
    %6063 = vset.pattern.permute.xlu0 0
    %6064 = vperm.xlu0 %6063, %v6046
    %v6065 = vpop.permute.xlu0 %6064
    %6068 = vset.pattern.permute.xlu0 0
    %6069 = vperm.xlu0 %6068, %v6047
    %v6070 = vpop.permute.xlu0 %6069
    %6073 = vset.pattern.permute.xlu0 0
    %6074 = vperm.xlu0 %6073, %v6048
    %v6075 = vpop.permute.xlu0 %6074
    %6078 = vset.pattern.permute.xlu0 0
    %6079 = vperm.xlu0 %6078, %v6049
    %v6080 = vpop.permute.xlu0 %6079
    %6083 = vset.pattern.permute.xlu0 0
    %6084 = vperm.xlu0 %6083, %v6050
    %v6085 = vpop.permute.xlu0 %6084
    %6088 = vset.pattern.permute.xlu0 0
    %6089 = vperm.xlu0 %6088, %v6051
    %v6090 = vpop.permute.xlu0 %6089
    %vm6092 = vcmask 523264
    %v6094 = vsel %vm6092, %v6036, 0
    %v6097 = vsel %vm6092, %v6037, 0
    %v6100 = vsel %vm6092, %v6038, 0
    %v6103 = vsel %vm6092, %v6039, 0
    %v6106 = vsel %vm6092, %v6040, 0
    %v6109 = vsel %vm6092, %v6041, 0
    %v6112 = vsel %vm6092, %v6042, 0
    %v6115 = vsel %vm6092, %v6043, 0
    %6117 = vmatprep.subr.mxu0 %v6021
    %6118 = vmatpush1.msra.mxu0 %v6020
    %6119 = vmatprep.subr.mxu0 %v6023
    %6120 = vmatpush1.msra.mxu0 %v6022
    %6121 = vmatprep.subr.mxu0 %v6025
    %6122 = vmatpush1.msra.mxu0 %v6024
    %6123 = vmatprep.subr.mxu0 %v6027
    %6124 = vmatpush1.msra.mxu0 %v6026
    %6125 = vmatprep.subr.mxu0 %v6029
    %6126 = vmatpush1.msra.mxu0 %v6028
    %6127 = vmatprep.subr.mxu0 %v6031
    %6128 = vmatpush1.msra.mxu0 %v6030
    %6129 = vmatprep.subr.mxu0 %v6033
    %6130 = vmatpush1.msra.mxu0 %v6032
    %6131 = vmatprep.subr.mxu0 %v6035
    %6132 = vmatpush1.msra.mxu0 %v6034
    %6133 = vmatprep.subr.mxu0 0.0
    %6134 = vmatpush1.msra.mxu0 0.0
    %6135 = vmatprep.subr.mxu0 0.0
    %6136 = vmatpush1.msra.mxu0 0.0
    %6137 = vmatprep.subr.mxu0 0.0
    %6138 = vmatpush1.msra.mxu0 0.0
    %6139 = vmatprep.subr.mxu0 0.0
    %6140 = vmatpush1.msra.mxu0 0.0
    %6141 = vmatprep.subr.mxu0 0.0
    %6142 = vmatpush1.msra.mxu0 0.0
    %6143 = vmatprep.subr.mxu0 0.0
    %6144 = vmatpush1.msra.mxu0 0.0
    %6145 = vmatprep.subr.mxu0 0.0
    %6146 = vmatpush1.msra.mxu0 0.0
    %6147 = vmatprep.subr.mxu0 0.0
    %6148 = vmatpush1.msra.mxu0 0.0
    %6149 = vmatprep.subr.mxu0 0.0
    %6150 = vmatpush1.msra.mxu0 0.0
    %6151 = vmatprep.subr.mxu0 0.0
    %6152 = vmatpush1.msra.mxu0 0.0
    %6153 = vmatprep.subr.mxu0 0.0
    %6154 = vmatpush1.msra.mxu0 0.0
    %6155 = vmatprep.subr.mxu0 0.0
    %6156 = vmatpush1.msra.mxu0 0.0
    %6157 = vmatprep.subr.mxu0 0.0
    %6158 = vmatpush1.msra.mxu0 0.0
    %6159 = vmatprep.subr.mxu0 0.0
    %6160 = vmatpush1.msra.mxu0 0.0
    %6161 = vmatprep.subr.mxu0 0.0
    %6162 = vmatpush1.msra.mxu0 0.0
    %6163 = vmatprep.subr.mxu0 0.0
    %6164 = vmatpush1.msra.mxu0 0.0
    %6165 = vmatprep.subr.mxu0 0.0
    %6166 = vmatpush1.msra.mxu0 0.0
    %6167 = vmatprep.subr.mxu0 0.0
    %6168 = vmatpush1.msra.mxu0 0.0
    %6169 = vmatprep.subr.mxu0 0.0
    %6170 = vmatpush1.msra.mxu0 0.0
    %6171 = vmatprep.subr.mxu0 0.0
    %6172 = vmatpush1.msra.mxu0 0.0
    %6173 = vmatprep.subr.mxu0 0.0
    %6174 = vmatpush1.msra.mxu0 0.0
    %6175 = vmatprep.subr.mxu0 0.0
    %6176 = vmatpush1.msra.mxu0 0.0
    %6177 = vmatprep.subr.mxu0 0.0
    %6178 = vmatpush1.msra.mxu0 0.0
    %6179 = vmatprep.subr.mxu0 0.0
    %6180 = vmatpush1.msra.mxu0 0.0
    %6181 = vmatprep.mubr.f32.mxu0 0.0
    %6182 = vmatmul.mubr.f32.gmra.mrb[0].mxu0 %v6094
    %v6183 = vpop.f32.mrb[0].mxu0
    %v6184 = vadd.f32 %v6055, %v6183
    %v6185 = vpop.f32.mrb[0].mxu0
    %v6186 = vadd.f32 %v6055, %v6185
    %6187 = vmatprep.mubr.f32.mxu0 0.0
    %6188 = vmatmul.mubr.f32.gmra.mrb[0].mxu0 %v6097
    %v6189 = vpop.f32.mrb[0].mxu0
    %v6190 = vadd.f32 %v6060, %v6189
    %v6191 = vpop.f32.mrb[0].mxu0
    %v6192 = vadd.f32 %v6060, %v6191
    %6193 = vmatprep.mubr.f32.mxu0 0.0
    %6194 = vmatmul.mubr.f32.gmra.mrb[0].mxu0 %v6100
    %v6195 = vpop.f32.mrb[0].mxu0
    %v6196 = vadd.f32 %v6065, %v6195
    %v6197 = vpop.f32.mrb[0].mxu0
    %v6198 = vadd.f32 %v6065, %v6197
    %6199 = vmatprep.mubr.f32.mxu0 0.0
    %6200 = vmatmul.mubr.f32.gmra.mrb[0].mxu0 %v6103
    %v6201 = vpop.f32.mrb[0].mxu0
    %v6202 = vadd.f32 %v6070, %v6201
    %v6203 = vpop.f32.mrb[0].mxu0
    %v6204 = vadd.f32 %v6070, %v6203
    %6205 = vmatprep.mubr.f32.mxu0 0.0
    %6206 = vmatmul.mubr.f32.gmra.mrb[0].mxu0 %v6106
    %v6207 = vpop.f32.mrb[0].mxu0
    %v6208 = vadd.f32 %v6075, %v6207
    %v6209 = vpop.f32.mrb[0].mxu0
    %v6210 = vadd.f32 %v6075, %v6209
    %6211 = vmatprep.mubr.f32.mxu0 0.0
    %6212 = vmatmul.mubr.f32.gmra.mrb[0].mxu0 %v6109
    %v6213 = vpop.f32.mrb[0].mxu0
    %v6214 = vadd.f32 %v6080, %v6213
    %v6215 = vpop.f32.mrb[0].mxu0
    %v6216 = vadd.f32 %v6080, %v6215
    %6217 = vmatprep.mubr.f32.mxu0 0.0
    %6218 = vmatmul.mubr.f32.gmra.mrb[0].mxu0 %v6112
    %v6219 = vpop.f32.mrb[0].mxu0
    %v6220 = vadd.f32 %v6085, %v6219
    %v6221 = vpop.f32.mrb[0].mxu0
    %v6222 = vadd.f32 %v6085, %v6221
    %6223 = vmatprep.mubr.f32.mxu0 0.0
    %6224 = vmatmul.mubr.f32.gmra.mrb[0].mxu0 %v6115
    %v6225 = vpop.f32.mrb[0].mxu0
    %v6226 = vadd.f32 %v6090, %v6225
    %v6227 = vpop.f32.mrb[0].mxu0
    %v6228 = vadd.f32 %v6090, %v6227
    %6229 = vdwg.mxu0
    %v6230 = vmax.f32 %v6184, 0.0
    %v6231 = vmax.f32 %v6186, 0.0
    %v6232 = vmax.f32 %v6190, 0.0
    %v6233 = vmax.f32 %v6192, 0.0
    %v6234 = vmax.f32 %v6196, 0.0
    %v6235 = vmax.f32 %v6198, 0.0
    %v6236 = vmax.f32 %v6202, 0.0
    %v6237 = vmax.f32 %v6204, 0.0
    %v6238 = vmax.f32 %v6208, 0.0
    %v6239 = vmax.f32 %v6210, 0.0
    %v6240 = vmax.f32 %v6214, 0.0
    %v6241 = vmax.f32 %v6216, 0.0
    %v6242 = vmax.f32 %v6220, 0.0
    %v6243 = vmax.f32 %v6222, 0.0
    %v6244 = vmax.f32 %v6226, 0.0
    %v6245 = vmax.f32 %v6228, 0.0
    %v6246 = vld [vmem:[%s14] sm:$0x1]
    %v6247 = vld [vmem:[#allocation2] sm:$0x1]
    %6249 = vset.pattern.permute.xlu0 0
    %6250 = vperm.xlu0 %6249, %v6247
    %v6251 = vpop.permute.xlu0 %6250
    %v6253 = vlaneseq
    %v6254 = vshrl.u32 %v6253, 7
    %v6255 = vsub.s32 0, %v6254
    %v6256 = vrot.slane %v6251, %v6255
    %v6258 = vsel %vm6092, %v6246, 0
    %6260 = vmatprep.subr.mxu0 %v6231
    %6261 = vmatpush1.msra.mxu0 %v6230
    %6262 = vmatprep.subr.mxu0 %v6233
    %6263 = vmatpush1.msra.mxu0 %v6232
    %6264 = vmatprep.subr.mxu0 %v6235
    %6265 = vmatpush1.msra.mxu0 %v6234
    %6266 = vmatprep.subr.mxu0 %v6237
    %6267 = vmatpush1.msra.mxu0 %v6236
    %6268 = vmatprep.subr.mxu0 %v6239
    %6269 = vmatpush1.msra.mxu0 %v6238
    %6270 = vmatprep.subr.mxu0 %v6241
    %6271 = vmatpush1.msra.mxu0 %v6240
    %6272 = vmatprep.subr.mxu0 %v6243
    %6273 = vmatpush1.msra.mxu0 %v6242
    %6274 = vmatprep.subr.mxu0 %v6245
    %6275 = vmatpush1.msra.mxu0 %v6244
    %6276 = vmatprep.subr.mxu0 0.0
    %6277 = vmatpush1.msra.mxu0 0.0
    %6278 = vmatprep.subr.mxu0 0.0
    %6279 = vmatpush1.msra.mxu0 0.0
    %6280 = vmatprep.subr.mxu0 0.0
    %6281 = vmatpush1.msra.mxu0 0.0
    %6282 = vmatprep.subr.mxu0 0.0
    %6283 = vmatpush1.msra.mxu0 0.0
    %6284 = vmatprep.subr.mxu0 0.0
    %6285 = vmatpush1.msra.mxu0 0.0
    %6286 = vmatprep.subr.mxu0 0.0
    %6287 = vmatpush1.msra.mxu0 0.0
    %6288 = vmatprep.subr.mxu0 0.0
    %6289 = vmatpush1.msra.mxu0 0.0
    %6290 = vmatprep.subr.mxu0 0.0
    %6291 = vmatpush1.msra.mxu0 0.0
    %6292 = vmatprep.subr.mxu0 0.0
    %6293 = vmatpush1.msra.mxu0 0.0
    %6294 = vmatprep.subr.mxu0 0.0
    %6295 = vmatpush1.msra.mxu0 0.0
    %6296 = vmatprep.subr.mxu0 0.0
    %6297 = vmatpush1.msra.mxu0 0.0
    %6298 = vmatprep.subr.mxu0 0.0
    %6299 = vmatpush1.msra.mxu0 0.0
    %6300 = vmatprep.subr.mxu0 0.0
    %6301 = vmatpush1.msra.mxu0 0.0
    %6302 = vmatprep.subr.mxu0 0.0
    %6303 = vmatpush1.msra.mxu0 0.0
    %6304 = vmatprep.subr.mxu0 0.0
    %6305 = vmatpush1.msra.mxu0 0.0
    %6306 = vmatprep.subr.mxu0 0.0
    %6307 = vmatpush1.msra.mxu0 0.0
    %6308 = vmatprep.subr.mxu0 0.0
    %6309 = vmatpush1.msra.mxu0 0.0
    %6310 = vmatprep.subr.mxu0 0.0
    %6311 = vmatpush1.msra.mxu0 0.0
    %6312 = vmatprep.subr.mxu0 0.0
    %6313 = vmatpush1.msra.mxu0 0.0
    %6314 = vmatprep.subr.mxu0 0.0
    %6315 = vmatpush1.msra.mxu0 0.0
    %6316 = vmatprep.subr.mxu0 0.0
    %6317 = vmatpush1.msra.mxu0 0.0
    %6318 = vmatprep.subr.mxu0 0.0
    %6319 = vmatpush1.msra.mxu0 0.0
    %6320 = vmatprep.subr.mxu0 0.0
    %6321 = vmatpush1.msra.mxu0 0.0
    %6322 = vmatprep.subr.mxu0 0.0
    %6323 = vmatpush1.msra.mxu0 0.0
    %6324 = vmatprep.mubr.f32.mxu0 0.0
    %6325 = vmatmul.mubr.f32.gmra.mrb[0].mxu0 %v6258
    %v6326 = vpop.f32.mrb[0].mxu0
    %v6327 = vadd.f32 %v6256, %v6326
    %v6328 = vpop.f32.mrb[0].mxu0
    %v6329 = vadd.f32 %v6256, %v6328
    %6330 = vdwg.mxu0
    %v6331 = vtanh.pop %v6327
    %v6332 = vtanh.pop %v6329
    %v6335 = vcombine.low %v6331, %v6332
    %v6337 = vunpack.c.l.s4 1966171168
    %v6338 = vunpack.c.0.s8 %v6337
    %v6339 = vlaneseq
    %v6340 = vshrl.u32 %v6339, 7
    %v6341 = vsub.s32 %v6338, %v6340
    %v6342 = vrot.slane %v6335, %v6341
    %v6344 = vunpack.c.l.s4 1966171168
    %v6345 = vunpack.c.0.s8 %v6344
    %v6346 = vlaneseq
    %v6347 = vshrl.u32 %v6346, 7
    %v6348 = vsub.s32 %v6345, %v6347
    %v6349 = vrot.slane %v6342, %v6348
    %v6351 = vlaneseq
    %vm6352 = vcmp.ge.s32.totalorder %v6351, 0
    %vm6353 = vcmp.lt.s32.totalorder %v6351, 256
    %vm6354 = vmand %vm6352, %vm6353
    %6355 = vst.msk [vmem:[#allocation5] sm:$0x3] %vm6354, %v6349
    // Predicated region
    $region66: #{decoder_forward.1} parent=1 // pred_check
      _
    $region67: #{decoder_forward.1} parent=1 // pred_check_branch
      %6357 = sbr.rel (0) target = $region69
    $region68: #{decoder_forward.1} parent=1 // pred_region
      %s6359 = ssub.s32 128, 128
      %6360 = vsyncadd [#allocation4], %s6359
      %s6362 = sshll.u32 [#allocation3], 4
      %s6363 = int_to_ptr.vmem [resolvable:$true] %s6362
      %6365 = dma.vmem_to_hbm [thread:$0]  %s6363, 128, %s16, [#allocation4]
    $region69: #{decoder_forward.1} parent=1 // pred_fallthru
      _
    // Predicated region
    $region70: #{decoder_forward.1} parent=1 // pred_check
      _
    $region71: #{decoder_forward.1} parent=1 // pred_check_branch
      %6367 = sbr.rel (0) target = $region73
    $region72: #{decoder_forward.1} parent=1 // pred_region
      %s6369 = ssub.s32 32, 32
      %6370 = vsyncadd [#allocation6], %s6369
      %s6372 = sshll.u32 [#allocation5], 4
      %s6373 = int_to_ptr.vmem [resolvable:$true] %s6372
      %6375 = dma.vmem_to_hbm [thread:$0]  %s6373, 32, %s17, [#allocation6]
    $region73: #{decoder_forward.1} parent=1 // pred_fallthru
      _
    // Predicated region
    $region74: #{decoder_forward.1} parent=1 // pred_check
      _
    $region75: #{decoder_forward.1} parent=1 // pred_check_branch
      %6377 = sbr.rel (0) target = $region77
    $region76: #{decoder_forward.1} parent=1 // pred_region
      %6378 = dma.done [#allocation4], 128
    $region77: #{decoder_forward.1} parent=1 // pred_fallthru
      _
    // Predicated region
    $region78: #{decoder_forward.1} parent=1 // pred_check
      _
    $region79: #{decoder_forward.1} parent=1 // pred_check_branch
      %6380 = sbr.rel (0) target = $region81
    $region80: #{decoder_forward.1} parent=1 // pred_region
      %6381 = dma.done [#allocation6], 32
    $region81: #{decoder_forward.1} parent=1 // pred_fallthru
      _
    %6382 = vsyncpa [#allocation4], 1
    %6383 = vsyncpa [#allocation6], 1

</llo_original>
